<compile_context>
chip_gen: v6e
topology: v6e:2x2x1
jax: 0.10.0
libtpu: 0.0.40
codegen_flags: <defaults>
</compile_context>

<pallas_src>
import functools

import jax
import jax.numpy as jnp
from jax import lax
from jax.experimental import pallas as pl
from jax.experimental.pallas import tpu as pltpu

BN_EPS = 1e-5
LANE = 128  # output-channel padding; on v6e/v7x, 256 would fill the MXU N dim
            # for Cout >= 128 (keep 128 here: test Cout is 8/16, and v5e is 128-wide).


def _round_up(x, m):
    return (x + m - 1) // m * m


def _pick_row_block(H):
    # Row-chunk the image so each grid step has a few thousand output pixels:
    # amortizes per-step overhead, bounds the per-step VMEM working set, and
    # gives the pipeliner / megacore real depth (grid = (N, H // RB)).
    for rb in (64, 32, 16, 8, 4, 2):
        if H % rb == 0 and H // rb >= 2:
            return rb
    return H


# --------------------------------------------------------------------------- #
# Kernel 1: fused (prev-block BN+ReLU) -> 3x3 conv (folded-K matmul) -> partial
# BN statistics.  One grid step = (batch item n, row chunk r).
# --------------------------------------------------------------------------- #
def _conv_stats_kernel(x_ref, w_ref, scale_ref, shift_ref, y_ref, stats_ref,
                       xpad_ref, slab_ref, *, apply_act, row_block):
    """
    x_ref:     (H, W, Cin)        block-0: raw f32 input; later blocks: bf16 raw
                                  conv output of the previous block (Cpad lanes)
    w_ref:     (9*Cin, Cpad) bf16 taps folded into the contraction dim
    scale_ref: (1, Cin)  f32      previous block's fused BN scale (unused block 0)
    shift_ref: (1, Cin)  f32      previous block's fused BN shift (unused block 0)
    y_ref:     (RB, W, Cpad) bf16 raw conv output rows for this chunk (lane dense)
    stats_ref: (2, Cpad) f32      [per-chunk mean, per-chunk centered M2]
    xpad_ref:  VMEM (H+2, W+2, Cin) bf16   halo-padded, activated image (per n)
    slab_ref:  VMEM (RB*W, 9*Cin) bf16     im2col slab (used when Cin is lane aligned)
    """
    H, W, Cin = x_ref.shape
    RB = row_block
    Cpad = w_ref.shape[-1]
    r = pl.program_id(1)

    # Once per batch item: previous block's BN scale/shift + ReLU (f32 math on
    # bf16 storage), bf16 cast and zero halo — all in VMEM, no wrapper passes.
    @pl.when(r == 0)
    def _():
        xpad_ref[...] = jnp.zeros_like(xpad_ref)
        x = x_ref[...].astype(jnp.float32)
        if apply_act:
            x = jnp.maximum(x * scale_ref[...] + shift_ref[...], 0.0)
        xpad_ref[1:H + 1, 1:W + 1, :] = x.astype(jnp.bfloat16)

    # 3x3 conv (padding=1, stride=1) for this row chunk.
    row0 = pl.multiple_of(r * RB, RB)
    taps = []
    for ky in range(3):
        for kx in range(3):
            t = xpad_ref[pl.ds(row0 + ky, RB), kx:kx + W, :]
            taps.append(t.reshape(RB * W, Cin))

    if Cin % LANE == 0:
        # Lane-aligned channels: build the (RB*W, 9*Cin) im2col operand in VMEM
        # scratch (aligned 128-lane stores) and run ONE K=9*Cin MXU matmul.
        for j, t in enumerate(taps):
            slab_ref[:, j * Cin:(j + 1) * Cin] = t
        acc = jnp.dot(slab_ref[...], w_ref[...],
                      preferred_element_type=jnp.float32)
    else:
        # Network input layer only (small, lane-sparse Cin): 9 shifted K=Cin
        # matmuls accumulated in f32.
        wv = w_ref[...]
        acc = jnp.zeros((RB * W, Cpad), jnp.float32)
        for j, t in enumerate(taps):
            acc = acc + jnp.dot(t, wv[j * Cin:(j + 1) * Cin, :],
                                preferred_element_type=jnp.float32)

    # Raw conv output stored bf16 (the next block re-reads it as a bf16 MXU
    # operand anyway) -> half the HBM bytes of f32, lane-dense Cpad stores.
    y_ref[...] = acc.reshape(RB, W, Cpad).astype(jnp.bfloat16)

    # Per-chunk BN statistics in f32, centered (mean, M2) to avoid the
    # E[x^2]-E[x]^2 cancellation; combined Chan-style outside the kernel.
    mean = jnp.mean(acc, axis=0, keepdims=True)
    stats_ref[0:1, :] = mean
    stats_ref[1:2, :] = jnp.sum(jnp.square(acc - mean), axis=0, keepdims=True)


# --------------------------------------------------------------------------- #
# Kernel 2: final block's BatchNorm affine (precomputed scale/shift) + ReLU.
# (Every other block's BN+ReLU is fused into the *next* block's conv kernel.)
# --------------------------------------------------------------------------- #
def _bn_relu_out_kernel(y_ref, scale_ref, shift_ref, out_ref):
    Cout = out_ref.shape[-1]
    y = y_ref[...][:, :, :Cout].astype(jnp.float32)
    out_ref[...] = jnp.maximum(y * scale_ref[...] + shift_ref[...], 0.0)


# --------------------------------------------------------------------------- #
# Wrappers.
# --------------------------------------------------------------------------- #
def _conv_block(x, w, prev_scale, prev_shift):
    """Conv3x3(p=1, s=1) of (optionally BN+ReLU-activated) x.

    Returns the raw conv output (bf16, Cout zero-padded to a lane-dense Cpad)
    and per-chunk BN statistics.  The previous block's BN+ReLU (prev_scale /
    prev_shift) is applied inside the kernel; pass None for the first block.
    """
    N, H, W, Cin = x.shape
    Cout, Cin_w = w.shape[0], w.shape[1]
    assert Cin_w <= Cin
    Cpad = _round_up(Cout, LANE)
    RB = _pick_row_block(H)
    assert H % RB == 0
    nR = H // RB
    apply_act = prev_scale is not None

    # PyTorch weight (Cout, Cin_w, 3, 3) -> (3, 3, Cin, Cpad) -> (9*Cin, Cpad):
    # taps folded into the contraction dim; Cin/Cout zero-padded to match the
    # Cpad-padded activations threaded through the stack (padded channels are
    # exactly zero so they contribute nothing).
    wk = jnp.transpose(w, (2, 3, 1, 0))
    wk = jnp.pad(wk, ((0, 0), (0, 0), (0, Cin - Cin_w), (0, Cpad - Cout)))
    wk = wk.reshape(9 * Cin, Cpad).astype(jnp.bfloat16)

    if prev_scale is None:
        prev_scale = jnp.ones((1, Cin), jnp.float32)
        prev_shift = jnp.zeros((1, Cin), jnp.float32)

    kernel = functools.partial(_conv_stats_kernel, apply_act=apply_act,
                               row_block=RB)

    y_raw, stats = pl.pallas_call(
        kernel,
        grid=(N, nR),
        in_specs=[
            pl.BlockSpec((None, H, W, Cin), lambda n, r: (n, 0, 0, 0)),
            pl.BlockSpec((9 * Cin, Cpad), lambda n, r: (0, 0)),
            pl.BlockSpec((1, Cin), lambda n, r: (0, 0)),
            pl.BlockSpec((1, Cin), lambda n, r: (0, 0)),
        ],
        out_specs=[
            pl.BlockSpec((None, RB, W, Cpad), lambda n, r: (n, r, 0, 0)),
            pl.BlockSpec((None, None, 2, Cpad), lambda n, r: (n, r, 0, 0)),
        ],
        out_shape=[
            jax.ShapeDtypeStruct((N, H, W, Cpad), jnp.bfloat16),
            jax.ShapeDtypeStruct((N, nR, 2, Cpad), jnp.float32),
        ],
        scratch_shapes=[
            pltpu.VMEM((H + 2, W + 2, Cin), jnp.bfloat16),   # halo'd activated image
            pltpu.VMEM((RB * W, 9 * Cin), jnp.bfloat16),     # folded-K im2col slab
        ],
        compiler_params=pltpu.CompilerParams(
            dimension_semantics=("parallel", "arbitrary")),
    )(x, wk, prev_scale, prev_shift)
    return y_raw, stats, RB * W


def _combine_stats(stats, chunk_count):
    # stats: (N, nR, 2, Cpad); every chunk has `chunk_count` pixels, so combine
    # (mean, M2) Chan-style (numerically safe for deep stacks).
    Cpad = stats.shape[-1]
    means = stats[:, :, 0, :].reshape(-1, Cpad)
    m2s = stats[:, :, 1, :].reshape(-1, Cpad)
    n_chunks = means.shape[0]
    mean = jnp.mean(means, axis=0)
    m2 = jnp.sum(m2s, axis=0) + chunk_count * jnp.sum(
        jnp.square(means - mean[None, :]), axis=0)
    var = m2 / (n_chunks * chunk_count)            # biased variance (train-mode BN)
    return mean, var


def _bn_affine(mean, var, gamma, beta, Cpad):
    # Padded channels: mean = var = 0 and gamma/beta padded with 0 => scale = shift = 0.
    Cout = gamma.shape[0]
    g = jnp.pad(gamma, (0, Cpad - Cout)).astype(jnp.float32)
    b = jnp.pad(beta, (0, Cpad - Cout)).astype(jnp.float32)
    s = g * lax.rsqrt(var + BN_EPS)
    t = b - mean * s
    return s.reshape(1, Cpad), t.reshape(1, Cpad)


def _bn_relu_out(y_raw, scale, shift, Cout):
    N, H, W, Cpad = y_raw.shape
    RB = _pick_row_block(H)
    nR = H // RB
    return pl.pallas_call(
        _bn_relu_out_kernel,
        grid=(N, nR),
        in_specs=[
            pl.BlockSpec((None, RB, W, Cpad), lambda n, r: (n, r, 0, 0)),
            pl.BlockSpec((1, Cout), lambda n, r: (0, 0)),
            pl.BlockSpec((1, Cout), lambda n, r: (0, 0)),
        ],
        out_specs=pl.BlockSpec((None, RB, W, Cout), lambda n, r: (n, r, 0, 0)),
        out_shape=jax.ShapeDtypeStruct((N, H, W, Cout), jnp.float32),
        compiler_params=pltpu.CompilerParams(
            dimension_semantics=("parallel", "parallel")),
    )(y_raw, scale[:, :Cout], shift[:, :Cout])


def init_layer_params(key, in_channels, layer_list, net_name="vgg"):
    assert net_name == "vgg", "only the 'vgg' path is implemented"
    params = []
    cin = in_channels
    for v in layer_list:
        key, k1, k2, k3, k4 = jax.random.split(key, 5)
        w = 0.1 * jax.random.normal(k1, (v, cin, 3, 3), jnp.float32)
        b = 0.05 * jax.random.normal(k2, (v,), jnp.float32)
        gamma = 1.0 + 0.1 * jax.random.normal(k3, (v,), jnp.float32)
        beta = 0.05 * jax.random.normal(k4, (v,), jnp.float32)
        params.append((w, b, gamma, beta))
        cin = v
    return params


def layer_forward(x_nchw, params):
    # NHWC across the whole stack: one transpose at entry, one at exit.
    act = jnp.transpose(x_nchw, (0, 2, 3, 1))
    scale = shift = None
    cout = None
    for (w, b, gamma, beta) in params:
        # Conv bias `b` intentionally unused: train-mode BN subtracts the
        # per-channel batch mean, which cancels a constant bias exactly.
        y_raw, stats, chunk = _conv_block(act, w, scale, shift)
        cout = w.shape[0]
        mean, var = _combine_stats(stats, chunk)
        scale, shift = _bn_affine(mean, var, gamma, beta, y_raw.shape[-1])
        act = y_raw           # raw conv output stays in HBM (bf16, Cpad lanes)
    out = _bn_relu_out(act, scale, shift, cout)   # last block's BN + ReLU
    return jnp.transpose(out, (0, 3, 1, 2))


# --------------------------------------------------------------------------- #
# Pure-JAX reference (correctness check).  Models the kernel's declared mixed
# precision: bf16 conv operands + bf16 HBM storage of the raw conv output, f32
# accumulation and f32 BatchNorm math.  The conv bias is omitted on purpose —
# train-mode BN batch-mean subtraction cancels a constant per-channel bias
# exactly, so the PyTorch module's forward semantics are preserved.
# --------------------------------------------------------------------------- #
def _ref_layer(x, params):
    act = x  # NCHW f32
    for (w, b, gamma, beta) in params:
        xq = act.astype(jnp.bfloat16).astype(jnp.float32)
        wq = w.astype(jnp.bfloat16).astype(jnp.float32)
        y = lax.conv_general_dilated(
            xq, wq, window_strides=(1, 1), padding=((1, 1), (1, 1)),
            dimension_numbers=("NCHW", "OIHW", "NCHW"),
            preferred_element_type=jnp.float32)
        mean = jnp.mean(y, axis=(0, 2, 3))
        var = jnp.mean(jnp.square(y - mean[None, :, None, None]), axis=(0, 2, 3))
        s = gamma * lax.rsqrt(var + BN_EPS)
        t = beta - mean * s
        y_store = y.astype(jnp.bfloat16).astype(jnp.float32)  # bf16 HBM storage
        act = jnp.maximum(
            y_store * s[None, :, None, None] + t[None, :, None, None], 0.0)
    return act


if __name__ == "__main__":
    key = jax.random.PRNGKey(0)
    key_x, key_p = jax.random.split(key)

    # Layer(in_channels=4, layer_list=[8, 16], net_name='vgg'); x is NCHW.
    x = jax.random.normal(key_x, (2, 4, 16, 16), jnp.float32)
    params = init_layer_params(key_p, in_channels=4, layer_list=[8, 16],
                               net_name="vgg")

    fwd = jax.jit(layer_forward)
    out = jax.block_until_ready(fwd(x, params))
    ref = jax.block_until_ready(_ref_layer(x, params))

    assert out.shape == (2, 16, 16, 16), out.shape
    assert bool(jnp.all(jnp.isfinite(out)))
    # Tolerance budget: kernel and reference round the *same* raw conv output to
    # bf16, but their f32 accumulation orders differ, so a ~1-ULP (2^-8) bf16
    # wobble can appear at rounding boundaries and be amplified by the BN scale.
    assert jnp.allclose(out, ref, rtol=1e-2, atol=2e-2), float(
        jnp.max(jnp.abs(out - ref)))

    print("KERNEL_OK")
</pallas_src>

<mosaic_0001>
module attributes {stable_mosaic.version = 11 : i64} {
  func.func @_conv_stats_kernel(%arg0: i32, %arg1: i32, %arg2: memref<1x16x16x4xf32, #tpu.memory_space<vmem>>, %arg3: memref<36x128xbf16, #tpu.memory_space<vmem>>, %arg4: memref<1x4xf32, #tpu.memory_space<vmem>>, %arg5: memref<1x4xf32, #tpu.memory_space<vmem>>, %arg6: memref<1x8x16x128xbf16, #tpu.memory_space<vmem>>, %arg7: memref<1x1x2x128xf32, #tpu.memory_space<vmem>>, %arg8: memref<18x18x4xbf16, #tpu.memory_space<vmem>>, %arg9: memref<128x36xbf16, #tpu.memory_space<vmem>>) attributes {dimension_semantics = [#tpu.dimension_semantics<parallel>, #tpu.dimension_semantics<arbitrary>], iteration_bounds = array<i64: 2, 2>, scalar_prefetch = 0 : i64, scratch_operands = 2 : i64, tpu.core_type = #tpu.core_type<tc>, window_params = [{transform_indices = @transform_0, window_bounds = array<i64: 1, 16, 16, 4>}, {pipeline_mode = #tpu.pipeline_mode<synchronous>, transform_indices = @transform_1, window_bounds = array<i64: 36, 128>}, {pipeline_mode = #tpu.pipeline_mode<synchronous>, transform_indices = @transform_2, window_bounds = array<i64: 1, 4>}, {pipeline_mode = #tpu.pipeline_mode<synchronous>, transform_indices = @transform_3, window_bounds = array<i64: 1, 4>}, {transform_indices = @transform_4, window_bounds = array<i64: 1, 8, 16, 128>}, {transform_indices = @transform_5, window_bounds = array<i64: 1, 1, 2, 128>}]} {
    %c0_i32 = arith.constant 0 : i32
    %0 = arith.cmpi eq, %arg1, %c0_i32 : i32
    %1 = arith.extui %0 : i1 to i32
    %c0_i32_0 = arith.constant 0 : i32
    %2 = arith.cmpi ne, %1, %c0_i32_0 : i32
    scf.if %2 {
      %cst_49 = arith.constant 0.000000e+00 : bf16
      %90 = vector.broadcast %cst_49 : bf16 to vector<18x18x4xbf16>
      %c0_50 = arith.constant 0 : index
      %c0_51 = arith.constant 0 : index
      %c0_52 = arith.constant 0 : index
      %91 = vector.load %arg8[%c0_50, %c0_51, %c0_52] : memref<18x18x4xbf16, #tpu.memory_space<vmem>>, vector<18x18x4xbf16>
      tpu.vector_store %arg8[%c0_50, %c0_51, %c0_52], %90 {strides = array<i32>} : memref<18x18x4xbf16, #tpu.memory_space<vmem>>, vector<18x18x4xbf16>,
      %c0_53 = arith.constant 0 : index
      %c0_54 = arith.constant 0 : index
      %c0_55 = arith.constant 0 : index
      %c0_56 = arith.constant 0 : index
      %92 = vector.load %arg2[%c0_53, %c0_54, %c0_55, %c0_56] : memref<1x16x16x4xf32, #tpu.memory_space<vmem>>, vector<1x16x16x4xf32>
      %93 = vector.shape_cast %92 : vector<1x16x16x4xf32> to vector<16x16x4xf32>
      %94 = arith.truncf %93 : vector<16x16x4xf32> to vector<16x16x4xbf16>
      %c1_57 = arith.constant 1 : index
      %c1_58 = arith.constant 1 : index
      %c0_59 = arith.constant 0 : index
      %95 = vector.load %arg8[%c1_57, %c1_58, %c0_59] : memref<18x18x4xbf16, #tpu.memory_space<vmem>>, vector<16x16x4xbf16>
      tpu.vector_store %arg8[%c1_57, %c1_58, %c0_59], %94 {strides = array<i32>} : memref<18x18x4xbf16, #tpu.memory_space<vmem>>, vector<16x16x4xbf16>,
    } else {
    }
    %c8_i32 = arith.constant 8 : i32
    %3 = arith.muli %arg1, %c8_i32 : i32
    %4 = tpu.assume_multiple %3, 8 : i32
    %c0_i32_1 = arith.constant 0 : i32
    %5 = arith.addi %4, %c0_i32_1 : i32
    %6 = arith.index_cast %5 : i32 to index
    %c0 = arith.constant 0 : index
    %c0_2 = arith.constant 0 : index
    %7 = vector.load %arg8[%6, %c0, %c0_2] : memref<18x18x4xbf16, #tpu.memory_space<vmem>>, vector<8x16x4xbf16>
    %8 = vector.shape_cast %7 : vector<8x16x4xbf16> to vector<128x4xbf16>
    %c0_i32_3 = arith.constant 0 : i32
    %9 = arith.addi %4, %c0_i32_3 : i32
    %10 = arith.index_cast %9 : i32 to index
    %c1 = arith.constant 1 : index
    %c0_4 = arith.constant 0 : index
    %11 = vector.load %arg8[%10, %c1, %c0_4] : memref<18x18x4xbf16, #tpu.memory_space<vmem>>, vector<8x16x4xbf16>
    %12 = vector.shape_cast %11 : vector<8x16x4xbf16> to vector<128x4xbf16>
    %c0_i32_5 = arith.constant 0 : i32
    %13 = arith.addi %4, %c0_i32_5 : i32
    %14 = arith.index_cast %13 : i32 to index
    %c2 = arith.constant 2 : index
    %c0_6 = arith.constant 0 : index
    %15 = vector.load %arg8[%14, %c2, %c0_6] : memref<18x18x4xbf16, #tpu.memory_space<vmem>>, vector<8x16x4xbf16>
    %16 = vector.shape_cast %15 : vector<8x16x4xbf16> to vector<128x4xbf16>
    %c1_i32 = arith.constant 1 : i32
    %17 = arith.addi %4, %c1_i32 : i32
    %18 = arith.index_cast %17 : i32 to index
    %c0_7 = arith.constant 0 : index
    %c0_8 = arith.constant 0 : index
    %19 = vector.load %arg8[%18, %c0_7, %c0_8] : memref<18x18x4xbf16, #tpu.memory_space<vmem>>, vector<8x16x4xbf16>
    %20 = vector.shape_cast %19 : vector<8x16x4xbf16> to vector<128x4xbf16>
    %c1_i32_9 = arith.constant 1 : i32
    %21 = arith.addi %4, %c1_i32_9 : i32
    %22 = arith.index_cast %21 : i32 to index
    %c1_10 = arith.constant 1 : index
    %c0_11 = arith.constant 0 : index
    %23 = vector.load %arg8[%22, %c1_10, %c0_11] : memref<18x18x4xbf16, #tpu.memory_space<vmem>>, vector<8x16x4xbf16>
    %24 = vector.shape_cast %23 : vector<8x16x4xbf16> to vector<128x4xbf16>
    %c1_i32_12 = arith.constant 1 : i32
    %25 = arith.addi %4, %c1_i32_12 : i32
    %26 = arith.index_cast %25 : i32 to index
    %c2_13 = arith.constant 2 : index
    %c0_14 = arith.constant 0 : index
    %27 = vector.load %arg8[%26, %c2_13, %c0_14] : memref<18x18x4xbf16, #tpu.memory_space<vmem>>, vector<8x16x4xbf16>
    %28 = vector.shape_cast %27 : vector<8x16x4xbf16> to vector<128x4xbf16>
    %c2_i32 = arith.constant 2 : i32
    %29 = arith.addi %4, %c2_i32 : i32
    %30 = arith.index_cast %29 : i32 to index
    %c0_15 = arith.constant 0 : index
    %c0_16 = arith.constant 0 : index
    %31 = vector.load %arg8[%30, %c0_15, %c0_16] : memref<18x18x4xbf16, #tpu.memory_space<vmem>>, vector<8x16x4xbf16>
    %32 = vector.shape_cast %31 : vector<8x16x4xbf16> to vector<128x4xbf16>
    %c2_i32_17 = arith.constant 2 : i32
    %33 = arith.addi %4, %c2_i32_17 : i32
    %34 = arith.index_cast %33 : i32 to index
    %c1_18 = arith.constant 1 : index
    %c0_19 = arith.constant 0 : index
    %35 = vector.load %arg8[%34, %c1_18, %c0_19] : memref<18x18x4xbf16, #tpu.memory_space<vmem>>, vector<8x16x4xbf16>
    %36 = vector.shape_cast %35 : vector<8x16x4xbf16> to vector<128x4xbf16>
    %c2_i32_20 = arith.constant 2 : i32
    %37 = arith.addi %4, %c2_i32_20 : i32
    %38 = arith.index_cast %37 : i32 to index
    %c2_21 = arith.constant 2 : index
    %c0_22 = arith.constant 0 : index
    %39 = vector.load %arg8[%38, %c2_21, %c0_22] : memref<18x18x4xbf16, #tpu.memory_space<vmem>>, vector<8x16x4xbf16>
    %40 = vector.shape_cast %39 : vector<8x16x4xbf16> to vector<128x4xbf16>
    %c0_23 = arith.constant 0 : index
    %c0_24 = arith.constant 0 : index
    %41 = vector.load %arg3[%c0_23, %c0_24] : memref<36x128xbf16, #tpu.memory_space<vmem>>, vector<36x128xbf16>
    %cst = arith.constant 0.000000e+00 : f32
    %42 = vector.broadcast %cst : f32 to vector<128x128xf32>
    %43 = vector.extract_strided_slice %41 {offsets = [0, 0], sizes = [4, 128], strides = [1, 1]} : vector<36x128xbf16> to vector<4x128xbf16>
    %cst_25 = arith.constant dense<0.000000e+00> : vector<128x128xf32>
    %44 = tpu.matmul %8, %43, %cst_25 {dimension_numbers = #tpu.dot_dimension_numbers<[1], [0], [0], [1], [0, 0, 1, 1], [], []>} : vector<128x4xbf16>, vector<4x128xbf16>, vector<128x128xf32> -> vector<128x128xf32>
    %45 = arith.addf %42, %44 : vector<128x128xf32>
    %46 = vector.extract_strided_slice %41 {offsets = [4, 0], sizes = [4, 128], strides = [1, 1]} : vector<36x128xbf16> to vector<4x128xbf16>
    %cst_26 = arith.constant dense<0.000000e+00> : vector<128x128xf32>
    %47 = tpu.matmul %12, %46, %cst_26 {dimension_numbers = #tpu.dot_dimension_numbers<[1], [0], [0], [1], [0, 0, 1, 1], [], []>} : vector<128x4xbf16>, vector<4x128xbf16>, vector<128x128xf32> -> vector<128x128xf32>
    %48 = arith.addf %45, %47 : vector<128x128xf32>
    %49 = vector.extract_strided_slice %41 {offsets = [8, 0], sizes = [4, 128], strides = [1, 1]} : vector<36x128xbf16> to vector<4x128xbf16>
    %cst_27 = arith.constant dense<0.000000e+00> : vector<128x128xf32>
    %50 = tpu.matmul %16, %49, %cst_27 {dimension_numbers = #tpu.dot_dimension_numbers<[1], [0], [0], [1], [0, 0, 1, 1], [], []>} : vector<128x4xbf16>, vector<4x128xbf16>, vector<128x128xf32> -> vector<128x128xf32>
    %51 = arith.addf %48, %50 : vector<128x128xf32>
    %52 = vector.extract_strided_slice %41 {offsets = [12, 0], sizes = [4, 128], strides = [1, 1]} : vector<36x128xbf16> to vector<4x128xbf16>
    %cst_28 = arith.constant dense<0.000000e+00> : vector<128x128xf32>
    %53 = tpu.matmul %20, %52, %cst_28 {dimension_numbers = #tpu.dot_dimension_numbers<[1], [0], [0], [1], [0, 0, 1, 1], [], []>} : vector<128x4xbf16>, vector<4x128xbf16>, vector<128x128xf32> -> vector<128x128xf32>
    %54 = arith.addf %51, %53 : vector<128x128xf32>
    %55 = vector.extract_strided_slice %41 {offsets = [16, 0], sizes = [4, 128], strides = [1, 1]} : vector<36x128xbf16> to vector<4x128xbf16>
    %cst_29 = arith.constant dense<0.000000e+00> : vector<128x128xf32>
    %56 = tpu.matmul %24, %55, %cst_29 {dimension_numbers = #tpu.dot_dimension_numbers<[1], [0], [0], [1], [0, 0, 1, 1], [], []>} : vector<128x4xbf16>, vector<4x128xbf16>, vector<128x128xf32> -> vector<128x128xf32>
    %57 = arith.addf %54, %56 : vector<128x128xf32>
    %58 = vector.extract_strided_slice %41 {offsets = [20, 0], sizes = [4, 128], strides = [1, 1]} : vector<36x128xbf16> to vector<4x128xbf16>
    %cst_30 = arith.constant dense<0.000000e+00> : vector<128x128xf32>
    %59 = tpu.matmul %28, %58, %cst_30 {dimension_numbers = #tpu.dot_dimension_numbers<[1], [0], [0], [1], [0, 0, 1, 1], [], []>} : vector<128x4xbf16>, vector<4x128xbf16>, vector<128x128xf32> -> vector<128x128xf32>
    %60 = arith.addf %57, %59 : vector<128x128xf32>
    %61 = vector.extract_strided_slice %41 {offsets = [24, 0], sizes = [4, 128], strides = [1, 1]} : vector<36x128xbf16> to vector<4x128xbf16>
    %cst_31 = arith.constant dense<0.000000e+00> : vector<128x128xf32>
    %62 = tpu.matmul %32, %61, %cst_31 {dimension_numbers = #tpu.dot_dimension_numbers<[1], [0], [0], [1], [0, 0, 1, 1], [], []>} : vector<128x4xbf16>, vector<4x128xbf16>, vector<128x128xf32> -> vector<128x128xf32>
    %63 = arith.addf %60, %62 : vector<128x128xf32>
    %64 = vector.extract_strided_slice %41 {offsets = [28, 0], sizes = [4, 128], strides = [1, 1]} : vector<36x128xbf16> to vector<4x128xbf16>
    %cst_32 = arith.constant dense<0.000000e+00> : vector<128x128xf32>
    %65 = tpu.matmul %36, %64, %cst_32 {dimension_numbers = #tpu.dot_dimension_numbers<[1], [0], [0], [1], [0, 0, 1, 1], [], []>} : vector<128x4xbf16>, vector<4x128xbf16>, vector<128x128xf32> -> vector<128x128xf32>
    %66 = arith.addf %63, %65 : vector<128x128xf32>
    %67 = vector.extract_strided_slice %41 {offsets = [32, 0], sizes = [4, 128], strides = [1, 1]} : vector<36x128xbf16> to vector<4x128xbf16>
    %cst_33 = arith.constant dense<0.000000e+00> : vector<128x128xf32>
    %68 = tpu.matmul %40, %67, %cst_33 {dimension_numbers = #tpu.dot_dimension_numbers<[1], [0], [0], [1], [0, 0, 1, 1], [], []>} : vector<128x4xbf16>, vector<4x128xbf16>, vector<128x128xf32> -> vector<128x128xf32>
    %69 = arith.addf %66, %68 : vector<128x128xf32>
    %70 = vector.shape_cast %69 : vector<128x128xf32> to vector<8x16x128xf32>
    %71 = arith.truncf %70 : vector<8x16x128xf32> to vector<8x16x128xbf16>
    %c0_34 = arith.constant 0 : index
    %c0_35 = arith.constant 0 : index
    %c0_36 = arith.constant 0 : index
    %c0_37 = arith.constant 0 : index
    %72 = vector.load %arg6[%c0_34, %c0_35, %c0_36, %c0_37] : memref<1x8x16x128xbf16, #tpu.memory_space<vmem>>, vector<1x8x16x128xbf16>
    %73 = vector.shape_cast %72 : vector<1x8x16x128xbf16> to vector<8x16x128xbf16>
    %74 = vector.shape_cast %71 : vector<8x16x128xbf16> to vector<1x8x16x128xbf16>
    tpu.vector_store %arg6[%c0_34, %c0_35, %c0_36, %c0_37], %74 {strides = array<i32>} : memref<1x8x16x128xbf16, #tpu.memory_space<vmem>>, vector<1x8x16x128xbf16>,
    %cst_38 = arith.constant dense<0.000000e+00> : vector<128xf32>
    %75 = vector.multi_reduction <add>, %69, %cst_38 [0] : vector<128x128xf32> to vector<128xf32>
    %76 = vector.shape_cast %75 : vector<128xf32> to vector<1x128xf32>
    %cst_39 = arith.constant 1.280000e+02 : f32
    %77 = vector.broadcast %cst_39 : f32 to vector<1x128xf32>
    %78 = arith.divf %76, %77 : vector<1x128xf32>
    %c0_40 = arith.constant 0 : index
    %c0_41 = arith.constant 0 : index
    %c0_42 = arith.constant 0 : index
    %c0_43 = arith.constant 0 : index
    %79 = vector.load %arg7[%c0_40, %c0_41, %c0_42, %c0_43] : memref<1x1x2x128xf32, #tpu.memory_space<vmem>>, vector<1x1x1x128xf32>
    %80 = vector.shape_cast %79 : vector<1x1x1x128xf32> to vector<1x128xf32>
    %81 = vector.shape_cast %78 : vector<1x128xf32> to vector<1x1x1x128xf32>
    tpu.vector_store %arg7[%c0_40, %c0_41, %c0_42, %c0_43], %81 {strides = array<i32>} : memref<1x1x2x128xf32, #tpu.memory_space<vmem>>, vector<1x1x1x128xf32>,
    %82 = vector.broadcast %78 : vector<1x128xf32> to vector<128x128xf32>
    %83 = arith.subf %69, %82 : vector<128x128xf32>
    %84 = arith.mulf %83, %83 : vector<128x128xf32>
    %cst_44 = arith.constant dense<0.000000e+00> : vector<128xf32>
    %85 = vector.multi_reduction <add>, %84, %cst_44 [0] : vector<128x128xf32> to vector<128xf32>
    %86 = vector.shape_cast %85 : vector<128xf32> to vector<1x128xf32>
    %c0_45 = arith.constant 0 : index
    %c0_46 = arith.constant 0 : index
    %c1_47 = arith.constant 1 : index
    %c0_48 = arith.constant 0 : index
    %87 = vector.load %arg7[%c0_45, %c0_46, %c1_47, %c0_48] : memref<1x1x2x128xf32, #tpu.memory_space<vmem>>, vector<1x1x1x128xf32>
    %88 = vector.shape_cast %87 : vector<1x1x1x128xf32> to vector<1x128xf32>
    %89 = vector.shape_cast %86 : vector<1x128xf32> to vector<1x1x1x128xf32>
    tpu.vector_store %arg7[%c0_45, %c0_46, %c1_47, %c0_48], %89 {strides = array<i32>} : memref<1x1x2x128xf32, #tpu.memory_space<vmem>>, vector<1x1x1x128xf32>,
    return
  }
  func.func @transform_0(%arg0: i32, %arg1: i32) -> (i32, i32, i32, i32) {
    %c0_i32 = arith.constant 0 : i32
    %c0_i32_0 = arith.constant 0 : i32
    %c0_i32_1 = arith.constant 0 : i32
    %c0_i32_2 = arith.constant 0 : i32
    return %arg0, %c0_i32, %c0_i32_0, %c0_i32_1 : i32, i32, i32, i32
  }
  func.func @transform_1(%arg0: i32, %arg1: i32) -> (i32, i32) {
    %c0_i32 = arith.constant 0 : i32
    %c0_i32_0 = arith.constant 0 : i32
    %c0_i32_1 = arith.constant 0 : i32
    return %c0_i32, %c0_i32_0 : i32, i32
  }
  func.func @transform_2(%arg0: i32, %arg1: i32) -> (i32, i32) {
    %c0_i32 = arith.constant 0 : i32
    %c0_i32_0 = arith.constant 0 : i32
    %c0_i32_1 = arith.constant 0 : i32
    return %c0_i32, %c0_i32_0 : i32, i32
  }
  func.func @transform_3(%arg0: i32, %arg1: i32) -> (i32, i32) {
    %c0_i32 = arith.constant 0 : i32
    %c0_i32_0 = arith.constant 0 : i32
    %c0_i32_1 = arith.constant 0 : i32
    return %c0_i32, %c0_i32_0 : i32, i32
  }
  func.func @transform_4(%arg0: i32, %arg1: i32) -> (i32, i32, i32, i32) {
    %c0_i32 = arith.constant 0 : i32
    %c0_i32_0 = arith.constant 0 : i32
    %c0_i32_1 = arith.constant 0 : i32
    return %arg0, %arg1, %c0_i32, %c0_i32_0 : i32, i32, i32, i32
  }
  func.func @transform_5(%arg0: i32, %arg1: i32) -> (i32, i32, i32, i32) {
    %c0_i32 = arith.constant 0 : i32
    %c0_i32_0 = arith.constant 0 : i32
    %c0_i32_1 = arith.constant 0 : i32
    return %arg0, %arg1, %c0_i32, %c0_i32_0 : i32, i32, i32, i32
  }
}

module attributes {stable_mosaic.version = 11 : i64} {
  func.func @_conv_stats_kernel(%arg0: i32, %arg1: i32, %arg2: memref<1x16x16x128xbf16, #tpu.memory_space<vmem>>, %arg3: memref<1152x128xbf16, #tpu.memory_space<vmem>>, %arg4: memref<1x128xf32, #tpu.memory_space<vmem>>, %arg5: memref<1x128xf32, #tpu.memory_space<vmem>>, %arg6: memref<1x8x16x128xbf16, #tpu.memory_space<vmem>>, %arg7: memref<1x1x2x128xf32, #tpu.memory_space<vmem>>, %arg8: memref<18x18x128xbf16, #tpu.memory_space<vmem>>, %arg9: memref<128x1152xbf16, #tpu.memory_space<vmem>>) attributes {dimension_semantics = [#tpu.dimension_semantics<parallel>, #tpu.dimension_semantics<arbitrary>], iteration_bounds = array<i64: 2, 2>, scalar_prefetch = 0 : i64, scratch_operands = 2 : i64, tpu.core_type = #tpu.core_type<tc>, window_params = [{transform_indices = @transform_0, window_bounds = array<i64: 1, 16, 16, 128>}, {pipeline_mode = #tpu.pipeline_mode<synchronous>, transform_indices = @transform_1, window_bounds = array<i64: 1152, 128>}, {pipeline_mode = #tpu.pipeline_mode<synchronous>, transform_indices = @transform_2, window_bounds = array<i64: 1, 128>}, {pipeline_mode = #tpu.pipeline_mode<synchronous>, transform_indices = @transform_3, window_bounds = array<i64: 1, 128>}, {transform_indices = @transform_4, window_bounds = array<i64: 1, 8, 16, 128>}, {transform_indices = @transform_5, window_bounds = array<i64: 1, 1, 2, 128>}]} {
    %c0_i32 = arith.constant 0 : i32
    %0 = arith.cmpi eq, %arg1, %c0_i32 : i32
    %1 = arith.extui %0 : i1 to i32
    %c0_i32_0 = arith.constant 0 : i32
    %2 = arith.cmpi ne, %1, %c0_i32_0 : i32
    scf.if %2 {
      %cst_52 = arith.constant 0.000000e+00 : bf16
      %73 = vector.broadcast %cst_52 : bf16 to vector<18x18x128xbf16>
      %c0_53 = arith.constant 0 : index
      %c0_54 = arith.constant 0 : index
      %c0_55 = arith.constant 0 : index
      %74 = vector.load %arg8[%c0_53, %c0_54, %c0_55] : memref<18x18x128xbf16, #tpu.memory_space<vmem>>, vector<18x18x128xbf16>
      tpu.vector_store %arg8[%c0_53, %c0_54, %c0_55], %73 {strides = array<i32>} : memref<18x18x128xbf16, #tpu.memory_space<vmem>>, vector<18x18x128xbf16>,
      %c0_56 = arith.constant 0 : index
      %c0_57 = arith.constant 0 : index
      %c0_58 = arith.constant 0 : index
      %c0_59 = arith.constant 0 : index
      %75 = vector.load %arg2[%c0_56, %c0_57, %c0_58, %c0_59] : memref<1x16x16x128xbf16, #tpu.memory_space<vmem>>, vector<1x16x16x128xbf16>
      %76 = vector.shape_cast %75 : vector<1x16x16x128xbf16> to vector<16x16x128xbf16>
      %77 = arith.extf %76 : vector<16x16x128xbf16> to vector<16x16x128xf32>
      %c0_60 = arith.constant 0 : index
      %c0_61 = arith.constant 0 : index
      %78 = vector.load %arg4[%c0_60, %c0_61] : memref<1x128xf32, #tpu.memory_space<vmem>>, vector<1x128xf32>
      %79 = vector.shape_cast %78 : vector<1x128xf32> to vector<1x1x128xf32>
      %80 = vector.broadcast %79 : vector<1x1x128xf32> to vector<16x16x128xf32>
      %81 = arith.mulf %77, %80 : vector<16x16x128xf32>
      %c0_62 = arith.constant 0 : index
      %c0_63 = arith.constant 0 : index
      %82 = vector.load %arg5[%c0_62, %c0_63] : memref<1x128xf32, #tpu.memory_space<vmem>>, vector<1x128xf32>
      %83 = vector.shape_cast %82 : vector<1x128xf32> to vector<1x1x128xf32>
      %84 = vector.broadcast %83 : vector<1x1x128xf32> to vector<16x16x128xf32>
      %85 = arith.addf %81, %84 : vector<16x16x128xf32>
      %cst_64 = arith.constant 0.000000e+00 : f32
      %86 = vector.broadcast %cst_64 : f32 to vector<16x16x128xf32>
      %87 = arith.maximumf %85, %86 : vector<16x16x128xf32>
      %88 = arith.truncf %87 : vector<16x16x128xf32> to vector<16x16x128xbf16>
      %c1_65 = arith.constant 1 : index
      %c1_66 = arith.constant 1 : index
      %c0_67 = arith.constant 0 : index
      %89 = vector.load %arg8[%c1_65, %c1_66, %c0_67] : memref<18x18x128xbf16, #tpu.memory_space<vmem>>, vector<16x16x128xbf16>
      tpu.vector_store %arg8[%c1_65, %c1_66, %c0_67], %88 {strides = array<i32>} : memref<18x18x128xbf16, #tpu.memory_space<vmem>>, vector<16x16x128xbf16>,
    } else {
    }
    %c8_i32 = arith.constant 8 : i32
    %3 = arith.muli %arg1, %c8_i32 : i32
    %4 = tpu.assume_multiple %3, 8 : i32
    %c0_i32_1 = arith.constant 0 : i32
    %5 = arith.addi %4, %c0_i32_1 : i32
    %6 = arith.index_cast %5 : i32 to index
    %c0 = arith.constant 0 : index
    %c0_2 = arith.constant 0 : index
    %7 = vector.load %arg8[%6, %c0, %c0_2] : memref<18x18x128xbf16, #tpu.memory_space<vmem>>, vector<8x16x128xbf16>
    %8 = vector.shape_cast %7 : vector<8x16x128xbf16> to vector<128x128xbf16>
    %c0_i32_3 = arith.constant 0 : i32
    %9 = arith.addi %4, %c0_i32_3 : i32
    %10 = arith.index_cast %9 : i32 to index
    %c1 = arith.constant 1 : index
    %c0_4 = arith.constant 0 : index
    %11 = vector.load %arg8[%10, %c1, %c0_4] : memref<18x18x128xbf16, #tpu.memory_space<vmem>>, vector<8x16x128xbf16>
    %12 = vector.shape_cast %11 : vector<8x16x128xbf16> to vector<128x128xbf16>
    %c0_i32_5 = arith.constant 0 : i32
    %13 = arith.addi %4, %c0_i32_5 : i32
    %14 = arith.index_cast %13 : i32 to index
    %c2 = arith.constant 2 : index
    %c0_6 = arith.constant 0 : index
    %15 = vector.load %arg8[%14, %c2, %c0_6] : memref<18x18x128xbf16, #tpu.memory_space<vmem>>, vector<8x16x128xbf16>
    %16 = vector.shape_cast %15 : vector<8x16x128xbf16> to vector<128x128xbf16>
    %c1_i32 = arith.constant 1 : i32
    %17 = arith.addi %4, %c1_i32 : i32
    %18 = arith.index_cast %17 : i32 to index
    %c0_7 = arith.constant 0 : index
    %c0_8 = arith.constant 0 : index
    %19 = vector.load %arg8[%18, %c0_7, %c0_8] : memref<18x18x128xbf16, #tpu.memory_space<vmem>>, vector<8x16x128xbf16>
    %20 = vector.shape_cast %19 : vector<8x16x128xbf16> to vector<128x128xbf16>
    %c1_i32_9 = arith.constant 1 : i32
    %21 = arith.addi %4, %c1_i32_9 : i32
    %22 = arith.index_cast %21 : i32 to index
    %c1_10 = arith.constant 1 : index
    %c0_11 = arith.constant 0 : index
    %23 = vector.load %arg8[%22, %c1_10, %c0_11] : memref<18x18x128xbf16, #tpu.memory_space<vmem>>, vector<8x16x128xbf16>
    %24 = vector.shape_cast %23 : vector<8x16x128xbf16> to vector<128x128xbf16>
    %c1_i32_12 = arith.constant 1 : i32
    %25 = arith.addi %4, %c1_i32_12 : i32
    %26 = arith.index_cast %25 : i32 to index
    %c2_13 = arith.constant 2 : index
    %c0_14 = arith.constant 0 : index
    %27 = vector.load %arg8[%26, %c2_13, %c0_14] : memref<18x18x128xbf16, #tpu.memory_space<vmem>>, vector<8x16x128xbf16>
    %28 = vector.shape_cast %27 : vector<8x16x128xbf16> to vector<128x128xbf16>
    %c2_i32 = arith.constant 2 : i32
    %29 = arith.addi %4, %c2_i32 : i32
    %30 = arith.index_cast %29 : i32 to index
    %c0_15 = arith.constant 0 : index
    %c0_16 = arith.constant 0 : index
    %31 = vector.load %arg8[%30, %c0_15, %c0_16] : memref<18x18x128xbf16, #tpu.memory_space<vmem>>, vector<8x16x128xbf16>
    %32 = vector.shape_cast %31 : vector<8x16x128xbf16> to vector<128x128xbf16>
    %c2_i32_17 = arith.constant 2 : i32
    %33 = arith.addi %4, %c2_i32_17 : i32
    %34 = arith.index_cast %33 : i32 to index
    %c1_18 = arith.constant 1 : index
    %c0_19 = arith.constant 0 : index
    %35 = vector.load %arg8[%34, %c1_18, %c0_19] : memref<18x18x128xbf16, #tpu.memory_space<vmem>>, vector<8x16x128xbf16>
    %36 = vector.shape_cast %35 : vector<8x16x128xbf16> to vector<128x128xbf16>
    %c2_i32_20 = arith.constant 2 : i32
    %37 = arith.addi %4, %c2_i32_20 : i32
    %38 = arith.index_cast %37 : i32 to index
    %c2_21 = arith.constant 2 : index
    %c0_22 = arith.constant 0 : index
    %39 = vector.load %arg8[%38, %c2_21, %c0_22] : memref<18x18x128xbf16, #tpu.memory_space<vmem>>, vector<8x16x128xbf16>
    %40 = vector.shape_cast %39 : vector<8x16x128xbf16> to vector<128x128xbf16>
    %c0_23 = arith.constant 0 : index
    %c0_24 = arith.constant 0 : index
    %41 = vector.load %arg9[%c0_23, %c0_24] : memref<128x1152xbf16, #tpu.memory_space<vmem>>, vector<128x128xbf16>
    tpu.vector_store %arg9[%c0_23, %c0_24], %8 {strides = array<i32>} : memref<128x1152xbf16, #tpu.memory_space<vmem>>, vector<128x128xbf16>,
    %c0_25 = arith.constant 0 : index
    %c128 = arith.constant 128 : index
    %42 = vector.load %arg9[%c0_25, %c128] : memref<128x1152xbf16, #tpu.memory_space<vmem>>, vector<128x128xbf16>
    tpu.vector_store %arg9[%c0_25, %c128], %12 {strides = array<i32>} : memref<128x1152xbf16, #tpu.memory_space<vmem>>, vector<128x128xbf16>,
    %c0_26 = arith.constant 0 : index
    %c256 = arith.constant 256 : index
    %43 = vector.load %arg9[%c0_26, %c256] : memref<128x1152xbf16, #tpu.memory_space<vmem>>, vector<128x128xbf16>
    tpu.vector_store %arg9[%c0_26, %c256], %16 {strides = array<i32>} : memref<128x1152xbf16, #tpu.memory_space<vmem>>, vector<128x128xbf16>,
    %c0_27 = arith.constant 0 : index
    %c384 = arith.constant 384 : index
    %44 = vector.load %arg9[%c0_27, %c384] : memref<128x1152xbf16, #tpu.memory_space<vmem>>, vector<128x128xbf16>
    tpu.vector_store %arg9[%c0_27, %c384], %20 {strides = array<i32>} : memref<128x1152xbf16, #tpu.memory_space<vmem>>, vector<128x128xbf16>,
    %c0_28 = arith.constant 0 : index
    %c512 = arith.constant 512 : index
    %45 = vector.load %arg9[%c0_28, %c512] : memref<128x1152xbf16, #tpu.memory_space<vmem>>, vector<128x128xbf16>
    tpu.vector_store %arg9[%c0_28, %c512], %24 {strides = array<i32>} : memref<128x1152xbf16, #tpu.memory_space<vmem>>, vector<128x128xbf16>,
    %c0_29 = arith.constant 0 : index
    %c640 = arith.constant 640 : index
    %46 = vector.load %arg9[%c0_29, %c640] : memref<128x1152xbf16, #tpu.memory_space<vmem>>, vector<128x128xbf16>
    tpu.vector_store %arg9[%c0_29, %c640], %28 {strides = array<i32>} : memref<128x1152xbf16, #tpu.memory_space<vmem>>, vector<128x128xbf16>,
    %c0_30 = arith.constant 0 : index
    %c768 = arith.constant 768 : index
    %47 = vector.load %arg9[%c0_30, %c768] : memref<128x1152xbf16, #tpu.memory_space<vmem>>, vector<128x128xbf16>
    tpu.vector_store %arg9[%c0_30, %c768], %32 {strides = array<i32>} : memref<128x1152xbf16, #tpu.memory_space<vmem>>, vector<128x128xbf16>,
    %c0_31 = arith.constant 0 : index
    %c896 = arith.constant 896 : index
    %48 = vector.load %arg9[%c0_31, %c896] : memref<128x1152xbf16, #tpu.memory_space<vmem>>, vector<128x128xbf16>
    tpu.vector_store %arg9[%c0_31, %c896], %36 {strides = array<i32>} : memref<128x1152xbf16, #tpu.memory_space<vmem>>, vector<128x128xbf16>,
    %c0_32 = arith.constant 0 : index
    %c1024 = arith.constant 1024 : index
    %49 = vector.load %arg9[%c0_32, %c1024] : memref<128x1152xbf16, #tpu.memory_space<vmem>>, vector<128x128xbf16>
    tpu.vector_store %arg9[%c0_32, %c1024], %40 {strides = array<i32>} : memref<128x1152xbf16, #tpu.memory_space<vmem>>, vector<128x128xbf16>,
    %c0_33 = arith.constant 0 : index
    %c0_34 = arith.constant 0 : index
    %50 = vector.load %arg9[%c0_33, %c0_34] : memref<128x1152xbf16, #tpu.memory_space<vmem>>, vector<128x1152xbf16>
    %c0_35 = arith.constant 0 : index
    %c0_36 = arith.constant 0 : index
    %51 = vector.load %arg3[%c0_35, %c0_36] : memref<1152x128xbf16, #tpu.memory_space<vmem>>, vector<1152x128xbf16>
    %cst = arith.constant dense<0.000000e+00> : vector<128x128xf32>
    %52 = tpu.matmul %50, %51, %cst {dimension_numbers = #tpu.dot_dimension_numbers<[1], [0], [0], [1], [0, 0, 1, 1], [], []>} : vector<128x1152xbf16>, vector<1152x128xbf16>, vector<128x128xf32> -> vector<128x128xf32>
    %53 = vector.shape_cast %52 : vector<128x128xf32> to vector<8x16x128xf32>
    %54 = arith.truncf %53 : vector<8x16x128xf32> to vector<8x16x128xbf16>
    %c0_37 = arith.constant 0 : index
    %c0_38 = arith.constant 0 : index
    %c0_39 = arith.constant 0 : index
    %c0_40 = arith.constant 0 : index
    %55 = vector.load %arg6[%c0_37, %c0_38, %c0_39, %c0_40] : memref<1x8x16x128xbf16, #tpu.memory_space<vmem>>, vector<1x8x16x128xbf16>
    %56 = vector.shape_cast %55 : vector<1x8x16x128xbf16> to vector<8x16x128xbf16>
    %57 = vector.shape_cast %54 : vector<8x16x128xbf16> to vector<1x8x16x128xbf16>
    tpu.vector_store %arg6[%c0_37, %c0_38, %c0_39, %c0_40], %57 {strides = array<i32>} : memref<1x8x16x128xbf16, #tpu.memory_space<vmem>>, vector<1x8x16x128xbf16>,
    %cst_41 = arith.constant dense<0.000000e+00> : vector<128xf32>
    %58 = vector.multi_reduction <add>, %52, %cst_41 [0] : vector<128x128xf32> to vector<128xf32>
    %59 = vector.shape_cast %58 : vector<128xf32> to vector<1x128xf32>
    %cst_42 = arith.constant 1.280000e+02 : f32
    %60 = vector.broadcast %cst_42 : f32 to vector<1x128xf32>
    %61 = arith.divf %59, %60 : vector<1x128xf32>
    %c0_43 = arith.constant 0 : index
    %c0_44 = arith.constant 0 : index
    %c0_45 = arith.constant 0 : index
    %c0_46 = arith.constant 0 : index
    %62 = vector.load %arg7[%c0_43, %c0_44, %c0_45, %c0_46] : memref<1x1x2x128xf32, #tpu.memory_space<vmem>>, vector<1x1x1x128xf32>
    %63 = vector.shape_cast %62 : vector<1x1x1x128xf32> to vector<1x128xf32>
    %64 = vector.shape_cast %61 : vector<1x128xf32> to vector<1x1x1x128xf32>
    tpu.vector_store %arg7[%c0_43, %c0_44, %c0_45, %c0_46], %64 {strides = array<i32>} : memref<1x1x2x128xf32, #tpu.memory_space<vmem>>, vector<1x1x1x128xf32>,
    %65 = vector.broadcast %61 : vector<1x128xf32> to vector<128x128xf32>
    %66 = arith.subf %52, %65 : vector<128x128xf32>
    %67 = arith.mulf %66, %66 : vector<128x128xf32>
    %cst_47 = arith.constant dense<0.000000e+00> : vector<128xf32>
    %68 = vector.multi_reduction <add>, %67, %cst_47 [0] : vector<128x128xf32> to vector<128xf32>
    %69 = vector.shape_cast %68 : vector<128xf32> to vector<1x128xf32>
    %c0_48 = arith.constant 0 : index
    %c0_49 = arith.constant 0 : index
    %c1_50 = arith.constant 1 : index
    %c0_51 = arith.constant 0 : index
    %70 = vector.load %arg7[%c0_48, %c0_49, %c1_50, %c0_51] : memref<1x1x2x128xf32, #tpu.memory_space<vmem>>, vector<1x1x1x128xf32>
    %71 = vector.shape_cast %70 : vector<1x1x1x128xf32> to vector<1x128xf32>
    %72 = vector.shape_cast %69 : vector<1x128xf32> to vector<1x1x1x128xf32>
    tpu.vector_store %arg7[%c0_48, %c0_49, %c1_50, %c0_51], %72 {strides = array<i32>} : memref<1x1x2x128xf32, #tpu.memory_space<vmem>>, vector<1x1x1x128xf32>,
    return
  }
  func.func @transform_0(%arg0: i32, %arg1: i32) -> (i32, i32, i32, i32) {
    %c0_i32 = arith.constant 0 : i32
    %c0_i32_0 = arith.constant 0 : i32
    %c0_i32_1 = arith.constant 0 : i32
    %c0_i32_2 = arith.constant 0 : i32
    return %arg0, %c0_i32, %c0_i32_0, %c0_i32_1 : i32, i32, i32, i32
  }
  func.func @transform_1(%arg0: i32, %arg1: i32) -> (i32, i32) {
    %c0_i32 = arith.constant 0 : i32
    %c0_i32_0 = arith.constant 0 : i32
    %c0_i32_1 = arith.constant 0 : i32
    return %c0_i32, %c0_i32_0 : i32, i32
  }
  func.func @transform_2(%arg0: i32, %arg1: i32) -> (i32, i32) {
    %c0_i32 = arith.constant 0 : i32
    %c0_i32_0 = arith.constant 0 : i32
    %c0_i32_1 = arith.constant 0 : i32
    return %c0_i32, %c0_i32_0 : i32, i32
  }
  func.func @transform_3(%arg0: i32, %arg1: i32) -> (i32, i32) {
    %c0_i32 = arith.constant 0 : i32
    %c0_i32_0 = arith.constant 0 : i32
    %c0_i32_1 = arith.constant 0 : i32
    return %c0_i32, %c0_i32_0 : i32, i32
  }
  func.func @transform_4(%arg0: i32, %arg1: i32) -> (i32, i32, i32, i32) {
    %c0_i32 = arith.constant 0 : i32
    %c0_i32_0 = arith.constant 0 : i32
    %c0_i32_1 = arith.constant 0 : i32
    return %arg0, %arg1, %c0_i32, %c0_i32_0 : i32, i32, i32, i32
  }
  func.func @transform_5(%arg0: i32, %arg1: i32) -> (i32, i32, i32, i32) {
    %c0_i32 = arith.constant 0 : i32
    %c0_i32_0 = arith.constant 0 : i32
    %c0_i32_1 = arith.constant 0 : i32
    return %arg0, %arg1, %c0_i32, %c0_i32_0 : i32, i32, i32, i32
  }
}

module attributes {stable_mosaic.version = 11 : i64} {
  func.func @_bn_relu_out_kernel(%arg0: i32, %arg1: i32, %arg2: memref<1x8x16x128xbf16, #tpu.memory_space<vmem>>, %arg3: memref<1x16xf32, #tpu.memory_space<vmem>>, %arg4: memref<1x16xf32, #tpu.memory_space<vmem>>, %arg5: memref<1x8x16x16xf32, #tpu.memory_space<vmem>>) attributes {dimension_semantics = [#tpu.dimension_semantics<parallel>, #tpu.dimension_semantics<parallel>], iteration_bounds = array<i64: 2, 2>, scalar_prefetch = 0 : i64, scratch_operands = 0 : i64, tpu.core_type = #tpu.core_type<tc>, window_params = [{transform_indices = @transform_0, window_bounds = array<i64: 1, 8, 16, 128>}, {pipeline_mode = #tpu.pipeline_mode<synchronous>, transform_indices = @transform_1, window_bounds = array<i64: 1, 16>}, {pipeline_mode = #tpu.pipeline_mode<synchronous>, transform_indices = @transform_2, window_bounds = array<i64: 1, 16>}, {transform_indices = @transform_3, window_bounds = array<i64: 1, 8, 16, 16>}]} {
    %c0 = arith.constant 0 : index
    %c0_0 = arith.constant 0 : index
    %c0_1 = arith.constant 0 : index
    %c0_2 = arith.constant 0 : index
    %0 = vector.load %arg2[%c0, %c0_0, %c0_1, %c0_2] : memref<1x8x16x128xbf16, #tpu.memory_space<vmem>>, vector<1x8x16x128xbf16>
    %1 = vector.shape_cast %0 : vector<1x8x16x128xbf16> to vector<8x16x128xbf16>
    %2 = vector.extract_strided_slice %1 {offsets = [0, 0, 0], sizes = [8, 16, 16], strides = [1, 1, 1]} : vector<8x16x128xbf16> to vector<8x16x16xbf16>
    %3 = arith.extf %2 : vector<8x16x16xbf16> to vector<8x16x16xf32>
    %c0_3 = arith.constant 0 : index
    %c0_4 = arith.constant 0 : index
    %4 = vector.load %arg3[%c0_3, %c0_4] : memref<1x16xf32, #tpu.memory_space<vmem>>, vector<1x16xf32>
    %5 = vector.shape_cast %4 : vector<1x16xf32> to vector<1x1x16xf32>
    %6 = vector.broadcast %5 : vector<1x1x16xf32> to vector<8x16x16xf32>
    %7 = arith.mulf %3, %6 : vector<8x16x16xf32>
    %c0_5 = arith.constant 0 : index
    %c0_6 = arith.constant 0 : index
    %8 = vector.load %arg4[%c0_5, %c0_6] : memref<1x16xf32, #tpu.memory_space<vmem>>, vector<1x16xf32>
    %9 = vector.shape_cast %8 : vector<1x16xf32> to vector<1x1x16xf32>
    %10 = vector.broadcast %9 : vector<1x1x16xf32> to vector<8x16x16xf32>
    %11 = arith.addf %7, %10 : vector<8x16x16xf32>
    %cst = arith.constant 0.000000e+00 : f32
    %12 = vector.broadcast %cst : f32 to vector<8x16x16xf32>
    %13 = arith.maximumf %11, %12 : vector<8x16x16xf32>
    %c0_7 = arith.constant 0 : index
    %c0_8 = arith.constant 0 : index
    %c0_9 = arith.constant 0 : index
    %c0_10 = arith.constant 0 : index
    %14 = vector.load %arg5[%c0_7, %c0_8, %c0_9, %c0_10] : memref<1x8x16x16xf32, #tpu.memory_space<vmem>>, vector<1x8x16x16xf32>
    %15 = vector.shape_cast %14 : vector<1x8x16x16xf32> to vector<8x16x16xf32>
    %16 = vector.shape_cast %13 : vector<8x16x16xf32> to vector<1x8x16x16xf32>
    tpu.vector_store %arg5[%c0_7, %c0_8, %c0_9, %c0_10], %16 {strides = array<i32>} : memref<1x8x16x16xf32, #tpu.memory_space<vmem>>, vector<1x8x16x16xf32>,
    return
  }
  func.func @transform_0(%arg0: i32, %arg1: i32) -> (i32, i32, i32, i32) {
    %c0_i32 = arith.constant 0 : i32
    %c0_i32_0 = arith.constant 0 : i32
    %c0_i32_1 = arith.constant 0 : i32
    return %arg0, %arg1, %c0_i32, %c0_i32_0 : i32, i32, i32, i32
  }
  func.func @transform_1(%arg0: i32, %arg1: i32) -> (i32, i32) {
    %c0_i32 = arith.constant 0 : i32
    %c0_i32_0 = arith.constant 0 : i32
    %c0_i32_1 = arith.constant 0 : i32
    return %c0_i32, %c0_i32_0 : i32, i32
  }
  func.func @transform_2(%arg0: i32, %arg1: i32) -> (i32, i32) {
    %c0_i32 = arith.constant 0 : i32
    %c0_i32_0 = arith.constant 0 : i32
    %c0_i32_1 = arith.constant 0 : i32
    return %c0_i32, %c0_i32_0 : i32, i32
  }
  func.func @transform_3(%arg0: i32, %arg1: i32) -> (i32, i32, i32, i32) {
    %c0_i32 = arith.constant 0 : i32
    %c0_i32_0 = arith.constant 0 : i32
    %c0_i32_1 = arith.constant 0 : i32
    return %arg0, %arg1, %c0_i32, %c0_i32_0 : i32, i32, i32, i32
  }
}

</mosaic_0001>

<llo_original>
// kernel: layer_forward.5
$region0: #{layer_forward.5}
  #allocation0 [shape = 'u32[]', space=smem, size = 0x4, offset = 0x4, fixed_abs, tag = 'smem constant byte address 0x4 - core index']
  #allocation1 [shape = 'u32[144,128]{1,0:T(1,128)}', space=vmem, size = 0x12000, scoped, tag = 'internal scratch']
  %s0 = inlined_call_operand.vmem [shape: bf16[2,16,16,128], index: 0, kind: input, shape index: {}]
  %s1 = inlined_call_operand.vmem [shape: f32[1,16], index: 1, kind: input, shape index: {}]
  %s2 = inlined_call_operand.vmem [shape: f32[1,16], index: 2, kind: input, shape index: {}]
  %s3 = inlined_call_operand.vmem [shape: f32[2,16,16,16], index: 3, kind: output, shape index: {}]
  %s4 = sld [smem:[#allocation0]]
  $region45: #{layer_forward.5} parent=0
    _
  %s6 = ssub.s32 1, %s4
  %s7 = scalar_select 0, %s6, %s4
  loop: start=0, step=1, limit=6
  $region2: #{layer_forward.5} parent=0 // loop_pre_header
    _
  $region3: #{layer_forward.5} parent=0 // loop_header
    %s9 = sphi 0, %s13
    %p10 = scmp.ge.s32.totalorder %s9, 6
    %s16 = sphi 0, %s28
    %s17 = sphi 0, %s24
    %s18 = sphi 0, %s16
    %s19 = sphi 0, %s17
    %s20 = sphi 0, %s18
    %s21 = sphi 0, %s19
    %s33 = sphi 0, %s35
    %s36 = sphi 0, %s33
    %s37 = sphi 0, %s36
    %s53 = sphi 0, %s37
    %s57 = sphi 0, %s57
    %s59 = sphi 0, %s57
    %s60 = sphi 0, %s59
    %s74 = sphi 0, %s60
    %s78 = sphi 0, %s78
    %s80 = sphi 0, %s78
    %s81 = sphi 0, %s80
    %s95 = sphi 0, %s81
    %s103 = sphi 0, %s105
    %s106 = sphi 0, %s103
    %s107 = sphi 0, %s106
    %s123 = sphi 0, %s107
  $region4: #{layer_forward.5} parent=0 // loop_header_branch
    %12 = sbr.rel (%p10) target = $region8
  $region5: #{layer_forward.5} parent=0 // loop_body
    %s14 = ssub.s32 %s9, 1
    %s15 = ssub.s32 %s9, 2
    %s22 = sadd.s32 1, %s17
    %p23 = scmp.ge.s32.totalorder %s22, 2
    %s24 = scalar_select %p23, 0, %s22
    %s25 = sadd.s32 1, %s16
    %s26 = scalar_select %p23, %s25, %s16
    %p27 = scmp.ge.s32.totalorder %s26, 2
    %s28 = scalar_select %p27, 0, %s26
    %s29 = ssub.s32 %s16, %s28
    %s30 = ssub.s32 %s17, %s24
    %s31 = sor.u32 %s29, %s30
    %p32 = scmp.eq.s32.totalorder %s31, 0
    %s34 = sadd.s32 %s33, 1
    %s35 = scalar_select %p32, %s33, %s34
    %p38 = pneg %p32
    %p39 = scmp.eq.s32.totalorder %s9, 3
    %p40 = por %p38, %p39
    %p41 = scmp.ne.s32.totalorder %s33, %s36
    %p42 = scmp.eq.s32.totalorder %s9, 0
    %p43 = por %p41, %p42
    %p44 = scmp.ne.s32.totalorder %s33, %s36
    %p45 = scmp.eq.s32.totalorder %s14, 3
    %p46 = por %p44, %p45
    %p47 = scmp.ne.s32.totalorder %s36, %s37
    %p48 = scmp.eq.s32.totalorder %s14, 0
    %p49 = por %p47, %p48
    %p50 = scmp.ne.s32.totalorder %s36, %s37
    %p51 = scmp.eq.s32.totalorder %s15, 3
    %p52 = por %p50, %p51
    %p54 = scmp.ne.s32.totalorder %s37, %s53
    %p55 = scmp.eq.s32.totalorder %s15, 0
    %p56 = por %p54, %p55
    %s58 = sadd.s32 %s57, 1
    %p61 = scmp.eq.s32.totalorder %s9, 3
    %p62 = scmp.ne.s32.totalorder %s57, %s59
    %p63 = scmp.eq.s32.totalorder %s9, 0
    %p64 = por %p62, %p63
    %p65 = scmp.ne.s32.totalorder %s57, %s59
    %p66 = scmp.eq.s32.totalorder %s14, 3
    %p67 = por %p65, %p66
    %p68 = scmp.ne.s32.totalorder %s59, %s60
    %p69 = scmp.eq.s32.totalorder %s14, 0
    %p70 = por %p68, %p69
    %p71 = scmp.ne.s32.totalorder %s59, %s60
    %p72 = scmp.eq.s32.totalorder %s15, 3
    %p73 = por %p71, %p72
    %p75 = scmp.ne.s32.totalorder %s60, %s74
    %p76 = scmp.eq.s32.totalorder %s15, 0
    %p77 = por %p75, %p76
    %s79 = sadd.s32 %s78, 1
    %p82 = scmp.eq.s32.totalorder %s9, 3
    %p83 = scmp.ne.s32.totalorder %s78, %s80
    %p84 = scmp.eq.s32.totalorder %s9, 0
    %p85 = por %p83, %p84
    %p86 = scmp.ne.s32.totalorder %s78, %s80
    %p87 = scmp.eq.s32.totalorder %s14, 3
    %p88 = por %p86, %p87
    %p89 = scmp.ne.s32.totalorder %s80, %s81
    %p90 = scmp.eq.s32.totalorder %s14, 0
    %p91 = por %p89, %p90
    %p92 = scmp.ne.s32.totalorder %s80, %s81
    %p93 = scmp.eq.s32.totalorder %s15, 3
    %p94 = por %p92, %p93
    %p96 = scmp.ne.s32.totalorder %s81, %s95
    %p97 = scmp.eq.s32.totalorder %s15, 0
    %p98 = por %p96, %p97
    %s99 = ssub.s32 %s16, %s28
    %s100 = ssub.s32 %s17, %s24
    %s101 = sor.u32 %s99, %s100
    %p102 = scmp.eq.s32.totalorder %s101, 0
    %s104 = sadd.s32 %s103, 1
    %s105 = scalar_select %p102, %s103, %s104
    %p108 = pneg %p102
    %p109 = scmp.eq.s32.totalorder %s9, 3
    %p110 = por %p108, %p109
    %p111 = scmp.ne.s32.totalorder %s103, %s106
    %p112 = scmp.eq.s32.totalorder %s9, 0
    %p113 = por %p111, %p112
    %p114 = scmp.ne.s32.totalorder %s103, %s106
    %p115 = scmp.eq.s32.totalorder %s14, 3
    %p116 = por %p114, %p115
    %p117 = scmp.ne.s32.totalorder %s106, %s107
    %p118 = scmp.eq.s32.totalorder %s14, 0
    %p119 = por %p117, %p118
    %p120 = scmp.ne.s32.totalorder %s106, %s107
    %p121 = scmp.eq.s32.totalorder %s15, 3
    %p122 = por %p120, %p121
    %p124 = scmp.ne.s32.totalorder %s107, %s123
    %p125 = scmp.eq.s32.totalorder %s15, 0
    %p126 = por %p124, %p125
    %p127 = scmp.le.s32.totalorder 1, %s9
    %p128 = scmp.lt.s32.totalorder %s9, 5
    %p129 = pnand %p127, %p128
    %p130 = pneg %p129
    // Predicated region
    $region9: #{layer_forward.5} parent=5 // pred_check
      _
    $region10: #{layer_forward.5} parent=5 // pred_check_branch
      %132 = sbr.rel (%p129) target = $region12
    $region11: #{layer_forward.5} parent=5 // pred_region
      %s133 = ssub.s32 %s9, 1
      // Predicated region
      $region13: #{layer_forward.5} parent=11 // pred_check
        %p134 = pneg %p70
      $region14: #{layer_forward.5} parent=11 // pred_check_branch
        %136 = sbr.rel (%p134) target = $region16
      $region15: #{layer_forward.5} parent=11 // pred_region
        _
      $region16: #{layer_forward.5} parent=11 // pred_fallthru
        _
      // Predicated region
      $region17: #{layer_forward.5} parent=11 // pred_check
        %p137 = pneg %p91
      $region18: #{layer_forward.5} parent=11 // pred_check_branch
        %139 = sbr.rel (%p137) target = $region20
      $region19: #{layer_forward.5} parent=11 // pred_region
        _
      $region20: #{layer_forward.5} parent=11 // pred_fallthru
        _
    $region12: #{layer_forward.5} parent=5 // pred_fallthru
      _
    %p140 = scmp.lt.s32.totalorder %s9, 4
    // Predicated region
    $region21: #{layer_forward.5} parent=5 // pred_check
      %p141 = pneg %p140
    $region22: #{layer_forward.5} parent=5 // pred_check_branch
      %143 = sbr.rel (%p141) target = $region24
    $region23: #{layer_forward.5} parent=5 // pred_region
      // Predicated region
      $region25: #{layer_forward.5} parent=23 // pred_check
        %p144 = pneg %p43
      $region26: #{layer_forward.5} parent=23 // pred_check_branch
        %146 = sbr.rel (%p144) target = $region28
      $region27: #{layer_forward.5} parent=23 // pred_region
        %s147 = smul.u32 8, %s17
        %p148 = scmp.lt.s32.totalorder %s16, 1
        %s149 = scalar_select %p148, %s16, 1
        %p150 = scmp.lt.s32.totalorder %s147, 15
        %s151 = scalar_select %p150, %s147, 15
        %s152 = smul.addr %s151, 2
        %s153 = smul.addr %s149, 32
        %s154 = sadd.s32 %s152, %s153
        %s155 = smul.addr %s154, 4
        %s156 = scalar_lea.vmem %s0, %s155
        %s157 = smul.u32 8, %s17
      $region28: #{layer_forward.5} parent=23 // pred_fallthru
        _
    $region24: #{layer_forward.5} parent=5 // pred_fallthru
      _
    %p158 = scmp.le.s32.totalorder 1, %s9
    %p159 = scmp.lt.s32.totalorder %s9, 5
    %p160 = pnand %p158, %p159
    %p161 = pneg %p160
    // Predicated region
    $region29: #{layer_forward.5} parent=5 // pred_check
      _
    $region30: #{layer_forward.5} parent=5 // pred_check_branch
      %163 = sbr.rel (%p160) target = $region32
    $region31: #{layer_forward.5} parent=5 // pred_region
      %s164 = ssub.s32 %s9, 1
      %s165 = smul.u32 8, %s19
      %p166 = scmp.lt.s32.totalorder %s18, 1
      %s167 = scalar_select %p166, %s18, 1
      %p168 = scmp.lt.s32.totalorder %s165, 15
      %s169 = scalar_select %p168, %s165, 15
      %s170 = smul.addr %s169, 2
      %s171 = smul.addr %s167, 32
      %s172 = sadd.s32 %s170, %s171
      %s173 = smul.addr %s172, 4
      %s174 = scalar_lea.vmem %s0, %s173
      %p175 = pneg %p49
      %p176 = pneg %p46
      %p177 = pneg %p70
      %p178 = pneg %p67
      %p179 = pneg %p91
      %p180 = pneg %p88
      %p181 = pneg %p119
      %p182 = pneg %p116
      %s183 = smul.u32 8, %s19
      %p184 = scmp.lt.s32.totalorder %s18, 1
      %s185 = scalar_select %p184, %s18, 1
      %p186 = scmp.lt.s32.totalorder %s183, 15
      %s187 = scalar_select %p186, %s183, 15
      %s188 = smul.addr %s187, 2
      %s189 = smul.addr %s185, 32
      %s190 = sadd.s32 %s188, %s189
      %s191 = smul.addr %s190, 8
      %s192 = scalar_lea.vmem %s3, %s191
      %s193 = smul.u32 8, %s19
      %p194 = scmp.lt.s32.totalorder %s18, 1
      %s195 = scalar_select %p194, %s18, 1
      %p196 = scmp.lt.s32.totalorder %s193, 15
      %s197 = scalar_select %p196, %s193, 15
      %s198 = smul.addr %s197, 2
      %s199 = smul.addr %s195, 32
      %s200 = sadd.s32 %s198, %s199
      %s201 = smul.addr %s200, 4
      %s202 = scalar_lea.vmem %s0, %s201
      %s203 = smul.u32 8, %s19
      %s204 = smul.u32 8, %s19
      %p205 = scmp.lt.s32.totalorder %s18, 1
      %s206 = scalar_select %p205, %s18, 1
      %p207 = scmp.lt.s32.totalorder %s204, 15
      %s208 = scalar_select %p207, %s204, 15
      %s209 = smul.addr %s208, 2
      %s210 = smul.addr %s206, 32
      %s211 = sadd.s32 %s209, %s210
      %s212 = smul.addr %s211, 8
      %s213 = scalar_lea.vmem %s3, %s212
      %s214 = smul.u32 8, %s19
      %v215 = vld [vmem:[%s202] sm:$0xf]
      %v216 = vld [vmem:[%s202 + $0x4] sm:$0xf]
      %v217 = vld [vmem:[%s202 + $0x8] sm:$0xf]
      %v218 = vld [vmem:[%s202 + $0xc] sm:$0xf]
      %v219 = vld [vmem:[%s202 + $0x10] sm:$0xf]
      %v220 = vld [vmem:[%s202 + $0x14] sm:$0xf]
      %v221 = vld [vmem:[%s202 + $0x18] sm:$0xf]
      %v222 = vld [vmem:[%s202 + $0x1c] sm:$0xf]
      %v223 = vld [vmem:[%s202 + $0x20] sm:$0xf]
      %v224 = vld [vmem:[%s202 + $0x24] sm:$0xf]
      %v225 = vld [vmem:[%s202 + $0x28] sm:$0xf]
      %v226 = vld [vmem:[%s202 + $0x2c] sm:$0xf]
      %v227 = vld [vmem:[%s202 + $0x30] sm:$0xf]
      %v228 = vld [vmem:[%s202 + $0x34] sm:$0xf]
      %v229 = vld [vmem:[%s202 + $0x38] sm:$0xf]
      %v230 = vld [vmem:[%s202 + $0x3c] sm:$0xf]
      %v231 = vunpack.c.l.bf16 %v215
      %v232 = vunpack.c.l.bf16 %v216
      %v233 = vunpack.c.l.bf16 %v217
      %v234 = vunpack.c.l.bf16 %v218
      %v235 = vunpack.c.l.bf16 %v219
      %v236 = vunpack.c.l.bf16 %v220
      %v237 = vunpack.c.l.bf16 %v221
      %v238 = vunpack.c.l.bf16 %v222
      %v239 = vunpack.c.l.bf16 %v223
      %v240 = vunpack.c.l.bf16 %v224
      %v241 = vunpack.c.l.bf16 %v225
      %v242 = vunpack.c.l.bf16 %v226
      %v243 = vunpack.c.l.bf16 %v227
      %v244 = vunpack.c.l.bf16 %v228
      %v245 = vunpack.c.l.bf16 %v229
      %v246 = vunpack.c.l.bf16 %v230
      %v247 = vld [vmem:[%s1] sm:$0x1]
      %v249 = vlaneseq
      %v250 = vshrl.u32 %v249, 7
      %v251 = vsub.s32 0, %v250
      %v252 = vrot.slane %v247, %v251
      %v254 = vmul.f32 %v231, %v252
      %v255 = vmul.f32 %v232, %v252
      %v256 = vmul.f32 %v233, %v252
      %v257 = vmul.f32 %v234, %v252
      %v258 = vmul.f32 %v235, %v252
      %v259 = vmul.f32 %v236, %v252
      %v260 = vmul.f32 %v237, %v252
      %v261 = vmul.f32 %v238, %v252
      %v262 = vmul.f32 %v239, %v252
      %v263 = vmul.f32 %v240, %v252
      %v264 = vmul.f32 %v241, %v252
      %v265 = vmul.f32 %v242, %v252
      %v266 = vmul.f32 %v243, %v252
      %v267 = vmul.f32 %v244, %v252
      %v268 = vmul.f32 %v245, %v252
      %v269 = vmul.f32 %v246, %v252
      %v270 = vld [vmem:[%s2] sm:$0x1]
      %v272 = vlaneseq
      %v273 = vshrl.u32 %v272, 7
      %v274 = vsub.s32 0, %v273
      %v275 = vrot.slane %v270, %v274
      %v277 = vadd.f32 %v254, %v275
      %v278 = vadd.f32 %v255, %v275
      %v279 = vadd.f32 %v256, %v275
      %v280 = vadd.f32 %v257, %v275
      %v281 = vadd.f32 %v258, %v275
      %v282 = vadd.f32 %v259, %v275
      %v283 = vadd.f32 %v260, %v275
      %v284 = vadd.f32 %v261, %v275
      %v285 = vadd.f32 %v262, %v275
      %v286 = vadd.f32 %v263, %v275
      %v287 = vadd.f32 %v264, %v275
      %v288 = vadd.f32 %v265, %v275
      %v289 = vadd.f32 %v266, %v275
      %v290 = vadd.f32 %v267, %v275
      %v291 = vadd.f32 %v268, %v275
      %v292 = vadd.f32 %v269, %v275
      %v293 = vmax.f32 %v277, 0.0
      %v294 = vmax.f32 %v278, 0.0
      %v295 = vmax.f32 %v279, 0.0
      %v296 = vmax.f32 %v280, 0.0
      %v297 = vmax.f32 %v281, 0.0
      %v298 = vmax.f32 %v282, 0.0
      %v299 = vmax.f32 %v283, 0.0
      %v300 = vmax.f32 %v284, 0.0
      %v301 = vmax.f32 %v285, 0.0
      %v302 = vmax.f32 %v286, 0.0
      %v303 = vmax.f32 %v287, 0.0
      %v304 = vmax.f32 %v288, 0.0
      %v305 = vmax.f32 %v289, 0.0
      %v306 = vmax.f32 %v290, 0.0
      %v307 = vmax.f32 %v291, 0.0
      %v308 = vmax.f32 %v292, 0.0
      %vm309 = vcmask 130048
      %310 = vst.msk [vmem:[%s213] sm:$0xff] %vm309, %v293
      %311 = vst.msk [vmem:[%s213 + $0x8] sm:$0xff] %vm309, %v294
      %312 = vst.msk [vmem:[%s213 + $0x10] sm:$0xff] %vm309, %v295
      %313 = vst.msk [vmem:[%s213 + $0x18] sm:$0xff] %vm309, %v296
      %314 = vst.msk [vmem:[%s213 + $0x20] sm:$0xff] %vm309, %v297
      %315 = vst.msk [vmem:[%s213 + $0x28] sm:$0xff] %vm309, %v298
      %316 = vst.msk [vmem:[%s213 + $0x30] sm:$0xff] %vm309, %v299
      %317 = vst.msk [vmem:[%s213 + $0x38] sm:$0xff] %vm309, %v300
      %318 = vst.msk [vmem:[%s213 + $0x40] sm:$0xff] %vm309, %v301
      %319 = vst.msk [vmem:[%s213 + $0x48] sm:$0xff] %vm309, %v302
      %320 = vst.msk [vmem:[%s213 + $0x50] sm:$0xff] %vm309, %v303
      %321 = vst.msk [vmem:[%s213 + $0x58] sm:$0xff] %vm309, %v304
      %322 = vst.msk [vmem:[%s213 + $0x60] sm:$0xff] %vm309, %v305
      %323 = vst.msk [vmem:[%s213 + $0x68] sm:$0xff] %vm309, %v306
      %324 = vst.msk [vmem:[%s213 + $0x70] sm:$0xff] %vm309, %v307
      %325 = vst.msk [vmem:[%s213 + $0x78] sm:$0xff] %vm309, %v308
      %s326 = smul.u32 8, %s19
      %p327 = scmp.lt.s32.totalorder %s18, 1
      %s328 = scalar_select %p327, %s18, 1
      %p329 = scmp.lt.s32.totalorder %s326, 15
      %s330 = scalar_select %p329, %s326, 15
      %s331 = smul.addr %s330, 2
      %s332 = smul.addr %s328, 32
      %s333 = sadd.s32 %s331, %s332
      %s334 = smul.addr %s333, 8
      %s335 = scalar_lea.vmem %s3, %s334
      // Predicated region
      $region33: #{layer_forward.5} parent=31 // pred_check
        %p336 = pneg %p116
      $region34: #{layer_forward.5} parent=31 // pred_check_branch
        %338 = sbr.rel (%p336) target = $region36
      $region35: #{layer_forward.5} parent=31 // pred_region
        %s339 = smul.u32 8, %s19
      $region36: #{layer_forward.5} parent=31 // pred_fallthru
        _
    $region32: #{layer_forward.5} parent=5 // pred_fallthru
      _
    %p340 = scmp.le.s32.totalorder 2, %s9
    // Predicated region
    $region37: #{layer_forward.5} parent=5 // pred_check
      %p341 = pneg %p340
    $region38: #{layer_forward.5} parent=5 // pred_check_branch
      %343 = sbr.rel (%p341) target = $region40
    $region39: #{layer_forward.5} parent=5 // pred_region
      %s344 = ssub.s32 %s9, 2
      // Predicated region
      $region41: #{layer_forward.5} parent=39 // pred_check
        %p345 = pneg %p122
      $region42: #{layer_forward.5} parent=39 // pred_check_branch
        %347 = sbr.rel (%p345) target = $region44
      $region43: #{layer_forward.5} parent=39 // pred_region
        %s348 = smul.u32 8, %s21
        %p349 = scmp.lt.s32.totalorder %s20, 1
        %s350 = scalar_select %p349, %s20, 1
        %p351 = scmp.lt.s32.totalorder %s348, 15
        %s352 = scalar_select %p351, %s348, 15
        %s353 = smul.addr %s352, 2
        %s354 = smul.addr %s350, 32
        %s355 = sadd.s32 %s353, %s354
        %s356 = smul.addr %s355, 8
        %s357 = scalar_lea.vmem %s3, %s356
      $region44: #{layer_forward.5} parent=39 // pred_fallthru
        _
    $region40: #{layer_forward.5} parent=5 // pred_fallthru
      _
  $region6: #{layer_forward.5} parent=0 // loop_footer
    %s13 = sadd.s32 1, %s9
  $region7: #{layer_forward.5} parent=0 // loop_footer_branch
    %8 = sbr.rel target = $region3
  $region8: #{layer_forward.5} parent=0 // loop_exit
    _

// kernel: layer_forward.3
$region0: #{layer_forward.3}
  #allocation0 [shape = 'u32[]', space=smem, size = 0x4, offset = 0x4, fixed_abs, tag = 'smem constant byte address 0x4 - core index']
  #allocation1 [shape = 'u32[144,128]{1,0:T(1,128)}', space=vmem, size = 0x12000, scoped, tag = 'internal scratch']
  #allocation2 [shape = 'bf16[18,18,4]{2,1,0:T(8,128)(2,1)}', space=vmem, size = 0x1b000, scoped, tag = 'scratch operand']
  #allocation3 [shape = 'bf16[128,36]{1,0:T(8,128)(2,1)}', space=vmem, size = 0x8000, scoped, tag = 'scratch operand']
  %s0 = inlined_call_operand.vmem [shape: f32[2,16,16,4], index: 0, kind: input, shape index: {}]
  %s1 = inlined_call_operand.vmem [shape: bf16[36,128], index: 1, kind: input, shape index: {}]
  %s2 = inlined_call_operand.vmem [shape: f32[1,4], index: 2, kind: input, shape index: {}]
  %s3 = inlined_call_operand.vmem [shape: f32[1,4], index: 3, kind: input, shape index: {}]
  %s4 = inlined_call_operand.vmem [shape: bf16[2,16,16,128], index: 4, kind: output, shape index: {0}]
  %s5 = inlined_call_operand.vmem [shape: f32[2,2,2,128], index: 5, kind: output, shape index: {1}]
  %6 = xla_tuple %s4, %s5
  %s7 = sld [smem:[#allocation0]]
  $region61: #{layer_forward.3} parent=0
    _
  %s9 = ssub.s32 1, %s7
  %s10 = scalar_select 0, %s9, %s7
  loop: start=0, step=1, limit=6
  $region2: #{layer_forward.3} parent=0 // loop_pre_header
    _
  $region3: #{layer_forward.3} parent=0 // loop_header
    %s12 = sphi 0, %s16
    %p13 = scmp.ge.s32.totalorder %s12, 6
    %s19 = sphi 0, %s31
    %s20 = sphi 0, %s27
    %s21 = sphi 0, %s19
    %s22 = sphi 0, %s20
    %s23 = sphi 0, %s21
    %s24 = sphi 0, %s22
    %s34 = sphi 0, %s36
    %s37 = sphi 0, %s34
    %s38 = sphi 0, %s37
    %s54 = sphi 0, %s38
    %s58 = sphi 0, %s58
    %s60 = sphi 0, %s58
    %s61 = sphi 0, %s60
    %s75 = sphi 0, %s61
    %s79 = sphi 0, %s79
    %s81 = sphi 0, %s79
    %s82 = sphi 0, %s81
    %s96 = sphi 0, %s82
    %s100 = sphi 0, %s100
    %s102 = sphi 0, %s100
    %s103 = sphi 0, %s102
    %s117 = sphi 0, %s103
    %s125 = sphi 0, %s127
    %s128 = sphi 0, %s125
    %s129 = sphi 0, %s128
    %s145 = sphi 0, %s129
    %s153 = sphi 0, %s155
    %s156 = sphi 0, %s153
    %s157 = sphi 0, %s156
    %s173 = sphi 0, %s157
  $region4: #{layer_forward.3} parent=0 // loop_header_branch
    %15 = sbr.rel (%p13) target = $region8
  $region5: #{layer_forward.3} parent=0 // loop_body
    %s17 = ssub.s32 %s12, 1
    %s18 = ssub.s32 %s12, 2
    %s25 = sadd.s32 1, %s20
    %p26 = scmp.ge.s32.totalorder %s25, 2
    %s27 = scalar_select %p26, 0, %s25
    %s28 = sadd.s32 1, %s19
    %s29 = scalar_select %p26, %s28, %s19
    %p30 = scmp.ge.s32.totalorder %s29, 2
    %s31 = scalar_select %p30, 0, %s29
    %s32 = ssub.s32 %s19, %s31
    %p33 = scmp.eq.s32.totalorder %s32, 0
    %s35 = sadd.s32 %s34, 1
    %s36 = scalar_select %p33, %s34, %s35
    %p39 = pneg %p33
    %p40 = scmp.eq.s32.totalorder %s12, 3
    %p41 = por %p39, %p40
    %p42 = scmp.ne.s32.totalorder %s34, %s37
    %p43 = scmp.eq.s32.totalorder %s12, 0
    %p44 = por %p42, %p43
    %p45 = scmp.ne.s32.totalorder %s34, %s37
    %p46 = scmp.eq.s32.totalorder %s17, 3
    %p47 = por %p45, %p46
    %p48 = scmp.ne.s32.totalorder %s37, %s38
    %p49 = scmp.eq.s32.totalorder %s17, 0
    %p50 = por %p48, %p49
    %p51 = scmp.ne.s32.totalorder %s37, %s38
    %p52 = scmp.eq.s32.totalorder %s18, 3
    %p53 = por %p51, %p52
    %p55 = scmp.ne.s32.totalorder %s38, %s54
    %p56 = scmp.eq.s32.totalorder %s18, 0
    %p57 = por %p55, %p56
    %s59 = sadd.s32 %s58, 1
    %p62 = scmp.eq.s32.totalorder %s12, 3
    %p63 = scmp.ne.s32.totalorder %s58, %s60
    %p64 = scmp.eq.s32.totalorder %s12, 0
    %p65 = por %p63, %p64
    %p66 = scmp.ne.s32.totalorder %s58, %s60
    %p67 = scmp.eq.s32.totalorder %s17, 3
    %p68 = por %p66, %p67
    %p69 = scmp.ne.s32.totalorder %s60, %s61
    %p70 = scmp.eq.s32.totalorder %s17, 0
    %p71 = por %p69, %p70
    %p72 = scmp.ne.s32.totalorder %s60, %s61
    %p73 = scmp.eq.s32.totalorder %s18, 3
    %p74 = por %p72, %p73
    %p76 = scmp.ne.s32.totalorder %s61, %s75
    %p77 = scmp.eq.s32.totalorder %s18, 0
    %p78 = por %p76, %p77
    %s80 = sadd.s32 %s79, 1
    %p83 = scmp.eq.s32.totalorder %s12, 3
    %p84 = scmp.ne.s32.totalorder %s79, %s81
    %p85 = scmp.eq.s32.totalorder %s12, 0
    %p86 = por %p84, %p85
    %p87 = scmp.ne.s32.totalorder %s79, %s81
    %p88 = scmp.eq.s32.totalorder %s17, 3
    %p89 = por %p87, %p88
    %p90 = scmp.ne.s32.totalorder %s81, %s82
    %p91 = scmp.eq.s32.totalorder %s17, 0
    %p92 = por %p90, %p91
    %p93 = scmp.ne.s32.totalorder %s81, %s82
    %p94 = scmp.eq.s32.totalorder %s18, 3
    %p95 = por %p93, %p94
    %p97 = scmp.ne.s32.totalorder %s82, %s96
    %p98 = scmp.eq.s32.totalorder %s18, 0
    %p99 = por %p97, %p98
    %s101 = sadd.s32 %s100, 1
    %p104 = scmp.eq.s32.totalorder %s12, 3
    %p105 = scmp.ne.s32.totalorder %s100, %s102
    %p106 = scmp.eq.s32.totalorder %s12, 0
    %p107 = por %p105, %p106
    %p108 = scmp.ne.s32.totalorder %s100, %s102
    %p109 = scmp.eq.s32.totalorder %s17, 3
    %p110 = por %p108, %p109
    %p111 = scmp.ne.s32.totalorder %s102, %s103
    %p112 = scmp.eq.s32.totalorder %s17, 0
    %p113 = por %p111, %p112
    %p114 = scmp.ne.s32.totalorder %s102, %s103
    %p115 = scmp.eq.s32.totalorder %s18, 3
    %p116 = por %p114, %p115
    %p118 = scmp.ne.s32.totalorder %s103, %s117
    %p119 = scmp.eq.s32.totalorder %s18, 0
    %p120 = por %p118, %p119
    %s121 = ssub.s32 %s19, %s31
    %s122 = ssub.s32 %s20, %s27
    %s123 = sor.u32 %s121, %s122
    %p124 = scmp.eq.s32.totalorder %s123, 0
    %s126 = sadd.s32 %s125, 1
    %s127 = scalar_select %p124, %s125, %s126
    %p130 = pneg %p124
    %p131 = scmp.eq.s32.totalorder %s12, 3
    %p132 = por %p130, %p131
    %p133 = scmp.ne.s32.totalorder %s125, %s128
    %p134 = scmp.eq.s32.totalorder %s12, 0
    %p135 = por %p133, %p134
    %p136 = scmp.ne.s32.totalorder %s125, %s128
    %p137 = scmp.eq.s32.totalorder %s17, 3
    %p138 = por %p136, %p137
    %p139 = scmp.ne.s32.totalorder %s128, %s129
    %p140 = scmp.eq.s32.totalorder %s17, 0
    %p141 = por %p139, %p140
    %p142 = scmp.ne.s32.totalorder %s128, %s129
    %p143 = scmp.eq.s32.totalorder %s18, 3
    %p144 = por %p142, %p143
    %p146 = scmp.ne.s32.totalorder %s129, %s145
    %p147 = scmp.eq.s32.totalorder %s18, 0
    %p148 = por %p146, %p147
    %s149 = ssub.s32 %s19, %s31
    %s150 = ssub.s32 %s20, %s27
    %s151 = sor.u32 %s149, %s150
    %p152 = scmp.eq.s32.totalorder %s151, 0
    %s154 = sadd.s32 %s153, 1
    %s155 = scalar_select %p152, %s153, %s154
    %p158 = pneg %p152
    %p159 = scmp.eq.s32.totalorder %s12, 3
    %p160 = por %p158, %p159
    %p161 = scmp.ne.s32.totalorder %s153, %s156
    %p162 = scmp.eq.s32.totalorder %s12, 0
    %p163 = por %p161, %p162
    %p164 = scmp.ne.s32.totalorder %s153, %s156
    %p165 = scmp.eq.s32.totalorder %s17, 3
    %p166 = por %p164, %p165
    %p167 = scmp.ne.s32.totalorder %s156, %s157
    %p168 = scmp.eq.s32.totalorder %s17, 0
    %p169 = por %p167, %p168
    %p170 = scmp.ne.s32.totalorder %s156, %s157
    %p171 = scmp.eq.s32.totalorder %s18, 3
    %p172 = por %p170, %p171
    %p174 = scmp.ne.s32.totalorder %s157, %s173
    %p175 = scmp.eq.s32.totalorder %s18, 0
    %p176 = por %p174, %p175
    %p177 = scmp.le.s32.totalorder 1, %s12
    %p178 = scmp.lt.s32.totalorder %s12, 5
    %p179 = pnand %p177, %p178
    %p180 = pneg %p179
    // Predicated region
    $region9: #{layer_forward.3} parent=5 // pred_check
      _
    $region10: #{layer_forward.3} parent=5 // pred_check_branch
      %182 = sbr.rel (%p179) target = $region12
    $region11: #{layer_forward.3} parent=5 // pred_region
      %s183 = ssub.s32 %s12, 1
      // Predicated region
      $region13: #{layer_forward.3} parent=11 // pred_check
        %p184 = pneg %p71
      $region14: #{layer_forward.3} parent=11 // pred_check_branch
        %186 = sbr.rel (%p184) target = $region16
      $region15: #{layer_forward.3} parent=11 // pred_region
        _
      $region16: #{layer_forward.3} parent=11 // pred_fallthru
        _
      // Predicated region
      $region17: #{layer_forward.3} parent=11 // pred_check
        %p187 = pneg %p92
      $region18: #{layer_forward.3} parent=11 // pred_check_branch
        %189 = sbr.rel (%p187) target = $region20
      $region19: #{layer_forward.3} parent=11 // pred_region
        _
      $region20: #{layer_forward.3} parent=11 // pred_fallthru
        _
      // Predicated region
      $region21: #{layer_forward.3} parent=11 // pred_check
        %p190 = pneg %p113
      $region22: #{layer_forward.3} parent=11 // pred_check_branch
        %192 = sbr.rel (%p190) target = $region24
      $region23: #{layer_forward.3} parent=11 // pred_region
        _
      $region24: #{layer_forward.3} parent=11 // pred_fallthru
        _
    $region12: #{layer_forward.3} parent=5 // pred_fallthru
      _
    %p193 = scmp.lt.s32.totalorder %s12, 4
    // Predicated region
    $region25: #{layer_forward.3} parent=5 // pred_check
      %p194 = pneg %p193
    $region26: #{layer_forward.3} parent=5 // pred_check_branch
      %196 = sbr.rel (%p194) target = $region28
    $region27: #{layer_forward.3} parent=5 // pred_region
      // Predicated region
      $region29: #{layer_forward.3} parent=27 // pred_check
        %p197 = pneg %p44
      $region30: #{layer_forward.3} parent=27 // pred_check_branch
        %199 = sbr.rel (%p197) target = $region32
      $region31: #{layer_forward.3} parent=27 // pred_region
        %p200 = scmp.lt.s32.totalorder %s19, 1
        %s201 = scalar_select %p200, %s19, 1
        %s202 = smul.addr %s201, 32
        %s203 = smul.addr %s202, 8
        %s204 = scalar_lea.vmem %s0, %s203
      $region32: #{layer_forward.3} parent=27 // pred_fallthru
        _
    $region28: #{layer_forward.3} parent=5 // pred_fallthru
      _
    %p205 = scmp.le.s32.totalorder 1, %s12
    %p206 = scmp.lt.s32.totalorder %s12, 5
    %p207 = pnand %p205, %p206
    %p208 = pneg %p207
    // Predicated region
    $region33: #{layer_forward.3} parent=5 // pred_check
      _
    $region34: #{layer_forward.3} parent=5 // pred_check_branch
      %210 = sbr.rel (%p207) target = $region36
    $region35: #{layer_forward.3} parent=5 // pred_region
      %s211 = ssub.s32 %s12, 1
      %p212 = scmp.lt.s32.totalorder %s21, 1
      %s213 = scalar_select %p212, %s21, 1
      %s214 = smul.addr %s213, 32
      %s215 = smul.addr %s214, 8
      %s216 = scalar_lea.vmem %s0, %s215
      %p217 = pneg %p50
      %p218 = pneg %p47
      %p219 = pneg %p71
      %p220 = pneg %p68
      %p221 = pneg %p92
      %p222 = pneg %p89
      %p223 = pneg %p113
      %p224 = pneg %p110
      %p225 = pneg %p141
      %p226 = pneg %p138
      %s227 = smul.u32 8, %s22
      %p228 = scmp.lt.s32.totalorder %s21, 1
      %s229 = scalar_select %p228, %s21, 1
      %p230 = scmp.lt.s32.totalorder %s227, 15
      %s231 = scalar_select %p230, %s227, 15
      %s232 = smul.addr %s231, 2
      %s233 = smul.addr %s229, 32
      %s234 = sadd.s32 %s232, %s233
      %s235 = smul.addr %s234, 4
      %s236 = scalar_lea.vmem %s4, %s235
      %p237 = pneg %p169
      %p238 = pneg %p166
      %p239 = scmp.lt.s32.totalorder %s21, 1
      %s240 = scalar_select %p239, %s21, 1
      %p241 = scmp.lt.s32.totalorder %s22, 1
      %s242 = scalar_select %p241, %s22, 1
      %s243 = smul.addr %s240, 2
      %s244 = sadd.s32 %s242, %s243
      %s245 = smul.addr %s244, 2
      %s246 = scalar_lea.vmem %s5, %s245
      %p247 = scmp.lt.s32.totalorder %s21, 1
      %s248 = scalar_select %p247, %s21, 1
      %s249 = smul.addr %s248, 32
      %s250 = smul.addr %s249, 8
      %s251 = scalar_lea.vmem %s0, %s250
      %s252 = smul.u32 8, %s22
      %p253 = scmp.lt.s32.totalorder %s21, 1
      %s254 = scalar_select %p253, %s21, 1
      %p255 = scmp.lt.s32.totalorder %s252, 15
      %s256 = scalar_select %p255, %s252, 15
      %s257 = smul.addr %s256, 2
      %s258 = smul.addr %s254, 32
      %s259 = sadd.s32 %s257, %s258
      %s260 = smul.addr %s259, 4
      %s261 = scalar_lea.vmem %s4, %s260
      %s262 = smul.u32 8, %s22
      %p263 = scmp.lt.s32.totalorder %s21, 1
      %s264 = scalar_select %p263, %s21, 1
      %p265 = scmp.lt.s32.totalorder %s22, 1
      %s266 = scalar_select %p265, %s22, 1
      %s267 = smul.addr %s264, 2
      %s268 = sadd.s32 %s266, %s267
      %s269 = smul.addr %s268, 2
      %s270 = scalar_lea.vmem %s5, %s269
      %p272 = scmp.eq.s32.totalorder %s22, 0
      // Predicated region
      $region37: #{layer_forward.3} parent=35 // pred_check
        %p273 = pneg %p272
      $region38: #{layer_forward.3} parent=35 // pred_check_branch
        %275 = sbr.rel (%p273) target = $region40
      $region39: #{layer_forward.3} parent=35 // pred_region
        %vm276 = vcmask 27648
        %277 = vst.msk [vmem:[#allocation2] sm:$0xf] %vm276, 0
        %278 = vst.msk [vmem:[#allocation2 + $0x4] sm:$0xf] %vm276, 0
        %vm279 = vcmask 24576
        %280 = vst.msk [vmem:[#allocation2 + $0x8] sm:$0x1] %vm279, 0
        %281 = vst.msk [vmem:[#allocation2 + $0xc] sm:$0xf] %vm276, 0
        %282 = vst.msk [vmem:[#allocation2 + $0x10] sm:$0xf] %vm276, 0
        %283 = vst.msk [vmem:[#allocation2 + $0x14] sm:$0x1] %vm279, 0
        %284 = vst.msk [vmem:[#allocation2 + $0x18] sm:$0xf] %vm276, 0
        %285 = vst.msk [vmem:[#allocation2 + $0x1c] sm:$0xf] %vm276, 0
        %286 = vst.msk [vmem:[#allocation2 + $0x20] sm:$0x1] %vm279, 0
        %287 = vst.msk [vmem:[#allocation2 + $0x24] sm:$0xf] %vm276, 0
        %288 = vst.msk [vmem:[#allocation2 + $0x28] sm:$0xf] %vm276, 0
        %289 = vst.msk [vmem:[#allocation2 + $0x2c] sm:$0x1] %vm279, 0
        %290 = vst.msk [vmem:[#allocation2 + $0x30] sm:$0xf] %vm276, 0
        %291 = vst.msk [vmem:[#allocation2 + $0x34] sm:$0xf] %vm276, 0
        %292 = vst.msk [vmem:[#allocation2 + $0x38] sm:$0x1] %vm279, 0
        %293 = vst.msk [vmem:[#allocation2 + $0x3c] sm:$0xf] %vm276, 0
        %294 = vst.msk [vmem:[#allocation2 + $0x40] sm:$0xf] %vm276, 0
        %295 = vst.msk [vmem:[#allocation2 + $0x44] sm:$0x1] %vm279, 0
        %296 = vst.msk [vmem:[#allocation2 + $0x48] sm:$0xf] %vm276, 0
        %297 = vst.msk [vmem:[#allocation2 + $0x4c] sm:$0xf] %vm276, 0
        %298 = vst.msk [vmem:[#allocation2 + $0x50] sm:$0x1] %vm279, 0
        %299 = vst.msk [vmem:[#allocation2 + $0x54] sm:$0xf] %vm276, 0
        %300 = vst.msk [vmem:[#allocation2 + $0x58] sm:$0xf] %vm276, 0
        %301 = vst.msk [vmem:[#allocation2 + $0x5c] sm:$0x1] %vm279, 0
        %302 = vst.msk [vmem:[#allocation2 + $0x60] sm:$0xf] %vm276, 0
        %303 = vst.msk [vmem:[#allocation2 + $0x64] sm:$0xf] %vm276, 0
        %304 = vst.msk [vmem:[#allocation2 + $0x68] sm:$0x1] %vm279, 0
        %305 = vst.msk [vmem:[#allocation2 + $0x6c] sm:$0xf] %vm276, 0
        %306 = vst.msk [vmem:[#allocation2 + $0x70] sm:$0xf] %vm276, 0
        %307 = vst.msk [vmem:[#allocation2 + $0x74] sm:$0x1] %vm279, 0
        %308 = vst.msk [vmem:[#allocation2 + $0x78] sm:$0xf] %vm276, 0
        %309 = vst.msk [vmem:[#allocation2 + $0x7c] sm:$0xf] %vm276, 0
        %310 = vst.msk [vmem:[#allocation2 + $0x80] sm:$0x1] %vm279, 0
        %311 = vst.msk [vmem:[#allocation2 + $0x84] sm:$0xf] %vm276, 0
        %312 = vst.msk [vmem:[#allocation2 + $0x88] sm:$0xf] %vm276, 0
        %313 = vst.msk [vmem:[#allocation2 + $0x8c] sm:$0x1] %vm279, 0
        %314 = vst.msk [vmem:[#allocation2 + $0x90] sm:$0xf] %vm276, 0
        %315 = vst.msk [vmem:[#allocation2 + $0x94] sm:$0xf] %vm276, 0
        %316 = vst.msk [vmem:[#allocation2 + $0x98] sm:$0x1] %vm279, 0
        %317 = vst.msk [vmem:[#allocation2 + $0x9c] sm:$0xf] %vm276, 0
        %318 = vst.msk [vmem:[#allocation2 + $0xa0] sm:$0xf] %vm276, 0
        %319 = vst.msk [vmem:[#allocation2 + $0xa4] sm:$0x1] %vm279, 0
        %320 = vst.msk [vmem:[#allocation2 + $0xa8] sm:$0xf] %vm276, 0
        %321 = vst.msk [vmem:[#allocation2 + $0xac] sm:$0xf] %vm276, 0
        %322 = vst.msk [vmem:[#allocation2 + $0xb0] sm:$0x1] %vm279, 0
        %323 = vst.msk [vmem:[#allocation2 + $0xb4] sm:$0xf] %vm276, 0
        %324 = vst.msk [vmem:[#allocation2 + $0xb8] sm:$0xf] %vm276, 0
        %325 = vst.msk [vmem:[#allocation2 + $0xbc] sm:$0x1] %vm279, 0
        %326 = vst.msk [vmem:[#allocation2 + $0xc0] sm:$0xf] %vm276, 0
        %327 = vst.msk [vmem:[#allocation2 + $0xc4] sm:$0xf] %vm276, 0
        %328 = vst.msk [vmem:[#allocation2 + $0xc8] sm:$0x1] %vm279, 0
        %329 = vst.msk [vmem:[#allocation2 + $0xcc] sm:$0xf] %vm276, 0
        %330 = vst.msk [vmem:[#allocation2 + $0xd0] sm:$0xf] %vm276, 0
        %331 = vst.msk [vmem:[#allocation2 + $0xd4] sm:$0x1] %vm279, 0
        %v332 = vld [vmem:[%s251] sm:$0xff]
        %v333 = vld [vmem:[%s251 + $0x8] sm:$0xff]
        %v334 = vld [vmem:[%s251 + $0x10] sm:$0xff]
        %v335 = vld [vmem:[%s251 + $0x18] sm:$0xff]
        %v336 = vld [vmem:[%s251 + $0x20] sm:$0xff]
        %v337 = vld [vmem:[%s251 + $0x28] sm:$0xff]
        %v338 = vld [vmem:[%s251 + $0x30] sm:$0xff]
        %v339 = vld [vmem:[%s251 + $0x38] sm:$0xff]
        %v340 = vld [vmem:[%s251 + $0x40] sm:$0xff]
        %v341 = vld [vmem:[%s251 + $0x48] sm:$0xff]
        %v342 = vld [vmem:[%s251 + $0x50] sm:$0xff]
        %v343 = vld [vmem:[%s251 + $0x58] sm:$0xff]
        %v344 = vld [vmem:[%s251 + $0x60] sm:$0xff]
        %v345 = vld [vmem:[%s251 + $0x68] sm:$0xff]
        %v346 = vld [vmem:[%s251 + $0x70] sm:$0xff]
        %v347 = vld [vmem:[%s251 + $0x78] sm:$0xff]
        %v348 = vld [vmem:[%s251 + $0x80] sm:$0xff]
        %v349 = vld [vmem:[%s251 + $0x88] sm:$0xff]
        %v350 = vld [vmem:[%s251 + $0x90] sm:$0xff]
        %v351 = vld [vmem:[%s251 + $0x98] sm:$0xff]
        %v352 = vld [vmem:[%s251 + $0xa0] sm:$0xff]
        %v353 = vld [vmem:[%s251 + $0xa8] sm:$0xff]
        %v354 = vld [vmem:[%s251 + $0xb0] sm:$0xff]
        %v355 = vld [vmem:[%s251 + $0xb8] sm:$0xff]
        %v356 = vld [vmem:[%s251 + $0xc0] sm:$0xff]
        %v357 = vld [vmem:[%s251 + $0xc8] sm:$0xff]
        %v358 = vld [vmem:[%s251 + $0xd0] sm:$0xff]
        %v359 = vld [vmem:[%s251 + $0xd8] sm:$0xff]
        %v360 = vld [vmem:[%s251 + $0xe0] sm:$0xff]
        %v361 = vld [vmem:[%s251 + $0xe8] sm:$0xff]
        %v362 = vld [vmem:[%s251 + $0xf0] sm:$0xff]
        %v363 = vld [vmem:[%s251 + $0xf8] sm:$0xff]
        %v364 = vpack.c.bf16 %v333, %v332
        %v365 = vpack.c.bf16 %v335, %v334
        %v366 = vpack.c.bf16 %v337, %v336
        %v367 = vpack.c.bf16 %v339, %v338
        %v368 = vpack.c.bf16 %v341, %v340
        %v369 = vpack.c.bf16 %v343, %v342
        %v370 = vpack.c.bf16 %v345, %v344
        %v371 = vpack.c.bf16 %v347, %v346
        %v372 = vpack.c.bf16 %v349, %v348
        %v373 = vpack.c.bf16 %v351, %v350
        %v374 = vpack.c.bf16 %v353, %v352
        %v375 = vpack.c.bf16 %v355, %v354
        %v376 = vpack.c.bf16 %v357, %v356
        %v377 = vpack.c.bf16 %v359, %v358
        %v378 = vpack.c.bf16 %v361, %v360
        %v379 = vpack.c.bf16 %v363, %v362
        %v396 = vunpack.c.l.b16 %v364
        %v397 = vunpack.c.h.b16 %v364
        %v398 = vunpack.c.l.b16 %v365
        %v399 = vunpack.c.h.b16 %v365
        %v400 = vunpack.c.l.b16 %v366
        %v401 = vunpack.c.h.b16 %v366
        %v402 = vunpack.c.l.b16 %v367
        %v403 = vunpack.c.h.b16 %v367
        %v404 = vunpack.c.l.b16 %v368
        %v405 = vunpack.c.h.b16 %v368
        %v406 = vunpack.c.l.b16 %v369
        %v407 = vunpack.c.h.b16 %v369
        %v408 = vunpack.c.l.b16 %v370
        %v409 = vunpack.c.h.b16 %v370
        %v410 = vunpack.c.l.b16 %v371
        %v411 = vunpack.c.h.b16 %v371
        %v412 = vunpack.c.l.b16 %v372
        %v413 = vunpack.c.h.b16 %v372
        %v414 = vunpack.c.l.b16 %v373
        %v415 = vunpack.c.h.b16 %v373
        %v416 = vunpack.c.l.b16 %v374
        %v417 = vunpack.c.h.b16 %v374
        %v418 = vunpack.c.l.b16 %v375
        %v419 = vunpack.c.h.b16 %v375
        %v420 = vunpack.c.l.b16 %v376
        %v421 = vunpack.c.h.b16 %v376
        %v422 = vunpack.c.l.b16 %v377
        %v423 = vunpack.c.h.b16 %v377
        %v424 = vunpack.c.l.b16 %v378
        %v425 = vunpack.c.h.b16 %v378
        %v426 = vunpack.c.l.b16 %v379
        %v427 = vunpack.c.h.b16 %v379
        %v428 = vpack.c.b16 %v396, %v396
        %v429 = vpack.c.b16 %v397, %v397
        %v430 = vpack.c.b16 %v398, %v398
        %v431 = vpack.c.b16 %v399, %v399
        %v432 = vpack.c.b16 %v400, %v400
        %v433 = vpack.c.b16 %v401, %v401
        %v434 = vpack.c.b16 %v402, %v402
        %v435 = vpack.c.b16 %v403, %v403
        %v436 = vpack.c.b16 %v404, %v404
        %v437 = vpack.c.b16 %v405, %v405
        %v438 = vpack.c.b16 %v406, %v406
        %v439 = vpack.c.b16 %v407, %v407
        %v440 = vpack.c.b16 %v408, %v408
        %v441 = vpack.c.b16 %v409, %v409
        %v442 = vpack.c.b16 %v410, %v410
        %v443 = vpack.c.b16 %v411, %v411
        %v444 = vpack.c.b16 %v412, %v412
        %v445 = vpack.c.b16 %v413, %v413
        %v446 = vpack.c.b16 %v414, %v414
        %v447 = vpack.c.b16 %v415, %v415
        %v448 = vpack.c.b16 %v416, %v416
        %v449 = vpack.c.b16 %v417, %v417
        %v450 = vpack.c.b16 %v418, %v418
        %v451 = vpack.c.b16 %v419, %v419
        %v452 = vpack.c.b16 %v420, %v420
        %v453 = vpack.c.b16 %v421, %v421
        %v454 = vpack.c.b16 %v422, %v422
        %v455 = vpack.c.b16 %v423, %v423
        %v456 = vpack.c.b16 %v424, %v424
        %v457 = vpack.c.b16 %v425, %v425
        %v458 = vpack.c.b16 %v426, %v426
        %v459 = vpack.c.b16 %v427, %v427
        %vm460 = vsmask.f32 256
        %vm461 = vsmask.f32 4368
        %vm462 = vmor %vm460, %vm461
        %v464 = vshrl.u32 %v428, 16
        %v466 = vrot.slane %v464, 7
        %v467 = vshll.u32 %v428, 16
        %v469 = vor.u32 %v466, %v467
        %v470 = vrot.slane %v466, 4
        %v472 = vshrl.u32 %v429, 16
        %v474 = vrot.slane %v472, 7
        %v475 = vshll.u32 %v429, 16
        %v477 = vor.u32 %v474, %v475
        %v478 = vsel %vm462, %v470, %v477
        %v479 = vrot.slane %v474, 4
        %v481 = vshrl.u32 %v430, 16
        %v483 = vrot.slane %v481, 7
        %v484 = vshll.u32 %v430, 16
        %v486 = vor.u32 %v483, %v484
        %v487 = vrot.slane %v483, 4
        %v489 = vshrl.u32 %v431, 16
        %v491 = vrot.slane %v489, 7
        %v492 = vshll.u32 %v431, 16
        %v494 = vor.u32 %v491, %v492
        %v495 = vsel %vm462, %v487, %v494
        %v496 = vrot.slane %v491, 4
        %v498 = vshrl.u32 %v432, 16
        %v500 = vrot.slane %v498, 7
        %v501 = vshll.u32 %v432, 16
        %v503 = vor.u32 %v500, %v501
        %v504 = vrot.slane %v500, 4
        %v506 = vshrl.u32 %v433, 16
        %v508 = vrot.slane %v506, 7
        %v509 = vshll.u32 %v433, 16
        %v511 = vor.u32 %v508, %v509
        %v512 = vsel %vm462, %v504, %v511
        %v513 = vrot.slane %v508, 4
        %v515 = vshrl.u32 %v434, 16
        %v517 = vrot.slane %v515, 7
        %v518 = vshll.u32 %v434, 16
        %v520 = vor.u32 %v517, %v518
        %v521 = vrot.slane %v517, 4
        %v523 = vshrl.u32 %v435, 16
        %v525 = vrot.slane %v523, 7
        %v526 = vshll.u32 %v435, 16
        %v528 = vor.u32 %v525, %v526
        %v529 = vsel %vm462, %v521, %v528
        %v530 = vrot.slane %v525, 4
        %v532 = vshrl.u32 %v436, 16
        %v534 = vrot.slane %v532, 7
        %v535 = vshll.u32 %v436, 16
        %v537 = vor.u32 %v534, %v535
        %v538 = vrot.slane %v534, 4
        %v540 = vshrl.u32 %v437, 16
        %v542 = vrot.slane %v540, 7
        %v543 = vshll.u32 %v437, 16
        %v545 = vor.u32 %v542, %v543
        %v546 = vsel %vm462, %v538, %v545
        %v547 = vrot.slane %v542, 4
        %v549 = vshrl.u32 %v438, 16
        %v551 = vrot.slane %v549, 7
        %v552 = vshll.u32 %v438, 16
        %v554 = vor.u32 %v551, %v552
        %v555 = vrot.slane %v551, 4
        %v557 = vshrl.u32 %v439, 16
        %v559 = vrot.slane %v557, 7
        %v560 = vshll.u32 %v439, 16
        %v562 = vor.u32 %v559, %v560
        %v563 = vsel %vm462, %v555, %v562
        %v564 = vrot.slane %v559, 4
        %v566 = vshrl.u32 %v440, 16
        %v568 = vrot.slane %v566, 7
        %v569 = vshll.u32 %v440, 16
        %v571 = vor.u32 %v568, %v569
        %v572 = vrot.slane %v568, 4
        %v574 = vshrl.u32 %v441, 16
        %v576 = vrot.slane %v574, 7
        %v577 = vshll.u32 %v441, 16
        %v579 = vor.u32 %v576, %v577
        %v580 = vsel %vm462, %v572, %v579
        %v581 = vrot.slane %v576, 4
        %v583 = vshrl.u32 %v442, 16
        %v585 = vrot.slane %v583, 7
        %v586 = vshll.u32 %v442, 16
        %v588 = vor.u32 %v585, %v586
        %v589 = vrot.slane %v585, 4
        %v591 = vshrl.u32 %v443, 16
        %v593 = vrot.slane %v591, 7
        %v594 = vshll.u32 %v443, 16
        %v596 = vor.u32 %v593, %v594
        %v597 = vsel %vm462, %v589, %v596
        %v598 = vrot.slane %v593, 4
        %v600 = vshrl.u32 %v444, 16
        %v602 = vrot.slane %v600, 7
        %v603 = vshll.u32 %v444, 16
        %v605 = vor.u32 %v602, %v603
        %v606 = vrot.slane %v602, 4
        %v608 = vshrl.u32 %v445, 16
        %v610 = vrot.slane %v608, 7
        %v611 = vshll.u32 %v445, 16
        %v613 = vor.u32 %v610, %v611
        %v614 = vsel %vm462, %v606, %v613
        %v615 = vrot.slane %v610, 4
        %v617 = vshrl.u32 %v446, 16
        %v619 = vrot.slane %v617, 7
        %v620 = vshll.u32 %v446, 16
        %v622 = vor.u32 %v619, %v620
        %v623 = vrot.slane %v619, 4
        %v625 = vshrl.u32 %v447, 16
        %v627 = vrot.slane %v625, 7
        %v628 = vshll.u32 %v447, 16
        %v630 = vor.u32 %v627, %v628
        %v631 = vsel %vm462, %v623, %v630
        %v632 = vrot.slane %v627, 4
        %v634 = vshrl.u32 %v448, 16
        %v636 = vrot.slane %v634, 7
        %v637 = vshll.u32 %v448, 16
        %v639 = vor.u32 %v636, %v637
        %v640 = vrot.slane %v636, 4
        %v642 = vshrl.u32 %v449, 16
        %v644 = vrot.slane %v642, 7
        %v645 = vshll.u32 %v449, 16
        %v647 = vor.u32 %v644, %v645
        %v648 = vsel %vm462, %v640, %v647
        %v649 = vrot.slane %v644, 4
        %v651 = vshrl.u32 %v450, 16
        %v653 = vrot.slane %v651, 7
        %v654 = vshll.u32 %v450, 16
        %v656 = vor.u32 %v653, %v654
        %v657 = vrot.slane %v653, 4
        %v659 = vshrl.u32 %v451, 16
        %v661 = vrot.slane %v659, 7
        %v662 = vshll.u32 %v451, 16
        %v664 = vor.u32 %v661, %v662
        %v665 = vsel %vm462, %v657, %v664
        %v666 = vrot.slane %v661, 4
        %v668 = vshrl.u32 %v452, 16
        %v670 = vrot.slane %v668, 7
        %v671 = vshll.u32 %v452, 16
        %v673 = vor.u32 %v670, %v671
        %v674 = vrot.slane %v670, 4
        %v676 = vshrl.u32 %v453, 16
        %v678 = vrot.slane %v676, 7
        %v679 = vshll.u32 %v453, 16
        %v681 = vor.u32 %v678, %v679
        %v682 = vsel %vm462, %v674, %v681
        %v683 = vrot.slane %v678, 4
        %v685 = vshrl.u32 %v454, 16
        %v687 = vrot.slane %v685, 7
        %v688 = vshll.u32 %v454, 16
        %v690 = vor.u32 %v687, %v688
        %v691 = vrot.slane %v687, 4
        %v693 = vshrl.u32 %v455, 16
        %v695 = vrot.slane %v693, 7
        %v696 = vshll.u32 %v455, 16
        %v698 = vor.u32 %v695, %v696
        %v699 = vsel %vm462, %v691, %v698
        %v700 = vrot.slane %v695, 4
        %v702 = vshrl.u32 %v456, 16
        %v704 = vrot.slane %v702, 7
        %v705 = vshll.u32 %v456, 16
        %v707 = vor.u32 %v704, %v705
        %v708 = vrot.slane %v704, 4
        %v710 = vshrl.u32 %v457, 16
        %v712 = vrot.slane %v710, 7
        %v713 = vshll.u32 %v457, 16
        %v715 = vor.u32 %v712, %v713
        %v716 = vsel %vm462, %v708, %v715
        %v717 = vrot.slane %v712, 4
        %v719 = vshrl.u32 %v458, 16
        %v721 = vrot.slane %v719, 7
        %v722 = vshll.u32 %v458, 16
        %v724 = vor.u32 %v721, %v722
        %v725 = vrot.slane %v721, 4
        %v727 = vshrl.u32 %v459, 16
        %v729 = vrot.slane %v727, 7
        %v730 = vshll.u32 %v459, 16
        %v732 = vor.u32 %v729, %v730
        %v733 = vsel %vm462, %v725, %v732
        %v734 = vrot.slane %v729, 4
        %s783 = scalar_lea.vmem [#allocation2], 12
        %vm784 = vcmask 27648
        %vm785 = vsmask.f32 7938
        %vm786 = vmand %vm784, %vm785
        %v787 = vld [vmem:[%s783] sm:$0xf]
        %v788 = vsel %vm786, %v469, %v787
        %789 = vst [vmem:[%s783] sm:$0xf] %v788
        %790 = vst.msk [vmem:[%s783 + $0x4] sm:$0xf] %vm276, %v478
        %vm791 = vcmask 24576
        %vm792 = vmand %vm791, %vm460
        %v793 = vld [vmem:[%s783 + $0x8] sm:$0x1]
        %v794 = vsel %vm792, %v479, %v793
        %795 = vst [vmem:[%s783 + $0x8] sm:$0x1] %v794
        %v796 = vld [vmem:[%s783 + $0xc] sm:$0xf]
        %v797 = vsel %vm786, %v486, %v796
        %798 = vst [vmem:[%s783 + $0xc] sm:$0xf] %v797
        %799 = vst.msk [vmem:[%s783 + $0x10] sm:$0xf] %vm276, %v495
        %v800 = vld [vmem:[%s783 + $0x14] sm:$0x1]
        %v801 = vsel %vm792, %v496, %v800
        %802 = vst [vmem:[%s783 + $0x14] sm:$0x1] %v801
        %v803 = vld [vmem:[%s783 + $0x18] sm:$0xf]
        %v804 = vsel %vm786, %v503, %v803
        %805 = vst [vmem:[%s783 + $0x18] sm:$0xf] %v804
        %806 = vst.msk [vmem:[%s783 + $0x1c] sm:$0xf] %vm276, %v512
        %v807 = vld [vmem:[%s783 + $0x20] sm:$0x1]
        %v808 = vsel %vm792, %v513, %v807
        %809 = vst [vmem:[%s783 + $0x20] sm:$0x1] %v808
        %v810 = vld [vmem:[%s783 + $0x24] sm:$0xf]
        %v811 = vsel %vm786, %v520, %v810
        %812 = vst [vmem:[%s783 + $0x24] sm:$0xf] %v811
        %813 = vst.msk [vmem:[%s783 + $0x28] sm:$0xf] %vm276, %v529
        %v814 = vld [vmem:[%s783 + $0x2c] sm:$0x1]
        %v815 = vsel %vm792, %v530, %v814
        %816 = vst [vmem:[%s783 + $0x2c] sm:$0x1] %v815
        %v817 = vld [vmem:[%s783 + $0x30] sm:$0xf]
        %v818 = vsel %vm786, %v537, %v817
        %819 = vst [vmem:[%s783 + $0x30] sm:$0xf] %v818
        %820 = vst.msk [vmem:[%s783 + $0x34] sm:$0xf] %vm276, %v546
        %v821 = vld [vmem:[%s783 + $0x38] sm:$0x1]
        %v822 = vsel %vm792, %v547, %v821
        %823 = vst [vmem:[%s783 + $0x38] sm:$0x1] %v822
        %v824 = vld [vmem:[%s783 + $0x3c] sm:$0xf]
        %v825 = vsel %vm786, %v554, %v824
        %826 = vst [vmem:[%s783 + $0x3c] sm:$0xf] %v825
        %827 = vst.msk [vmem:[%s783 + $0x40] sm:$0xf] %vm276, %v563
        %v828 = vld [vmem:[%s783 + $0x44] sm:$0x1]
        %v829 = vsel %vm792, %v564, %v828
        %830 = vst [vmem:[%s783 + $0x44] sm:$0x1] %v829
        %v831 = vld [vmem:[%s783 + $0x48] sm:$0xf]
        %v832 = vsel %vm786, %v571, %v831
        %833 = vst [vmem:[%s783 + $0x48] sm:$0xf] %v832
        %834 = vst.msk [vmem:[%s783 + $0x4c] sm:$0xf] %vm276, %v580
        %v835 = vld [vmem:[%s783 + $0x50] sm:$0x1]
        %v836 = vsel %vm792, %v581, %v835
        %837 = vst [vmem:[%s783 + $0x50] sm:$0x1] %v836
        %v838 = vld [vmem:[%s783 + $0x54] sm:$0xf]
        %v839 = vsel %vm786, %v588, %v838
        %840 = vst [vmem:[%s783 + $0x54] sm:$0xf] %v839
        %841 = vst.msk [vmem:[%s783 + $0x58] sm:$0xf] %vm276, %v597
        %v842 = vld [vmem:[%s783 + $0x5c] sm:$0x1]
        %v843 = vsel %vm792, %v598, %v842
        %844 = vst [vmem:[%s783 + $0x5c] sm:$0x1] %v843
        %v845 = vld [vmem:[%s783 + $0x60] sm:$0xf]
        %v846 = vsel %vm786, %v605, %v845
        %847 = vst [vmem:[%s783 + $0x60] sm:$0xf] %v846
        %848 = vst.msk [vmem:[%s783 + $0x64] sm:$0xf] %vm276, %v614
        %v849 = vld [vmem:[%s783 + $0x68] sm:$0x1]
        %v850 = vsel %vm792, %v615, %v849
        %851 = vst [vmem:[%s783 + $0x68] sm:$0x1] %v850
        %v852 = vld [vmem:[%s783 + $0x6c] sm:$0xf]
        %v853 = vsel %vm786, %v622, %v852
        %854 = vst [vmem:[%s783 + $0x6c] sm:$0xf] %v853
        %855 = vst.msk [vmem:[%s783 + $0x70] sm:$0xf] %vm276, %v631
        %v856 = vld [vmem:[%s783 + $0x74] sm:$0x1]
        %v857 = vsel %vm792, %v632, %v856
        %858 = vst [vmem:[%s783 + $0x74] sm:$0x1] %v857
        %v859 = vld [vmem:[%s783 + $0x78] sm:$0xf]
        %v860 = vsel %vm786, %v639, %v859
        %861 = vst [vmem:[%s783 + $0x78] sm:$0xf] %v860
        %862 = vst.msk [vmem:[%s783 + $0x7c] sm:$0xf] %vm276, %v648
        %v863 = vld [vmem:[%s783 + $0x80] sm:$0x1]
        %v864 = vsel %vm792, %v649, %v863
        %865 = vst [vmem:[%s783 + $0x80] sm:$0x1] %v864
        %v866 = vld [vmem:[%s783 + $0x84] sm:$0xf]
        %v867 = vsel %vm786, %v656, %v866
        %868 = vst [vmem:[%s783 + $0x84] sm:$0xf] %v867
        %869 = vst.msk [vmem:[%s783 + $0x88] sm:$0xf] %vm276, %v665
        %v870 = vld [vmem:[%s783 + $0x8c] sm:$0x1]
        %v871 = vsel %vm792, %v666, %v870
        %872 = vst [vmem:[%s783 + $0x8c] sm:$0x1] %v871
        %v873 = vld [vmem:[%s783 + $0x90] sm:$0xf]
        %v874 = vsel %vm786, %v673, %v873
        %875 = vst [vmem:[%s783 + $0x90] sm:$0xf] %v874
        %876 = vst.msk [vmem:[%s783 + $0x94] sm:$0xf] %vm276, %v682
        %v877 = vld [vmem:[%s783 + $0x98] sm:$0x1]
        %v878 = vsel %vm792, %v683, %v877
        %879 = vst [vmem:[%s783 + $0x98] sm:$0x1] %v878
        %v880 = vld [vmem:[%s783 + $0x9c] sm:$0xf]
        %v881 = vsel %vm786, %v690, %v880
        %882 = vst [vmem:[%s783 + $0x9c] sm:$0xf] %v881
        %883 = vst.msk [vmem:[%s783 + $0xa0] sm:$0xf] %vm276, %v699
        %v884 = vld [vmem:[%s783 + $0xa4] sm:$0x1]
        %v885 = vsel %vm792, %v700, %v884
        %886 = vst [vmem:[%s783 + $0xa4] sm:$0x1] %v885
        %v887 = vld [vmem:[%s783 + $0xa8] sm:$0xf]
        %v888 = vsel %vm786, %v707, %v887
        %889 = vst [vmem:[%s783 + $0xa8] sm:$0xf] %v888
        %890 = vst.msk [vmem:[%s783 + $0xac] sm:$0xf] %vm276, %v716
        %v891 = vld [vmem:[%s783 + $0xb0] sm:$0x1]
        %v892 = vsel %vm792, %v717, %v891
        %893 = vst [vmem:[%s783 + $0xb0] sm:$0x1] %v892
        %v894 = vld [vmem:[%s783 + $0xb4] sm:$0xf]
        %v895 = vsel %vm786, %v724, %v894
        %896 = vst [vmem:[%s783 + $0xb4] sm:$0xf] %v895
        %897 = vst.msk [vmem:[%s783 + $0xb8] sm:$0xf] %vm276, %v733
        %v898 = vld [vmem:[%s783 + $0xbc] sm:$0x1]
        %v899 = vsel %vm792, %v734, %v898
        %900 = vst [vmem:[%s783 + $0xbc] sm:$0x1] %v899
      $region40: #{layer_forward.3} parent=35 // pred_fallthru
        _
      %s901 = smul.u32 %s22, 8
      %s902 = smul.u32 %s901, 3
      %s903 = smul.addr %s902, 4
      %s904 = scalar_lea.vmem [#allocation2], %s903
      %v905 = vld [vmem:[%s904] sm:$0xf]
      %v906 = vld [vmem:[%s904 + $0x4] sm:$0xf]
      %v907 = vld [vmem:[%s904 + $0xc] sm:$0xf]
      %v908 = vld [vmem:[%s904 + $0x10] sm:$0xf]
      %v909 = vld [vmem:[%s904 + $0x18] sm:$0xf]
      %v910 = vld [vmem:[%s904 + $0x1c] sm:$0xf]
      %v911 = vld [vmem:[%s904 + $0x24] sm:$0xf]
      %v912 = vld [vmem:[%s904 + $0x28] sm:$0xf]
      %v913 = vld [vmem:[%s904 + $0x30] sm:$0xf]
      %v914 = vld [vmem:[%s904 + $0x34] sm:$0xf]
      %v915 = vld [vmem:[%s904 + $0x3c] sm:$0xf]
      %v916 = vld [vmem:[%s904 + $0x40] sm:$0xf]
      %v917 = vld [vmem:[%s904 + $0x48] sm:$0xf]
      %v918 = vld [vmem:[%s904 + $0x4c] sm:$0xf]
      %v919 = vld [vmem:[%s904 + $0x54] sm:$0xf]
      %v920 = vld [vmem:[%s904 + $0x58] sm:$0xf]
      %v921 = vld [vmem:[%s904 + $0x8] sm:$0x1]
      %v922 = vld [vmem:[%s904 + $0x14] sm:$0x1]
      %v923 = vld [vmem:[%s904 + $0x20] sm:$0x1]
      %v924 = vld [vmem:[%s904 + $0x2c] sm:$0x1]
      %v925 = vld [vmem:[%s904 + $0x38] sm:$0x1]
      %v926 = vld [vmem:[%s904 + $0x44] sm:$0x1]
      %v927 = vld [vmem:[%s904 + $0x50] sm:$0x1]
      %v928 = vld [vmem:[%s904 + $0x5c] sm:$0x1]
      %vm929 = vsmask.f32 3328
      %vm930 = vsmask.f32 7440
      %vm931 = vmor %vm929, %vm930
      %v933 = vshrl.u32 %v905, 16
      %v935 = vrot.slane %v933, 4
      %v936 = vshll.u32 %v905, 16
      %v938 = vrot.slane %v936, 5
      %v939 = vor.u32 %v935, %v938
      %v940 = vrot.slane %v939, 4
      %v942 = vshll.u32 %v906, 16
      %v944 = vrot.slane %v942, 5
      %v945 = vsel %vm931, %v940, %v944
      %v946 = vshrl.u32 %v906, 16
      %v948 = vrot.slane %v946, 4
      %v949 = vor.u32 %v948, %v944
      %v950 = vrot.slane %v949, 4
      %v952 = vshll.u32 %v921, 16
      %v954 = vrot.slane %v952, 5
      %v955 = vsel %vm931, %v950, %v954
      %v957 = vshrl.u32 %v907, 16
      %v959 = vrot.slane %v957, 4
      %v960 = vshll.u32 %v907, 16
      %v962 = vrot.slane %v960, 5
      %v963 = vor.u32 %v959, %v962
      %v964 = vrot.slane %v963, 4
      %v966 = vshll.u32 %v908, 16
      %v968 = vrot.slane %v966, 5
      %v969 = vsel %vm931, %v964, %v968
      %v970 = vshrl.u32 %v908, 16
      %v972 = vrot.slane %v970, 4
      %v973 = vor.u32 %v972, %v968
      %v974 = vrot.slane %v973, 4
      %v976 = vshll.u32 %v922, 16
      %v978 = vrot.slane %v976, 5
      %v979 = vsel %vm931, %v974, %v978
      %v981 = vshrl.u32 %v909, 16
      %v983 = vrot.slane %v981, 4
      %v984 = vshll.u32 %v909, 16
      %v986 = vrot.slane %v984, 5
      %v987 = vor.u32 %v983, %v986
      %v988 = vrot.slane %v987, 4
      %v990 = vshll.u32 %v910, 16
      %v992 = vrot.slane %v990, 5
      %v993 = vsel %vm931, %v988, %v992
      %v994 = vshrl.u32 %v910, 16
      %v996 = vrot.slane %v994, 4
      %v997 = vor.u32 %v996, %v992
      %v998 = vrot.slane %v997, 4
      %v1000 = vshll.u32 %v923, 16
      %v1002 = vrot.slane %v1000, 5
      %v1003 = vsel %vm931, %v998, %v1002
      %v1005 = vshrl.u32 %v911, 16
      %v1007 = vrot.slane %v1005, 4
      %v1008 = vshll.u32 %v911, 16
      %v1010 = vrot.slane %v1008, 5
      %v1011 = vor.u32 %v1007, %v1010
      %v1012 = vrot.slane %v1011, 4
      %v1014 = vshll.u32 %v912, 16
      %v1016 = vrot.slane %v1014, 5
      %v1017 = vsel %vm931, %v1012, %v1016
      %v1018 = vshrl.u32 %v912, 16
      %v1020 = vrot.slane %v1018, 4
      %v1021 = vor.u32 %v1020, %v1016
      %v1022 = vrot.slane %v1021, 4
      %v1024 = vshll.u32 %v924, 16
      %v1026 = vrot.slane %v1024, 5
      %v1027 = vsel %vm931, %v1022, %v1026
      %v1029 = vshrl.u32 %v913, 16
      %v1031 = vrot.slane %v1029, 4
      %v1032 = vshll.u32 %v913, 16
      %v1034 = vrot.slane %v1032, 5
      %v1035 = vor.u32 %v1031, %v1034
      %v1036 = vrot.slane %v1035, 4
      %v1038 = vshll.u32 %v914, 16
      %v1040 = vrot.slane %v1038, 5
      %v1041 = vsel %vm931, %v1036, %v1040
      %v1042 = vshrl.u32 %v914, 16
      %v1044 = vrot.slane %v1042, 4
      %v1045 = vor.u32 %v1044, %v1040
      %v1046 = vrot.slane %v1045, 4
      %v1048 = vshll.u32 %v925, 16
      %v1050 = vrot.slane %v1048, 5
      %v1051 = vsel %vm931, %v1046, %v1050
      %v1053 = vshrl.u32 %v915, 16
      %v1055 = vrot.slane %v1053, 4
      %v1056 = vshll.u32 %v915, 16
      %v1058 = vrot.slane %v1056, 5
      %v1059 = vor.u32 %v1055, %v1058
      %v1060 = vrot.slane %v1059, 4
      %v1062 = vshll.u32 %v916, 16
      %v1064 = vrot.slane %v1062, 5
      %v1065 = vsel %vm931, %v1060, %v1064
      %v1066 = vshrl.u32 %v916, 16
      %v1068 = vrot.slane %v1066, 4
      %v1069 = vor.u32 %v1068, %v1064
      %v1070 = vrot.slane %v1069, 4
      %v1072 = vshll.u32 %v926, 16
      %v1074 = vrot.slane %v1072, 5
      %v1075 = vsel %vm931, %v1070, %v1074
      %v1077 = vshrl.u32 %v917, 16
      %v1079 = vrot.slane %v1077, 4
      %v1080 = vshll.u32 %v917, 16
      %v1082 = vrot.slane %v1080, 5
      %v1083 = vor.u32 %v1079, %v1082
      %v1084 = vrot.slane %v1083, 4
      %v1086 = vshll.u32 %v918, 16
      %v1088 = vrot.slane %v1086, 5
      %v1089 = vsel %vm931, %v1084, %v1088
      %v1090 = vshrl.u32 %v918, 16
      %v1092 = vrot.slane %v1090, 4
      %v1093 = vor.u32 %v1092, %v1088
      %v1094 = vrot.slane %v1093, 4
      %v1096 = vshll.u32 %v927, 16
      %v1098 = vrot.slane %v1096, 5
      %v1099 = vsel %vm931, %v1094, %v1098
      %v1101 = vshrl.u32 %v919, 16
      %v1103 = vrot.slane %v1101, 4
      %v1104 = vshll.u32 %v919, 16
      %v1106 = vrot.slane %v1104, 5
      %v1107 = vor.u32 %v1103, %v1106
      %v1108 = vrot.slane %v1107, 4
      %v1110 = vshll.u32 %v920, 16
      %v1112 = vrot.slane %v1110, 5
      %v1113 = vsel %vm931, %v1108, %v1112
      %v1114 = vshrl.u32 %v920, 16
      %v1116 = vrot.slane %v1114, 4
      %v1117 = vor.u32 %v1116, %v1112
      %v1118 = vrot.slane %v1117, 4
      %v1120 = vshll.u32 %v928, 16
      %v1122 = vrot.slane %v1120, 5
      %v1123 = vsel %vm931, %v1118, %v1122
      %v1124 = vld [vmem:[%s904] sm:$0xe]
      %v1125 = vld [vmem:[%s904 + $0xc] sm:$0xe]
      %v1126 = vld [vmem:[%s904 + $0x18] sm:$0xe]
      %v1127 = vld [vmem:[%s904 + $0x24] sm:$0xe]
      %v1128 = vld [vmem:[%s904 + $0x30] sm:$0xe]
      %v1129 = vld [vmem:[%s904 + $0x3c] sm:$0xe]
      %v1130 = vld [vmem:[%s904 + $0x48] sm:$0xe]
      %v1131 = vld [vmem:[%s904 + $0x54] sm:$0xe]
      %vm1156 = vcmask 1042432
      %vm1157 = vcmask 1046532
      %vm1158 = vmor %vm1156, %vm1157
      %v1159 = vrot.slane %v1124, 5
      %v1160 = vrot.slane %v1159, 4
      %v1161 = vrot.slane %v906, 5
      %v1162 = vsel %vm1158, %v1160, %v1161
      %v1163 = vrot.slane %v1161, 4
      %v1164 = vrot.slane %v921, 5
      %v1165 = vsel %vm1158, %v1163, %v1164
      %v1166 = vrot.slane %v1125, 5
      %v1167 = vrot.slane %v1166, 4
      %v1168 = vrot.slane %v908, 5
      %v1169 = vsel %vm1158, %v1167, %v1168
      %v1170 = vrot.slane %v1168, 4
      %v1171 = vrot.slane %v922, 5
      %v1172 = vsel %vm1158, %v1170, %v1171
      %v1173 = vrot.slane %v1126, 5
      %v1174 = vrot.slane %v1173, 4
      %v1175 = vrot.slane %v910, 5
      %v1176 = vsel %vm1158, %v1174, %v1175
      %v1177 = vrot.slane %v1175, 4
      %v1178 = vrot.slane %v923, 5
      %v1179 = vsel %vm1158, %v1177, %v1178
      %v1180 = vrot.slane %v1127, 5
      %v1181 = vrot.slane %v1180, 4
      %v1182 = vrot.slane %v912, 5
      %v1183 = vsel %vm1158, %v1181, %v1182
      %v1184 = vrot.slane %v1182, 4
      %v1185 = vrot.slane %v924, 5
      %v1186 = vsel %vm1158, %v1184, %v1185
      %v1187 = vrot.slane %v1128, 5
      %v1188 = vrot.slane %v1187, 4
      %v1189 = vrot.slane %v914, 5
      %v1190 = vsel %vm1158, %v1188, %v1189
      %v1191 = vrot.slane %v1189, 4
      %v1192 = vrot.slane %v925, 5
      %v1193 = vsel %vm1158, %v1191, %v1192
      %v1194 = vrot.slane %v1129, 5
      %v1195 = vrot.slane %v1194, 4
      %v1196 = vrot.slane %v916, 5
      %v1197 = vsel %vm1158, %v1195, %v1196
      %v1198 = vrot.slane %v1196, 4
      %v1199 = vrot.slane %v926, 5
      %v1200 = vsel %vm1158, %v1198, %v1199
      %v1201 = vrot.slane %v1130, 5
      %v1202 = vrot.slane %v1201, 4
      %v1203 = vrot.slane %v918, 5
      %v1204 = vsel %vm1158, %v1202, %v1203
      %v1205 = vrot.slane %v1203, 4
      %v1206 = vrot.slane %v927, 5
      %v1207 = vsel %vm1158, %v1205, %v1206
      %v1208 = vrot.slane %v1131, 5
      %v1209 = vrot.slane %v1208, 4
      %v1210 = vrot.slane %v920, 5
      %v1211 = vsel %vm1158, %v1209, %v1210
      %v1212 = vrot.slane %v1210, 4
      %v1213 = vrot.slane %v928, 5
      %v1214 = vsel %vm1158, %v1212, %v1213
      %s1215 = sadd.s32 %s901, 1
      %s1216 = smul.u32 %s1215, 3
      %s1217 = smul.addr %s1216, 4
      %s1218 = scalar_lea.vmem [#allocation2], %s1217
      %v1219 = vld [vmem:[%s1218] sm:$0xf]
      %v1220 = vld [vmem:[%s1218 + $0x4] sm:$0xf]
      %v1221 = vld [vmem:[%s1218 + $0xc] sm:$0xf]
      %v1222 = vld [vmem:[%s1218 + $0x10] sm:$0xf]
      %v1223 = vld [vmem:[%s1218 + $0x18] sm:$0xf]
      %v1224 = vld [vmem:[%s1218 + $0x1c] sm:$0xf]
      %v1225 = vld [vmem:[%s1218 + $0x24] sm:$0xf]
      %v1226 = vld [vmem:[%s1218 + $0x28] sm:$0xf]
      %v1227 = vld [vmem:[%s1218 + $0x30] sm:$0xf]
      %v1228 = vld [vmem:[%s1218 + $0x34] sm:$0xf]
      %v1229 = vld [vmem:[%s1218 + $0x3c] sm:$0xf]
      %v1230 = vld [vmem:[%s1218 + $0x40] sm:$0xf]
      %v1231 = vld [vmem:[%s1218 + $0x48] sm:$0xf]
      %v1232 = vld [vmem:[%s1218 + $0x4c] sm:$0xf]
      %v1233 = vld [vmem:[%s1218 + $0x54] sm:$0xf]
      %v1234 = vld [vmem:[%s1218 + $0x58] sm:$0xf]
      %v1235 = vld [vmem:[%s1218 + $0x8] sm:$0x1]
      %v1236 = vld [vmem:[%s1218 + $0x14] sm:$0x1]
      %v1237 = vld [vmem:[%s1218 + $0x20] sm:$0x1]
      %v1238 = vld [vmem:[%s1218 + $0x2c] sm:$0x1]
      %v1239 = vld [vmem:[%s1218 + $0x38] sm:$0x1]
      %v1240 = vld [vmem:[%s1218 + $0x44] sm:$0x1]
      %v1241 = vld [vmem:[%s1218 + $0x50] sm:$0x1]
      %v1242 = vld [vmem:[%s1218 + $0x5c] sm:$0x1]
      %v1244 = vshrl.u32 %v1219, 16
      %v1246 = vrot.slane %v1244, 4
      %v1247 = vshll.u32 %v1219, 16
      %v1249 = vrot.slane %v1247, 5
      %v1250 = vor.u32 %v1246, %v1249
      %v1251 = vrot.slane %v1250, 4
      %v1253 = vshll.u32 %v1220, 16
      %v1255 = vrot.slane %v1253, 5
      %v1256 = vsel %vm931, %v1251, %v1255
      %v1257 = vshrl.u32 %v1220, 16
      %v1259 = vrot.slane %v1257, 4
      %v1260 = vor.u32 %v1259, %v1255
      %v1261 = vrot.slane %v1260, 4
      %v1263 = vshll.u32 %v1235, 16
      %v1265 = vrot.slane %v1263, 5
      %v1266 = vsel %vm931, %v1261, %v1265
      %v1268 = vshrl.u32 %v1221, 16
      %v1270 = vrot.slane %v1268, 4
      %v1271 = vshll.u32 %v1221, 16
      %v1273 = vrot.slane %v1271, 5
      %v1274 = vor.u32 %v1270, %v1273
      %v1275 = vrot.slane %v1274, 4
      %v1277 = vshll.u32 %v1222, 16
      %v1279 = vrot.slane %v1277, 5
      %v1280 = vsel %vm931, %v1275, %v1279
      %v1281 = vshrl.u32 %v1222, 16
      %v1283 = vrot.slane %v1281, 4
      %v1284 = vor.u32 %v1283, %v1279
      %v1285 = vrot.slane %v1284, 4
      %v1287 = vshll.u32 %v1236, 16
      %v1289 = vrot.slane %v1287, 5
      %v1290 = vsel %vm931, %v1285, %v1289
      %v1292 = vshrl.u32 %v1223, 16
      %v1294 = vrot.slane %v1292, 4
      %v1295 = vshll.u32 %v1223, 16
      %v1297 = vrot.slane %v1295, 5
      %v1298 = vor.u32 %v1294, %v1297
      %v1299 = vrot.slane %v1298, 4
      %v1301 = vshll.u32 %v1224, 16
      %v1303 = vrot.slane %v1301, 5
      %v1304 = vsel %vm931, %v1299, %v1303
      %v1305 = vshrl.u32 %v1224, 16
      %v1307 = vrot.slane %v1305, 4
      %v1308 = vor.u32 %v1307, %v1303
      %v1309 = vrot.slane %v1308, 4
      %v1311 = vshll.u32 %v1237, 16
      %v1313 = vrot.slane %v1311, 5
      %v1314 = vsel %vm931, %v1309, %v1313
      %v1316 = vshrl.u32 %v1225, 16
      %v1318 = vrot.slane %v1316, 4
      %v1319 = vshll.u32 %v1225, 16
      %v1321 = vrot.slane %v1319, 5
      %v1322 = vor.u32 %v1318, %v1321
      %v1323 = vrot.slane %v1322, 4
      %v1325 = vshll.u32 %v1226, 16
      %v1327 = vrot.slane %v1325, 5
      %v1328 = vsel %vm931, %v1323, %v1327
      %v1329 = vshrl.u32 %v1226, 16
      %v1331 = vrot.slane %v1329, 4
      %v1332 = vor.u32 %v1331, %v1327
      %v1333 = vrot.slane %v1332, 4
      %v1335 = vshll.u32 %v1238, 16
      %v1337 = vrot.slane %v1335, 5
      %v1338 = vsel %vm931, %v1333, %v1337
      %v1340 = vshrl.u32 %v1227, 16
      %v1342 = vrot.slane %v1340, 4
      %v1343 = vshll.u32 %v1227, 16
      %v1345 = vrot.slane %v1343, 5
      %v1346 = vor.u32 %v1342, %v1345
      %v1347 = vrot.slane %v1346, 4
      %v1349 = vshll.u32 %v1228, 16
      %v1351 = vrot.slane %v1349, 5
      %v1352 = vsel %vm931, %v1347, %v1351
      %v1353 = vshrl.u32 %v1228, 16
      %v1355 = vrot.slane %v1353, 4
      %v1356 = vor.u32 %v1355, %v1351
      %v1357 = vrot.slane %v1356, 4
      %v1359 = vshll.u32 %v1239, 16
      %v1361 = vrot.slane %v1359, 5
      %v1362 = vsel %vm931, %v1357, %v1361
      %v1364 = vshrl.u32 %v1229, 16
      %v1366 = vrot.slane %v1364, 4
      %v1367 = vshll.u32 %v1229, 16
      %v1369 = vrot.slane %v1367, 5
      %v1370 = vor.u32 %v1366, %v1369
      %v1371 = vrot.slane %v1370, 4
      %v1373 = vshll.u32 %v1230, 16
      %v1375 = vrot.slane %v1373, 5
      %v1376 = vsel %vm931, %v1371, %v1375
      %v1377 = vshrl.u32 %v1230, 16
      %v1379 = vrot.slane %v1377, 4
      %v1380 = vor.u32 %v1379, %v1375
      %v1381 = vrot.slane %v1380, 4
      %v1383 = vshll.u32 %v1240, 16
      %v1385 = vrot.slane %v1383, 5
      %v1386 = vsel %vm931, %v1381, %v1385
      %v1388 = vshrl.u32 %v1231, 16
      %v1390 = vrot.slane %v1388, 4
      %v1391 = vshll.u32 %v1231, 16
      %v1393 = vrot.slane %v1391, 5
      %v1394 = vor.u32 %v1390, %v1393
      %v1395 = vrot.slane %v1394, 4
      %v1397 = vshll.u32 %v1232, 16
      %v1399 = vrot.slane %v1397, 5
      %v1400 = vsel %vm931, %v1395, %v1399
      %v1401 = vshrl.u32 %v1232, 16
      %v1403 = vrot.slane %v1401, 4
      %v1404 = vor.u32 %v1403, %v1399
      %v1405 = vrot.slane %v1404, 4
      %v1407 = vshll.u32 %v1241, 16
      %v1409 = vrot.slane %v1407, 5
      %v1410 = vsel %vm931, %v1405, %v1409
      %v1412 = vshrl.u32 %v1233, 16
      %v1414 = vrot.slane %v1412, 4
      %v1415 = vshll.u32 %v1233, 16
      %v1417 = vrot.slane %v1415, 5
      %v1418 = vor.u32 %v1414, %v1417
      %v1419 = vrot.slane %v1418, 4
      %v1421 = vshll.u32 %v1234, 16
      %v1423 = vrot.slane %v1421, 5
      %v1424 = vsel %vm931, %v1419, %v1423
      %v1425 = vshrl.u32 %v1234, 16
      %v1427 = vrot.slane %v1425, 4
      %v1428 = vor.u32 %v1427, %v1423
      %v1429 = vrot.slane %v1428, 4
      %v1431 = vshll.u32 %v1242, 16
      %v1433 = vrot.slane %v1431, 5
      %v1434 = vsel %vm931, %v1429, %v1433
      %v1435 = vld [vmem:[%s1218] sm:$0xe]
      %v1436 = vld [vmem:[%s1218 + $0xc] sm:$0xe]
      %v1437 = vld [vmem:[%s1218 + $0x18] sm:$0xe]
      %v1438 = vld [vmem:[%s1218 + $0x24] sm:$0xe]
      %v1439 = vld [vmem:[%s1218 + $0x30] sm:$0xe]
      %v1440 = vld [vmem:[%s1218 + $0x3c] sm:$0xe]
      %v1441 = vld [vmem:[%s1218 + $0x48] sm:$0xe]
      %v1442 = vld [vmem:[%s1218 + $0x54] sm:$0xe]
      %v1467 = vrot.slane %v1435, 5
      %v1468 = vrot.slane %v1467, 4
      %v1469 = vrot.slane %v1220, 5
      %v1470 = vsel %vm1158, %v1468, %v1469
      %v1471 = vrot.slane %v1469, 4
      %v1472 = vrot.slane %v1235, 5
      %v1473 = vsel %vm1158, %v1471, %v1472
      %v1474 = vrot.slane %v1436, 5
      %v1475 = vrot.slane %v1474, 4
      %v1476 = vrot.slane %v1222, 5
      %v1477 = vsel %vm1158, %v1475, %v1476
      %v1478 = vrot.slane %v1476, 4
      %v1479 = vrot.slane %v1236, 5
      %v1480 = vsel %vm1158, %v1478, %v1479
      %v1481 = vrot.slane %v1437, 5
      %v1482 = vrot.slane %v1481, 4
      %v1483 = vrot.slane %v1224, 5
      %v1484 = vsel %vm1158, %v1482, %v1483
      %v1485 = vrot.slane %v1483, 4
      %v1486 = vrot.slane %v1237, 5
      %v1487 = vsel %vm1158, %v1485, %v1486
      %v1488 = vrot.slane %v1438, 5
      %v1489 = vrot.slane %v1488, 4
      %v1490 = vrot.slane %v1226, 5
      %v1491 = vsel %vm1158, %v1489, %v1490
      %v1492 = vrot.slane %v1490, 4
      %v1493 = vrot.slane %v1238, 5
      %v1494 = vsel %vm1158, %v1492, %v1493
      %v1495 = vrot.slane %v1439, 5
      %v1496 = vrot.slane %v1495, 4
      %v1497 = vrot.slane %v1228, 5
      %v1498 = vsel %vm1158, %v1496, %v1497
      %v1499 = vrot.slane %v1497, 4
      %v1500 = vrot.slane %v1239, 5
      %v1501 = vsel %vm1158, %v1499, %v1500
      %v1502 = vrot.slane %v1440, 5
      %v1503 = vrot.slane %v1502, 4
      %v1504 = vrot.slane %v1230, 5
      %v1505 = vsel %vm1158, %v1503, %v1504
      %v1506 = vrot.slane %v1504, 4
      %v1507 = vrot.slane %v1240, 5
      %v1508 = vsel %vm1158, %v1506, %v1507
      %v1509 = vrot.slane %v1441, 5
      %v1510 = vrot.slane %v1509, 4
      %v1511 = vrot.slane %v1232, 5
      %v1512 = vsel %vm1158, %v1510, %v1511
      %v1513 = vrot.slane %v1511, 4
      %v1514 = vrot.slane %v1241, 5
      %v1515 = vsel %vm1158, %v1513, %v1514
      %v1516 = vrot.slane %v1442, 5
      %v1517 = vrot.slane %v1516, 4
      %v1518 = vrot.slane %v1234, 5
      %v1519 = vsel %vm1158, %v1517, %v1518
      %v1520 = vrot.slane %v1518, 4
      %v1521 = vrot.slane %v1242, 5
      %v1522 = vsel %vm1158, %v1520, %v1521
      %s1523 = sadd.s32 %s901, 2
      %s1524 = smul.u32 %s1523, 3
      %s1525 = smul.addr %s1524, 4
      %s1526 = scalar_lea.vmem [#allocation2], %s1525
      %v1527 = vld [vmem:[%s1526] sm:$0xf]
      %v1528 = vld [vmem:[%s1526 + $0x4] sm:$0xf]
      %v1529 = vld [vmem:[%s1526 + $0xc] sm:$0xf]
      %v1530 = vld [vmem:[%s1526 + $0x10] sm:$0xf]
      %v1531 = vld [vmem:[%s1526 + $0x18] sm:$0xf]
      %v1532 = vld [vmem:[%s1526 + $0x1c] sm:$0xf]
      %v1533 = vld [vmem:[%s1526 + $0x24] sm:$0xf]
      %v1534 = vld [vmem:[%s1526 + $0x28] sm:$0xf]
      %v1535 = vld [vmem:[%s1526 + $0x30] sm:$0xf]
      %v1536 = vld [vmem:[%s1526 + $0x34] sm:$0xf]
      %v1537 = vld [vmem:[%s1526 + $0x3c] sm:$0xf]
      %v1538 = vld [vmem:[%s1526 + $0x40] sm:$0xf]
      %v1539 = vld [vmem:[%s1526 + $0x48] sm:$0xf]
      %v1540 = vld [vmem:[%s1526 + $0x4c] sm:$0xf]
      %v1541 = vld [vmem:[%s1526 + $0x54] sm:$0xf]
      %v1542 = vld [vmem:[%s1526 + $0x58] sm:$0xf]
      %v1543 = vld [vmem:[%s1526 + $0x8] sm:$0x1]
      %v1544 = vld [vmem:[%s1526 + $0x14] sm:$0x1]
      %v1545 = vld [vmem:[%s1526 + $0x20] sm:$0x1]
      %v1546 = vld [vmem:[%s1526 + $0x2c] sm:$0x1]
      %v1547 = vld [vmem:[%s1526 + $0x38] sm:$0x1]
      %v1548 = vld [vmem:[%s1526 + $0x44] sm:$0x1]
      %v1549 = vld [vmem:[%s1526 + $0x50] sm:$0x1]
      %v1550 = vld [vmem:[%s1526 + $0x5c] sm:$0x1]
      %v1552 = vshrl.u32 %v1527, 16
      %v1554 = vrot.slane %v1552, 4
      %v1555 = vshll.u32 %v1527, 16
      %v1557 = vrot.slane %v1555, 5
      %v1558 = vor.u32 %v1554, %v1557
      %v1559 = vrot.slane %v1558, 4
      %v1561 = vshll.u32 %v1528, 16
      %v1563 = vrot.slane %v1561, 5
      %v1564 = vsel %vm931, %v1559, %v1563
      %v1565 = vshrl.u32 %v1528, 16
      %v1567 = vrot.slane %v1565, 4
      %v1568 = vor.u32 %v1567, %v1563
      %v1569 = vrot.slane %v1568, 4
      %v1571 = vshll.u32 %v1543, 16
      %v1573 = vrot.slane %v1571, 5
      %v1574 = vsel %vm931, %v1569, %v1573
      %v1576 = vshrl.u32 %v1529, 16
      %v1578 = vrot.slane %v1576, 4
      %v1579 = vshll.u32 %v1529, 16
      %v1581 = vrot.slane %v1579, 5
      %v1582 = vor.u32 %v1578, %v1581
      %v1583 = vrot.slane %v1582, 4
      %v1585 = vshll.u32 %v1530, 16
      %v1587 = vrot.slane %v1585, 5
      %v1588 = vsel %vm931, %v1583, %v1587
      %v1589 = vshrl.u32 %v1530, 16
      %v1591 = vrot.slane %v1589, 4
      %v1592 = vor.u32 %v1591, %v1587
      %v1593 = vrot.slane %v1592, 4
      %v1595 = vshll.u32 %v1544, 16
      %v1597 = vrot.slane %v1595, 5
      %v1598 = vsel %vm931, %v1593, %v1597
      %v1600 = vshrl.u32 %v1531, 16
      %v1602 = vrot.slane %v1600, 4
      %v1603 = vshll.u32 %v1531, 16
      %v1605 = vrot.slane %v1603, 5
      %v1606 = vor.u32 %v1602, %v1605
      %v1607 = vrot.slane %v1606, 4
      %v1609 = vshll.u32 %v1532, 16
      %v1611 = vrot.slane %v1609, 5
      %v1612 = vsel %vm931, %v1607, %v1611
      %v1613 = vshrl.u32 %v1532, 16
      %v1615 = vrot.slane %v1613, 4
      %v1616 = vor.u32 %v1615, %v1611
      %v1617 = vrot.slane %v1616, 4
      %v1619 = vshll.u32 %v1545, 16
      %v1621 = vrot.slane %v1619, 5
      %v1622 = vsel %vm931, %v1617, %v1621
      %v1624 = vshrl.u32 %v1533, 16
      %v1626 = vrot.slane %v1624, 4
      %v1627 = vshll.u32 %v1533, 16
      %v1629 = vrot.slane %v1627, 5
      %v1630 = vor.u32 %v1626, %v1629
      %v1631 = vrot.slane %v1630, 4
      %v1633 = vshll.u32 %v1534, 16
      %v1635 = vrot.slane %v1633, 5
      %v1636 = vsel %vm931, %v1631, %v1635
      %v1637 = vshrl.u32 %v1534, 16
      %v1639 = vrot.slane %v1637, 4
      %v1640 = vor.u32 %v1639, %v1635
      %v1641 = vrot.slane %v1640, 4
      %v1643 = vshll.u32 %v1546, 16
      %v1645 = vrot.slane %v1643, 5
      %v1646 = vsel %vm931, %v1641, %v1645
      %v1648 = vshrl.u32 %v1535, 16
      %v1650 = vrot.slane %v1648, 4
      %v1651 = vshll.u32 %v1535, 16
      %v1653 = vrot.slane %v1651, 5
      %v1654 = vor.u32 %v1650, %v1653
      %v1655 = vrot.slane %v1654, 4
      %v1657 = vshll.u32 %v1536, 16
      %v1659 = vrot.slane %v1657, 5
      %v1660 = vsel %vm931, %v1655, %v1659
      %v1661 = vshrl.u32 %v1536, 16
      %v1663 = vrot.slane %v1661, 4
      %v1664 = vor.u32 %v1663, %v1659
      %v1665 = vrot.slane %v1664, 4
      %v1667 = vshll.u32 %v1547, 16
      %v1669 = vrot.slane %v1667, 5
      %v1670 = vsel %vm931, %v1665, %v1669
      %v1672 = vshrl.u32 %v1537, 16
      %v1674 = vrot.slane %v1672, 4
      %v1675 = vshll.u32 %v1537, 16
      %v1677 = vrot.slane %v1675, 5
      %v1678 = vor.u32 %v1674, %v1677
      %v1679 = vrot.slane %v1678, 4
      %v1681 = vshll.u32 %v1538, 16
      %v1683 = vrot.slane %v1681, 5
      %v1684 = vsel %vm931, %v1679, %v1683
      %v1685 = vshrl.u32 %v1538, 16
      %v1687 = vrot.slane %v1685, 4
      %v1688 = vor.u32 %v1687, %v1683
      %v1689 = vrot.slane %v1688, 4
      %v1691 = vshll.u32 %v1548, 16
      %v1693 = vrot.slane %v1691, 5
      %v1694 = vsel %vm931, %v1689, %v1693
      %v1696 = vshrl.u32 %v1539, 16
      %v1698 = vrot.slane %v1696, 4
      %v1699 = vshll.u32 %v1539, 16
      %v1701 = vrot.slane %v1699, 5
      %v1702 = vor.u32 %v1698, %v1701
      %v1703 = vrot.slane %v1702, 4
      %v1705 = vshll.u32 %v1540, 16
      %v1707 = vrot.slane %v1705, 5
      %v1708 = vsel %vm931, %v1703, %v1707
      %v1709 = vshrl.u32 %v1540, 16
      %v1711 = vrot.slane %v1709, 4
      %v1712 = vor.u32 %v1711, %v1707
      %v1713 = vrot.slane %v1712, 4
      %v1715 = vshll.u32 %v1549, 16
      %v1717 = vrot.slane %v1715, 5
      %v1718 = vsel %vm931, %v1713, %v1717
      %v1720 = vshrl.u32 %v1541, 16
      %v1722 = vrot.slane %v1720, 4
      %v1723 = vshll.u32 %v1541, 16
      %v1725 = vrot.slane %v1723, 5
      %v1726 = vor.u32 %v1722, %v1725
      %v1727 = vrot.slane %v1726, 4
      %v1729 = vshll.u32 %v1542, 16
      %v1731 = vrot.slane %v1729, 5
      %v1732 = vsel %vm931, %v1727, %v1731
      %v1733 = vshrl.u32 %v1542, 16
      %v1735 = vrot.slane %v1733, 4
      %v1736 = vor.u32 %v1735, %v1731
      %v1737 = vrot.slane %v1736, 4
      %v1739 = vshll.u32 %v1550, 16
      %v1741 = vrot.slane %v1739, 5
      %v1742 = vsel %vm931, %v1737, %v1741
      %v1743 = vld [vmem:[%s1526] sm:$0xe]
      %v1744 = vld [vmem:[%s1526 + $0xc] sm:$0xe]
      %v1745 = vld [vmem:[%s1526 + $0x18] sm:$0xe]
      %v1746 = vld [vmem:[%s1526 + $0x24] sm:$0xe]
      %v1747 = vld [vmem:[%s1526 + $0x30] sm:$0xe]
      %v1748 = vld [vmem:[%s1526 + $0x3c] sm:$0xe]
      %v1749 = vld [vmem:[%s1526 + $0x48] sm:$0xe]
      %v1750 = vld [vmem:[%s1526 + $0x54] sm:$0xe]
      %v1775 = vrot.slane %v1743, 5
      %v1776 = vrot.slane %v1775, 4
      %v1777 = vrot.slane %v1528, 5
      %v1778 = vsel %vm1158, %v1776, %v1777
      %v1779 = vrot.slane %v1777, 4
      %v1780 = vrot.slane %v1543, 5
      %v1781 = vsel %vm1158, %v1779, %v1780
      %v1782 = vrot.slane %v1744, 5
      %v1783 = vrot.slane %v1782, 4
      %v1784 = vrot.slane %v1530, 5
      %v1785 = vsel %vm1158, %v1783, %v1784
      %v1786 = vrot.slane %v1784, 4
      %v1787 = vrot.slane %v1544, 5
      %v1788 = vsel %vm1158, %v1786, %v1787
      %v1789 = vrot.slane %v1745, 5
      %v1790 = vrot.slane %v1789, 4
      %v1791 = vrot.slane %v1532, 5
      %v1792 = vsel %vm1158, %v1790, %v1791
      %v1793 = vrot.slane %v1791, 4
      %v1794 = vrot.slane %v1545, 5
      %v1795 = vsel %vm1158, %v1793, %v1794
      %v1796 = vrot.slane %v1746, 5
      %v1797 = vrot.slane %v1796, 4
      %v1798 = vrot.slane %v1534, 5
      %v1799 = vsel %vm1158, %v1797, %v1798
      %v1800 = vrot.slane %v1798, 4
      %v1801 = vrot.slane %v1546, 5
      %v1802 = vsel %vm1158, %v1800, %v1801
      %v1803 = vrot.slane %v1747, 5
      %v1804 = vrot.slane %v1803, 4
      %v1805 = vrot.slane %v1536, 5
      %v1806 = vsel %vm1158, %v1804, %v1805
      %v1807 = vrot.slane %v1805, 4
      %v1808 = vrot.slane %v1547, 5
      %v1809 = vsel %vm1158, %v1807, %v1808
      %v1810 = vrot.slane %v1748, 5
      %v1811 = vrot.slane %v1810, 4
      %v1812 = vrot.slane %v1538, 5
      %v1813 = vsel %vm1158, %v1811, %v1812
      %v1814 = vrot.slane %v1812, 4
      %v1815 = vrot.slane %v1548, 5
      %v1816 = vsel %vm1158, %v1814, %v1815
      %v1817 = vrot.slane %v1749, 5
      %v1818 = vrot.slane %v1817, 4
      %v1819 = vrot.slane %v1540, 5
      %v1820 = vsel %vm1158, %v1818, %v1819
      %v1821 = vrot.slane %v1819, 4
      %v1822 = vrot.slane %v1549, 5
      %v1823 = vsel %vm1158, %v1821, %v1822
      %v1824 = vrot.slane %v1750, 5
      %v1825 = vrot.slane %v1824, 4
      %v1826 = vrot.slane %v1542, 5
      %v1827 = vsel %vm1158, %v1825, %v1826
      %v1828 = vrot.slane %v1826, 4
      %v1829 = vrot.slane %v1550, 5
      %v1830 = vsel %vm1158, %v1828, %v1829
      %v1831 = vld [vmem:[%s1] sm:$0xf]
      %v1832 = vld [vmem:[%s1 + $0x4] sm:$0xf]
      %v1833 = vld [vmem:[%s1 + $0x8] sm:$0xf]
      %v1834 = vld [vmem:[%s1 + $0xc] sm:$0xf]
      %v1835 = vld [vmem:[%s1 + $0x10] sm:$0x3]
      %v1836 = vunpack.c.l.b16 %v945
      %v1837 = vunpack.c.l.b16 %v955
      %v1838 = vunpack.c.l.b16 %v969
      %v1839 = vunpack.c.l.b16 %v979
      %v1840 = vunpack.c.l.b16 %v993
      %v1841 = vunpack.c.l.b16 %v1003
      %v1842 = vunpack.c.l.b16 %v1017
      %v1843 = vunpack.c.l.b16 %v1027
      %v1844 = vunpack.c.l.b16 %v1041
      %v1845 = vunpack.c.l.b16 %v1051
      %v1846 = vunpack.c.l.b16 %v1065
      %v1847 = vunpack.c.l.b16 %v1075
      %v1848 = vunpack.c.l.b16 %v1089
      %v1849 = vunpack.c.l.b16 %v1099
      %v1850 = vunpack.c.l.b16 %v1113
      %v1851 = vunpack.c.l.b16 %v1123
      %v1852 = vpack.c.b16 %v1837, %v1836
      %v1853 = vpack.c.b16 %v1839, %v1838
      %v1854 = vpack.c.b16 %v1841, %v1840
      %v1855 = vpack.c.b16 %v1843, %v1842
      %v1856 = vpack.c.b16 %v1845, %v1844
      %v1857 = vpack.c.b16 %v1847, %v1846
      %v1858 = vpack.c.b16 %v1849, %v1848
      %v1859 = vpack.c.b16 %v1851, %v1850
      %v1861 = vunpack.c.l.b16 %v1831
      %v1862 = vpack.c.b16 %v1861, %v1861
      %v1863 = vrot.slane %v1862, 2
      %vm1864 = vcmask 31744
      %v1866 = vsel %vm1864, %v1852, 0
      %v1869 = vsel %vm1864, %v1853, 0
      %v1872 = vsel %vm1864, %v1854, 0
      %v1875 = vsel %vm1864, %v1855, 0
      %v1878 = vsel %vm1864, %v1856, 0
      %v1881 = vsel %vm1864, %v1857, 0
      %v1884 = vsel %vm1864, %v1858, 0
      %v1887 = vsel %vm1864, %v1859, 0
      %vm1889 = vcmask 1041408
      %v1891 = vsel %vm1889, %v1863, 0
      %1893 = vmatprep.subr.bf16.mxu0 0
      %1894 = vmatpush1.bf16.msra.mxu0 0
      %1895 = vmatprep.subr.bf16.mxu0 0
      %1896 = vmatpush1.bf16.msra.mxu0 0
      %1897 = vmatprep.subr.bf16.mxu0 0
      %1898 = vmatpush1.bf16.msra.mxu0 0
      %1899 = vmatprep.subr.bf16.mxu0 0
      %1900 = vmatpush1.bf16.msra.mxu0 0
      %1901 = vmatprep.subr.bf16.mxu0 0
      %1902 = vmatpush1.bf16.msra.mxu0 0
      %1903 = vmatprep.subr.bf16.mxu0 0
      %1904 = vmatpush1.bf16.msra.mxu0 0
      %1905 = vmatprep.subr.bf16.mxu0 0
      %1906 = vmatpush1.bf16.msra.mxu0 0
      %1907 = vmatprep.subr.bf16.mxu0 0
      %1908 = vmatpush1.bf16.msra.mxu0 %v1891
      %1909 = vmatprep.subr.bf16.mxu0 0
      %1910 = vmatpush2.bf16.msra.mxu0 0
      %1911 = vmatprep.subr.bf16.mxu0 0
      %1912 = vmatpush2.bf16.msra.mxu0 0
      %1913 = vmatprep.subr.bf16.mxu0 0
      %1914 = vmatpush2.bf16.msra.mxu0 0
      %1915 = vmatprep.subr.bf16.mxu0 0
      %1916 = vmatpush2.bf16.msra.mxu0 0
      %1917 = vmatprep.subr.bf16.mxu0 0
      %1918 = vmatpush2.bf16.msra.mxu0 0
      %1919 = vmatprep.subr.bf16.mxu0 0
      %1920 = vmatpush2.bf16.msra.mxu0 0
      %1921 = vmatprep.subr.bf16.mxu0 0
      %1922 = vmatpush2.bf16.msra.mxu0 0
      %1923 = vmatprep.subr.bf16.mxu0 0
      %1924 = vmatpush2.bf16.msra.mxu0 0
      %1925 = vmatprep.mubr.bf16.mxu0 0
      %1926 = vmatmul.mubr.bf16.gmra.mxu0 %v1866
      %v1927 = vpop.f32.mrf.mxu0
      %v1928 = vadd.f32 0.0, %v1927
      %v1929 = vpop.f32.mrf.mxu0
      %v1930 = vpop.f32.mrf.mxu0
      %v1931 = vadd.f32 0.0, %v1930
      %v1932 = vpop.f32.mrf.mxu0
      %1933 = vmatprep.mubr.bf16.mxu0 0
      %1934 = vmatmul.mubr.bf16.gmra.mxu0 %v1869
      %v1935 = vpop.f32.mrf.mxu0
      %v1936 = vadd.f32 0.0, %v1935
      %v1937 = vpop.f32.mrf.mxu0
      %v1938 = vpop.f32.mrf.mxu0
      %v1939 = vadd.f32 0.0, %v1938
      %v1940 = vpop.f32.mrf.mxu0
      %1941 = vmatprep.mubr.bf16.mxu0 0
      %1942 = vmatmul.mubr.bf16.gmra.mxu0 %v1872
      %v1943 = vpop.f32.mrf.mxu0
      %v1944 = vadd.f32 0.0, %v1943
      %v1945 = vpop.f32.mrf.mxu0
      %v1946 = vpop.f32.mrf.mxu0
      %v1947 = vadd.f32 0.0, %v1946
      %v1948 = vpop.f32.mrf.mxu0
      %1949 = vmatprep.mubr.bf16.mxu0 0
      %1950 = vmatmul.mubr.bf16.gmra.mxu0 %v1875
      %v1951 = vpop.f32.mrf.mxu0
      %v1952 = vadd.f32 0.0, %v1951
      %v1953 = vpop.f32.mrf.mxu0
      %v1954 = vpop.f32.mrf.mxu0
      %v1955 = vadd.f32 0.0, %v1954
      %v1956 = vpop.f32.mrf.mxu0
      %1957 = vmatprep.mubr.bf16.mxu0 0
      %1958 = vmatmul.mubr.bf16.gmra.mxu0 %v1878
      %v1959 = vpop.f32.mrf.mxu0
      %v1960 = vadd.f32 0.0, %v1959
      %v1961 = vpop.f32.mrf.mxu0
      %v1962 = vpop.f32.mrf.mxu0
      %v1963 = vadd.f32 0.0, %v1962
      %v1964 = vpop.f32.mrf.mxu0
      %1965 = vmatprep.mubr.bf16.mxu0 0
      %1966 = vmatmul.mubr.bf16.gmra.mxu0 %v1881
      %v1967 = vpop.f32.mrf.mxu0
      %v1968 = vadd.f32 0.0, %v1967
      %v1969 = vpop.f32.mrf.mxu0
      %v1970 = vpop.f32.mrf.mxu0
      %v1971 = vadd.f32 0.0, %v1970
      %v1972 = vpop.f32.mrf.mxu0
      %1973 = vmatprep.mubr.bf16.mxu0 0
      %1974 = vmatmul.mubr.bf16.gmra.mxu0 %v1884
      %v1975 = vpop.f32.mrf.mxu0
      %v1976 = vadd.f32 0.0, %v1975
      %v1977 = vpop.f32.mrf.mxu0
      %v1978 = vpop.f32.mrf.mxu0
      %v1979 = vadd.f32 0.0, %v1978
      %v1980 = vpop.f32.mrf.mxu0
      %1981 = vmatprep.mubr.bf16.mxu0 0
      %1982 = vmatmul.mubr.bf16.gmra.mxu0 %v1887
      %v1983 = vpop.f32.mrf.mxu0
      %v1984 = vadd.f32 0.0, %v1983
      %v1985 = vpop.f32.mrf.mxu0
      %v1986 = vpop.f32.mrf.mxu0
      %v1987 = vadd.f32 0.0, %v1986
      %v1988 = vpop.f32.mrf.mxu0
      %1989 = vdwg.mxu0
      %v1998 = vunpack.c.l.b16 %v905
      %v1999 = vunpack.c.l.b16 %v906
      %v2000 = vunpack.c.l.b16 %v907
      %v2001 = vunpack.c.l.b16 %v908
      %v2002 = vunpack.c.l.b16 %v909
      %v2003 = vunpack.c.l.b16 %v910
      %v2004 = vunpack.c.l.b16 %v911
      %v2005 = vunpack.c.l.b16 %v912
      %v2006 = vunpack.c.l.b16 %v913
      %v2007 = vunpack.c.l.b16 %v914
      %v2008 = vunpack.c.l.b16 %v915
      %v2009 = vunpack.c.l.b16 %v916
      %v2010 = vunpack.c.l.b16 %v917
      %v2011 = vunpack.c.l.b16 %v918
      %v2012 = vunpack.c.l.b16 %v919
      %v2013 = vunpack.c.l.b16 %v920
      %v2014 = vpack.c.b16 %v1999, %v1998
      %v2015 = vpack.c.b16 %v2001, %v2000
      %v2016 = vpack.c.b16 %v2003, %v2002
      %v2017 = vpack.c.b16 %v2005, %v2004
      %v2018 = vpack.c.b16 %v2007, %v2006
      %v2019 = vpack.c.b16 %v2009, %v2008
      %v2020 = vpack.c.b16 %v2011, %v2010
      %v2021 = vpack.c.b16 %v2013, %v2012
      %v2023 = vsel %vm1864, %v2014, 0
      %v2026 = vsel %vm1864, %v2015, 0
      %v2029 = vsel %vm1864, %v2016, 0
      %v2032 = vsel %vm1864, %v2017, 0
      %v2035 = vsel %vm1864, %v2018, 0
      %v2038 = vsel %vm1864, %v2019, 0
      %v2041 = vsel %vm1864, %v2020, 0
      %v2044 = vsel %vm1864, %v2021, 0
      %v2047 = vsel %vm1889, %v1831, 0
      %2049 = vmatprep.subr.bf16.mxu0 0
      %2050 = vmatpush1.bf16.msra.mxu0 0
      %2051 = vmatprep.subr.bf16.mxu0 0
      %2052 = vmatpush1.bf16.msra.mxu0 0
      %2053 = vmatprep.subr.bf16.mxu0 0
      %2054 = vmatpush1.bf16.msra.mxu0 0
      %2055 = vmatprep.subr.bf16.mxu0 0
      %2056 = vmatpush1.bf16.msra.mxu0 0
      %2057 = vmatprep.subr.bf16.mxu0 0
      %2058 = vmatpush1.bf16.msra.mxu0 0
      %2059 = vmatprep.subr.bf16.mxu0 0
      %2060 = vmatpush1.bf16.msra.mxu0 0
      %2061 = vmatprep.subr.bf16.mxu0 0
      %2062 = vmatpush1.bf16.msra.mxu0 0
      %2063 = vmatprep.subr.bf16.mxu0 0
      %2064 = vmatpush1.bf16.msra.mxu0 %v2047
      %2065 = vmatprep.subr.bf16.mxu0 0
      %2066 = vmatpush2.bf16.msra.mxu0 0
      %2067 = vmatprep.subr.bf16.mxu0 0
      %2068 = vmatpush2.bf16.msra.mxu0 0
      %2069 = vmatprep.subr.bf16.mxu0 0
      %2070 = vmatpush2.bf16.msra.mxu0 0
      %2071 = vmatprep.subr.bf16.mxu0 0
      %2072 = vmatpush2.bf16.msra.mxu0 0
      %2073 = vmatprep.subr.bf16.mxu0 0
      %2074 = vmatpush2.bf16.msra.mxu0 0
      %2075 = vmatprep.subr.bf16.mxu0 0
      %2076 = vmatpush2.bf16.msra.mxu0 0
      %2077 = vmatprep.subr.bf16.mxu0 0
      %2078 = vmatpush2.bf16.msra.mxu0 0
      %2079 = vmatprep.subr.bf16.mxu0 0
      %2080 = vmatpush2.bf16.msra.mxu0 0
      %2081 = vmatprep.mubr.bf16.mxu0 0
      %2082 = vmatmul.mubr.bf16.gmra.mxu0 %v2023
      %v2083 = vpop.f32.mrf.mxu0
      %v2084 = vadd.f32 %v1928, %v2083
      %v2085 = vpop.f32.mrf.mxu0
      %v2086 = vpop.f32.mrf.mxu0
      %v2087 = vadd.f32 %v1931, %v2086
      %v2088 = vpop.f32.mrf.mxu0
      %2089 = vmatprep.mubr.bf16.mxu0 0
      %2090 = vmatmul.mubr.bf16.gmra.mxu0 %v2026
      %v2091 = vpop.f32.mrf.mxu0
      %v2092 = vadd.f32 %v1936, %v2091
      %v2093 = vpop.f32.mrf.mxu0
      %v2094 = vpop.f32.mrf.mxu0
      %v2095 = vadd.f32 %v1939, %v2094
      %v2096 = vpop.f32.mrf.mxu0
      %2097 = vmatprep.mubr.bf16.mxu0 0
      %2098 = vmatmul.mubr.bf16.gmra.mxu0 %v2029
      %v2099 = vpop.f32.mrf.mxu0
      %v2100 = vadd.f32 %v1944, %v2099
      %v2101 = vpop.f32.mrf.mxu0
      %v2102 = vpop.f32.mrf.mxu0
      %v2103 = vadd.f32 %v1947, %v2102
      %v2104 = vpop.f32.mrf.mxu0
      %2105 = vmatprep.mubr.bf16.mxu0 0
      %2106 = vmatmul.mubr.bf16.gmra.mxu0 %v2032
      %v2107 = vpop.f32.mrf.mxu0
      %v2108 = vadd.f32 %v1952, %v2107
      %v2109 = vpop.f32.mrf.mxu0
      %v2110 = vpop.f32.mrf.mxu0
      %v2111 = vadd.f32 %v1955, %v2110
      %v2112 = vpop.f32.mrf.mxu0
      %2113 = vmatprep.mubr.bf16.mxu0 0
      %2114 = vmatmul.mubr.bf16.gmra.mxu0 %v2035
      %v2115 = vpop.f32.mrf.mxu0
      %v2116 = vadd.f32 %v1960, %v2115
      %v2117 = vpop.f32.mrf.mxu0
      %v2118 = vpop.f32.mrf.mxu0
      %v2119 = vadd.f32 %v1963, %v2118
      %v2120 = vpop.f32.mrf.mxu0
      %2121 = vmatprep.mubr.bf16.mxu0 0
      %2122 = vmatmul.mubr.bf16.gmra.mxu0 %v2038
      %v2123 = vpop.f32.mrf.mxu0
      %v2124 = vadd.f32 %v1968, %v2123
      %v2125 = vpop.f32.mrf.mxu0
      %v2126 = vpop.f32.mrf.mxu0
      %v2127 = vadd.f32 %v1971, %v2126
      %v2128 = vpop.f32.mrf.mxu0
      %2129 = vmatprep.mubr.bf16.mxu0 0
      %2130 = vmatmul.mubr.bf16.gmra.mxu0 %v2041
      %v2131 = vpop.f32.mrf.mxu0
      %v2132 = vadd.f32 %v1976, %v2131
      %v2133 = vpop.f32.mrf.mxu0
      %v2134 = vpop.f32.mrf.mxu0
      %v2135 = vadd.f32 %v1979, %v2134
      %v2136 = vpop.f32.mrf.mxu0
      %2137 = vmatprep.mubr.bf16.mxu0 0
      %2138 = vmatmul.mubr.bf16.gmra.mxu0 %v2044
      %v2139 = vpop.f32.mrf.mxu0
      %v2140 = vadd.f32 %v1984, %v2139
      %v2141 = vpop.f32.mrf.mxu0
      %v2142 = vpop.f32.mrf.mxu0
      %v2143 = vadd.f32 %v1987, %v2142
      %v2144 = vpop.f32.mrf.mxu0
      %2145 = vdwg.mxu0
      %v2146 = vunpack.c.l.b16 %v1162
      %v2147 = vunpack.c.l.b16 %v1165
      %v2148 = vunpack.c.l.b16 %v1169
      %v2149 = vunpack.c.l.b16 %v1172
      %v2150 = vunpack.c.l.b16 %v1176
      %v2151 = vunpack.c.l.b16 %v1179
      %v2152 = vunpack.c.l.b16 %v1183
      %v2153 = vunpack.c.l.b16 %v1186
      %v2154 = vunpack.c.l.b16 %v1190
      %v2155 = vunpack.c.l.b16 %v1193
      %v2156 = vunpack.c.l.b16 %v1197
      %v2157 = vunpack.c.l.b16 %v1200
      %v2158 = vunpack.c.l.b16 %v1204
      %v2159 = vunpack.c.l.b16 %v1207
      %v2160 = vunpack.c.l.b16 %v1211
      %v2161 = vunpack.c.l.b16 %v1214
      %v2162 = vpack.c.b16 %v2147, %v2146
      %v2163 = vpack.c.b16 %v2149, %v2148
      %v2164 = vpack.c.b16 %v2151, %v2150
      %v2165 = vpack.c.b16 %v2153, %v2152
      %v2166 = vpack.c.b16 %v2155, %v2154
      %v2167 = vpack.c.b16 %v2157, %v2156
      %v2168 = vpack.c.b16 %v2159, %v2158
      %v2169 = vpack.c.b16 %v2161, %v2160
      %v2171 = vsel %vm1864, %v2162, 0
      %v2174 = vsel %vm1864, %v2163, 0
      %v2177 = vsel %vm1864, %v2164, 0
      %v2180 = vsel %vm1864, %v2165, 0
      %v2183 = vsel %vm1864, %v2166, 0
      %v2186 = vsel %vm1864, %v2167, 0
      %v2189 = vsel %vm1864, %v2168, 0
      %v2192 = vsel %vm1864, %v2169, 0
      %v2195 = vsel %vm1889, %v1832, 0
      %2197 = vmatprep.subr.bf16.mxu0 0
      %2198 = vmatpush1.bf16.msra.mxu0 0
      %2199 = vmatprep.subr.bf16.mxu0 0
      %2200 = vmatpush1.bf16.msra.mxu0 0
      %2201 = vmatprep.subr.bf16.mxu0 0
      %2202 = vmatpush1.bf16.msra.mxu0 0
      %2203 = vmatprep.subr.bf16.mxu0 0
      %2204 = vmatpush1.bf16.msra.mxu0 0
      %2205 = vmatprep.subr.bf16.mxu0 0
      %2206 = vmatpush1.bf16.msra.mxu0 0
      %2207 = vmatprep.subr.bf16.mxu0 0
      %2208 = vmatpush1.bf16.msra.mxu0 0
      %2209 = vmatprep.subr.bf16.mxu0 0
      %2210 = vmatpush1.bf16.msra.mxu0 0
      %2211 = vmatprep.subr.bf16.mxu0 0
      %2212 = vmatpush1.bf16.msra.mxu0 %v2195
      %2213 = vmatprep.subr.bf16.mxu0 0
      %2214 = vmatpush2.bf16.msra.mxu0 0
      %2215 = vmatprep.subr.bf16.mxu0 0
      %2216 = vmatpush2.bf16.msra.mxu0 0
      %2217 = vmatprep.subr.bf16.mxu0 0
      %2218 = vmatpush2.bf16.msra.mxu0 0
      %2219 = vmatprep.subr.bf16.mxu0 0
      %2220 = vmatpush2.bf16.msra.mxu0 0
      %2221 = vmatprep.subr.bf16.mxu0 0
      %2222 = vmatpush2.bf16.msra.mxu0 0
      %2223 = vmatprep.subr.bf16.mxu0 0
      %2224 = vmatpush2.bf16.msra.mxu0 0
      %2225 = vmatprep.subr.bf16.mxu0 0
      %2226 = vmatpush2.bf16.msra.mxu0 0
      %2227 = vmatprep.subr.bf16.mxu0 0
      %2228 = vmatpush2.bf16.msra.mxu0 0
      %2229 = vmatprep.mubr.bf16.mxu0 0
      %2230 = vmatmul.mubr.bf16.gmra.mxu0 %v2171
      %v2231 = vpop.f32.mrf.mxu0
      %v2232 = vadd.f32 0.0, %v2231
      %v2233 = vpop.f32.mrf.mxu0
      %v2234 = vpop.f32.mrf.mxu0
      %v2235 = vadd.f32 0.0, %v2234
      %v2236 = vpop.f32.mrf.mxu0
      %2237 = vmatprep.mubr.bf16.mxu0 0
      %2238 = vmatmul.mubr.bf16.gmra.mxu0 %v2174
      %v2239 = vpop.f32.mrf.mxu0
      %v2240 = vadd.f32 0.0, %v2239
      %v2241 = vpop.f32.mrf.mxu0
      %v2242 = vpop.f32.mrf.mxu0
      %v2243 = vadd.f32 0.0, %v2242
      %v2244 = vpop.f32.mrf.mxu0
      %2245 = vmatprep.mubr.bf16.mxu0 0
      %2246 = vmatmul.mubr.bf16.gmra.mxu0 %v2177
      %v2247 = vpop.f32.mrf.mxu0
      %v2248 = vadd.f32 0.0, %v2247
      %v2249 = vpop.f32.mrf.mxu0
      %v2250 = vpop.f32.mrf.mxu0
      %v2251 = vadd.f32 0.0, %v2250
      %v2252 = vpop.f32.mrf.mxu0
      %2253 = vmatprep.mubr.bf16.mxu0 0
      %2254 = vmatmul.mubr.bf16.gmra.mxu0 %v2180
      %v2255 = vpop.f32.mrf.mxu0
      %v2256 = vadd.f32 0.0, %v2255
      %v2257 = vpop.f32.mrf.mxu0
      %v2258 = vpop.f32.mrf.mxu0
      %v2259 = vadd.f32 0.0, %v2258
      %v2260 = vpop.f32.mrf.mxu0
      %2261 = vmatprep.mubr.bf16.mxu0 0
      %2262 = vmatmul.mubr.bf16.gmra.mxu0 %v2183
      %v2263 = vpop.f32.mrf.mxu0
      %v2264 = vadd.f32 0.0, %v2263
      %v2265 = vpop.f32.mrf.mxu0
      %v2266 = vpop.f32.mrf.mxu0
      %v2267 = vadd.f32 0.0, %v2266
      %v2268 = vpop.f32.mrf.mxu0
      %2269 = vmatprep.mubr.bf16.mxu0 0
      %2270 = vmatmul.mubr.bf16.gmra.mxu0 %v2186
      %v2271 = vpop.f32.mrf.mxu0
      %v2272 = vadd.f32 0.0, %v2271
      %v2273 = vpop.f32.mrf.mxu0
      %v2274 = vpop.f32.mrf.mxu0
      %v2275 = vadd.f32 0.0, %v2274
      %v2276 = vpop.f32.mrf.mxu0
      %2277 = vmatprep.mubr.bf16.mxu0 0
      %2278 = vmatmul.mubr.bf16.gmra.mxu0 %v2189
      %v2279 = vpop.f32.mrf.mxu0
      %v2280 = vadd.f32 0.0, %v2279
      %v2281 = vpop.f32.mrf.mxu0
      %v2282 = vpop.f32.mrf.mxu0
      %v2283 = vadd.f32 0.0, %v2282
      %v2284 = vpop.f32.mrf.mxu0
      %2285 = vmatprep.mubr.bf16.mxu0 0
      %2286 = vmatmul.mubr.bf16.gmra.mxu0 %v2192
      %v2287 = vpop.f32.mrf.mxu0
      %v2288 = vadd.f32 0.0, %v2287
      %v2289 = vpop.f32.mrf.mxu0
      %v2290 = vpop.f32.mrf.mxu0
      %v2291 = vadd.f32 0.0, %v2290
      %v2292 = vpop.f32.mrf.mxu0
      %2293 = vdwg.mxu0
      %v2294 = vadd.f32 %v2084, %v2232
      %v2295 = vadd.f32 %v2087, %v2235
      %v2296 = vadd.f32 %v2092, %v2240
      %v2297 = vadd.f32 %v2095, %v2243
      %v2298 = vadd.f32 %v2100, %v2248
      %v2299 = vadd.f32 %v2103, %v2251
      %v2300 = vadd.f32 %v2108, %v2256
      %v2301 = vadd.f32 %v2111, %v2259
      %v2302 = vadd.f32 %v2116, %v2264
      %v2303 = vadd.f32 %v2119, %v2267
      %v2304 = vadd.f32 %v2124, %v2272
      %v2305 = vadd.f32 %v2127, %v2275
      %v2306 = vadd.f32 %v2132, %v2280
      %v2307 = vadd.f32 %v2135, %v2283
      %v2308 = vadd.f32 %v2140, %v2288
      %v2309 = vadd.f32 %v2143, %v2291
      %v2318 = vunpack.c.l.b16 %v1219
      %v2319 = vunpack.c.l.b16 %v1220
      %v2320 = vunpack.c.l.b16 %v1221
      %v2321 = vunpack.c.l.b16 %v1222
      %v2322 = vunpack.c.l.b16 %v1223
      %v2323 = vunpack.c.l.b16 %v1224
      %v2324 = vunpack.c.l.b16 %v1225
      %v2325 = vunpack.c.l.b16 %v1226
      %v2326 = vunpack.c.l.b16 %v1227
      %v2327 = vunpack.c.l.b16 %v1228
      %v2328 = vunpack.c.l.b16 %v1229
      %v2329 = vunpack.c.l.b16 %v1230
      %v2330 = vunpack.c.l.b16 %v1231
      %v2331 = vunpack.c.l.b16 %v1232
      %v2332 = vunpack.c.l.b16 %v1233
      %v2333 = vunpack.c.l.b16 %v1234
      %v2334 = vpack.c.b16 %v2319, %v2318
      %v2335 = vpack.c.b16 %v2321, %v2320
      %v2336 = vpack.c.b16 %v2323, %v2322
      %v2337 = vpack.c.b16 %v2325, %v2324
      %v2338 = vpack.c.b16 %v2327, %v2326
      %v2339 = vpack.c.b16 %v2329, %v2328
      %v2340 = vpack.c.b16 %v2331, %v2330
      %v2341 = vpack.c.b16 %v2333, %v2332
      %v2343 = vunpack.c.l.b16 %v1832
      %v2344 = vpack.c.b16 %v2343, %v2343
      %v2345 = vrot.slane %v2344, 2
      %v2347 = vsel %vm1864, %v2334, 0
      %v2350 = vsel %vm1864, %v2335, 0
      %v2353 = vsel %vm1864, %v2336, 0
      %v2356 = vsel %vm1864, %v2337, 0
      %v2359 = vsel %vm1864, %v2338, 0
      %v2362 = vsel %vm1864, %v2339, 0
      %v2365 = vsel %vm1864, %v2340, 0
      %v2368 = vsel %vm1864, %v2341, 0
      %v2371 = vsel %vm1889, %v2345, 0
      %2373 = vmatprep.subr.bf16.mxu0 0
      %2374 = vmatpush1.bf16.msra.mxu0 0
      %2375 = vmatprep.subr.bf16.mxu0 0
      %2376 = vmatpush1.bf16.msra.mxu0 0
      %2377 = vmatprep.subr.bf16.mxu0 0
      %2378 = vmatpush1.bf16.msra.mxu0 0
      %2379 = vmatprep.subr.bf16.mxu0 0
      %2380 = vmatpush1.bf16.msra.mxu0 0
      %2381 = vmatprep.subr.bf16.mxu0 0
      %2382 = vmatpush1.bf16.msra.mxu0 0
      %2383 = vmatprep.subr.bf16.mxu0 0
      %2384 = vmatpush1.bf16.msra.mxu0 0
      %2385 = vmatprep.subr.bf16.mxu0 0
      %2386 = vmatpush1.bf16.msra.mxu0 0
      %2387 = vmatprep.subr.bf16.mxu0 0
      %2388 = vmatpush1.bf16.msra.mxu0 %v2371
      %2389 = vmatprep.subr.bf16.mxu0 0
      %2390 = vmatpush2.bf16.msra.mxu0 0
      %2391 = vmatprep.subr.bf16.mxu0 0
      %2392 = vmatpush2.bf16.msra.mxu0 0
      %2393 = vmatprep.subr.bf16.mxu0 0
      %2394 = vmatpush2.bf16.msra.mxu0 0
      %2395 = vmatprep.subr.bf16.mxu0 0
      %2396 = vmatpush2.bf16.msra.mxu0 0
      %2397 = vmatprep.subr.bf16.mxu0 0
      %2398 = vmatpush2.bf16.msra.mxu0 0
      %2399 = vmatprep.subr.bf16.mxu0 0
      %2400 = vmatpush2.bf16.msra.mxu0 0
      %2401 = vmatprep.subr.bf16.mxu0 0
      %2402 = vmatpush2.bf16.msra.mxu0 0
      %2403 = vmatprep.subr.bf16.mxu0 0
      %2404 = vmatpush2.bf16.msra.mxu0 0
      %2405 = vmatprep.mubr.bf16.mxu0 0
      %2406 = vmatmul.mubr.bf16.gmra.mxu0 %v2347
      %v2407 = vpop.f32.mrf.mxu0
      %v2408 = vadd.f32 0.0, %v2407
      %v2409 = vpop.f32.mrf.mxu0
      %v2410 = vpop.f32.mrf.mxu0
      %v2411 = vadd.f32 0.0, %v2410
      %v2412 = vpop.f32.mrf.mxu0
      %2413 = vmatprep.mubr.bf16.mxu0 0
      %2414 = vmatmul.mubr.bf16.gmra.mxu0 %v2350
      %v2415 = vpop.f32.mrf.mxu0
      %v2416 = vadd.f32 0.0, %v2415
      %v2417 = vpop.f32.mrf.mxu0
      %v2418 = vpop.f32.mrf.mxu0
      %v2419 = vadd.f32 0.0, %v2418
      %v2420 = vpop.f32.mrf.mxu0
      %2421 = vmatprep.mubr.bf16.mxu0 0
      %2422 = vmatmul.mubr.bf16.gmra.mxu0 %v2353
      %v2423 = vpop.f32.mrf.mxu0
      %v2424 = vadd.f32 0.0, %v2423
      %v2425 = vpop.f32.mrf.mxu0
      %v2426 = vpop.f32.mrf.mxu0
      %v2427 = vadd.f32 0.0, %v2426
      %v2428 = vpop.f32.mrf.mxu0
      %2429 = vmatprep.mubr.bf16.mxu0 0
      %2430 = vmatmul.mubr.bf16.gmra.mxu0 %v2356
      %v2431 = vpop.f32.mrf.mxu0
      %v2432 = vadd.f32 0.0, %v2431
      %v2433 = vpop.f32.mrf.mxu0
      %v2434 = vpop.f32.mrf.mxu0
      %v2435 = vadd.f32 0.0, %v2434
      %v2436 = vpop.f32.mrf.mxu0
      %2437 = vmatprep.mubr.bf16.mxu0 0
      %2438 = vmatmul.mubr.bf16.gmra.mxu0 %v2359
      %v2439 = vpop.f32.mrf.mxu0
      %v2440 = vadd.f32 0.0, %v2439
      %v2441 = vpop.f32.mrf.mxu0
      %v2442 = vpop.f32.mrf.mxu0
      %v2443 = vadd.f32 0.0, %v2442
      %v2444 = vpop.f32.mrf.mxu0
      %2445 = vmatprep.mubr.bf16.mxu0 0
      %2446 = vmatmul.mubr.bf16.gmra.mxu0 %v2362
      %v2447 = vpop.f32.mrf.mxu0
      %v2448 = vadd.f32 0.0, %v2447
      %v2449 = vpop.f32.mrf.mxu0
      %v2450 = vpop.f32.mrf.mxu0
      %v2451 = vadd.f32 0.0, %v2450
      %v2452 = vpop.f32.mrf.mxu0
      %2453 = vmatprep.mubr.bf16.mxu0 0
      %2454 = vmatmul.mubr.bf16.gmra.mxu0 %v2365
      %v2455 = vpop.f32.mrf.mxu0
      %v2456 = vadd.f32 0.0, %v2455
      %v2457 = vpop.f32.mrf.mxu0
      %v2458 = vpop.f32.mrf.mxu0
      %v2459 = vadd.f32 0.0, %v2458
      %v2460 = vpop.f32.mrf.mxu0
      %2461 = vmatprep.mubr.bf16.mxu0 0
      %2462 = vmatmul.mubr.bf16.gmra.mxu0 %v2368
      %v2463 = vpop.f32.mrf.mxu0
      %v2464 = vadd.f32 0.0, %v2463
      %v2465 = vpop.f32.mrf.mxu0
      %v2466 = vpop.f32.mrf.mxu0
      %v2467 = vadd.f32 0.0, %v2466
      %v2468 = vpop.f32.mrf.mxu0
      %2469 = vdwg.mxu0
      %v2470 = vadd.f32 %v2294, %v2408
      %v2471 = vadd.f32 %v2295, %v2411
      %v2472 = vadd.f32 %v2296, %v2416
      %v2473 = vadd.f32 %v2297, %v2419
      %v2474 = vadd.f32 %v2298, %v2424
      %v2475 = vadd.f32 %v2299, %v2427
      %v2476 = vadd.f32 %v2300, %v2432
      %v2477 = vadd.f32 %v2301, %v2435
      %v2478 = vadd.f32 %v2302, %v2440
      %v2479 = vadd.f32 %v2303, %v2443
      %v2480 = vadd.f32 %v2304, %v2448
      %v2481 = vadd.f32 %v2305, %v2451
      %v2482 = vadd.f32 %v2306, %v2456
      %v2483 = vadd.f32 %v2307, %v2459
      %v2484 = vadd.f32 %v2308, %v2464
      %v2485 = vadd.f32 %v2309, %v2467
      %v2486 = vunpack.c.l.b16 %v1256
      %v2487 = vunpack.c.l.b16 %v1266
      %v2488 = vunpack.c.l.b16 %v1280
      %v2489 = vunpack.c.l.b16 %v1290
      %v2490 = vunpack.c.l.b16 %v1304
      %v2491 = vunpack.c.l.b16 %v1314
      %v2492 = vunpack.c.l.b16 %v1328
      %v2493 = vunpack.c.l.b16 %v1338
      %v2494 = vunpack.c.l.b16 %v1352
      %v2495 = vunpack.c.l.b16 %v1362
      %v2496 = vunpack.c.l.b16 %v1376
      %v2497 = vunpack.c.l.b16 %v1386
      %v2498 = vunpack.c.l.b16 %v1400
      %v2499 = vunpack.c.l.b16 %v1410
      %v2500 = vunpack.c.l.b16 %v1424
      %v2501 = vunpack.c.l.b16 %v1434
      %v2502 = vpack.c.b16 %v2487, %v2486
      %v2503 = vpack.c.b16 %v2489, %v2488
      %v2504 = vpack.c.b16 %v2491, %v2490
      %v2505 = vpack.c.b16 %v2493, %v2492
      %v2506 = vpack.c.b16 %v2495, %v2494
      %v2507 = vpack.c.b16 %v2497, %v2496
      %v2508 = vpack.c.b16 %v2499, %v2498
      %v2509 = vpack.c.b16 %v2501, %v2500
      %v2511 = vsel %vm1864, %v2502, 0
      %v2514 = vsel %vm1864, %v2503, 0
      %v2517 = vsel %vm1864, %v2504, 0
      %v2520 = vsel %vm1864, %v2505, 0
      %v2523 = vsel %vm1864, %v2506, 0
      %v2526 = vsel %vm1864, %v2507, 0
      %v2529 = vsel %vm1864, %v2508, 0
      %v2532 = vsel %vm1864, %v2509, 0
      %v2535 = vsel %vm1889, %v1833, 0
      %2537 = vmatprep.subr.bf16.mxu0 0
      %2538 = vmatpush1.bf16.msra.mxu0 0
      %2539 = vmatprep.subr.bf16.mxu0 0
      %2540 = vmatpush1.bf16.msra.mxu0 0
      %2541 = vmatprep.subr.bf16.mxu0 0
      %2542 = vmatpush1.bf16.msra.mxu0 0
      %2543 = vmatprep.subr.bf16.mxu0 0
      %2544 = vmatpush1.bf16.msra.mxu0 0
      %2545 = vmatprep.subr.bf16.mxu0 0
      %2546 = vmatpush1.bf16.msra.mxu0 0
      %2547 = vmatprep.subr.bf16.mxu0 0
      %2548 = vmatpush1.bf16.msra.mxu0 0
      %2549 = vmatprep.subr.bf16.mxu0 0
      %2550 = vmatpush1.bf16.msra.mxu0 0
      %2551 = vmatprep.subr.bf16.mxu0 0
      %2552 = vmatpush1.bf16.msra.mxu0 %v2535
      %2553 = vmatprep.subr.bf16.mxu0 0
      %2554 = vmatpush2.bf16.msra.mxu0 0
      %2555 = vmatprep.subr.bf16.mxu0 0
      %2556 = vmatpush2.bf16.msra.mxu0 0
      %2557 = vmatprep.subr.bf16.mxu0 0
      %2558 = vmatpush2.bf16.msra.mxu0 0
      %2559 = vmatprep.subr.bf16.mxu0 0
      %2560 = vmatpush2.bf16.msra.mxu0 0
      %2561 = vmatprep.subr.bf16.mxu0 0
      %2562 = vmatpush2.bf16.msra.mxu0 0
      %2563 = vmatprep.subr.bf16.mxu0 0
      %2564 = vmatpush2.bf16.msra.mxu0 0
      %2565 = vmatprep.subr.bf16.mxu0 0
      %2566 = vmatpush2.bf16.msra.mxu0 0
      %2567 = vmatprep.subr.bf16.mxu0 0
      %2568 = vmatpush2.bf16.msra.mxu0 0
      %2569 = vmatprep.mubr.bf16.mxu0 0
      %2570 = vmatmul.mubr.bf16.gmra.mxu0 %v2511
      %v2571 = vpop.f32.mrf.mxu0
      %v2572 = vadd.f32 0.0, %v2571
      %v2573 = vpop.f32.mrf.mxu0
      %v2574 = vpop.f32.mrf.mxu0
      %v2575 = vadd.f32 0.0, %v2574
      %v2576 = vpop.f32.mrf.mxu0
      %2577 = vmatprep.mubr.bf16.mxu0 0
      %2578 = vmatmul.mubr.bf16.gmra.mxu0 %v2514
      %v2579 = vpop.f32.mrf.mxu0
      %v2580 = vadd.f32 0.0, %v2579
      %v2581 = vpop.f32.mrf.mxu0
      %v2582 = vpop.f32.mrf.mxu0
      %v2583 = vadd.f32 0.0, %v2582
      %v2584 = vpop.f32.mrf.mxu0
      %2585 = vmatprep.mubr.bf16.mxu0 0
      %2586 = vmatmul.mubr.bf16.gmra.mxu0 %v2517
      %v2587 = vpop.f32.mrf.mxu0
      %v2588 = vadd.f32 0.0, %v2587
      %v2589 = vpop.f32.mrf.mxu0
      %v2590 = vpop.f32.mrf.mxu0
      %v2591 = vadd.f32 0.0, %v2590
      %v2592 = vpop.f32.mrf.mxu0
      %2593 = vmatprep.mubr.bf16.mxu0 0
      %2594 = vmatmul.mubr.bf16.gmra.mxu0 %v2520
      %v2595 = vpop.f32.mrf.mxu0
      %v2596 = vadd.f32 0.0, %v2595
      %v2597 = vpop.f32.mrf.mxu0
      %v2598 = vpop.f32.mrf.mxu0
      %v2599 = vadd.f32 0.0, %v2598
      %v2600 = vpop.f32.mrf.mxu0
      %2601 = vmatprep.mubr.bf16.mxu0 0
      %2602 = vmatmul.mubr.bf16.gmra.mxu0 %v2523
      %v2603 = vpop.f32.mrf.mxu0
      %v2604 = vadd.f32 0.0, %v2603
      %v2605 = vpop.f32.mrf.mxu0
      %v2606 = vpop.f32.mrf.mxu0
      %v2607 = vadd.f32 0.0, %v2606
      %v2608 = vpop.f32.mrf.mxu0
      %2609 = vmatprep.mubr.bf16.mxu0 0
      %2610 = vmatmul.mubr.bf16.gmra.mxu0 %v2526
      %v2611 = vpop.f32.mrf.mxu0
      %v2612 = vadd.f32 0.0, %v2611
      %v2613 = vpop.f32.mrf.mxu0
      %v2614 = vpop.f32.mrf.mxu0
      %v2615 = vadd.f32 0.0, %v2614
      %v2616 = vpop.f32.mrf.mxu0
      %2617 = vmatprep.mubr.bf16.mxu0 0
      %2618 = vmatmul.mubr.bf16.gmra.mxu0 %v2529
      %v2619 = vpop.f32.mrf.mxu0
      %v2620 = vadd.f32 0.0, %v2619
      %v2621 = vpop.f32.mrf.mxu0
      %v2622 = vpop.f32.mrf.mxu0
      %v2623 = vadd.f32 0.0, %v2622
      %v2624 = vpop.f32.mrf.mxu0
      %2625 = vmatprep.mubr.bf16.mxu0 0
      %2626 = vmatmul.mubr.bf16.gmra.mxu0 %v2532
      %v2627 = vpop.f32.mrf.mxu0
      %v2628 = vadd.f32 0.0, %v2627
      %v2629 = vpop.f32.mrf.mxu0
      %v2630 = vpop.f32.mrf.mxu0
      %v2631 = vadd.f32 0.0, %v2630
      %v2632 = vpop.f32.mrf.mxu0
      %2633 = vdwg.mxu0
      %v2634 = vadd.f32 %v2470, %v2572
      %v2635 = vadd.f32 %v2471, %v2575
      %v2636 = vadd.f32 %v2472, %v2580
      %v2637 = vadd.f32 %v2473, %v2583
      %v2638 = vadd.f32 %v2474, %v2588
      %v2639 = vadd.f32 %v2475, %v2591
      %v2640 = vadd.f32 %v2476, %v2596
      %v2641 = vadd.f32 %v2477, %v2599
      %v2642 = vadd.f32 %v2478, %v2604
      %v2643 = vadd.f32 %v2479, %v2607
      %v2644 = vadd.f32 %v2480, %v2612
      %v2645 = vadd.f32 %v2481, %v2615
      %v2646 = vadd.f32 %v2482, %v2620
      %v2647 = vadd.f32 %v2483, %v2623
      %v2648 = vadd.f32 %v2484, %v2628
      %v2649 = vadd.f32 %v2485, %v2631
      %v2650 = vunpack.c.l.b16 %v1470
      %v2651 = vunpack.c.l.b16 %v1473
      %v2652 = vunpack.c.l.b16 %v1477
      %v2653 = vunpack.c.l.b16 %v1480
      %v2654 = vunpack.c.l.b16 %v1484
      %v2655 = vunpack.c.l.b16 %v1487
      %v2656 = vunpack.c.l.b16 %v1491
      %v2657 = vunpack.c.l.b16 %v1494
      %v2658 = vunpack.c.l.b16 %v1498
      %v2659 = vunpack.c.l.b16 %v1501
      %v2660 = vunpack.c.l.b16 %v1505
      %v2661 = vunpack.c.l.b16 %v1508
      %v2662 = vunpack.c.l.b16 %v1512
      %v2663 = vunpack.c.l.b16 %v1515
      %v2664 = vunpack.c.l.b16 %v1519
      %v2665 = vunpack.c.l.b16 %v1522
      %v2666 = vpack.c.b16 %v2651, %v2650
      %v2667 = vpack.c.b16 %v2653, %v2652
      %v2668 = vpack.c.b16 %v2655, %v2654
      %v2669 = vpack.c.b16 %v2657, %v2656
      %v2670 = vpack.c.b16 %v2659, %v2658
      %v2671 = vpack.c.b16 %v2661, %v2660
      %v2672 = vpack.c.b16 %v2663, %v2662
      %v2673 = vpack.c.b16 %v2665, %v2664
      %v2675 = vunpack.c.l.b16 %v1833
      %v2676 = vpack.c.b16 %v2675, %v2675
      %v2677 = vrot.slane %v2676, 2
      %v2679 = vsel %vm1864, %v2666, 0
      %v2682 = vsel %vm1864, %v2667, 0
      %v2685 = vsel %vm1864, %v2668, 0
      %v2688 = vsel %vm1864, %v2669, 0
      %v2691 = vsel %vm1864, %v2670, 0
      %v2694 = vsel %vm1864, %v2671, 0
      %v2697 = vsel %vm1864, %v2672, 0
      %v2700 = vsel %vm1864, %v2673, 0
      %v2703 = vsel %vm1889, %v2677, 0
      %2705 = vmatprep.subr.bf16.mxu0 0
      %2706 = vmatpush1.bf16.msra.mxu0 0
      %2707 = vmatprep.subr.bf16.mxu0 0
      %2708 = vmatpush1.bf16.msra.mxu0 0
      %2709 = vmatprep.subr.bf16.mxu0 0
      %2710 = vmatpush1.bf16.msra.mxu0 0
      %2711 = vmatprep.subr.bf16.mxu0 0
      %2712 = vmatpush1.bf16.msra.mxu0 0
      %2713 = vmatprep.subr.bf16.mxu0 0
      %2714 = vmatpush1.bf16.msra.mxu0 0
      %2715 = vmatprep.subr.bf16.mxu0 0
      %2716 = vmatpush1.bf16.msra.mxu0 0
      %2717 = vmatprep.subr.bf16.mxu0 0
      %2718 = vmatpush1.bf16.msra.mxu0 0
      %2719 = vmatprep.subr.bf16.mxu0 0
      %2720 = vmatpush1.bf16.msra.mxu0 %v2703
      %2721 = vmatprep.subr.bf16.mxu0 0
      %2722 = vmatpush2.bf16.msra.mxu0 0
      %2723 = vmatprep.subr.bf16.mxu0 0
      %2724 = vmatpush2.bf16.msra.mxu0 0
      %2725 = vmatprep.subr.bf16.mxu0 0
      %2726 = vmatpush2.bf16.msra.mxu0 0
      %2727 = vmatprep.subr.bf16.mxu0 0
      %2728 = vmatpush2.bf16.msra.mxu0 0
      %2729 = vmatprep.subr.bf16.mxu0 0
      %2730 = vmatpush2.bf16.msra.mxu0 0
      %2731 = vmatprep.subr.bf16.mxu0 0
      %2732 = vmatpush2.bf16.msra.mxu0 0
      %2733 = vmatprep.subr.bf16.mxu0 0
      %2734 = vmatpush2.bf16.msra.mxu0 0
      %2735 = vmatprep.subr.bf16.mxu0 0
      %2736 = vmatpush2.bf16.msra.mxu0 0
      %2737 = vmatprep.mubr.bf16.mxu0 0
      %2738 = vmatmul.mubr.bf16.gmra.mxu0 %v2679
      %v2739 = vpop.f32.mrf.mxu0
      %v2740 = vadd.f32 0.0, %v2739
      %v2741 = vpop.f32.mrf.mxu0
      %v2742 = vpop.f32.mrf.mxu0
      %v2743 = vadd.f32 0.0, %v2742
      %v2744 = vpop.f32.mrf.mxu0
      %2745 = vmatprep.mubr.bf16.mxu0 0
      %2746 = vmatmul.mubr.bf16.gmra.mxu0 %v2682
      %v2747 = vpop.f32.mrf.mxu0
      %v2748 = vadd.f32 0.0, %v2747
      %v2749 = vpop.f32.mrf.mxu0
      %v2750 = vpop.f32.mrf.mxu0
      %v2751 = vadd.f32 0.0, %v2750
      %v2752 = vpop.f32.mrf.mxu0
      %2753 = vmatprep.mubr.bf16.mxu0 0
      %2754 = vmatmul.mubr.bf16.gmra.mxu0 %v2685
      %v2755 = vpop.f32.mrf.mxu0
      %v2756 = vadd.f32 0.0, %v2755
      %v2757 = vpop.f32.mrf.mxu0
      %v2758 = vpop.f32.mrf.mxu0
      %v2759 = vadd.f32 0.0, %v2758
      %v2760 = vpop.f32.mrf.mxu0
      %2761 = vmatprep.mubr.bf16.mxu0 0
      %2762 = vmatmul.mubr.bf16.gmra.mxu0 %v2688
      %v2763 = vpop.f32.mrf.mxu0
      %v2764 = vadd.f32 0.0, %v2763
      %v2765 = vpop.f32.mrf.mxu0
      %v2766 = vpop.f32.mrf.mxu0
      %v2767 = vadd.f32 0.0, %v2766
      %v2768 = vpop.f32.mrf.mxu0
      %2769 = vmatprep.mubr.bf16.mxu0 0
      %2770 = vmatmul.mubr.bf16.gmra.mxu0 %v2691
      %v2771 = vpop.f32.mrf.mxu0
      %v2772 = vadd.f32 0.0, %v2771
      %v2773 = vpop.f32.mrf.mxu0
      %v2774 = vpop.f32.mrf.mxu0
      %v2775 = vadd.f32 0.0, %v2774
      %v2776 = vpop.f32.mrf.mxu0
      %2777 = vmatprep.mubr.bf16.mxu0 0
      %2778 = vmatmul.mubr.bf16.gmra.mxu0 %v2694
      %v2779 = vpop.f32.mrf.mxu0
      %v2780 = vadd.f32 0.0, %v2779
      %v2781 = vpop.f32.mrf.mxu0
      %v2782 = vpop.f32.mrf.mxu0
      %v2783 = vadd.f32 0.0, %v2782
      %v2784 = vpop.f32.mrf.mxu0
      %2785 = vmatprep.mubr.bf16.mxu0 0
      %2786 = vmatmul.mubr.bf16.gmra.mxu0 %v2697
      %v2787 = vpop.f32.mrf.mxu0
      %v2788 = vadd.f32 0.0, %v2787
      %v2789 = vpop.f32.mrf.mxu0
      %v2790 = vpop.f32.mrf.mxu0
      %v2791 = vadd.f32 0.0, %v2790
      %v2792 = vpop.f32.mrf.mxu0
      %2793 = vmatprep.mubr.bf16.mxu0 0
      %2794 = vmatmul.mubr.bf16.gmra.mxu0 %v2700
      %v2795 = vpop.f32.mrf.mxu0
      %v2796 = vadd.f32 0.0, %v2795
      %v2797 = vpop.f32.mrf.mxu0
      %v2798 = vpop.f32.mrf.mxu0
      %v2799 = vadd.f32 0.0, %v2798
      %v2800 = vpop.f32.mrf.mxu0
      %2801 = vdwg.mxu0
      %v2802 = vadd.f32 %v2634, %v2740
      %v2803 = vadd.f32 %v2635, %v2743
      %v2804 = vadd.f32 %v2636, %v2748
      %v2805 = vadd.f32 %v2637, %v2751
      %v2806 = vadd.f32 %v2638, %v2756
      %v2807 = vadd.f32 %v2639, %v2759
      %v2808 = vadd.f32 %v2640, %v2764
      %v2809 = vadd.f32 %v2641, %v2767
      %v2810 = vadd.f32 %v2642, %v2772
      %v2811 = vadd.f32 %v2643, %v2775
      %v2812 = vadd.f32 %v2644, %v2780
      %v2813 = vadd.f32 %v2645, %v2783
      %v2814 = vadd.f32 %v2646, %v2788
      %v2815 = vadd.f32 %v2647, %v2791
      %v2816 = vadd.f32 %v2648, %v2796
      %v2817 = vadd.f32 %v2649, %v2799
      %v2826 = vunpack.c.l.b16 %v1527
      %v2827 = vunpack.c.l.b16 %v1528
      %v2828 = vunpack.c.l.b16 %v1529
      %v2829 = vunpack.c.l.b16 %v1530
      %v2830 = vunpack.c.l.b16 %v1531
      %v2831 = vunpack.c.l.b16 %v1532
      %v2832 = vunpack.c.l.b16 %v1533
      %v2833 = vunpack.c.l.b16 %v1534
      %v2834 = vunpack.c.l.b16 %v1535
      %v2835 = vunpack.c.l.b16 %v1536
      %v2836 = vunpack.c.l.b16 %v1537
      %v2837 = vunpack.c.l.b16 %v1538
      %v2838 = vunpack.c.l.b16 %v1539
      %v2839 = vunpack.c.l.b16 %v1540
      %v2840 = vunpack.c.l.b16 %v1541
      %v2841 = vunpack.c.l.b16 %v1542
      %v2842 = vpack.c.b16 %v2827, %v2826
      %v2843 = vpack.c.b16 %v2829, %v2828
      %v2844 = vpack.c.b16 %v2831, %v2830
      %v2845 = vpack.c.b16 %v2833, %v2832
      %v2846 = vpack.c.b16 %v2835, %v2834
      %v2847 = vpack.c.b16 %v2837, %v2836
      %v2848 = vpack.c.b16 %v2839, %v2838
      %v2849 = vpack.c.b16 %v2841, %v2840
      %v2851 = vsel %vm1864, %v2842, 0
      %v2854 = vsel %vm1864, %v2843, 0
      %v2857 = vsel %vm1864, %v2844, 0
      %v2860 = vsel %vm1864, %v2845, 0
      %v2863 = vsel %vm1864, %v2846, 0
      %v2866 = vsel %vm1864, %v2847, 0
      %v2869 = vsel %vm1864, %v2848, 0
      %v2872 = vsel %vm1864, %v2849, 0
      %v2875 = vsel %vm1889, %v1834, 0
      %2877 = vmatprep.subr.bf16.mxu0 0
      %2878 = vmatpush1.bf16.msra.mxu0 0
      %2879 = vmatprep.subr.bf16.mxu0 0
      %2880 = vmatpush1.bf16.msra.mxu0 0
      %2881 = vmatprep.subr.bf16.mxu0 0
      %2882 = vmatpush1.bf16.msra.mxu0 0
      %2883 = vmatprep.subr.bf16.mxu0 0
      %2884 = vmatpush1.bf16.msra.mxu0 0
      %2885 = vmatprep.subr.bf16.mxu0 0
      %2886 = vmatpush1.bf16.msra.mxu0 0
      %2887 = vmatprep.subr.bf16.mxu0 0
      %2888 = vmatpush1.bf16.msra.mxu0 0
      %2889 = vmatprep.subr.bf16.mxu0 0
      %2890 = vmatpush1.bf16.msra.mxu0 0
      %2891 = vmatprep.subr.bf16.mxu0 0
      %2892 = vmatpush1.bf16.msra.mxu0 %v2875
      %2893 = vmatprep.subr.bf16.mxu0 0
      %2894 = vmatpush2.bf16.msra.mxu0 0
      %2895 = vmatprep.subr.bf16.mxu0 0
      %2896 = vmatpush2.bf16.msra.mxu0 0
      %2897 = vmatprep.subr.bf16.mxu0 0
      %2898 = vmatpush2.bf16.msra.mxu0 0
      %2899 = vmatprep.subr.bf16.mxu0 0
      %2900 = vmatpush2.bf16.msra.mxu0 0
      %2901 = vmatprep.subr.bf16.mxu0 0
      %2902 = vmatpush2.bf16.msra.mxu0 0
      %2903 = vmatprep.subr.bf16.mxu0 0
      %2904 = vmatpush2.bf16.msra.mxu0 0
      %2905 = vmatprep.subr.bf16.mxu0 0
      %2906 = vmatpush2.bf16.msra.mxu0 0
      %2907 = vmatprep.subr.bf16.mxu0 0
      %2908 = vmatpush2.bf16.msra.mxu0 0
      %2909 = vmatprep.mubr.bf16.mxu0 0
      %2910 = vmatmul.mubr.bf16.gmra.mxu0 %v2851
      %v2911 = vpop.f32.mrf.mxu0
      %v2912 = vadd.f32 0.0, %v2911
      %v2913 = vpop.f32.mrf.mxu0
      %v2914 = vpop.f32.mrf.mxu0
      %v2915 = vadd.f32 0.0, %v2914
      %v2916 = vpop.f32.mrf.mxu0
      %2917 = vmatprep.mubr.bf16.mxu0 0
      %2918 = vmatmul.mubr.bf16.gmra.mxu0 %v2854
      %v2919 = vpop.f32.mrf.mxu0
      %v2920 = vadd.f32 0.0, %v2919
      %v2921 = vpop.f32.mrf.mxu0
      %v2922 = vpop.f32.mrf.mxu0
      %v2923 = vadd.f32 0.0, %v2922
      %v2924 = vpop.f32.mrf.mxu0
      %2925 = vmatprep.mubr.bf16.mxu0 0
      %2926 = vmatmul.mubr.bf16.gmra.mxu0 %v2857
      %v2927 = vpop.f32.mrf.mxu0
      %v2928 = vadd.f32 0.0, %v2927
      %v2929 = vpop.f32.mrf.mxu0
      %v2930 = vpop.f32.mrf.mxu0
      %v2931 = vadd.f32 0.0, %v2930
      %v2932 = vpop.f32.mrf.mxu0
      %2933 = vmatprep.mubr.bf16.mxu0 0
      %2934 = vmatmul.mubr.bf16.gmra.mxu0 %v2860
      %v2935 = vpop.f32.mrf.mxu0
      %v2936 = vadd.f32 0.0, %v2935
      %v2937 = vpop.f32.mrf.mxu0
      %v2938 = vpop.f32.mrf.mxu0
      %v2939 = vadd.f32 0.0, %v2938
      %v2940 = vpop.f32.mrf.mxu0
      %2941 = vmatprep.mubr.bf16.mxu0 0
      %2942 = vmatmul.mubr.bf16.gmra.mxu0 %v2863
      %v2943 = vpop.f32.mrf.mxu0
      %v2944 = vadd.f32 0.0, %v2943
      %v2945 = vpop.f32.mrf.mxu0
      %v2946 = vpop.f32.mrf.mxu0
      %v2947 = vadd.f32 0.0, %v2946
      %v2948 = vpop.f32.mrf.mxu0
      %2949 = vmatprep.mubr.bf16.mxu0 0
      %2950 = vmatmul.mubr.bf16.gmra.mxu0 %v2866
      %v2951 = vpop.f32.mrf.mxu0
      %v2952 = vadd.f32 0.0, %v2951
      %v2953 = vpop.f32.mrf.mxu0
      %v2954 = vpop.f32.mrf.mxu0
      %v2955 = vadd.f32 0.0, %v2954
      %v2956 = vpop.f32.mrf.mxu0
      %2957 = vmatprep.mubr.bf16.mxu0 0
      %2958 = vmatmul.mubr.bf16.gmra.mxu0 %v2869
      %v2959 = vpop.f32.mrf.mxu0
      %v2960 = vadd.f32 0.0, %v2959
      %v2961 = vpop.f32.mrf.mxu0
      %v2962 = vpop.f32.mrf.mxu0
      %v2963 = vadd.f32 0.0, %v2962
      %v2964 = vpop.f32.mrf.mxu0
      %2965 = vmatprep.mubr.bf16.mxu0 0
      %2966 = vmatmul.mubr.bf16.gmra.mxu0 %v2872
      %v2967 = vpop.f32.mrf.mxu0
      %v2968 = vadd.f32 0.0, %v2967
      %v2969 = vpop.f32.mrf.mxu0
      %v2970 = vpop.f32.mrf.mxu0
      %v2971 = vadd.f32 0.0, %v2970
      %v2972 = vpop.f32.mrf.mxu0
      %2973 = vdwg.mxu0
      %v2974 = vadd.f32 %v2802, %v2912
      %v2975 = vadd.f32 %v2803, %v2915
      %v2976 = vadd.f32 %v2804, %v2920
      %v2977 = vadd.f32 %v2805, %v2923
      %v2978 = vadd.f32 %v2806, %v2928
      %v2979 = vadd.f32 %v2807, %v2931
      %v2980 = vadd.f32 %v2808, %v2936
      %v2981 = vadd.f32 %v2809, %v2939
      %v2982 = vadd.f32 %v2810, %v2944
      %v2983 = vadd.f32 %v2811, %v2947
      %v2984 = vadd.f32 %v2812, %v2952
      %v2985 = vadd.f32 %v2813, %v2955
      %v2986 = vadd.f32 %v2814, %v2960
      %v2987 = vadd.f32 %v2815, %v2963
      %v2988 = vadd.f32 %v2816, %v2968
      %v2989 = vadd.f32 %v2817, %v2971
      %v2990 = vunpack.c.l.b16 %v1564
      %v2991 = vunpack.c.l.b16 %v1574
      %v2992 = vunpack.c.l.b16 %v1588
      %v2993 = vunpack.c.l.b16 %v1598
      %v2994 = vunpack.c.l.b16 %v1612
      %v2995 = vunpack.c.l.b16 %v1622
      %v2996 = vunpack.c.l.b16 %v1636
      %v2997 = vunpack.c.l.b16 %v1646
      %v2998 = vunpack.c.l.b16 %v1660
      %v2999 = vunpack.c.l.b16 %v1670
      %v3000 = vunpack.c.l.b16 %v1684
      %v3001 = vunpack.c.l.b16 %v1694
      %v3002 = vunpack.c.l.b16 %v1708
      %v3003 = vunpack.c.l.b16 %v1718
      %v3004 = vunpack.c.l.b16 %v1732
      %v3005 = vunpack.c.l.b16 %v1742
      %v3006 = vpack.c.b16 %v2991, %v2990
      %v3007 = vpack.c.b16 %v2993, %v2992
      %v3008 = vpack.c.b16 %v2995, %v2994
      %v3009 = vpack.c.b16 %v2997, %v2996
      %v3010 = vpack.c.b16 %v2999, %v2998
      %v3011 = vpack.c.b16 %v3001, %v3000
      %v3012 = vpack.c.b16 %v3003, %v3002
      %v3013 = vpack.c.b16 %v3005, %v3004
      %v3015 = vunpack.c.l.b16 %v1834
      %v3016 = vpack.c.b16 %v3015, %v3015
      %v3017 = vrot.slane %v3016, 2
      %v3019 = vsel %vm1864, %v3006, 0
      %v3022 = vsel %vm1864, %v3007, 0
      %v3025 = vsel %vm1864, %v3008, 0
      %v3028 = vsel %vm1864, %v3009, 0
      %v3031 = vsel %vm1864, %v3010, 0
      %v3034 = vsel %vm1864, %v3011, 0
      %v3037 = vsel %vm1864, %v3012, 0
      %v3040 = vsel %vm1864, %v3013, 0
      %v3043 = vsel %vm1889, %v3017, 0
      %3045 = vmatprep.subr.bf16.mxu0 0
      %3046 = vmatpush1.bf16.msra.mxu0 0
      %3047 = vmatprep.subr.bf16.mxu0 0
      %3048 = vmatpush1.bf16.msra.mxu0 0
      %3049 = vmatprep.subr.bf16.mxu0 0
      %3050 = vmatpush1.bf16.msra.mxu0 0
      %3051 = vmatprep.subr.bf16.mxu0 0
      %3052 = vmatpush1.bf16.msra.mxu0 0
      %3053 = vmatprep.subr.bf16.mxu0 0
      %3054 = vmatpush1.bf16.msra.mxu0 0
      %3055 = vmatprep.subr.bf16.mxu0 0
      %3056 = vmatpush1.bf16.msra.mxu0 0
      %3057 = vmatprep.subr.bf16.mxu0 0
      %3058 = vmatpush1.bf16.msra.mxu0 0
      %3059 = vmatprep.subr.bf16.mxu0 0
      %3060 = vmatpush1.bf16.msra.mxu0 %v3043
      %3061 = vmatprep.subr.bf16.mxu0 0
      %3062 = vmatpush2.bf16.msra.mxu0 0
      %3063 = vmatprep.subr.bf16.mxu0 0
      %3064 = vmatpush2.bf16.msra.mxu0 0
      %3065 = vmatprep.subr.bf16.mxu0 0
      %3066 = vmatpush2.bf16.msra.mxu0 0
      %3067 = vmatprep.subr.bf16.mxu0 0
      %3068 = vmatpush2.bf16.msra.mxu0 0
      %3069 = vmatprep.subr.bf16.mxu0 0
      %3070 = vmatpush2.bf16.msra.mxu0 0
      %3071 = vmatprep.subr.bf16.mxu0 0
      %3072 = vmatpush2.bf16.msra.mxu0 0
      %3073 = vmatprep.subr.bf16.mxu0 0
      %3074 = vmatpush2.bf16.msra.mxu0 0
      %3075 = vmatprep.subr.bf16.mxu0 0
      %3076 = vmatpush2.bf16.msra.mxu0 0
      %3077 = vmatprep.mubr.bf16.mxu0 0
      %3078 = vmatmul.mubr.bf16.gmra.mxu0 %v3019
      %v3079 = vpop.f32.mrf.mxu0
      %v3080 = vadd.f32 0.0, %v3079
      %v3081 = vpop.f32.mrf.mxu0
      %v3082 = vpop.f32.mrf.mxu0
      %v3083 = vadd.f32 0.0, %v3082
      %v3084 = vpop.f32.mrf.mxu0
      %3085 = vmatprep.mubr.bf16.mxu0 0
      %3086 = vmatmul.mubr.bf16.gmra.mxu0 %v3022
      %v3087 = vpop.f32.mrf.mxu0
      %v3088 = vadd.f32 0.0, %v3087
      %v3089 = vpop.f32.mrf.mxu0
      %v3090 = vpop.f32.mrf.mxu0
      %v3091 = vadd.f32 0.0, %v3090
      %v3092 = vpop.f32.mrf.mxu0
      %3093 = vmatprep.mubr.bf16.mxu0 0
      %3094 = vmatmul.mubr.bf16.gmra.mxu0 %v3025
      %v3095 = vpop.f32.mrf.mxu0
      %v3096 = vadd.f32 0.0, %v3095
      %v3097 = vpop.f32.mrf.mxu0
      %v3098 = vpop.f32.mrf.mxu0
      %v3099 = vadd.f32 0.0, %v3098
      %v3100 = vpop.f32.mrf.mxu0
      %3101 = vmatprep.mubr.bf16.mxu0 0
      %3102 = vmatmul.mubr.bf16.gmra.mxu0 %v3028
      %v3103 = vpop.f32.mrf.mxu0
      %v3104 = vadd.f32 0.0, %v3103
      %v3105 = vpop.f32.mrf.mxu0
      %v3106 = vpop.f32.mrf.mxu0
      %v3107 = vadd.f32 0.0, %v3106
      %v3108 = vpop.f32.mrf.mxu0
      %3109 = vmatprep.mubr.bf16.mxu0 0
      %3110 = vmatmul.mubr.bf16.gmra.mxu0 %v3031
      %v3111 = vpop.f32.mrf.mxu0
      %v3112 = vadd.f32 0.0, %v3111
      %v3113 = vpop.f32.mrf.mxu0
      %v3114 = vpop.f32.mrf.mxu0
      %v3115 = vadd.f32 0.0, %v3114
      %v3116 = vpop.f32.mrf.mxu0
      %3117 = vmatprep.mubr.bf16.mxu0 0
      %3118 = vmatmul.mubr.bf16.gmra.mxu0 %v3034
      %v3119 = vpop.f32.mrf.mxu0
      %v3120 = vadd.f32 0.0, %v3119
      %v3121 = vpop.f32.mrf.mxu0
      %v3122 = vpop.f32.mrf.mxu0
      %v3123 = vadd.f32 0.0, %v3122
      %v3124 = vpop.f32.mrf.mxu0
      %3125 = vmatprep.mubr.bf16.mxu0 0
      %3126 = vmatmul.mubr.bf16.gmra.mxu0 %v3037
      %v3127 = vpop.f32.mrf.mxu0
      %v3128 = vadd.f32 0.0, %v3127
      %v3129 = vpop.f32.mrf.mxu0
      %v3130 = vpop.f32.mrf.mxu0
      %v3131 = vadd.f32 0.0, %v3130
      %v3132 = vpop.f32.mrf.mxu0
      %3133 = vmatprep.mubr.bf16.mxu0 0
      %3134 = vmatmul.mubr.bf16.gmra.mxu0 %v3040
      %v3135 = vpop.f32.mrf.mxu0
      %v3136 = vadd.f32 0.0, %v3135
      %v3137 = vpop.f32.mrf.mxu0
      %v3138 = vpop.f32.mrf.mxu0
      %v3139 = vadd.f32 0.0, %v3138
      %v3140 = vpop.f32.mrf.mxu0
      %3141 = vdwg.mxu0
      %v3142 = vadd.f32 %v2974, %v3080
      %v3143 = vadd.f32 %v2975, %v3083
      %v3144 = vadd.f32 %v2976, %v3088
      %v3145 = vadd.f32 %v2977, %v3091
      %v3146 = vadd.f32 %v2978, %v3096
      %v3147 = vadd.f32 %v2979, %v3099
      %v3148 = vadd.f32 %v2980, %v3104
      %v3149 = vadd.f32 %v2981, %v3107
      %v3150 = vadd.f32 %v2982, %v3112
      %v3151 = vadd.f32 %v2983, %v3115
      %v3152 = vadd.f32 %v2984, %v3120
      %v3153 = vadd.f32 %v2985, %v3123
      %v3154 = vadd.f32 %v2986, %v3128
      %v3155 = vadd.f32 %v2987, %v3131
      %v3156 = vadd.f32 %v2988, %v3136
      %v3157 = vadd.f32 %v2989, %v3139
      %v3158 = vunpack.c.l.b16 %v1778
      %v3159 = vunpack.c.l.b16 %v1781
      %v3160 = vunpack.c.l.b16 %v1785
      %v3161 = vunpack.c.l.b16 %v1788
      %v3162 = vunpack.c.l.b16 %v1792
      %v3163 = vunpack.c.l.b16 %v1795
      %v3164 = vunpack.c.l.b16 %v1799
      %v3165 = vunpack.c.l.b16 %v1802
      %v3166 = vunpack.c.l.b16 %v1806
      %v3167 = vunpack.c.l.b16 %v1809
      %v3168 = vunpack.c.l.b16 %v1813
      %v3169 = vunpack.c.l.b16 %v1816
      %v3170 = vunpack.c.l.b16 %v1820
      %v3171 = vunpack.c.l.b16 %v1823
      %v3172 = vunpack.c.l.b16 %v1827
      %v3173 = vunpack.c.l.b16 %v1830
      %v3174 = vpack.c.b16 %v3159, %v3158
      %v3175 = vpack.c.b16 %v3161, %v3160
      %v3176 = vpack.c.b16 %v3163, %v3162
      %v3177 = vpack.c.b16 %v3165, %v3164
      %v3178 = vpack.c.b16 %v3167, %v3166
      %v3179 = vpack.c.b16 %v3169, %v3168
      %v3180 = vpack.c.b16 %v3171, %v3170
      %v3181 = vpack.c.b16 %v3173, %v3172
      %v3183 = vsel %vm1864, %v3174, 0
      %v3186 = vsel %vm1864, %v3175, 0
      %v3189 = vsel %vm1864, %v3176, 0
      %v3192 = vsel %vm1864, %v3177, 0
      %v3195 = vsel %vm1864, %v3178, 0
      %v3198 = vsel %vm1864, %v3179, 0
      %v3201 = vsel %vm1864, %v3180, 0
      %v3204 = vsel %vm1864, %v3181, 0
      %v3207 = vsel %vm1889, %v1835, 0
      %3209 = vmatprep.subr.bf16.mxu0 0
      %3210 = vmatpush1.bf16.msra.mxu0 0
      %3211 = vmatprep.subr.bf16.mxu0 0
      %3212 = vmatpush1.bf16.msra.mxu0 0
      %3213 = vmatprep.subr.bf16.mxu0 0
      %3214 = vmatpush1.bf16.msra.mxu0 0
      %3215 = vmatprep.subr.bf16.mxu0 0
      %3216 = vmatpush1.bf16.msra.mxu0 0
      %3217 = vmatprep.subr.bf16.mxu0 0
      %3218 = vmatpush1.bf16.msra.mxu0 0
      %3219 = vmatprep.subr.bf16.mxu0 0
      %3220 = vmatpush1.bf16.msra.mxu0 0
      %3221 = vmatprep.subr.bf16.mxu0 0
      %3222 = vmatpush1.bf16.msra.mxu0 0
      %3223 = vmatprep.subr.bf16.mxu0 0
      %3224 = vmatpush1.bf16.msra.mxu0 %v3207
      %3225 = vmatprep.subr.bf16.mxu0 0
      %3226 = vmatpush2.bf16.msra.mxu0 0
      %3227 = vmatprep.subr.bf16.mxu0 0
      %3228 = vmatpush2.bf16.msra.mxu0 0
      %3229 = vmatprep.subr.bf16.mxu0 0
      %3230 = vmatpush2.bf16.msra.mxu0 0
      %3231 = vmatprep.subr.bf16.mxu0 0
      %3232 = vmatpush2.bf16.msra.mxu0 0
      %3233 = vmatprep.subr.bf16.mxu0 0
      %3234 = vmatpush2.bf16.msra.mxu0 0
      %3235 = vmatprep.subr.bf16.mxu0 0
      %3236 = vmatpush2.bf16.msra.mxu0 0
      %3237 = vmatprep.subr.bf16.mxu0 0
      %3238 = vmatpush2.bf16.msra.mxu0 0
      %3239 = vmatprep.subr.bf16.mxu0 0
      %3240 = vmatpush2.bf16.msra.mxu0 0
      %3241 = vmatprep.mubr.bf16.mxu0 0
      %3242 = vmatmul.mubr.bf16.gmra.mxu0 %v3183
      %v3243 = vpop.f32.mrf.mxu0
      %v3244 = vadd.f32 0.0, %v3243
      %v3245 = vpop.f32.mrf.mxu0
      %v3246 = vpop.f32.mrf.mxu0
      %v3247 = vadd.f32 0.0, %v3246
      %v3248 = vpop.f32.mrf.mxu0
      %3249 = vmatprep.mubr.bf16.mxu0 0
      %3250 = vmatmul.mubr.bf16.gmra.mxu0 %v3186
      %v3251 = vpop.f32.mrf.mxu0
      %v3252 = vadd.f32 0.0, %v3251
      %v3253 = vpop.f32.mrf.mxu0
      %v3254 = vpop.f32.mrf.mxu0
      %v3255 = vadd.f32 0.0, %v3254
      %v3256 = vpop.f32.mrf.mxu0
      %3257 = vmatprep.mubr.bf16.mxu0 0
      %3258 = vmatmul.mubr.bf16.gmra.mxu0 %v3189
      %v3259 = vpop.f32.mrf.mxu0
      %v3260 = vadd.f32 0.0, %v3259
      %v3261 = vpop.f32.mrf.mxu0
      %v3262 = vpop.f32.mrf.mxu0
      %v3263 = vadd.f32 0.0, %v3262
      %v3264 = vpop.f32.mrf.mxu0
      %3265 = vmatprep.mubr.bf16.mxu0 0
      %3266 = vmatmul.mubr.bf16.gmra.mxu0 %v3192
      %v3267 = vpop.f32.mrf.mxu0
      %v3268 = vadd.f32 0.0, %v3267
      %v3269 = vpop.f32.mrf.mxu0
      %v3270 = vpop.f32.mrf.mxu0
      %v3271 = vadd.f32 0.0, %v3270
      %v3272 = vpop.f32.mrf.mxu0
      %3273 = vmatprep.mubr.bf16.mxu0 0
      %3274 = vmatmul.mubr.bf16.gmra.mxu0 %v3195
      %v3275 = vpop.f32.mrf.mxu0
      %v3276 = vadd.f32 0.0, %v3275
      %v3277 = vpop.f32.mrf.mxu0
      %v3278 = vpop.f32.mrf.mxu0
      %v3279 = vadd.f32 0.0, %v3278
      %v3280 = vpop.f32.mrf.mxu0
      %3281 = vmatprep.mubr.bf16.mxu0 0
      %3282 = vmatmul.mubr.bf16.gmra.mxu0 %v3198
      %v3283 = vpop.f32.mrf.mxu0
      %v3284 = vadd.f32 0.0, %v3283
      %v3285 = vpop.f32.mrf.mxu0
      %v3286 = vpop.f32.mrf.mxu0
      %v3287 = vadd.f32 0.0, %v3286
      %v3288 = vpop.f32.mrf.mxu0
      %3289 = vmatprep.mubr.bf16.mxu0 0
      %3290 = vmatmul.mubr.bf16.gmra.mxu0 %v3201
      %v3291 = vpop.f32.mrf.mxu0
      %v3292 = vadd.f32 0.0, %v3291
      %v3293 = vpop.f32.mrf.mxu0
      %v3294 = vpop.f32.mrf.mxu0
      %v3295 = vadd.f32 0.0, %v3294
      %v3296 = vpop.f32.mrf.mxu0
      %3297 = vmatprep.mubr.bf16.mxu0 0
      %3298 = vmatmul.mubr.bf16.gmra.mxu0 %v3204
      %v3299 = vpop.f32.mrf.mxu0
      %v3300 = vadd.f32 0.0, %v3299
      %v3301 = vpop.f32.mrf.mxu0
      %v3302 = vpop.f32.mrf.mxu0
      %v3303 = vadd.f32 0.0, %v3302
      %v3304 = vpop.f32.mrf.mxu0
      %3305 = vdwg.mxu0
      %v3306 = vadd.f32 %v3142, %v3244
      %v3307 = vadd.f32 %v3143, %v3247
      %v3308 = vadd.f32 %v3144, %v3252
      %v3309 = vadd.f32 %v3145, %v3255
      %v3310 = vadd.f32 %v3146, %v3260
      %v3311 = vadd.f32 %v3147, %v3263
      %v3312 = vadd.f32 %v3148, %v3268
      %v3313 = vadd.f32 %v3149, %v3271
      %v3314 = vadd.f32 %v3150, %v3276
      %v3315 = vadd.f32 %v3151, %v3279
      %v3316 = vadd.f32 %v3152, %v3284
      %v3317 = vadd.f32 %v3153, %v3287
      %v3318 = vadd.f32 %v3154, %v3292
      %v3319 = vadd.f32 %v3155, %v3295
      %v3320 = vadd.f32 %v3156, %v3300
      %v3321 = vadd.f32 %v3157, %v3303
      %v3322 = vpack.c.bf16 %v3307, %v3306
      %v3323 = vpack.c.bf16 %v3309, %v3308
      %v3324 = vpack.c.bf16 %v3311, %v3310
      %v3325 = vpack.c.bf16 %v3313, %v3312
      %v3326 = vpack.c.bf16 %v3315, %v3314
      %v3327 = vpack.c.bf16 %v3317, %v3316
      %v3328 = vpack.c.bf16 %v3319, %v3318
      %v3329 = vpack.c.bf16 %v3321, %v3320
      %v3338 = vunpack.c.l.b16 %v3322
      %v3339 = vunpack.c.h.b16 %v3322
      %v3340 = vunpack.c.l.b16 %v3323
      %v3341 = vunpack.c.h.b16 %v3323
      %v3342 = vunpack.c.l.b16 %v3324
      %v3343 = vunpack.c.h.b16 %v3324
      %v3344 = vunpack.c.l.b16 %v3325
      %v3345 = vunpack.c.h.b16 %v3325
      %v3346 = vunpack.c.l.b16 %v3326
      %v3347 = vunpack.c.h.b16 %v3326
      %v3348 = vunpack.c.l.b16 %v3327
      %v3349 = vunpack.c.h.b16 %v3327
      %v3350 = vunpack.c.l.b16 %v3328
      %v3351 = vunpack.c.h.b16 %v3328
      %v3352 = vunpack.c.l.b16 %v3329
      %v3353 = vunpack.c.h.b16 %v3329
      %v3354 = vpack.c.b16 %v3338, %v3338
      %v3355 = vpack.c.b16 %v3339, %v3339
      %v3356 = vpack.c.b16 %v3340, %v3340
      %v3357 = vpack.c.b16 %v3341, %v3341
      %v3358 = vpack.c.b16 %v3342, %v3342
      %v3359 = vpack.c.b16 %v3343, %v3343
      %v3360 = vpack.c.b16 %v3344, %v3344
      %v3361 = vpack.c.b16 %v3345, %v3345
      %v3362 = vpack.c.b16 %v3346, %v3346
      %v3363 = vpack.c.b16 %v3347, %v3347
      %v3364 = vpack.c.b16 %v3348, %v3348
      %v3365 = vpack.c.b16 %v3349, %v3349
      %v3366 = vpack.c.b16 %v3350, %v3350
      %v3367 = vpack.c.b16 %v3351, %v3351
      %v3368 = vpack.c.b16 %v3352, %v3352
      %v3369 = vpack.c.b16 %v3353, %v3353
      %3386 = vst [vmem:[%s261] sm:$0xf] %v3354
      %3387 = vst [vmem:[%s261 + $0x4] sm:$0xf] %v3355
      %3388 = vst [vmem:[%s261 + $0x8] sm:$0xf] %v3356
      %3389 = vst [vmem:[%s261 + $0xc] sm:$0xf] %v3357
      %3390 = vst [vmem:[%s261 + $0x10] sm:$0xf] %v3358
      %3391 = vst [vmem:[%s261 + $0x14] sm:$0xf] %v3359
      %3392 = vst [vmem:[%s261 + $0x18] sm:$0xf] %v3360
      %3393 = vst [vmem:[%s261 + $0x1c] sm:$0xf] %v3361
      %3394 = vst [vmem:[%s261 + $0x20] sm:$0xf] %v3362
      %3395 = vst [vmem:[%s261 + $0x24] sm:$0xf] %v3363
      %3396 = vst [vmem:[%s261 + $0x28] sm:$0xf] %v3364
      %3397 = vst [vmem:[%s261 + $0x2c] sm:$0xf] %v3365
      %3398 = vst [vmem:[%s261 + $0x30] sm:$0xf] %v3366
      %3399 = vst [vmem:[%s261 + $0x34] sm:$0xf] %v3367
      %3400 = vst [vmem:[%s261 + $0x38] sm:$0xf] %v3368
      %3401 = vst [vmem:[%s261 + $0x3c] sm:$0xf] %v3369
      %v3402 = vadd.f32 %v3306, %v3307
      %v3403 = vadd.f32 %v3402, %v3308
      %v3404 = vadd.f32 %v3403, %v3309
      %v3405 = vadd.f32 %v3404, %v3310
      %v3406 = vadd.f32 %v3405, %v3311
      %v3407 = vadd.f32 %v3406, %v3312
      %v3408 = vadd.f32 %v3407, %v3313
      %v3409 = vadd.f32 %v3408, %v3314
      %v3410 = vadd.f32 %v3409, %v3315
      %v3411 = vadd.f32 %v3410, %v3316
      %v3412 = vadd.f32 %v3411, %v3317
      %v3413 = vadd.f32 %v3412, %v3318
      %v3414 = vadd.f32 %v3413, %v3319
      %v3415 = vadd.f32 %v3414, %v3320
      %v3416 = vadd.f32 %v3415, %v3321
      %v3417 = vrot.slane %v3416, 4
      %v3418 = vadd.f32 %v3416, %v3417
      %v3419 = vrot.slane %v3418, 2
      %v3420 = vadd.f32 %v3418, %v3419
      %v3421 = vrot.slane %v3420, 1
      %v3422 = vadd.f32 %v3420, %v3421
      %v3423 = vrcp.pop 128.0
      %v3424 = vmul.f32 %v3422, %v3423
      %3425 = vst [vmem:[%s270] sm:$0x1] %v3424
      %v3426 = vsub.f32 %v3306, %v3424
      %v3427 = vsub.f32 %v3307, %v3424
      %v3428 = vsub.f32 %v3308, %v3424
      %v3429 = vsub.f32 %v3309, %v3424
      %v3430 = vsub.f32 %v3310, %v3424
      %v3431 = vsub.f32 %v3311, %v3424
      %v3432 = vsub.f32 %v3312, %v3424
      %v3433 = vsub.f32 %v3313, %v3424
      %v3434 = vsub.f32 %v3314, %v3424
      %v3435 = vsub.f32 %v3315, %v3424
      %v3436 = vsub.f32 %v3316, %v3424
      %v3437 = vsub.f32 %v3317, %v3424
      %v3438 = vsub.f32 %v3318, %v3424
      %v3439 = vsub.f32 %v3319, %v3424
      %v3440 = vsub.f32 %v3320, %v3424
      %v3441 = vsub.f32 %v3321, %v3424
      %v3442 = vmul.f32 %v3426, %v3426
      %v3443 = vmul.f32 %v3427, %v3427
      %v3444 = vmul.f32 %v3428, %v3428
      %v3445 = vmul.f32 %v3429, %v3429
      %v3446 = vmul.f32 %v3430, %v3430
      %v3447 = vmul.f32 %v3431, %v3431
      %v3448 = vmul.f32 %v3432, %v3432
      %v3449 = vmul.f32 %v3433, %v3433
      %v3450 = vmul.f32 %v3434, %v3434
      %v3451 = vmul.f32 %v3435, %v3435
      %v3452 = vmul.f32 %v3436, %v3436
      %v3453 = vmul.f32 %v3437, %v3437
      %v3454 = vmul.f32 %v3438, %v3438
      %v3455 = vmul.f32 %v3439, %v3439
      %v3456 = vmul.f32 %v3440, %v3440
      %v3457 = vmul.f32 %v3441, %v3441
      %v3458 = vadd.f32 %v3442, %v3443
      %v3459 = vadd.f32 %v3458, %v3444
      %v3460 = vadd.f32 %v3459, %v3445
      %v3461 = vadd.f32 %v3460, %v3446
      %v3462 = vadd.f32 %v3461, %v3447
      %v3463 = vadd.f32 %v3462, %v3448
      %v3464 = vadd.f32 %v3463, %v3449
      %v3465 = vadd.f32 %v3464, %v3450
      %v3466 = vadd.f32 %v3465, %v3451
      %v3467 = vadd.f32 %v3466, %v3452
      %v3468 = vadd.f32 %v3467, %v3453
      %v3469 = vadd.f32 %v3468, %v3454
      %v3470 = vadd.f32 %v3469, %v3455
      %v3471 = vadd.f32 %v3470, %v3456
      %v3472 = vadd.f32 %v3471, %v3457
      %v3473 = vrot.slane %v3472, 4
      %v3474 = vadd.f32 %v3472, %v3473
      %v3475 = vrot.slane %v3474, 2
      %v3476 = vadd.f32 %v3474, %v3475
      %v3477 = vrot.slane %v3476, 1
      %v3478 = vadd.f32 %v3476, %v3477
      %3479 = vst [vmem:[%s270 + $0x1] sm:$0x1] %v3478
      %s3480 = smul.u32 8, %s22
      %p3481 = scmp.lt.s32.totalorder %s21, 1
      %s3482 = scalar_select %p3481, %s21, 1
      %p3483 = scmp.lt.s32.totalorder %s3480, 15
      %s3484 = scalar_select %p3483, %s3480, 15
      %s3485 = smul.addr %s3484, 2
      %s3486 = smul.addr %s3482, 32
      %s3487 = sadd.s32 %s3485, %s3486
      %s3488 = smul.addr %s3487, 4
      %s3489 = scalar_lea.vmem %s4, %s3488
      %p3490 = scmp.lt.s32.totalorder %s21, 1
      %s3491 = scalar_select %p3490, %s21, 1
      %p3492 = scmp.lt.s32.totalorder %s22, 1
      %s3493 = scalar_select %p3492, %s22, 1
      %s3494 = smul.addr %s3491, 2
      %s3495 = sadd.s32 %s3493, %s3494
      %s3496 = smul.addr %s3495, 2
      %s3497 = scalar_lea.vmem %s5, %s3496
      // Predicated region
      $region41: #{layer_forward.3} parent=35 // pred_check
        %p3498 = pneg %p138
      $region42: #{layer_forward.3} parent=35 // pred_check_branch
        %3500 = sbr.rel (%p3498) target = $region44
      $region43: #{layer_forward.3} parent=35 // pred_region
        %s3501 = smul.u32 8, %s22
      $region44: #{layer_forward.3} parent=35 // pred_fallthru
        _
      // Predicated region
      $region45: #{layer_forward.3} parent=35 // pred_check
        %p3502 = pneg %p166
      $region46: #{layer_forward.3} parent=35 // pred_check_branch
        %3504 = sbr.rel (%p3502) target = $region48
      $region47: #{layer_forward.3} parent=35 // pred_region
        _
      $region48: #{layer_forward.3} parent=35 // pred_fallthru
        _
    $region36: #{layer_forward.3} parent=5 // pred_fallthru
      _
    %p3505 = scmp.le.s32.totalorder 2, %s12
    // Predicated region
    $region49: #{layer_forward.3} parent=5 // pred_check
      %p3506 = pneg %p3505
    $region50: #{layer_forward.3} parent=5 // pred_check_branch
      %3508 = sbr.rel (%p3506) target = $region52
    $region51: #{layer_forward.3} parent=5 // pred_region
      %s3509 = ssub.s32 %s12, 2
      // Predicated region
      $region53: #{layer_forward.3} parent=51 // pred_check
        %p3510 = pneg %p144
      $region54: #{layer_forward.3} parent=51 // pred_check_branch
        %3512 = sbr.rel (%p3510) target = $region56
      $region55: #{layer_forward.3} parent=51 // pred_region
        %s3513 = smul.u32 8, %s24
        %p3514 = scmp.lt.s32.totalorder %s23, 1
        %s3515 = scalar_select %p3514, %s23, 1
        %p3516 = scmp.lt.s32.totalorder %s3513, 15
        %s3517 = scalar_select %p3516, %s3513, 15
        %s3518 = smul.addr %s3517, 2
        %s3519 = smul.addr %s3515, 32
        %s3520 = sadd.s32 %s3518, %s3519
        %s3521 = smul.addr %s3520, 4
        %s3522 = scalar_lea.vmem %s4, %s3521
      $region56: #{layer_forward.3} parent=51 // pred_fallthru
        _
      // Predicated region
      $region57: #{layer_forward.3} parent=51 // pred_check
        %p3523 = pneg %p172
      $region58: #{layer_forward.3} parent=51 // pred_check_branch
        %3525 = sbr.rel (%p3523) target = $region60
      $region59: #{layer_forward.3} parent=51 // pred_region
        %p3526 = scmp.lt.s32.totalorder %s23, 1
        %s3527 = scalar_select %p3526, %s23, 1
        %p3528 = scmp.lt.s32.totalorder %s24, 1
        %s3529 = scalar_select %p3528, %s24, 1
        %s3530 = smul.addr %s3527, 2
        %s3531 = sadd.s32 %s3529, %s3530
        %s3532 = smul.addr %s3531, 2
        %s3533 = scalar_lea.vmem %s5, %s3532
      $region60: #{layer_forward.3} parent=51 // pred_fallthru
        _
    $region52: #{layer_forward.3} parent=5 // pred_fallthru
      _
  $region6: #{layer_forward.3} parent=0 // loop_footer
    %s16 = sadd.s32 1, %s12
  $region7: #{layer_forward.3} parent=0 // loop_footer_branch
    %11 = sbr.rel target = $region3
  $region8: #{layer_forward.3} parent=0 // loop_exit
    _

// kernel: layer_forward.4
$region0: #{layer_forward.4}
  #allocation0 [shape = 'u32[]', space=smem, size = 0x4, offset = 0x4, fixed_abs, tag = 'smem constant byte address 0x4 - core index']
  #allocation1 [shape = 'u32[144,128]{1,0:T(1,128)}', space=vmem, size = 0x12000, scoped, tag = 'internal scratch']
  #allocation2 [shape = 'bf16[18,18,128]{2,1,0:T(8,128)(2,1)}', space=vmem, size = 0x1b000, scoped, tag = 'scratch operand']
  #allocation3 [shape = 'bf16[128,1152]{1,0:T(8,128)(2,1)}', space=vmem, size = 0x48000, scoped, tag = 'scratch operand']
  %s0 = inlined_call_operand.vmem [shape: bf16[2,16,16,128], index: 0, kind: input, shape index: {}]
  %s1 = inlined_call_operand.vmem [shape: bf16[1152,128], index: 1, kind: input, shape index: {}]
  %s2 = inlined_call_operand.vmem [shape: f32[1,128], index: 2, kind: input, shape index: {}]
  %s3 = inlined_call_operand.vmem [shape: f32[1,128], index: 3, kind: input, shape index: {}]
  %s4 = inlined_call_operand.vmem [shape: bf16[2,16,16,128], index: 4, kind: output, shape index: {0}]
  %s5 = inlined_call_operand.vmem [shape: f32[2,2,2,128], index: 5, kind: output, shape index: {1}]
  %6 = xla_tuple %s4, %s5
  %s7 = sld [smem:[#allocation0]]
  $region61: #{layer_forward.4} parent=0
    _
  %s9 = ssub.s32 1, %s7
  %s10 = scalar_select 0, %s9, %s7
  loop: start=0, step=1, limit=6
  $region2: #{layer_forward.4} parent=0 // loop_pre_header
    _
  $region3: #{layer_forward.4} parent=0 // loop_header
    %s12 = sphi 0, %s16
    %p13 = scmp.ge.s32.totalorder %s12, 6
    %s19 = sphi 0, %s31
    %s20 = sphi 0, %s27
    %s21 = sphi 0, %s19
    %s22 = sphi 0, %s20
    %s23 = sphi 0, %s21
    %s24 = sphi 0, %s22
    %s34 = sphi 0, %s36
    %s37 = sphi 0, %s34
    %s38 = sphi 0, %s37
    %s54 = sphi 0, %s38
    %s58 = sphi 0, %s58
    %s60 = sphi 0, %s58
    %s61 = sphi 0, %s60
    %s75 = sphi 0, %s61
    %s79 = sphi 0, %s79
    %s81 = sphi 0, %s79
    %s82 = sphi 0, %s81
    %s96 = sphi 0, %s82
    %s100 = sphi 0, %s100
    %s102 = sphi 0, %s100
    %s103 = sphi 0, %s102
    %s117 = sphi 0, %s103
    %s125 = sphi 0, %s127
    %s128 = sphi 0, %s125
    %s129 = sphi 0, %s128
    %s145 = sphi 0, %s129
    %s153 = sphi 0, %s155
    %s156 = sphi 0, %s153
    %s157 = sphi 0, %s156
    %s173 = sphi 0, %s157
  $region4: #{layer_forward.4} parent=0 // loop_header_branch
    %15 = sbr.rel (%p13) target = $region8
  $region5: #{layer_forward.4} parent=0 // loop_body
    %s17 = ssub.s32 %s12, 1
    %s18 = ssub.s32 %s12, 2
    %s25 = sadd.s32 1, %s20
    %p26 = scmp.ge.s32.totalorder %s25, 2
    %s27 = scalar_select %p26, 0, %s25
    %s28 = sadd.s32 1, %s19
    %s29 = scalar_select %p26, %s28, %s19
    %p30 = scmp.ge.s32.totalorder %s29, 2
    %s31 = scalar_select %p30, 0, %s29
    %s32 = ssub.s32 %s19, %s31
    %p33 = scmp.eq.s32.totalorder %s32, 0
    %s35 = sadd.s32 %s34, 1
    %s36 = scalar_select %p33, %s34, %s35
    %p39 = pneg %p33
    %p40 = scmp.eq.s32.totalorder %s12, 3
    %p41 = por %p39, %p40
    %p42 = scmp.ne.s32.totalorder %s34, %s37
    %p43 = scmp.eq.s32.totalorder %s12, 0
    %p44 = por %p42, %p43
    %p45 = scmp.ne.s32.totalorder %s34, %s37
    %p46 = scmp.eq.s32.totalorder %s17, 3
    %p47 = por %p45, %p46
    %p48 = scmp.ne.s32.totalorder %s37, %s38
    %p49 = scmp.eq.s32.totalorder %s17, 0
    %p50 = por %p48, %p49
    %p51 = scmp.ne.s32.totalorder %s37, %s38
    %p52 = scmp.eq.s32.totalorder %s18, 3
    %p53 = por %p51, %p52
    %p55 = scmp.ne.s32.totalorder %s38, %s54
    %p56 = scmp.eq.s32.totalorder %s18, 0
    %p57 = por %p55, %p56
    %s59 = sadd.s32 %s58, 1
    %p62 = scmp.eq.s32.totalorder %s12, 3
    %p63 = scmp.ne.s32.totalorder %s58, %s60
    %p64 = scmp.eq.s32.totalorder %s12, 0
    %p65 = por %p63, %p64
    %p66 = scmp.ne.s32.totalorder %s58, %s60
    %p67 = scmp.eq.s32.totalorder %s17, 3
    %p68 = por %p66, %p67
    %p69 = scmp.ne.s32.totalorder %s60, %s61
    %p70 = scmp.eq.s32.totalorder %s17, 0
    %p71 = por %p69, %p70
    %p72 = scmp.ne.s32.totalorder %s60, %s61
    %p73 = scmp.eq.s32.totalorder %s18, 3
    %p74 = por %p72, %p73
    %p76 = scmp.ne.s32.totalorder %s61, %s75
    %p77 = scmp.eq.s32.totalorder %s18, 0
    %p78 = por %p76, %p77
    %s80 = sadd.s32 %s79, 1
    %p83 = scmp.eq.s32.totalorder %s12, 3
    %p84 = scmp.ne.s32.totalorder %s79, %s81
    %p85 = scmp.eq.s32.totalorder %s12, 0
    %p86 = por %p84, %p85
    %p87 = scmp.ne.s32.totalorder %s79, %s81
    %p88 = scmp.eq.s32.totalorder %s17, 3
    %p89 = por %p87, %p88
    %p90 = scmp.ne.s32.totalorder %s81, %s82
    %p91 = scmp.eq.s32.totalorder %s17, 0
    %p92 = por %p90, %p91
    %p93 = scmp.ne.s32.totalorder %s81, %s82
    %p94 = scmp.eq.s32.totalorder %s18, 3
    %p95 = por %p93, %p94
    %p97 = scmp.ne.s32.totalorder %s82, %s96
    %p98 = scmp.eq.s32.totalorder %s18, 0
    %p99 = por %p97, %p98
    %s101 = sadd.s32 %s100, 1
    %p104 = scmp.eq.s32.totalorder %s12, 3
    %p105 = scmp.ne.s32.totalorder %s100, %s102
    %p106 = scmp.eq.s32.totalorder %s12, 0
    %p107 = por %p105, %p106
    %p108 = scmp.ne.s32.totalorder %s100, %s102
    %p109 = scmp.eq.s32.totalorder %s17, 3
    %p110 = por %p108, %p109
    %p111 = scmp.ne.s32.totalorder %s102, %s103
    %p112 = scmp.eq.s32.totalorder %s17, 0
    %p113 = por %p111, %p112
    %p114 = scmp.ne.s32.totalorder %s102, %s103
    %p115 = scmp.eq.s32.totalorder %s18, 3
    %p116 = por %p114, %p115
    %p118 = scmp.ne.s32.totalorder %s103, %s117
    %p119 = scmp.eq.s32.totalorder %s18, 0
    %p120 = por %p118, %p119
    %s121 = ssub.s32 %s19, %s31
    %s122 = ssub.s32 %s20, %s27
    %s123 = sor.u32 %s121, %s122
    %p124 = scmp.eq.s32.totalorder %s123, 0
    %s126 = sadd.s32 %s125, 1
    %s127 = scalar_select %p124, %s125, %s126
    %p130 = pneg %p124
    %p131 = scmp.eq.s32.totalorder %s12, 3
    %p132 = por %p130, %p131
    %p133 = scmp.ne.s32.totalorder %s125, %s128
    %p134 = scmp.eq.s32.totalorder %s12, 0
    %p135 = por %p133, %p134
    %p136 = scmp.ne.s32.totalorder %s125, %s128
    %p137 = scmp.eq.s32.totalorder %s17, 3
    %p138 = por %p136, %p137
    %p139 = scmp.ne.s32.totalorder %s128, %s129
    %p140 = scmp.eq.s32.totalorder %s17, 0
    %p141 = por %p139, %p140
    %p142 = scmp.ne.s32.totalorder %s128, %s129
    %p143 = scmp.eq.s32.totalorder %s18, 3
    %p144 = por %p142, %p143
    %p146 = scmp.ne.s32.totalorder %s129, %s145
    %p147 = scmp.eq.s32.totalorder %s18, 0
    %p148 = por %p146, %p147
    %s149 = ssub.s32 %s19, %s31
    %s150 = ssub.s32 %s20, %s27
    %s151 = sor.u32 %s149, %s150
    %p152 = scmp.eq.s32.totalorder %s151, 0
    %s154 = sadd.s32 %s153, 1
    %s155 = scalar_select %p152, %s153, %s154
    %p158 = pneg %p152
    %p159 = scmp.eq.s32.totalorder %s12, 3
    %p160 = por %p158, %p159
    %p161 = scmp.ne.s32.totalorder %s153, %s156
    %p162 = scmp.eq.s32.totalorder %s12, 0
    %p163 = por %p161, %p162
    %p164 = scmp.ne.s32.totalorder %s153, %s156
    %p165 = scmp.eq.s32.totalorder %s17, 3
    %p166 = por %p164, %p165
    %p167 = scmp.ne.s32.totalorder %s156, %s157
    %p168 = scmp.eq.s32.totalorder %s17, 0
    %p169 = por %p167, %p168
    %p170 = scmp.ne.s32.totalorder %s156, %s157
    %p171 = scmp.eq.s32.totalorder %s18, 3
    %p172 = por %p170, %p171
    %p174 = scmp.ne.s32.totalorder %s157, %s173
    %p175 = scmp.eq.s32.totalorder %s18, 0
    %p176 = por %p174, %p175
    %p177 = scmp.le.s32.totalorder 1, %s12
    %p178 = scmp.lt.s32.totalorder %s12, 5
    %p179 = pnand %p177, %p178
    %p180 = pneg %p179
    // Predicated region
    $region9: #{layer_forward.4} parent=5 // pred_check
      _
    $region10: #{layer_forward.4} parent=5 // pred_check_branch
      %182 = sbr.rel (%p179) target = $region12
    $region11: #{layer_forward.4} parent=5 // pred_region
      %s183 = ssub.s32 %s12, 1
      // Predicated region
      $region13: #{layer_forward.4} parent=11 // pred_check
        %p184 = pneg %p71
      $region14: #{layer_forward.4} parent=11 // pred_check_branch
        %186 = sbr.rel (%p184) target = $region16
      $region15: #{layer_forward.4} parent=11 // pred_region
        _
      $region16: #{layer_forward.4} parent=11 // pred_fallthru
        _
      // Predicated region
      $region17: #{layer_forward.4} parent=11 // pred_check
        %p187 = pneg %p92
      $region18: #{layer_forward.4} parent=11 // pred_check_branch
        %189 = sbr.rel (%p187) target = $region20
      $region19: #{layer_forward.4} parent=11 // pred_region
        _
      $region20: #{layer_forward.4} parent=11 // pred_fallthru
        _
      // Predicated region
      $region21: #{layer_forward.4} parent=11 // pred_check
        %p190 = pneg %p113
      $region22: #{layer_forward.4} parent=11 // pred_check_branch
        %192 = sbr.rel (%p190) target = $region24
      $region23: #{layer_forward.4} parent=11 // pred_region
        _
      $region24: #{layer_forward.4} parent=11 // pred_fallthru
        _
    $region12: #{layer_forward.4} parent=5 // pred_fallthru
      _
    %p193 = scmp.lt.s32.totalorder %s12, 4
    // Predicated region
    $region25: #{layer_forward.4} parent=5 // pred_check
      %p194 = pneg %p193
    $region26: #{layer_forward.4} parent=5 // pred_check_branch
      %196 = sbr.rel (%p194) target = $region28
    $region27: #{layer_forward.4} parent=5 // pred_region
      // Predicated region
      $region29: #{layer_forward.4} parent=27 // pred_check
        %p197 = pneg %p44
      $region30: #{layer_forward.4} parent=27 // pred_check_branch
        %199 = sbr.rel (%p197) target = $region32
      $region31: #{layer_forward.4} parent=27 // pred_region
        %p200 = scmp.lt.s32.totalorder %s19, 1
        %s201 = scalar_select %p200, %s19, 1
        %s202 = smul.addr %s201, 32
        %s203 = smul.addr %s202, 4
        %s204 = scalar_lea.vmem %s0, %s203
      $region32: #{layer_forward.4} parent=27 // pred_fallthru
        _
    $region28: #{layer_forward.4} parent=5 // pred_fallthru
      _
    %p205 = scmp.le.s32.totalorder 1, %s12
    %p206 = scmp.lt.s32.totalorder %s12, 5
    %p207 = pnand %p205, %p206
    %p208 = pneg %p207
    // Predicated region
    $region33: #{layer_forward.4} parent=5 // pred_check
      _
    $region34: #{layer_forward.4} parent=5 // pred_check_branch
      %210 = sbr.rel (%p207) target = $region36
    $region35: #{layer_forward.4} parent=5 // pred_region
      %s211 = ssub.s32 %s12, 1
      %p212 = scmp.lt.s32.totalorder %s21, 1
      %s213 = scalar_select %p212, %s21, 1
      %s214 = smul.addr %s213, 32
      %s215 = smul.addr %s214, 4
      %s216 = scalar_lea.vmem %s0, %s215
      %p217 = pneg %p50
      %p218 = pneg %p47
      %p219 = pneg %p71
      %p220 = pneg %p68
      %p221 = pneg %p92
      %p222 = pneg %p89
      %p223 = pneg %p113
      %p224 = pneg %p110
      %p225 = pneg %p141
      %p226 = pneg %p138
      %s227 = smul.u32 8, %s22
      %p228 = scmp.lt.s32.totalorder %s21, 1
      %s229 = scalar_select %p228, %s21, 1
      %p230 = scmp.lt.s32.totalorder %s227, 15
      %s231 = scalar_select %p230, %s227, 15
      %s232 = smul.addr %s231, 2
      %s233 = smul.addr %s229, 32
      %s234 = sadd.s32 %s232, %s233
      %s235 = smul.addr %s234, 4
      %s236 = scalar_lea.vmem %s4, %s235
      %p237 = pneg %p169
      %p238 = pneg %p166
      %p239 = scmp.lt.s32.totalorder %s21, 1
      %s240 = scalar_select %p239, %s21, 1
      %p241 = scmp.lt.s32.totalorder %s22, 1
      %s242 = scalar_select %p241, %s22, 1
      %s243 = smul.addr %s240, 2
      %s244 = sadd.s32 %s242, %s243
      %s245 = smul.addr %s244, 2
      %s246 = scalar_lea.vmem %s5, %s245
      %p247 = scmp.lt.s32.totalorder %s21, 1
      %s248 = scalar_select %p247, %s21, 1
      %s249 = smul.addr %s248, 32
      %s250 = smul.addr %s249, 4
      %s251 = scalar_lea.vmem %s0, %s250
      %s252 = smul.u32 8, %s22
      %p253 = scmp.lt.s32.totalorder %s21, 1
      %s254 = scalar_select %p253, %s21, 1
      %p255 = scmp.lt.s32.totalorder %s252, 15
      %s256 = scalar_select %p255, %s252, 15
      %s257 = smul.addr %s256, 2
      %s258 = smul.addr %s254, 32
      %s259 = sadd.s32 %s257, %s258
      %s260 = smul.addr %s259, 4
      %s261 = scalar_lea.vmem %s4, %s260
      %s262 = smul.u32 8, %s22
      %p263 = scmp.lt.s32.totalorder %s21, 1
      %s264 = scalar_select %p263, %s21, 1
      %p265 = scmp.lt.s32.totalorder %s22, 1
      %s266 = scalar_select %p265, %s22, 1
      %s267 = smul.addr %s264, 2
      %s268 = sadd.s32 %s266, %s267
      %s269 = smul.addr %s268, 2
      %s270 = scalar_lea.vmem %s5, %s269
      %p272 = scmp.eq.s32.totalorder %s22, 0
      // Predicated region
      $region37: #{layer_forward.4} parent=35 // pred_check
        %p273 = pneg %p272
      $region38: #{layer_forward.4} parent=35 // pred_check_branch
        %275 = sbr.rel (%p273) target = $region40
      $region39: #{layer_forward.4} parent=35 // pred_region
        %276 = vst [vmem:[#allocation2] sm:$0xf] 0
        %277 = vst [vmem:[#allocation2 + $0x4] sm:$0xf] 0
        %278 = vst [vmem:[#allocation2 + $0x8] sm:$0x1] 0
        %279 = vst [vmem:[#allocation2 + $0xc] sm:$0xf] 0
        %280 = vst [vmem:[#allocation2 + $0x10] sm:$0xf] 0
        %281 = vst [vmem:[#allocation2 + $0x14] sm:$0x1] 0
        %282 = vst [vmem:[#allocation2 + $0x18] sm:$0xf] 0
        %283 = vst [vmem:[#allocation2 + $0x1c] sm:$0xf] 0
        %284 = vst [vmem:[#allocation2 + $0x20] sm:$0x1] 0
        %285 = vst [vmem:[#allocation2 + $0x24] sm:$0xf] 0
        %286 = vst [vmem:[#allocation2 + $0x28] sm:$0xf] 0
        %287 = vst [vmem:[#allocation2 + $0x2c] sm:$0x1] 0
        %288 = vst [vmem:[#allocation2 + $0x30] sm:$0xf] 0
        %289 = vst [vmem:[#allocation2 + $0x34] sm:$0xf] 0
        %290 = vst [vmem:[#allocation2 + $0x38] sm:$0x1] 0
        %291 = vst [vmem:[#allocation2 + $0x3c] sm:$0xf] 0
        %292 = vst [vmem:[#allocation2 + $0x40] sm:$0xf] 0
        %293 = vst [vmem:[#allocation2 + $0x44] sm:$0x1] 0
        %294 = vst [vmem:[#allocation2 + $0x48] sm:$0xf] 0
        %295 = vst [vmem:[#allocation2 + $0x4c] sm:$0xf] 0
        %296 = vst [vmem:[#allocation2 + $0x50] sm:$0x1] 0
        %297 = vst [vmem:[#allocation2 + $0x54] sm:$0xf] 0
        %298 = vst [vmem:[#allocation2 + $0x58] sm:$0xf] 0
        %299 = vst [vmem:[#allocation2 + $0x5c] sm:$0x1] 0
        %300 = vst [vmem:[#allocation2 + $0x60] sm:$0xf] 0
        %301 = vst [vmem:[#allocation2 + $0x64] sm:$0xf] 0
        %302 = vst [vmem:[#allocation2 + $0x68] sm:$0x1] 0
        %303 = vst [vmem:[#allocation2 + $0x6c] sm:$0xf] 0
        %304 = vst [vmem:[#allocation2 + $0x70] sm:$0xf] 0
        %305 = vst [vmem:[#allocation2 + $0x74] sm:$0x1] 0
        %306 = vst [vmem:[#allocation2 + $0x78] sm:$0xf] 0
        %307 = vst [vmem:[#allocation2 + $0x7c] sm:$0xf] 0
        %308 = vst [vmem:[#allocation2 + $0x80] sm:$0x1] 0
        %309 = vst [vmem:[#allocation2 + $0x84] sm:$0xf] 0
        %310 = vst [vmem:[#allocation2 + $0x88] sm:$0xf] 0
        %311 = vst [vmem:[#allocation2 + $0x8c] sm:$0x1] 0
        %312 = vst [vmem:[#allocation2 + $0x90] sm:$0xf] 0
        %313 = vst [vmem:[#allocation2 + $0x94] sm:$0xf] 0
        %314 = vst [vmem:[#allocation2 + $0x98] sm:$0x1] 0
        %315 = vst [vmem:[#allocation2 + $0x9c] sm:$0xf] 0
        %316 = vst [vmem:[#allocation2 + $0xa0] sm:$0xf] 0
        %317 = vst [vmem:[#allocation2 + $0xa4] sm:$0x1] 0
        %318 = vst [vmem:[#allocation2 + $0xa8] sm:$0xf] 0
        %319 = vst [vmem:[#allocation2 + $0xac] sm:$0xf] 0
        %320 = vst [vmem:[#allocation2 + $0xb0] sm:$0x1] 0
        %321 = vst [vmem:[#allocation2 + $0xb4] sm:$0xf] 0
        %322 = vst [vmem:[#allocation2 + $0xb8] sm:$0xf] 0
        %323 = vst [vmem:[#allocation2 + $0xbc] sm:$0x1] 0
        %324 = vst [vmem:[#allocation2 + $0xc0] sm:$0xf] 0
        %325 = vst [vmem:[#allocation2 + $0xc4] sm:$0xf] 0
        %326 = vst [vmem:[#allocation2 + $0xc8] sm:$0x1] 0
        %327 = vst [vmem:[#allocation2 + $0xcc] sm:$0xf] 0
        %328 = vst [vmem:[#allocation2 + $0xd0] sm:$0xf] 0
        %329 = vst [vmem:[#allocation2 + $0xd4] sm:$0x1] 0
        %v330 = vld [vmem:[%s251] sm:$0xf]
        %v331 = vld [vmem:[%s251 + $0x4] sm:$0xf]
        %v332 = vld [vmem:[%s251 + $0x8] sm:$0xf]
        %v333 = vld [vmem:[%s251 + $0xc] sm:$0xf]
        %v334 = vld [vmem:[%s251 + $0x10] sm:$0xf]
        %v335 = vld [vmem:[%s251 + $0x14] sm:$0xf]
        %v336 = vld [vmem:[%s251 + $0x18] sm:$0xf]
        %v337 = vld [vmem:[%s251 + $0x1c] sm:$0xf]
        %v338 = vld [vmem:[%s251 + $0x20] sm:$0xf]
        %v339 = vld [vmem:[%s251 + $0x24] sm:$0xf]
        %v340 = vld [vmem:[%s251 + $0x28] sm:$0xf]
        %v341 = vld [vmem:[%s251 + $0x2c] sm:$0xf]
        %v342 = vld [vmem:[%s251 + $0x30] sm:$0xf]
        %v343 = vld [vmem:[%s251 + $0x34] sm:$0xf]
        %v344 = vld [vmem:[%s251 + $0x38] sm:$0xf]
        %v345 = vld [vmem:[%s251 + $0x3c] sm:$0xf]
        %v346 = vld [vmem:[%s251 + $0x40] sm:$0xf]
        %v347 = vld [vmem:[%s251 + $0x44] sm:$0xf]
        %v348 = vld [vmem:[%s251 + $0x48] sm:$0xf]
        %v349 = vld [vmem:[%s251 + $0x4c] sm:$0xf]
        %v350 = vld [vmem:[%s251 + $0x50] sm:$0xf]
        %v351 = vld [vmem:[%s251 + $0x54] sm:$0xf]
        %v352 = vld [vmem:[%s251 + $0x58] sm:$0xf]
        %v353 = vld [vmem:[%s251 + $0x5c] sm:$0xf]
        %v354 = vld [vmem:[%s251 + $0x60] sm:$0xf]
        %v355 = vld [vmem:[%s251 + $0x64] sm:$0xf]
        %v356 = vld [vmem:[%s251 + $0x68] sm:$0xf]
        %v357 = vld [vmem:[%s251 + $0x6c] sm:$0xf]
        %v358 = vld [vmem:[%s251 + $0x70] sm:$0xf]
        %v359 = vld [vmem:[%s251 + $0x74] sm:$0xf]
        %v360 = vld [vmem:[%s251 + $0x78] sm:$0xf]
        %v361 = vld [vmem:[%s251 + $0x7c] sm:$0xf]
        %v362 = vunpack.c.l.bf16 %v330
        %v363 = vunpack.c.l.bf16 %v331
        %v364 = vunpack.c.l.bf16 %v332
        %v365 = vunpack.c.l.bf16 %v333
        %v366 = vunpack.c.l.bf16 %v334
        %v367 = vunpack.c.l.bf16 %v335
        %v368 = vunpack.c.l.bf16 %v336
        %v369 = vunpack.c.l.bf16 %v337
        %v370 = vunpack.c.l.bf16 %v338
        %v371 = vunpack.c.l.bf16 %v339
        %v372 = vunpack.c.l.bf16 %v340
        %v373 = vunpack.c.l.bf16 %v341
        %v374 = vunpack.c.l.bf16 %v342
        %v375 = vunpack.c.l.bf16 %v343
        %v376 = vunpack.c.l.bf16 %v344
        %v377 = vunpack.c.l.bf16 %v345
        %v378 = vunpack.c.l.bf16 %v346
        %v379 = vunpack.c.l.bf16 %v347
        %v380 = vunpack.c.l.bf16 %v348
        %v381 = vunpack.c.l.bf16 %v349
        %v382 = vunpack.c.l.bf16 %v350
        %v383 = vunpack.c.l.bf16 %v351
        %v384 = vunpack.c.l.bf16 %v352
        %v385 = vunpack.c.l.bf16 %v353
        %v386 = vunpack.c.l.bf16 %v354
        %v387 = vunpack.c.l.bf16 %v355
        %v388 = vunpack.c.l.bf16 %v356
        %v389 = vunpack.c.l.bf16 %v357
        %v390 = vunpack.c.l.bf16 %v358
        %v391 = vunpack.c.l.bf16 %v359
        %v392 = vunpack.c.l.bf16 %v360
        %v393 = vunpack.c.l.bf16 %v361
        %v394 = vld [vmem:[%s2] sm:$0x1]
        %v396 = vlaneseq
        %v397 = vshrl.u32 %v396, 7
        %v398 = vsub.s32 0, %v397
        %v399 = vrot.slane %v394, %v398
        %v401 = vmul.f32 %v362, %v399
        %v402 = vmul.f32 %v363, %v399
        %v403 = vmul.f32 %v364, %v399
        %v404 = vmul.f32 %v365, %v399
        %v405 = vmul.f32 %v366, %v399
        %v406 = vmul.f32 %v367, %v399
        %v407 = vmul.f32 %v368, %v399
        %v408 = vmul.f32 %v369, %v399
        %v409 = vmul.f32 %v370, %v399
        %v410 = vmul.f32 %v371, %v399
        %v411 = vmul.f32 %v372, %v399
        %v412 = vmul.f32 %v373, %v399
        %v413 = vmul.f32 %v374, %v399
        %v414 = vmul.f32 %v375, %v399
        %v415 = vmul.f32 %v376, %v399
        %v416 = vmul.f32 %v377, %v399
        %v417 = vmul.f32 %v378, %v399
        %v418 = vmul.f32 %v379, %v399
        %v419 = vmul.f32 %v380, %v399
        %v420 = vmul.f32 %v381, %v399
        %v421 = vmul.f32 %v382, %v399
        %v422 = vmul.f32 %v383, %v399
        %v423 = vmul.f32 %v384, %v399
        %v424 = vmul.f32 %v385, %v399
        %v425 = vmul.f32 %v386, %v399
        %v426 = vmul.f32 %v387, %v399
        %v427 = vmul.f32 %v388, %v399
        %v428 = vmul.f32 %v389, %v399
        %v429 = vmul.f32 %v390, %v399
        %v430 = vmul.f32 %v391, %v399
        %v431 = vmul.f32 %v392, %v399
        %v432 = vmul.f32 %v393, %v399
        %v433 = vld [vmem:[%s3] sm:$0x1]
        %v435 = vlaneseq
        %v436 = vshrl.u32 %v435, 7
        %v437 = vsub.s32 0, %v436
        %v438 = vrot.slane %v433, %v437
        %v440 = vadd.f32 %v401, %v438
        %v441 = vadd.f32 %v402, %v438
        %v442 = vadd.f32 %v403, %v438
        %v443 = vadd.f32 %v404, %v438
        %v444 = vadd.f32 %v405, %v438
        %v445 = vadd.f32 %v406, %v438
        %v446 = vadd.f32 %v407, %v438
        %v447 = vadd.f32 %v408, %v438
        %v448 = vadd.f32 %v409, %v438
        %v449 = vadd.f32 %v410, %v438
        %v450 = vadd.f32 %v411, %v438
        %v451 = vadd.f32 %v412, %v438
        %v452 = vadd.f32 %v413, %v438
        %v453 = vadd.f32 %v414, %v438
        %v454 = vadd.f32 %v415, %v438
        %v455 = vadd.f32 %v416, %v438
        %v456 = vadd.f32 %v417, %v438
        %v457 = vadd.f32 %v418, %v438
        %v458 = vadd.f32 %v419, %v438
        %v459 = vadd.f32 %v420, %v438
        %v460 = vadd.f32 %v421, %v438
        %v461 = vadd.f32 %v422, %v438
        %v462 = vadd.f32 %v423, %v438
        %v463 = vadd.f32 %v424, %v438
        %v464 = vadd.f32 %v425, %v438
        %v465 = vadd.f32 %v426, %v438
        %v466 = vadd.f32 %v427, %v438
        %v467 = vadd.f32 %v428, %v438
        %v468 = vadd.f32 %v429, %v438
        %v469 = vadd.f32 %v430, %v438
        %v470 = vadd.f32 %v431, %v438
        %v471 = vadd.f32 %v432, %v438
        %v472 = vmax.f32 %v440, 0.0
        %v473 = vmax.f32 %v441, 0.0
        %v474 = vmax.f32 %v442, 0.0
        %v475 = vmax.f32 %v443, 0.0
        %v476 = vmax.f32 %v444, 0.0
        %v477 = vmax.f32 %v445, 0.0
        %v478 = vmax.f32 %v446, 0.0
        %v479 = vmax.f32 %v447, 0.0
        %v480 = vmax.f32 %v448, 0.0
        %v481 = vmax.f32 %v449, 0.0
        %v482 = vmax.f32 %v450, 0.0
        %v483 = vmax.f32 %v451, 0.0
        %v484 = vmax.f32 %v452, 0.0
        %v485 = vmax.f32 %v453, 0.0
        %v486 = vmax.f32 %v454, 0.0
        %v487 = vmax.f32 %v455, 0.0
        %v488 = vmax.f32 %v456, 0.0
        %v489 = vmax.f32 %v457, 0.0
        %v490 = vmax.f32 %v458, 0.0
        %v491 = vmax.f32 %v459, 0.0
        %v492 = vmax.f32 %v460, 0.0
        %v493 = vmax.f32 %v461, 0.0
        %v494 = vmax.f32 %v462, 0.0
        %v495 = vmax.f32 %v463, 0.0
        %v496 = vmax.f32 %v464, 0.0
        %v497 = vmax.f32 %v465, 0.0
        %v498 = vmax.f32 %v466, 0.0
        %v499 = vmax.f32 %v467, 0.0
        %v500 = vmax.f32 %v468, 0.0
        %v501 = vmax.f32 %v469, 0.0
        %v502 = vmax.f32 %v470, 0.0
        %v503 = vmax.f32 %v471, 0.0
        %v504 = vpack.c.bf16 %v473, %v472
        %v505 = vpack.c.bf16 %v475, %v474
        %v506 = vpack.c.bf16 %v477, %v476
        %v507 = vpack.c.bf16 %v479, %v478
        %v508 = vpack.c.bf16 %v481, %v480
        %v509 = vpack.c.bf16 %v483, %v482
        %v510 = vpack.c.bf16 %v485, %v484
        %v511 = vpack.c.bf16 %v487, %v486
        %v512 = vpack.c.bf16 %v489, %v488
        %v513 = vpack.c.bf16 %v491, %v490
        %v514 = vpack.c.bf16 %v493, %v492
        %v515 = vpack.c.bf16 %v495, %v494
        %v516 = vpack.c.bf16 %v497, %v496
        %v517 = vpack.c.bf16 %v499, %v498
        %v518 = vpack.c.bf16 %v501, %v500
        %v519 = vpack.c.bf16 %v503, %v502
        %v536 = vunpack.c.l.b16 %v504
        %v537 = vunpack.c.h.b16 %v504
        %v538 = vunpack.c.l.b16 %v505
        %v539 = vunpack.c.h.b16 %v505
        %v540 = vunpack.c.l.b16 %v506
        %v541 = vunpack.c.h.b16 %v506
        %v542 = vunpack.c.l.b16 %v507
        %v543 = vunpack.c.h.b16 %v507
        %v544 = vunpack.c.l.b16 %v508
        %v545 = vunpack.c.h.b16 %v508
        %v546 = vunpack.c.l.b16 %v509
        %v547 = vunpack.c.h.b16 %v509
        %v548 = vunpack.c.l.b16 %v510
        %v549 = vunpack.c.h.b16 %v510
        %v550 = vunpack.c.l.b16 %v511
        %v551 = vunpack.c.h.b16 %v511
        %v552 = vunpack.c.l.b16 %v512
        %v553 = vunpack.c.h.b16 %v512
        %v554 = vunpack.c.l.b16 %v513
        %v555 = vunpack.c.h.b16 %v513
        %v556 = vunpack.c.l.b16 %v514
        %v557 = vunpack.c.h.b16 %v514
        %v558 = vunpack.c.l.b16 %v515
        %v559 = vunpack.c.h.b16 %v515
        %v560 = vunpack.c.l.b16 %v516
        %v561 = vunpack.c.h.b16 %v516
        %v562 = vunpack.c.l.b16 %v517
        %v563 = vunpack.c.h.b16 %v517
        %v564 = vunpack.c.l.b16 %v518
        %v565 = vunpack.c.h.b16 %v518
        %v566 = vunpack.c.l.b16 %v519
        %v567 = vunpack.c.h.b16 %v519
        %v568 = vpack.c.b16 %v536, %v536
        %v569 = vpack.c.b16 %v537, %v537
        %v570 = vpack.c.b16 %v538, %v538
        %v571 = vpack.c.b16 %v539, %v539
        %v572 = vpack.c.b16 %v540, %v540
        %v573 = vpack.c.b16 %v541, %v541
        %v574 = vpack.c.b16 %v542, %v542
        %v575 = vpack.c.b16 %v543, %v543
        %v576 = vpack.c.b16 %v544, %v544
        %v577 = vpack.c.b16 %v545, %v545
        %v578 = vpack.c.b16 %v546, %v546
        %v579 = vpack.c.b16 %v547, %v547
        %v580 = vpack.c.b16 %v548, %v548
        %v581 = vpack.c.b16 %v549, %v549
        %v582 = vpack.c.b16 %v550, %v550
        %v583 = vpack.c.b16 %v551, %v551
        %v584 = vpack.c.b16 %v552, %v552
        %v585 = vpack.c.b16 %v553, %v553
        %v586 = vpack.c.b16 %v554, %v554
        %v587 = vpack.c.b16 %v555, %v555
        %v588 = vpack.c.b16 %v556, %v556
        %v589 = vpack.c.b16 %v557, %v557
        %v590 = vpack.c.b16 %v558, %v558
        %v591 = vpack.c.b16 %v559, %v559
        %v592 = vpack.c.b16 %v560, %v560
        %v593 = vpack.c.b16 %v561, %v561
        %v594 = vpack.c.b16 %v562, %v562
        %v595 = vpack.c.b16 %v563, %v563
        %v596 = vpack.c.b16 %v564, %v564
        %v597 = vpack.c.b16 %v565, %v565
        %v598 = vpack.c.b16 %v566, %v566
        %v599 = vpack.c.b16 %v567, %v567
        %vm600 = vsmask.f32 256
        %vm601 = vsmask.f32 4368
        %vm602 = vmor %vm600, %vm601
        %v604 = vshrl.u32 %v568, 16
        %v606 = vrot.slane %v604, 7
        %v607 = vshll.u32 %v568, 16
        %v609 = vor.u32 %v606, %v607
        %v610 = vrot.slane %v606, 4
        %v612 = vshrl.u32 %v569, 16
        %v614 = vrot.slane %v612, 7
        %v615 = vshll.u32 %v569, 16
        %v617 = vor.u32 %v614, %v615
        %v618 = vsel %vm602, %v610, %v617
        %v619 = vrot.slane %v614, 4
        %v621 = vshrl.u32 %v570, 16
        %v623 = vrot.slane %v621, 7
        %v624 = vshll.u32 %v570, 16
        %v626 = vor.u32 %v623, %v624
        %v627 = vrot.slane %v623, 4
        %v629 = vshrl.u32 %v571, 16
        %v631 = vrot.slane %v629, 7
        %v632 = vshll.u32 %v571, 16
        %v634 = vor.u32 %v631, %v632
        %v635 = vsel %vm602, %v627, %v634
        %v636 = vrot.slane %v631, 4
        %v638 = vshrl.u32 %v572, 16
        %v640 = vrot.slane %v638, 7
        %v641 = vshll.u32 %v572, 16
        %v643 = vor.u32 %v640, %v641
        %v644 = vrot.slane %v640, 4
        %v646 = vshrl.u32 %v573, 16
        %v648 = vrot.slane %v646, 7
        %v649 = vshll.u32 %v573, 16
        %v651 = vor.u32 %v648, %v649
        %v652 = vsel %vm602, %v644, %v651
        %v653 = vrot.slane %v648, 4
        %v655 = vshrl.u32 %v574, 16
        %v657 = vrot.slane %v655, 7
        %v658 = vshll.u32 %v574, 16
        %v660 = vor.u32 %v657, %v658
        %v661 = vrot.slane %v657, 4
        %v663 = vshrl.u32 %v575, 16
        %v665 = vrot.slane %v663, 7
        %v666 = vshll.u32 %v575, 16
        %v668 = vor.u32 %v665, %v666
        %v669 = vsel %vm602, %v661, %v668
        %v670 = vrot.slane %v665, 4
        %v672 = vshrl.u32 %v576, 16
        %v674 = vrot.slane %v672, 7
        %v675 = vshll.u32 %v576, 16
        %v677 = vor.u32 %v674, %v675
        %v678 = vrot.slane %v674, 4
        %v680 = vshrl.u32 %v577, 16
        %v682 = vrot.slane %v680, 7
        %v683 = vshll.u32 %v577, 16
        %v685 = vor.u32 %v682, %v683
        %v686 = vsel %vm602, %v678, %v685
        %v687 = vrot.slane %v682, 4
        %v689 = vshrl.u32 %v578, 16
        %v691 = vrot.slane %v689, 7
        %v692 = vshll.u32 %v578, 16
        %v694 = vor.u32 %v691, %v692
        %v695 = vrot.slane %v691, 4
        %v697 = vshrl.u32 %v579, 16
        %v699 = vrot.slane %v697, 7
        %v700 = vshll.u32 %v579, 16
        %v702 = vor.u32 %v699, %v700
        %v703 = vsel %vm602, %v695, %v702
        %v704 = vrot.slane %v699, 4
        %v706 = vshrl.u32 %v580, 16
        %v708 = vrot.slane %v706, 7
        %v709 = vshll.u32 %v580, 16
        %v711 = vor.u32 %v708, %v709
        %v712 = vrot.slane %v708, 4
        %v714 = vshrl.u32 %v581, 16
        %v716 = vrot.slane %v714, 7
        %v717 = vshll.u32 %v581, 16
        %v719 = vor.u32 %v716, %v717
        %v720 = vsel %vm602, %v712, %v719
        %v721 = vrot.slane %v716, 4
        %v723 = vshrl.u32 %v582, 16
        %v725 = vrot.slane %v723, 7
        %v726 = vshll.u32 %v582, 16
        %v728 = vor.u32 %v725, %v726
        %v729 = vrot.slane %v725, 4
        %v731 = vshrl.u32 %v583, 16
        %v733 = vrot.slane %v731, 7
        %v734 = vshll.u32 %v583, 16
        %v736 = vor.u32 %v733, %v734
        %v737 = vsel %vm602, %v729, %v736
        %v738 = vrot.slane %v733, 4
        %v740 = vshrl.u32 %v584, 16
        %v742 = vrot.slane %v740, 7
        %v743 = vshll.u32 %v584, 16
        %v745 = vor.u32 %v742, %v743
        %v746 = vrot.slane %v742, 4
        %v748 = vshrl.u32 %v585, 16
        %v750 = vrot.slane %v748, 7
        %v751 = vshll.u32 %v585, 16
        %v753 = vor.u32 %v750, %v751
        %v754 = vsel %vm602, %v746, %v753
        %v755 = vrot.slane %v750, 4
        %v757 = vshrl.u32 %v586, 16
        %v759 = vrot.slane %v757, 7
        %v760 = vshll.u32 %v586, 16
        %v762 = vor.u32 %v759, %v760
        %v763 = vrot.slane %v759, 4
        %v765 = vshrl.u32 %v587, 16
        %v767 = vrot.slane %v765, 7
        %v768 = vshll.u32 %v587, 16
        %v770 = vor.u32 %v767, %v768
        %v771 = vsel %vm602, %v763, %v770
        %v772 = vrot.slane %v767, 4
        %v774 = vshrl.u32 %v588, 16
        %v776 = vrot.slane %v774, 7
        %v777 = vshll.u32 %v588, 16
        %v779 = vor.u32 %v776, %v777
        %v780 = vrot.slane %v776, 4
        %v782 = vshrl.u32 %v589, 16
        %v784 = vrot.slane %v782, 7
        %v785 = vshll.u32 %v589, 16
        %v787 = vor.u32 %v784, %v785
        %v788 = vsel %vm602, %v780, %v787
        %v789 = vrot.slane %v784, 4
        %v791 = vshrl.u32 %v590, 16
        %v793 = vrot.slane %v791, 7
        %v794 = vshll.u32 %v590, 16
        %v796 = vor.u32 %v793, %v794
        %v797 = vrot.slane %v793, 4
        %v799 = vshrl.u32 %v591, 16
        %v801 = vrot.slane %v799, 7
        %v802 = vshll.u32 %v591, 16
        %v804 = vor.u32 %v801, %v802
        %v805 = vsel %vm602, %v797, %v804
        %v806 = vrot.slane %v801, 4
        %v808 = vshrl.u32 %v592, 16
        %v810 = vrot.slane %v808, 7
        %v811 = vshll.u32 %v592, 16
        %v813 = vor.u32 %v810, %v811
        %v814 = vrot.slane %v810, 4
        %v816 = vshrl.u32 %v593, 16
        %v818 = vrot.slane %v816, 7
        %v819 = vshll.u32 %v593, 16
        %v821 = vor.u32 %v818, %v819
        %v822 = vsel %vm602, %v814, %v821
        %v823 = vrot.slane %v818, 4
        %v825 = vshrl.u32 %v594, 16
        %v827 = vrot.slane %v825, 7
        %v828 = vshll.u32 %v594, 16
        %v830 = vor.u32 %v827, %v828
        %v831 = vrot.slane %v827, 4
        %v833 = vshrl.u32 %v595, 16
        %v835 = vrot.slane %v833, 7
        %v836 = vshll.u32 %v595, 16
        %v838 = vor.u32 %v835, %v836
        %v839 = vsel %vm602, %v831, %v838
        %v840 = vrot.slane %v835, 4
        %v842 = vshrl.u32 %v596, 16
        %v844 = vrot.slane %v842, 7
        %v845 = vshll.u32 %v596, 16
        %v847 = vor.u32 %v844, %v845
        %v848 = vrot.slane %v844, 4
        %v850 = vshrl.u32 %v597, 16
        %v852 = vrot.slane %v850, 7
        %v853 = vshll.u32 %v597, 16
        %v855 = vor.u32 %v852, %v853
        %v856 = vsel %vm602, %v848, %v855
        %v857 = vrot.slane %v852, 4
        %v859 = vshrl.u32 %v598, 16
        %v861 = vrot.slane %v859, 7
        %v862 = vshll.u32 %v598, 16
        %v864 = vor.u32 %v861, %v862
        %v865 = vrot.slane %v861, 4
        %v867 = vshrl.u32 %v599, 16
        %v869 = vrot.slane %v867, 7
        %v870 = vshll.u32 %v599, 16
        %v872 = vor.u32 %v869, %v870
        %v873 = vsel %vm602, %v865, %v872
        %v874 = vrot.slane %v869, 4
        %s923 = scalar_lea.vmem [#allocation2], 12
        %vm924 = vcmask 1043456
        %vm925 = vsmask.f32 7938
        %vm926 = vmand %vm924, %vm925
        %v927 = vld [vmem:[%s923] sm:$0xf]
        %v928 = vsel %vm926, %v609, %v927
        %929 = vst [vmem:[%s923] sm:$0xf] %v928
        %930 = vst [vmem:[%s923 + $0x4] sm:$0xf] %v618
        %vm931 = vcmask 1040384
        %vm932 = vmand %vm931, %vm600
        %v933 = vld [vmem:[%s923 + $0x8] sm:$0x1]
        %v934 = vsel %vm932, %v619, %v933
        %935 = vst [vmem:[%s923 + $0x8] sm:$0x1] %v934
        %v936 = vld [vmem:[%s923 + $0xc] sm:$0xf]
        %v937 = vsel %vm926, %v626, %v936
        %938 = vst [vmem:[%s923 + $0xc] sm:$0xf] %v937
        %939 = vst [vmem:[%s923 + $0x10] sm:$0xf] %v635
        %v940 = vld [vmem:[%s923 + $0x14] sm:$0x1]
        %v941 = vsel %vm932, %v636, %v940
        %942 = vst [vmem:[%s923 + $0x14] sm:$0x1] %v941
        %v943 = vld [vmem:[%s923 + $0x18] sm:$0xf]
        %v944 = vsel %vm926, %v643, %v943
        %945 = vst [vmem:[%s923 + $0x18] sm:$0xf] %v944
        %946 = vst [vmem:[%s923 + $0x1c] sm:$0xf] %v652
        %v947 = vld [vmem:[%s923 + $0x20] sm:$0x1]
        %v948 = vsel %vm932, %v653, %v947
        %949 = vst [vmem:[%s923 + $0x20] sm:$0x1] %v948
        %v950 = vld [vmem:[%s923 + $0x24] sm:$0xf]
        %v951 = vsel %vm926, %v660, %v950
        %952 = vst [vmem:[%s923 + $0x24] sm:$0xf] %v951
        %953 = vst [vmem:[%s923 + $0x28] sm:$0xf] %v669
        %v954 = vld [vmem:[%s923 + $0x2c] sm:$0x1]
        %v955 = vsel %vm932, %v670, %v954
        %956 = vst [vmem:[%s923 + $0x2c] sm:$0x1] %v955
        %v957 = vld [vmem:[%s923 + $0x30] sm:$0xf]
        %v958 = vsel %vm926, %v677, %v957
        %959 = vst [vmem:[%s923 + $0x30] sm:$0xf] %v958
        %960 = vst [vmem:[%s923 + $0x34] sm:$0xf] %v686
        %v961 = vld [vmem:[%s923 + $0x38] sm:$0x1]
        %v962 = vsel %vm932, %v687, %v961
        %963 = vst [vmem:[%s923 + $0x38] sm:$0x1] %v962
        %v964 = vld [vmem:[%s923 + $0x3c] sm:$0xf]
        %v965 = vsel %vm926, %v694, %v964
        %966 = vst [vmem:[%s923 + $0x3c] sm:$0xf] %v965
        %967 = vst [vmem:[%s923 + $0x40] sm:$0xf] %v703
        %v968 = vld [vmem:[%s923 + $0x44] sm:$0x1]
        %v969 = vsel %vm932, %v704, %v968
        %970 = vst [vmem:[%s923 + $0x44] sm:$0x1] %v969
        %v971 = vld [vmem:[%s923 + $0x48] sm:$0xf]
        %v972 = vsel %vm926, %v711, %v971
        %973 = vst [vmem:[%s923 + $0x48] sm:$0xf] %v972
        %974 = vst [vmem:[%s923 + $0x4c] sm:$0xf] %v720
        %v975 = vld [vmem:[%s923 + $0x50] sm:$0x1]
        %v976 = vsel %vm932, %v721, %v975
        %977 = vst [vmem:[%s923 + $0x50] sm:$0x1] %v976
        %v978 = vld [vmem:[%s923 + $0x54] sm:$0xf]
        %v979 = vsel %vm926, %v728, %v978
        %980 = vst [vmem:[%s923 + $0x54] sm:$0xf] %v979
        %981 = vst [vmem:[%s923 + $0x58] sm:$0xf] %v737
        %v982 = vld [vmem:[%s923 + $0x5c] sm:$0x1]
        %v983 = vsel %vm932, %v738, %v982
        %984 = vst [vmem:[%s923 + $0x5c] sm:$0x1] %v983
        %v985 = vld [vmem:[%s923 + $0x60] sm:$0xf]
        %v986 = vsel %vm926, %v745, %v985
        %987 = vst [vmem:[%s923 + $0x60] sm:$0xf] %v986
        %988 = vst [vmem:[%s923 + $0x64] sm:$0xf] %v754
        %v989 = vld [vmem:[%s923 + $0x68] sm:$0x1]
        %v990 = vsel %vm932, %v755, %v989
        %991 = vst [vmem:[%s923 + $0x68] sm:$0x1] %v990
        %v992 = vld [vmem:[%s923 + $0x6c] sm:$0xf]
        %v993 = vsel %vm926, %v762, %v992
        %994 = vst [vmem:[%s923 + $0x6c] sm:$0xf] %v993
        %995 = vst [vmem:[%s923 + $0x70] sm:$0xf] %v771
        %v996 = vld [vmem:[%s923 + $0x74] sm:$0x1]
        %v997 = vsel %vm932, %v772, %v996
        %998 = vst [vmem:[%s923 + $0x74] sm:$0x1] %v997
        %v999 = vld [vmem:[%s923 + $0x78] sm:$0xf]
        %v1000 = vsel %vm926, %v779, %v999
        %1001 = vst [vmem:[%s923 + $0x78] sm:$0xf] %v1000
        %1002 = vst [vmem:[%s923 + $0x7c] sm:$0xf] %v788
        %v1003 = vld [vmem:[%s923 + $0x80] sm:$0x1]
        %v1004 = vsel %vm932, %v789, %v1003
        %1005 = vst [vmem:[%s923 + $0x80] sm:$0x1] %v1004
        %v1006 = vld [vmem:[%s923 + $0x84] sm:$0xf]
        %v1007 = vsel %vm926, %v796, %v1006
        %1008 = vst [vmem:[%s923 + $0x84] sm:$0xf] %v1007
        %1009 = vst [vmem:[%s923 + $0x88] sm:$0xf] %v805
        %v1010 = vld [vmem:[%s923 + $0x8c] sm:$0x1]
        %v1011 = vsel %vm932, %v806, %v1010
        %1012 = vst [vmem:[%s923 + $0x8c] sm:$0x1] %v1011
        %v1013 = vld [vmem:[%s923 + $0x90] sm:$0xf]
        %v1014 = vsel %vm926, %v813, %v1013
        %1015 = vst [vmem:[%s923 + $0x90] sm:$0xf] %v1014
        %1016 = vst [vmem:[%s923 + $0x94] sm:$0xf] %v822
        %v1017 = vld [vmem:[%s923 + $0x98] sm:$0x1]
        %v1018 = vsel %vm932, %v823, %v1017
        %1019 = vst [vmem:[%s923 + $0x98] sm:$0x1] %v1018
        %v1020 = vld [vmem:[%s923 + $0x9c] sm:$0xf]
        %v1021 = vsel %vm926, %v830, %v1020
        %1022 = vst [vmem:[%s923 + $0x9c] sm:$0xf] %v1021
        %1023 = vst [vmem:[%s923 + $0xa0] sm:$0xf] %v839
        %v1024 = vld [vmem:[%s923 + $0xa4] sm:$0x1]
        %v1025 = vsel %vm932, %v840, %v1024
        %1026 = vst [vmem:[%s923 + $0xa4] sm:$0x1] %v1025
        %v1027 = vld [vmem:[%s923 + $0xa8] sm:$0xf]
        %v1028 = vsel %vm926, %v847, %v1027
        %1029 = vst [vmem:[%s923 + $0xa8] sm:$0xf] %v1028
        %1030 = vst [vmem:[%s923 + $0xac] sm:$0xf] %v856
        %v1031 = vld [vmem:[%s923 + $0xb0] sm:$0x1]
        %v1032 = vsel %vm932, %v857, %v1031
        %1033 = vst [vmem:[%s923 + $0xb0] sm:$0x1] %v1032
        %v1034 = vld [vmem:[%s923 + $0xb4] sm:$0xf]
        %v1035 = vsel %vm926, %v864, %v1034
        %1036 = vst [vmem:[%s923 + $0xb4] sm:$0xf] %v1035
        %1037 = vst [vmem:[%s923 + $0xb8] sm:$0xf] %v873
        %v1038 = vld [vmem:[%s923 + $0xbc] sm:$0x1]
        %v1039 = vsel %vm932, %v874, %v1038
        %1040 = vst [vmem:[%s923 + $0xbc] sm:$0x1] %v1039
      $region40: #{layer_forward.4} parent=35 // pred_fallthru
        _
      %s1041 = smul.u32 %s22, 8
      %s1042 = smul.u32 %s1041, 3
      %s1043 = smul.addr %s1042, 4
      %s1044 = scalar_lea.vmem [#allocation2], %s1043
      %v1045 = vld [vmem:[%s1044] sm:$0xf]
      %v1046 = vld [vmem:[%s1044 + $0x4] sm:$0xf]
      %v1047 = vld [vmem:[%s1044 + $0xc] sm:$0xf]
      %v1048 = vld [vmem:[%s1044 + $0x10] sm:$0xf]
      %v1049 = vld [vmem:[%s1044 + $0x18] sm:$0xf]
      %v1050 = vld [vmem:[%s1044 + $0x1c] sm:$0xf]
      %v1051 = vld [vmem:[%s1044 + $0x24] sm:$0xf]
      %v1052 = vld [vmem:[%s1044 + $0x28] sm:$0xf]
      %v1053 = vld [vmem:[%s1044 + $0x30] sm:$0xf]
      %v1054 = vld [vmem:[%s1044 + $0x34] sm:$0xf]
      %v1055 = vld [vmem:[%s1044 + $0x3c] sm:$0xf]
      %v1056 = vld [vmem:[%s1044 + $0x40] sm:$0xf]
      %v1057 = vld [vmem:[%s1044 + $0x48] sm:$0xf]
      %v1058 = vld [vmem:[%s1044 + $0x4c] sm:$0xf]
      %v1059 = vld [vmem:[%s1044 + $0x54] sm:$0xf]
      %v1060 = vld [vmem:[%s1044 + $0x58] sm:$0xf]
      %v1061 = vld [vmem:[%s1044 + $0x8] sm:$0x1]
      %v1062 = vld [vmem:[%s1044 + $0x14] sm:$0x1]
      %v1063 = vld [vmem:[%s1044 + $0x20] sm:$0x1]
      %v1064 = vld [vmem:[%s1044 + $0x2c] sm:$0x1]
      %v1065 = vld [vmem:[%s1044 + $0x38] sm:$0x1]
      %v1066 = vld [vmem:[%s1044 + $0x44] sm:$0x1]
      %v1067 = vld [vmem:[%s1044 + $0x50] sm:$0x1]
      %v1068 = vld [vmem:[%s1044 + $0x5c] sm:$0x1]
      %vm1069 = vsmask.f32 3328
      %vm1070 = vsmask.f32 7440
      %vm1071 = vmor %vm1069, %vm1070
      %v1073 = vshrl.u32 %v1045, 16
      %v1075 = vrot.slane %v1073, 4
      %v1076 = vshll.u32 %v1045, 16
      %v1078 = vrot.slane %v1076, 5
      %v1079 = vor.u32 %v1075, %v1078
      %v1080 = vrot.slane %v1079, 4
      %v1082 = vshll.u32 %v1046, 16
      %v1084 = vrot.slane %v1082, 5
      %v1085 = vsel %vm1071, %v1080, %v1084
      %v1086 = vshrl.u32 %v1046, 16
      %v1088 = vrot.slane %v1086, 4
      %v1089 = vor.u32 %v1088, %v1084
      %v1090 = vrot.slane %v1089, 4
      %v1092 = vshll.u32 %v1061, 16
      %v1094 = vrot.slane %v1092, 5
      %v1095 = vsel %vm1071, %v1090, %v1094
      %v1097 = vshrl.u32 %v1047, 16
      %v1099 = vrot.slane %v1097, 4
      %v1100 = vshll.u32 %v1047, 16
      %v1102 = vrot.slane %v1100, 5
      %v1103 = vor.u32 %v1099, %v1102
      %v1104 = vrot.slane %v1103, 4
      %v1106 = vshll.u32 %v1048, 16
      %v1108 = vrot.slane %v1106, 5
      %v1109 = vsel %vm1071, %v1104, %v1108
      %v1110 = vshrl.u32 %v1048, 16
      %v1112 = vrot.slane %v1110, 4
      %v1113 = vor.u32 %v1112, %v1108
      %v1114 = vrot.slane %v1113, 4
      %v1116 = vshll.u32 %v1062, 16
      %v1118 = vrot.slane %v1116, 5
      %v1119 = vsel %vm1071, %v1114, %v1118
      %v1121 = vshrl.u32 %v1049, 16
      %v1123 = vrot.slane %v1121, 4
      %v1124 = vshll.u32 %v1049, 16
      %v1126 = vrot.slane %v1124, 5
      %v1127 = vor.u32 %v1123, %v1126
      %v1128 = vrot.slane %v1127, 4
      %v1130 = vshll.u32 %v1050, 16
      %v1132 = vrot.slane %v1130, 5
      %v1133 = vsel %vm1071, %v1128, %v1132
      %v1134 = vshrl.u32 %v1050, 16
      %v1136 = vrot.slane %v1134, 4
      %v1137 = vor.u32 %v1136, %v1132
      %v1138 = vrot.slane %v1137, 4
      %v1140 = vshll.u32 %v1063, 16
      %v1142 = vrot.slane %v1140, 5
      %v1143 = vsel %vm1071, %v1138, %v1142
      %v1145 = vshrl.u32 %v1051, 16
      %v1147 = vrot.slane %v1145, 4
      %v1148 = vshll.u32 %v1051, 16
      %v1150 = vrot.slane %v1148, 5
      %v1151 = vor.u32 %v1147, %v1150
      %v1152 = vrot.slane %v1151, 4
      %v1154 = vshll.u32 %v1052, 16
      %v1156 = vrot.slane %v1154, 5
      %v1157 = vsel %vm1071, %v1152, %v1156
      %v1158 = vshrl.u32 %v1052, 16
      %v1160 = vrot.slane %v1158, 4
      %v1161 = vor.u32 %v1160, %v1156
      %v1162 = vrot.slane %v1161, 4
      %v1164 = vshll.u32 %v1064, 16
      %v1166 = vrot.slane %v1164, 5
      %v1167 = vsel %vm1071, %v1162, %v1166
      %v1169 = vshrl.u32 %v1053, 16
      %v1171 = vrot.slane %v1169, 4
      %v1172 = vshll.u32 %v1053, 16
      %v1174 = vrot.slane %v1172, 5
      %v1175 = vor.u32 %v1171, %v1174
      %v1176 = vrot.slane %v1175, 4
      %v1178 = vshll.u32 %v1054, 16
      %v1180 = vrot.slane %v1178, 5
      %v1181 = vsel %vm1071, %v1176, %v1180
      %v1182 = vshrl.u32 %v1054, 16
      %v1184 = vrot.slane %v1182, 4
      %v1185 = vor.u32 %v1184, %v1180
      %v1186 = vrot.slane %v1185, 4
      %v1188 = vshll.u32 %v1065, 16
      %v1190 = vrot.slane %v1188, 5
      %v1191 = vsel %vm1071, %v1186, %v1190
      %v1193 = vshrl.u32 %v1055, 16
      %v1195 = vrot.slane %v1193, 4
      %v1196 = vshll.u32 %v1055, 16
      %v1198 = vrot.slane %v1196, 5
      %v1199 = vor.u32 %v1195, %v1198
      %v1200 = vrot.slane %v1199, 4
      %v1202 = vshll.u32 %v1056, 16
      %v1204 = vrot.slane %v1202, 5
      %v1205 = vsel %vm1071, %v1200, %v1204
      %v1206 = vshrl.u32 %v1056, 16
      %v1208 = vrot.slane %v1206, 4
      %v1209 = vor.u32 %v1208, %v1204
      %v1210 = vrot.slane %v1209, 4
      %v1212 = vshll.u32 %v1066, 16
      %v1214 = vrot.slane %v1212, 5
      %v1215 = vsel %vm1071, %v1210, %v1214
      %v1217 = vshrl.u32 %v1057, 16
      %v1219 = vrot.slane %v1217, 4
      %v1220 = vshll.u32 %v1057, 16
      %v1222 = vrot.slane %v1220, 5
      %v1223 = vor.u32 %v1219, %v1222
      %v1224 = vrot.slane %v1223, 4
      %v1226 = vshll.u32 %v1058, 16
      %v1228 = vrot.slane %v1226, 5
      %v1229 = vsel %vm1071, %v1224, %v1228
      %v1230 = vshrl.u32 %v1058, 16
      %v1232 = vrot.slane %v1230, 4
      %v1233 = vor.u32 %v1232, %v1228
      %v1234 = vrot.slane %v1233, 4
      %v1236 = vshll.u32 %v1067, 16
      %v1238 = vrot.slane %v1236, 5
      %v1239 = vsel %vm1071, %v1234, %v1238
      %v1241 = vshrl.u32 %v1059, 16
      %v1243 = vrot.slane %v1241, 4
      %v1244 = vshll.u32 %v1059, 16
      %v1246 = vrot.slane %v1244, 5
      %v1247 = vor.u32 %v1243, %v1246
      %v1248 = vrot.slane %v1247, 4
      %v1250 = vshll.u32 %v1060, 16
      %v1252 = vrot.slane %v1250, 5
      %v1253 = vsel %vm1071, %v1248, %v1252
      %v1254 = vshrl.u32 %v1060, 16
      %v1256 = vrot.slane %v1254, 4
      %v1257 = vor.u32 %v1256, %v1252
      %v1258 = vrot.slane %v1257, 4
      %v1260 = vshll.u32 %v1068, 16
      %v1262 = vrot.slane %v1260, 5
      %v1263 = vsel %vm1071, %v1258, %v1262
      %v1280 = vld [vmem:[%s1044] sm:$0xe]
      %v1281 = vld [vmem:[%s1044 + $0xc] sm:$0xe]
      %v1282 = vld [vmem:[%s1044 + $0x18] sm:$0xe]
      %v1283 = vld [vmem:[%s1044 + $0x24] sm:$0xe]
      %v1284 = vld [vmem:[%s1044 + $0x30] sm:$0xe]
      %v1285 = vld [vmem:[%s1044 + $0x3c] sm:$0xe]
      %v1286 = vld [vmem:[%s1044 + $0x48] sm:$0xe]
      %v1287 = vld [vmem:[%s1044 + $0x54] sm:$0xe]
      %vm1312 = vcmask 1042432
      %vm1313 = vcmask 1046532
      %vm1314 = vmor %vm1312, %vm1313
      %v1315 = vrot.slane %v1280, 5
      %v1316 = vrot.slane %v1315, 4
      %v1317 = vrot.slane %v1046, 5
      %v1318 = vsel %vm1314, %v1316, %v1317
      %v1319 = vrot.slane %v1317, 4
      %v1320 = vrot.slane %v1061, 5
      %v1321 = vsel %vm1314, %v1319, %v1320
      %v1322 = vrot.slane %v1281, 5
      %v1323 = vrot.slane %v1322, 4
      %v1324 = vrot.slane %v1048, 5
      %v1325 = vsel %vm1314, %v1323, %v1324
      %v1326 = vrot.slane %v1324, 4
      %v1327 = vrot.slane %v1062, 5
      %v1328 = vsel %vm1314, %v1326, %v1327
      %v1329 = vrot.slane %v1282, 5
      %v1330 = vrot.slane %v1329, 4
      %v1331 = vrot.slane %v1050, 5
      %v1332 = vsel %vm1314, %v1330, %v1331
      %v1333 = vrot.slane %v1331, 4
      %v1334 = vrot.slane %v1063, 5
      %v1335 = vsel %vm1314, %v1333, %v1334
      %v1336 = vrot.slane %v1283, 5
      %v1337 = vrot.slane %v1336, 4
      %v1338 = vrot.slane %v1052, 5
      %v1339 = vsel %vm1314, %v1337, %v1338
      %v1340 = vrot.slane %v1338, 4
      %v1341 = vrot.slane %v1064, 5
      %v1342 = vsel %vm1314, %v1340, %v1341
      %v1343 = vrot.slane %v1284, 5
      %v1344 = vrot.slane %v1343, 4
      %v1345 = vrot.slane %v1054, 5
      %v1346 = vsel %vm1314, %v1344, %v1345
      %v1347 = vrot.slane %v1345, 4
      %v1348 = vrot.slane %v1065, 5
      %v1349 = vsel %vm1314, %v1347, %v1348
      %v1350 = vrot.slane %v1285, 5
      %v1351 = vrot.slane %v1350, 4
      %v1352 = vrot.slane %v1056, 5
      %v1353 = vsel %vm1314, %v1351, %v1352
      %v1354 = vrot.slane %v1352, 4
      %v1355 = vrot.slane %v1066, 5
      %v1356 = vsel %vm1314, %v1354, %v1355
      %v1357 = vrot.slane %v1286, 5
      %v1358 = vrot.slane %v1357, 4
      %v1359 = vrot.slane %v1058, 5
      %v1360 = vsel %vm1314, %v1358, %v1359
      %v1361 = vrot.slane %v1359, 4
      %v1362 = vrot.slane %v1067, 5
      %v1363 = vsel %vm1314, %v1361, %v1362
      %v1364 = vrot.slane %v1287, 5
      %v1365 = vrot.slane %v1364, 4
      %v1366 = vrot.slane %v1060, 5
      %v1367 = vsel %vm1314, %v1365, %v1366
      %v1368 = vrot.slane %v1366, 4
      %v1369 = vrot.slane %v1068, 5
      %v1370 = vsel %vm1314, %v1368, %v1369
      %s1387 = sadd.s32 %s1041, 1
      %s1388 = smul.u32 %s1387, 3
      %s1389 = smul.addr %s1388, 4
      %s1390 = scalar_lea.vmem [#allocation2], %s1389
      %v1391 = vld [vmem:[%s1390] sm:$0xf]
      %v1392 = vld [vmem:[%s1390 + $0x4] sm:$0xf]
      %v1393 = vld [vmem:[%s1390 + $0xc] sm:$0xf]
      %v1394 = vld [vmem:[%s1390 + $0x10] sm:$0xf]
      %v1395 = vld [vmem:[%s1390 + $0x18] sm:$0xf]
      %v1396 = vld [vmem:[%s1390 + $0x1c] sm:$0xf]
      %v1397 = vld [vmem:[%s1390 + $0x24] sm:$0xf]
      %v1398 = vld [vmem:[%s1390 + $0x28] sm:$0xf]
      %v1399 = vld [vmem:[%s1390 + $0x30] sm:$0xf]
      %v1400 = vld [vmem:[%s1390 + $0x34] sm:$0xf]
      %v1401 = vld [vmem:[%s1390 + $0x3c] sm:$0xf]
      %v1402 = vld [vmem:[%s1390 + $0x40] sm:$0xf]
      %v1403 = vld [vmem:[%s1390 + $0x48] sm:$0xf]
      %v1404 = vld [vmem:[%s1390 + $0x4c] sm:$0xf]
      %v1405 = vld [vmem:[%s1390 + $0x54] sm:$0xf]
      %v1406 = vld [vmem:[%s1390 + $0x58] sm:$0xf]
      %v1407 = vld [vmem:[%s1390 + $0x8] sm:$0x1]
      %v1408 = vld [vmem:[%s1390 + $0x14] sm:$0x1]
      %v1409 = vld [vmem:[%s1390 + $0x20] sm:$0x1]
      %v1410 = vld [vmem:[%s1390 + $0x2c] sm:$0x1]
      %v1411 = vld [vmem:[%s1390 + $0x38] sm:$0x1]
      %v1412 = vld [vmem:[%s1390 + $0x44] sm:$0x1]
      %v1413 = vld [vmem:[%s1390 + $0x50] sm:$0x1]
      %v1414 = vld [vmem:[%s1390 + $0x5c] sm:$0x1]
      %v1416 = vshrl.u32 %v1391, 16
      %v1418 = vrot.slane %v1416, 4
      %v1419 = vshll.u32 %v1391, 16
      %v1421 = vrot.slane %v1419, 5
      %v1422 = vor.u32 %v1418, %v1421
      %v1423 = vrot.slane %v1422, 4
      %v1425 = vshll.u32 %v1392, 16
      %v1427 = vrot.slane %v1425, 5
      %v1428 = vsel %vm1071, %v1423, %v1427
      %v1429 = vshrl.u32 %v1392, 16
      %v1431 = vrot.slane %v1429, 4
      %v1432 = vor.u32 %v1431, %v1427
      %v1433 = vrot.slane %v1432, 4
      %v1435 = vshll.u32 %v1407, 16
      %v1437 = vrot.slane %v1435, 5
      %v1438 = vsel %vm1071, %v1433, %v1437
      %v1440 = vshrl.u32 %v1393, 16
      %v1442 = vrot.slane %v1440, 4
      %v1443 = vshll.u32 %v1393, 16
      %v1445 = vrot.slane %v1443, 5
      %v1446 = vor.u32 %v1442, %v1445
      %v1447 = vrot.slane %v1446, 4
      %v1449 = vshll.u32 %v1394, 16
      %v1451 = vrot.slane %v1449, 5
      %v1452 = vsel %vm1071, %v1447, %v1451
      %v1453 = vshrl.u32 %v1394, 16
      %v1455 = vrot.slane %v1453, 4
      %v1456 = vor.u32 %v1455, %v1451
      %v1457 = vrot.slane %v1456, 4
      %v1459 = vshll.u32 %v1408, 16
      %v1461 = vrot.slane %v1459, 5
      %v1462 = vsel %vm1071, %v1457, %v1461
      %v1464 = vshrl.u32 %v1395, 16
      %v1466 = vrot.slane %v1464, 4
      %v1467 = vshll.u32 %v1395, 16
      %v1469 = vrot.slane %v1467, 5
      %v1470 = vor.u32 %v1466, %v1469
      %v1471 = vrot.slane %v1470, 4
      %v1473 = vshll.u32 %v1396, 16
      %v1475 = vrot.slane %v1473, 5
      %v1476 = vsel %vm1071, %v1471, %v1475
      %v1477 = vshrl.u32 %v1396, 16
      %v1479 = vrot.slane %v1477, 4
      %v1480 = vor.u32 %v1479, %v1475
      %v1481 = vrot.slane %v1480, 4
      %v1483 = vshll.u32 %v1409, 16
      %v1485 = vrot.slane %v1483, 5
      %v1486 = vsel %vm1071, %v1481, %v1485
      %v1488 = vshrl.u32 %v1397, 16
      %v1490 = vrot.slane %v1488, 4
      %v1491 = vshll.u32 %v1397, 16
      %v1493 = vrot.slane %v1491, 5
      %v1494 = vor.u32 %v1490, %v1493
      %v1495 = vrot.slane %v1494, 4
      %v1497 = vshll.u32 %v1398, 16
      %v1499 = vrot.slane %v1497, 5
      %v1500 = vsel %vm1071, %v1495, %v1499
      %v1501 = vshrl.u32 %v1398, 16
      %v1503 = vrot.slane %v1501, 4
      %v1504 = vor.u32 %v1503, %v1499
      %v1505 = vrot.slane %v1504, 4
      %v1507 = vshll.u32 %v1410, 16
      %v1509 = vrot.slane %v1507, 5
      %v1510 = vsel %vm1071, %v1505, %v1509
      %v1512 = vshrl.u32 %v1399, 16
      %v1514 = vrot.slane %v1512, 4
      %v1515 = vshll.u32 %v1399, 16
      %v1517 = vrot.slane %v1515, 5
      %v1518 = vor.u32 %v1514, %v1517
      %v1519 = vrot.slane %v1518, 4
      %v1521 = vshll.u32 %v1400, 16
      %v1523 = vrot.slane %v1521, 5
      %v1524 = vsel %vm1071, %v1519, %v1523
      %v1525 = vshrl.u32 %v1400, 16
      %v1527 = vrot.slane %v1525, 4
      %v1528 = vor.u32 %v1527, %v1523
      %v1529 = vrot.slane %v1528, 4
      %v1531 = vshll.u32 %v1411, 16
      %v1533 = vrot.slane %v1531, 5
      %v1534 = vsel %vm1071, %v1529, %v1533
      %v1536 = vshrl.u32 %v1401, 16
      %v1538 = vrot.slane %v1536, 4
      %v1539 = vshll.u32 %v1401, 16
      %v1541 = vrot.slane %v1539, 5
      %v1542 = vor.u32 %v1538, %v1541
      %v1543 = vrot.slane %v1542, 4
      %v1545 = vshll.u32 %v1402, 16
      %v1547 = vrot.slane %v1545, 5
      %v1548 = vsel %vm1071, %v1543, %v1547
      %v1549 = vshrl.u32 %v1402, 16
      %v1551 = vrot.slane %v1549, 4
      %v1552 = vor.u32 %v1551, %v1547
      %v1553 = vrot.slane %v1552, 4
      %v1555 = vshll.u32 %v1412, 16
      %v1557 = vrot.slane %v1555, 5
      %v1558 = vsel %vm1071, %v1553, %v1557
      %v1560 = vshrl.u32 %v1403, 16
      %v1562 = vrot.slane %v1560, 4
      %v1563 = vshll.u32 %v1403, 16
      %v1565 = vrot.slane %v1563, 5
      %v1566 = vor.u32 %v1562, %v1565
      %v1567 = vrot.slane %v1566, 4
      %v1569 = vshll.u32 %v1404, 16
      %v1571 = vrot.slane %v1569, 5
      %v1572 = vsel %vm1071, %v1567, %v1571
      %v1573 = vshrl.u32 %v1404, 16
      %v1575 = vrot.slane %v1573, 4
      %v1576 = vor.u32 %v1575, %v1571
      %v1577 = vrot.slane %v1576, 4
      %v1579 = vshll.u32 %v1413, 16
      %v1581 = vrot.slane %v1579, 5
      %v1582 = vsel %vm1071, %v1577, %v1581
      %v1584 = vshrl.u32 %v1405, 16
      %v1586 = vrot.slane %v1584, 4
      %v1587 = vshll.u32 %v1405, 16
      %v1589 = vrot.slane %v1587, 5
      %v1590 = vor.u32 %v1586, %v1589
      %v1591 = vrot.slane %v1590, 4
      %v1593 = vshll.u32 %v1406, 16
      %v1595 = vrot.slane %v1593, 5
      %v1596 = vsel %vm1071, %v1591, %v1595
      %v1597 = vshrl.u32 %v1406, 16
      %v1599 = vrot.slane %v1597, 4
      %v1600 = vor.u32 %v1599, %v1595
      %v1601 = vrot.slane %v1600, 4
      %v1603 = vshll.u32 %v1414, 16
      %v1605 = vrot.slane %v1603, 5
      %v1606 = vsel %vm1071, %v1601, %v1605
      %v1623 = vld [vmem:[%s1390] sm:$0xe]
      %v1624 = vld [vmem:[%s1390 + $0xc] sm:$0xe]
      %v1625 = vld [vmem:[%s1390 + $0x18] sm:$0xe]
      %v1626 = vld [vmem:[%s1390 + $0x24] sm:$0xe]
      %v1627 = vld [vmem:[%s1390 + $0x30] sm:$0xe]
      %v1628 = vld [vmem:[%s1390 + $0x3c] sm:$0xe]
      %v1629 = vld [vmem:[%s1390 + $0x48] sm:$0xe]
      %v1630 = vld [vmem:[%s1390 + $0x54] sm:$0xe]
      %v1655 = vrot.slane %v1623, 5
      %v1656 = vrot.slane %v1655, 4
      %v1657 = vrot.slane %v1392, 5
      %v1658 = vsel %vm1314, %v1656, %v1657
      %v1659 = vrot.slane %v1657, 4
      %v1660 = vrot.slane %v1407, 5
      %v1661 = vsel %vm1314, %v1659, %v1660
      %v1662 = vrot.slane %v1624, 5
      %v1663 = vrot.slane %v1662, 4
      %v1664 = vrot.slane %v1394, 5
      %v1665 = vsel %vm1314, %v1663, %v1664
      %v1666 = vrot.slane %v1664, 4
      %v1667 = vrot.slane %v1408, 5
      %v1668 = vsel %vm1314, %v1666, %v1667
      %v1669 = vrot.slane %v1625, 5
      %v1670 = vrot.slane %v1669, 4
      %v1671 = vrot.slane %v1396, 5
      %v1672 = vsel %vm1314, %v1670, %v1671
      %v1673 = vrot.slane %v1671, 4
      %v1674 = vrot.slane %v1409, 5
      %v1675 = vsel %vm1314, %v1673, %v1674
      %v1676 = vrot.slane %v1626, 5
      %v1677 = vrot.slane %v1676, 4
      %v1678 = vrot.slane %v1398, 5
      %v1679 = vsel %vm1314, %v1677, %v1678
      %v1680 = vrot.slane %v1678, 4
      %v1681 = vrot.slane %v1410, 5
      %v1682 = vsel %vm1314, %v1680, %v1681
      %v1683 = vrot.slane %v1627, 5
      %v1684 = vrot.slane %v1683, 4
      %v1685 = vrot.slane %v1400, 5
      %v1686 = vsel %vm1314, %v1684, %v1685
      %v1687 = vrot.slane %v1685, 4
      %v1688 = vrot.slane %v1411, 5
      %v1689 = vsel %vm1314, %v1687, %v1688
      %v1690 = vrot.slane %v1628, 5
      %v1691 = vrot.slane %v1690, 4
      %v1692 = vrot.slane %v1402, 5
      %v1693 = vsel %vm1314, %v1691, %v1692
      %v1694 = vrot.slane %v1692, 4
      %v1695 = vrot.slane %v1412, 5
      %v1696 = vsel %vm1314, %v1694, %v1695
      %v1697 = vrot.slane %v1629, 5
      %v1698 = vrot.slane %v1697, 4
      %v1699 = vrot.slane %v1404, 5
      %v1700 = vsel %vm1314, %v1698, %v1699
      %v1701 = vrot.slane %v1699, 4
      %v1702 = vrot.slane %v1413, 5
      %v1703 = vsel %vm1314, %v1701, %v1702
      %v1704 = vrot.slane %v1630, 5
      %v1705 = vrot.slane %v1704, 4
      %v1706 = vrot.slane %v1406, 5
      %v1707 = vsel %vm1314, %v1705, %v1706
      %v1708 = vrot.slane %v1706, 4
      %v1709 = vrot.slane %v1414, 5
      %v1710 = vsel %vm1314, %v1708, %v1709
      %s1727 = sadd.s32 %s1041, 2
      %s1728 = smul.u32 %s1727, 3
      %s1729 = smul.addr %s1728, 4
      %s1730 = scalar_lea.vmem [#allocation2], %s1729
      %v1731 = vld [vmem:[%s1730] sm:$0xf]
      %v1732 = vld [vmem:[%s1730 + $0x4] sm:$0xf]
      %v1733 = vld [vmem:[%s1730 + $0xc] sm:$0xf]
      %v1734 = vld [vmem:[%s1730 + $0x10] sm:$0xf]
      %v1735 = vld [vmem:[%s1730 + $0x18] sm:$0xf]
      %v1736 = vld [vmem:[%s1730 + $0x1c] sm:$0xf]
      %v1737 = vld [vmem:[%s1730 + $0x24] sm:$0xf]
      %v1738 = vld [vmem:[%s1730 + $0x28] sm:$0xf]
      %v1739 = vld [vmem:[%s1730 + $0x30] sm:$0xf]
      %v1740 = vld [vmem:[%s1730 + $0x34] sm:$0xf]
      %v1741 = vld [vmem:[%s1730 + $0x3c] sm:$0xf]
      %v1742 = vld [vmem:[%s1730 + $0x40] sm:$0xf]
      %v1743 = vld [vmem:[%s1730 + $0x48] sm:$0xf]
      %v1744 = vld [vmem:[%s1730 + $0x4c] sm:$0xf]
      %v1745 = vld [vmem:[%s1730 + $0x54] sm:$0xf]
      %v1746 = vld [vmem:[%s1730 + $0x58] sm:$0xf]
      %v1747 = vld [vmem:[%s1730 + $0x8] sm:$0x1]
      %v1748 = vld [vmem:[%s1730 + $0x14] sm:$0x1]
      %v1749 = vld [vmem:[%s1730 + $0x20] sm:$0x1]
      %v1750 = vld [vmem:[%s1730 + $0x2c] sm:$0x1]
      %v1751 = vld [vmem:[%s1730 + $0x38] sm:$0x1]
      %v1752 = vld [vmem:[%s1730 + $0x44] sm:$0x1]
      %v1753 = vld [vmem:[%s1730 + $0x50] sm:$0x1]
      %v1754 = vld [vmem:[%s1730 + $0x5c] sm:$0x1]
      %v1756 = vshrl.u32 %v1731, 16
      %v1758 = vrot.slane %v1756, 4
      %v1759 = vshll.u32 %v1731, 16
      %v1761 = vrot.slane %v1759, 5
      %v1762 = vor.u32 %v1758, %v1761
      %v1763 = vrot.slane %v1762, 4
      %v1765 = vshll.u32 %v1732, 16
      %v1767 = vrot.slane %v1765, 5
      %v1768 = vsel %vm1071, %v1763, %v1767
      %v1769 = vshrl.u32 %v1732, 16
      %v1771 = vrot.slane %v1769, 4
      %v1772 = vor.u32 %v1771, %v1767
      %v1773 = vrot.slane %v1772, 4
      %v1775 = vshll.u32 %v1747, 16
      %v1777 = vrot.slane %v1775, 5
      %v1778 = vsel %vm1071, %v1773, %v1777
      %v1780 = vshrl.u32 %v1733, 16
      %v1782 = vrot.slane %v1780, 4
      %v1783 = vshll.u32 %v1733, 16
      %v1785 = vrot.slane %v1783, 5
      %v1786 = vor.u32 %v1782, %v1785
      %v1787 = vrot.slane %v1786, 4
      %v1789 = vshll.u32 %v1734, 16
      %v1791 = vrot.slane %v1789, 5
      %v1792 = vsel %vm1071, %v1787, %v1791
      %v1793 = vshrl.u32 %v1734, 16
      %v1795 = vrot.slane %v1793, 4
      %v1796 = vor.u32 %v1795, %v1791
      %v1797 = vrot.slane %v1796, 4
      %v1799 = vshll.u32 %v1748, 16
      %v1801 = vrot.slane %v1799, 5
      %v1802 = vsel %vm1071, %v1797, %v1801
      %v1804 = vshrl.u32 %v1735, 16
      %v1806 = vrot.slane %v1804, 4
      %v1807 = vshll.u32 %v1735, 16
      %v1809 = vrot.slane %v1807, 5
      %v1810 = vor.u32 %v1806, %v1809
      %v1811 = vrot.slane %v1810, 4
      %v1813 = vshll.u32 %v1736, 16
      %v1815 = vrot.slane %v1813, 5
      %v1816 = vsel %vm1071, %v1811, %v1815
      %v1817 = vshrl.u32 %v1736, 16
      %v1819 = vrot.slane %v1817, 4
      %v1820 = vor.u32 %v1819, %v1815
      %v1821 = vrot.slane %v1820, 4
      %v1823 = vshll.u32 %v1749, 16
      %v1825 = vrot.slane %v1823, 5
      %v1826 = vsel %vm1071, %v1821, %v1825
      %v1828 = vshrl.u32 %v1737, 16
      %v1830 = vrot.slane %v1828, 4
      %v1831 = vshll.u32 %v1737, 16
      %v1833 = vrot.slane %v1831, 5
      %v1834 = vor.u32 %v1830, %v1833
      %v1835 = vrot.slane %v1834, 4
      %v1837 = vshll.u32 %v1738, 16
      %v1839 = vrot.slane %v1837, 5
      %v1840 = vsel %vm1071, %v1835, %v1839
      %v1841 = vshrl.u32 %v1738, 16
      %v1843 = vrot.slane %v1841, 4
      %v1844 = vor.u32 %v1843, %v1839
      %v1845 = vrot.slane %v1844, 4
      %v1847 = vshll.u32 %v1750, 16
      %v1849 = vrot.slane %v1847, 5
      %v1850 = vsel %vm1071, %v1845, %v1849
      %v1852 = vshrl.u32 %v1739, 16
      %v1854 = vrot.slane %v1852, 4
      %v1855 = vshll.u32 %v1739, 16
      %v1857 = vrot.slane %v1855, 5
      %v1858 = vor.u32 %v1854, %v1857
      %v1859 = vrot.slane %v1858, 4
      %v1861 = vshll.u32 %v1740, 16
      %v1863 = vrot.slane %v1861, 5
      %v1864 = vsel %vm1071, %v1859, %v1863
      %v1865 = vshrl.u32 %v1740, 16
      %v1867 = vrot.slane %v1865, 4
      %v1868 = vor.u32 %v1867, %v1863
      %v1869 = vrot.slane %v1868, 4
      %v1871 = vshll.u32 %v1751, 16
      %v1873 = vrot.slane %v1871, 5
      %v1874 = vsel %vm1071, %v1869, %v1873
      %v1876 = vshrl.u32 %v1741, 16
      %v1878 = vrot.slane %v1876, 4
      %v1879 = vshll.u32 %v1741, 16
      %v1881 = vrot.slane %v1879, 5
      %v1882 = vor.u32 %v1878, %v1881
      %v1883 = vrot.slane %v1882, 4
      %v1885 = vshll.u32 %v1742, 16
      %v1887 = vrot.slane %v1885, 5
      %v1888 = vsel %vm1071, %v1883, %v1887
      %v1889 = vshrl.u32 %v1742, 16
      %v1891 = vrot.slane %v1889, 4
      %v1892 = vor.u32 %v1891, %v1887
      %v1893 = vrot.slane %v1892, 4
      %v1895 = vshll.u32 %v1752, 16
      %v1897 = vrot.slane %v1895, 5
      %v1898 = vsel %vm1071, %v1893, %v1897
      %v1900 = vshrl.u32 %v1743, 16
      %v1902 = vrot.slane %v1900, 4
      %v1903 = vshll.u32 %v1743, 16
      %v1905 = vrot.slane %v1903, 5
      %v1906 = vor.u32 %v1902, %v1905
      %v1907 = vrot.slane %v1906, 4
      %v1909 = vshll.u32 %v1744, 16
      %v1911 = vrot.slane %v1909, 5
      %v1912 = vsel %vm1071, %v1907, %v1911
      %v1913 = vshrl.u32 %v1744, 16
      %v1915 = vrot.slane %v1913, 4
      %v1916 = vor.u32 %v1915, %v1911
      %v1917 = vrot.slane %v1916, 4
      %v1919 = vshll.u32 %v1753, 16
      %v1921 = vrot.slane %v1919, 5
      %v1922 = vsel %vm1071, %v1917, %v1921
      %v1924 = vshrl.u32 %v1745, 16
      %v1926 = vrot.slane %v1924, 4
      %v1927 = vshll.u32 %v1745, 16
      %v1929 = vrot.slane %v1927, 5
      %v1930 = vor.u32 %v1926, %v1929
      %v1931 = vrot.slane %v1930, 4
      %v1933 = vshll.u32 %v1746, 16
      %v1935 = vrot.slane %v1933, 5
      %v1936 = vsel %vm1071, %v1931, %v1935
      %v1937 = vshrl.u32 %v1746, 16
      %v1939 = vrot.slane %v1937, 4
      %v1940 = vor.u32 %v1939, %v1935
      %v1941 = vrot.slane %v1940, 4
      %v1943 = vshll.u32 %v1754, 16
      %v1945 = vrot.slane %v1943, 5
      %v1946 = vsel %vm1071, %v1941, %v1945
      %v1963 = vld [vmem:[%s1730] sm:$0xe]
      %v1964 = vld [vmem:[%s1730 + $0xc] sm:$0xe]
      %v1965 = vld [vmem:[%s1730 + $0x18] sm:$0xe]
      %v1966 = vld [vmem:[%s1730 + $0x24] sm:$0xe]
      %v1967 = vld [vmem:[%s1730 + $0x30] sm:$0xe]
      %v1968 = vld [vmem:[%s1730 + $0x3c] sm:$0xe]
      %v1969 = vld [vmem:[%s1730 + $0x48] sm:$0xe]
      %v1970 = vld [vmem:[%s1730 + $0x54] sm:$0xe]
      %v1995 = vrot.slane %v1963, 5
      %v1996 = vrot.slane %v1995, 4
      %v1997 = vrot.slane %v1732, 5
      %v1998 = vsel %vm1314, %v1996, %v1997
      %v1999 = vrot.slane %v1997, 4
      %v2000 = vrot.slane %v1747, 5
      %v2001 = vsel %vm1314, %v1999, %v2000
      %v2002 = vrot.slane %v1964, 5
      %v2003 = vrot.slane %v2002, 4
      %v2004 = vrot.slane %v1734, 5
      %v2005 = vsel %vm1314, %v2003, %v2004
      %v2006 = vrot.slane %v2004, 4
      %v2007 = vrot.slane %v1748, 5
      %v2008 = vsel %vm1314, %v2006, %v2007
      %v2009 = vrot.slane %v1965, 5
      %v2010 = vrot.slane %v2009, 4
      %v2011 = vrot.slane %v1736, 5
      %v2012 = vsel %vm1314, %v2010, %v2011
      %v2013 = vrot.slane %v2011, 4
      %v2014 = vrot.slane %v1749, 5
      %v2015 = vsel %vm1314, %v2013, %v2014
      %v2016 = vrot.slane %v1966, 5
      %v2017 = vrot.slane %v2016, 4
      %v2018 = vrot.slane %v1738, 5
      %v2019 = vsel %vm1314, %v2017, %v2018
      %v2020 = vrot.slane %v2018, 4
      %v2021 = vrot.slane %v1750, 5
      %v2022 = vsel %vm1314, %v2020, %v2021
      %v2023 = vrot.slane %v1967, 5
      %v2024 = vrot.slane %v2023, 4
      %v2025 = vrot.slane %v1740, 5
      %v2026 = vsel %vm1314, %v2024, %v2025
      %v2027 = vrot.slane %v2025, 4
      %v2028 = vrot.slane %v1751, 5
      %v2029 = vsel %vm1314, %v2027, %v2028
      %v2030 = vrot.slane %v1968, 5
      %v2031 = vrot.slane %v2030, 4
      %v2032 = vrot.slane %v1742, 5
      %v2033 = vsel %vm1314, %v2031, %v2032
      %v2034 = vrot.slane %v2032, 4
      %v2035 = vrot.slane %v1752, 5
      %v2036 = vsel %vm1314, %v2034, %v2035
      %v2037 = vrot.slane %v1969, 5
      %v2038 = vrot.slane %v2037, 4
      %v2039 = vrot.slane %v1744, 5
      %v2040 = vsel %vm1314, %v2038, %v2039
      %v2041 = vrot.slane %v2039, 4
      %v2042 = vrot.slane %v1753, 5
      %v2043 = vsel %vm1314, %v2041, %v2042
      %v2044 = vrot.slane %v1970, 5
      %v2045 = vrot.slane %v2044, 4
      %v2046 = vrot.slane %v1746, 5
      %v2047 = vsel %vm1314, %v2045, %v2046
      %v2048 = vrot.slane %v2046, 4
      %v2049 = vrot.slane %v1754, 5
      %v2050 = vsel %vm1314, %v2048, %v2049
      %2067 = vst [vmem:[#allocation3] sm:$0xf] %v1045
      %2068 = vst [vmem:[#allocation3 + $0x24] sm:$0xf] %v1046
      %2069 = vst [vmem:[#allocation3 + $0x48] sm:$0xf] %v1047
      %2070 = vst [vmem:[#allocation3 + $0x6c] sm:$0xf] %v1048
      %2071 = vst [vmem:[#allocation3 + $0x90] sm:$0xf] %v1049
      %2072 = vst [vmem:[#allocation3 + $0xb4] sm:$0xf] %v1050
      %2073 = vst [vmem:[#allocation3 + $0xd8] sm:$0xf] %v1051
      %2074 = vst [vmem:[#allocation3 + $0xfc] sm:$0xf] %v1052
      %2075 = vst [vmem:[#allocation3 + $0x120] sm:$0xf] %v1053
      %2076 = vst [vmem:[#allocation3 + $0x144] sm:$0xf] %v1054
      %2077 = vst [vmem:[#allocation3 + $0x168] sm:$0xf] %v1055
      %2078 = vst [vmem:[#allocation3 + $0x18c] sm:$0xf] %v1056
      %2079 = vst [vmem:[#allocation3 + $0x1b0] sm:$0xf] %v1057
      %2080 = vst [vmem:[#allocation3 + $0x1d4] sm:$0xf] %v1058
      %2081 = vst [vmem:[#allocation3 + $0x1f8] sm:$0xf] %v1059
      %2082 = vst [vmem:[#allocation3 + $0x21c] sm:$0xf] %v1060
      %2083 = vst [vmem:[#allocation3 + $0x4] sm:$0xf] %v1085
      %2084 = vst [vmem:[#allocation3 + $0x28] sm:$0xf] %v1095
      %2085 = vst [vmem:[#allocation3 + $0x4c] sm:$0xf] %v1109
      %2086 = vst [vmem:[#allocation3 + $0x70] sm:$0xf] %v1119
      %2087 = vst [vmem:[#allocation3 + $0x94] sm:$0xf] %v1133
      %2088 = vst [vmem:[#allocation3 + $0xb8] sm:$0xf] %v1143
      %2089 = vst [vmem:[#allocation3 + $0xdc] sm:$0xf] %v1157
      %2090 = vst [vmem:[#allocation3 + $0x100] sm:$0xf] %v1167
      %2091 = vst [vmem:[#allocation3 + $0x124] sm:$0xf] %v1181
      %2092 = vst [vmem:[#allocation3 + $0x148] sm:$0xf] %v1191
      %2093 = vst [vmem:[#allocation3 + $0x16c] sm:$0xf] %v1205
      %2094 = vst [vmem:[#allocation3 + $0x190] sm:$0xf] %v1215
      %2095 = vst [vmem:[#allocation3 + $0x1b4] sm:$0xf] %v1229
      %2096 = vst [vmem:[#allocation3 + $0x1d8] sm:$0xf] %v1239
      %2097 = vst [vmem:[#allocation3 + $0x1fc] sm:$0xf] %v1253
      %2098 = vst [vmem:[#allocation3 + $0x220] sm:$0xf] %v1263
      %2099 = vst [vmem:[#allocation3 + $0x8] sm:$0xf] %v1318
      %2100 = vst [vmem:[#allocation3 + $0x2c] sm:$0xf] %v1321
      %2101 = vst [vmem:[#allocation3 + $0x50] sm:$0xf] %v1325
      %2102 = vst [vmem:[#allocation3 + $0x74] sm:$0xf] %v1328
      %2103 = vst [vmem:[#allocation3 + $0x98] sm:$0xf] %v1332
      %2104 = vst [vmem:[#allocation3 + $0xbc] sm:$0xf] %v1335
      %2105 = vst [vmem:[#allocation3 + $0xe0] sm:$0xf] %v1339
      %2106 = vst [vmem:[#allocation3 + $0x104] sm:$0xf] %v1342
      %2107 = vst [vmem:[#allocation3 + $0x128] sm:$0xf] %v1346
      %2108 = vst [vmem:[#allocation3 + $0x14c] sm:$0xf] %v1349
      %2109 = vst [vmem:[#allocation3 + $0x170] sm:$0xf] %v1353
      %2110 = vst [vmem:[#allocation3 + $0x194] sm:$0xf] %v1356
      %2111 = vst [vmem:[#allocation3 + $0x1b8] sm:$0xf] %v1360
      %2112 = vst [vmem:[#allocation3 + $0x1dc] sm:$0xf] %v1363
      %2113 = vst [vmem:[#allocation3 + $0x200] sm:$0xf] %v1367
      %2114 = vst [vmem:[#allocation3 + $0x224] sm:$0xf] %v1370
      %2115 = vst [vmem:[#allocation3 + $0xc] sm:$0xf] %v1391
      %2116 = vst [vmem:[#allocation3 + $0x30] sm:$0xf] %v1392
      %2117 = vst [vmem:[#allocation3 + $0x54] sm:$0xf] %v1393
      %2118 = vst [vmem:[#allocation3 + $0x78] sm:$0xf] %v1394
      %2119 = vst [vmem:[#allocation3 + $0x9c] sm:$0xf] %v1395
      %2120 = vst [vmem:[#allocation3 + $0xc0] sm:$0xf] %v1396
      %2121 = vst [vmem:[#allocation3 + $0xe4] sm:$0xf] %v1397
      %2122 = vst [vmem:[#allocation3 + $0x108] sm:$0xf] %v1398
      %2123 = vst [vmem:[#allocation3 + $0x12c] sm:$0xf] %v1399
      %2124 = vst [vmem:[#allocation3 + $0x150] sm:$0xf] %v1400
      %2125 = vst [vmem:[#allocation3 + $0x174] sm:$0xf] %v1401
      %2126 = vst [vmem:[#allocation3 + $0x198] sm:$0xf] %v1402
      %2127 = vst [vmem:[#allocation3 + $0x1bc] sm:$0xf] %v1403
      %2128 = vst [vmem:[#allocation3 + $0x1e0] sm:$0xf] %v1404
      %2129 = vst [vmem:[#allocation3 + $0x204] sm:$0xf] %v1405
      %2130 = vst [vmem:[#allocation3 + $0x228] sm:$0xf] %v1406
      %2131 = vst [vmem:[#allocation3 + $0x10] sm:$0xf] %v1428
      %2132 = vst [vmem:[#allocation3 + $0x34] sm:$0xf] %v1438
      %2133 = vst [vmem:[#allocation3 + $0x58] sm:$0xf] %v1452
      %2134 = vst [vmem:[#allocation3 + $0x7c] sm:$0xf] %v1462
      %2135 = vst [vmem:[#allocation3 + $0xa0] sm:$0xf] %v1476
      %2136 = vst [vmem:[#allocation3 + $0xc4] sm:$0xf] %v1486
      %2137 = vst [vmem:[#allocation3 + $0xe8] sm:$0xf] %v1500
      %2138 = vst [vmem:[#allocation3 + $0x10c] sm:$0xf] %v1510
      %2139 = vst [vmem:[#allocation3 + $0x130] sm:$0xf] %v1524
      %2140 = vst [vmem:[#allocation3 + $0x154] sm:$0xf] %v1534
      %2141 = vst [vmem:[#allocation3 + $0x178] sm:$0xf] %v1548
      %2142 = vst [vmem:[#allocation3 + $0x19c] sm:$0xf] %v1558
      %2143 = vst [vmem:[#allocation3 + $0x1c0] sm:$0xf] %v1572
      %2144 = vst [vmem:[#allocation3 + $0x1e4] sm:$0xf] %v1582
      %2145 = vst [vmem:[#allocation3 + $0x208] sm:$0xf] %v1596
      %2146 = vst [vmem:[#allocation3 + $0x22c] sm:$0xf] %v1606
      %2147 = vst [vmem:[#allocation3 + $0x14] sm:$0xf] %v1658
      %2148 = vst [vmem:[#allocation3 + $0x38] sm:$0xf] %v1661
      %2149 = vst [vmem:[#allocation3 + $0x5c] sm:$0xf] %v1665
      %2150 = vst [vmem:[#allocation3 + $0x80] sm:$0xf] %v1668
      %2151 = vst [vmem:[#allocation3 + $0xa4] sm:$0xf] %v1672
      %2152 = vst [vmem:[#allocation3 + $0xc8] sm:$0xf] %v1675
      %2153 = vst [vmem:[#allocation3 + $0xec] sm:$0xf] %v1679
      %2154 = vst [vmem:[#allocation3 + $0x110] sm:$0xf] %v1682
      %2155 = vst [vmem:[#allocation3 + $0x134] sm:$0xf] %v1686
      %2156 = vst [vmem:[#allocation3 + $0x158] sm:$0xf] %v1689
      %2157 = vst [vmem:[#allocation3 + $0x17c] sm:$0xf] %v1693
      %2158 = vst [vmem:[#allocation3 + $0x1a0] sm:$0xf] %v1696
      %2159 = vst [vmem:[#allocation3 + $0x1c4] sm:$0xf] %v1700
      %2160 = vst [vmem:[#allocation3 + $0x1e8] sm:$0xf] %v1703
      %2161 = vst [vmem:[#allocation3 + $0x20c] sm:$0xf] %v1707
      %2162 = vst [vmem:[#allocation3 + $0x230] sm:$0xf] %v1710
      %2163 = vst [vmem:[#allocation3 + $0x18] sm:$0xf] %v1731
      %2164 = vst [vmem:[#allocation3 + $0x3c] sm:$0xf] %v1732
      %2165 = vst [vmem:[#allocation3 + $0x60] sm:$0xf] %v1733
      %2166 = vst [vmem:[#allocation3 + $0x84] sm:$0xf] %v1734
      %2167 = vst [vmem:[#allocation3 + $0xa8] sm:$0xf] %v1735
      %2168 = vst [vmem:[#allocation3 + $0xcc] sm:$0xf] %v1736
      %2169 = vst [vmem:[#allocation3 + $0xf0] sm:$0xf] %v1737
      %2170 = vst [vmem:[#allocation3 + $0x114] sm:$0xf] %v1738
      %2171 = vst [vmem:[#allocation3 + $0x138] sm:$0xf] %v1739
      %2172 = vst [vmem:[#allocation3 + $0x15c] sm:$0xf] %v1740
      %2173 = vst [vmem:[#allocation3 + $0x180] sm:$0xf] %v1741
      %2174 = vst [vmem:[#allocation3 + $0x1a4] sm:$0xf] %v1742
      %2175 = vst [vmem:[#allocation3 + $0x1c8] sm:$0xf] %v1743
      %2176 = vst [vmem:[#allocation3 + $0x1ec] sm:$0xf] %v1744
      %2177 = vst [vmem:[#allocation3 + $0x210] sm:$0xf] %v1745
      %2178 = vst [vmem:[#allocation3 + $0x234] sm:$0xf] %v1746
      %2179 = vst [vmem:[#allocation3 + $0x1c] sm:$0xf] %v1768
      %2180 = vst [vmem:[#allocation3 + $0x40] sm:$0xf] %v1778
      %2181 = vst [vmem:[#allocation3 + $0x64] sm:$0xf] %v1792
      %2182 = vst [vmem:[#allocation3 + $0x88] sm:$0xf] %v1802
      %2183 = vst [vmem:[#allocation3 + $0xac] sm:$0xf] %v1816
      %2184 = vst [vmem:[#allocation3 + $0xd0] sm:$0xf] %v1826
      %2185 = vst [vmem:[#allocation3 + $0xf4] sm:$0xf] %v1840
      %2186 = vst [vmem:[#allocation3 + $0x118] sm:$0xf] %v1850
      %2187 = vst [vmem:[#allocation3 + $0x13c] sm:$0xf] %v1864
      %2188 = vst [vmem:[#allocation3 + $0x160] sm:$0xf] %v1874
      %2189 = vst [vmem:[#allocation3 + $0x184] sm:$0xf] %v1888
      %2190 = vst [vmem:[#allocation3 + $0x1a8] sm:$0xf] %v1898
      %2191 = vst [vmem:[#allocation3 + $0x1cc] sm:$0xf] %v1912
      %2192 = vst [vmem:[#allocation3 + $0x1f0] sm:$0xf] %v1922
      %2193 = vst [vmem:[#allocation3 + $0x214] sm:$0xf] %v1936
      %2194 = vst [vmem:[#allocation3 + $0x238] sm:$0xf] %v1946
      %2195 = vst [vmem:[#allocation3 + $0x20] sm:$0xf] %v1998
      %2196 = vst [vmem:[#allocation3 + $0x44] sm:$0xf] %v2001
      %2197 = vst [vmem:[#allocation3 + $0x68] sm:$0xf] %v2005
      %2198 = vst [vmem:[#allocation3 + $0x8c] sm:$0xf] %v2008
      %2199 = vst [vmem:[#allocation3 + $0xb0] sm:$0xf] %v2012
      %2200 = vst [vmem:[#allocation3 + $0xd4] sm:$0xf] %v2015
      %2201 = vst [vmem:[#allocation3 + $0xf8] sm:$0xf] %v2019
      %2202 = vst [vmem:[#allocation3 + $0x11c] sm:$0xf] %v2022
      %2203 = vst [vmem:[#allocation3 + $0x140] sm:$0xf] %v2026
      %2204 = vst [vmem:[#allocation3 + $0x164] sm:$0xf] %v2029
      %2205 = vst [vmem:[#allocation3 + $0x188] sm:$0xf] %v2033
      %2206 = vst [vmem:[#allocation3 + $0x1ac] sm:$0xf] %v2036
      %2207 = vst [vmem:[#allocation3 + $0x1d0] sm:$0xf] %v2040
      %2208 = vst [vmem:[#allocation3 + $0x1f4] sm:$0xf] %v2043
      %2209 = vst [vmem:[#allocation3 + $0x218] sm:$0xf] %v2047
      %2210 = vst [vmem:[#allocation3 + $0x23c] sm:$0xf] %v2050
      %v2211 = vld [vmem:[#allocation3] sm:$0xff]
      %v2212 = vld [vmem:[#allocation3 + $0x8] sm:$0xff]
      %v2213 = vld [vmem:[#allocation3 + $0x10] sm:$0xff]
      %v2214 = vld [vmem:[#allocation3 + $0x18] sm:$0xff]
      %v2215 = vld [vmem:[#allocation3 + $0x20] sm:$0xf]
      %v2216 = vld [vmem:[#allocation3 + $0x24] sm:$0xff]
      %v2217 = vld [vmem:[#allocation3 + $0x2c] sm:$0xff]
      %v2218 = vld [vmem:[#allocation3 + $0x34] sm:$0xff]
      %v2219 = vld [vmem:[#allocation3 + $0x3c] sm:$0xff]
      %v2220 = vld [vmem:[#allocation3 + $0x44] sm:$0xf]
      %v2221 = vld [vmem:[#allocation3 + $0x48] sm:$0xff]
      %v2222 = vld [vmem:[#allocation3 + $0x50] sm:$0xff]
      %v2223 = vld [vmem:[#allocation3 + $0x58] sm:$0xff]
      %v2224 = vld [vmem:[#allocation3 + $0x60] sm:$0xff]
      %v2225 = vld [vmem:[#allocation3 + $0x68] sm:$0xf]
      %v2226 = vld [vmem:[#allocation3 + $0x6c] sm:$0xff]
      %v2227 = vld [vmem:[#allocation3 + $0x74] sm:$0xff]
      %v2228 = vld [vmem:[#allocation3 + $0x7c] sm:$0xff]
      %v2229 = vld [vmem:[#allocation3 + $0x84] sm:$0xff]
      %v2230 = vld [vmem:[#allocation3 + $0x8c] sm:$0xf]
      %v2231 = vld [vmem:[#allocation3 + $0x90] sm:$0xff]
      %v2232 = vld [vmem:[#allocation3 + $0x98] sm:$0xff]
      %v2233 = vld [vmem:[#allocation3 + $0xa0] sm:$0xff]
      %v2234 = vld [vmem:[#allocation3 + $0xa8] sm:$0xff]
      %v2235 = vld [vmem:[#allocation3 + $0xb0] sm:$0xf]
      %v2236 = vld [vmem:[#allocation3 + $0xb4] sm:$0xff]
      %v2237 = vld [vmem:[#allocation3 + $0xbc] sm:$0xff]
      %v2238 = vld [vmem:[#allocation3 + $0xc4] sm:$0xff]
      %v2239 = vld [vmem:[#allocation3 + $0xcc] sm:$0xff]
      %v2240 = vld [vmem:[#allocation3 + $0xd4] sm:$0xf]
      %v2241 = vld [vmem:[#allocation3 + $0xd8] sm:$0xff]
      %v2242 = vld [vmem:[#allocation3 + $0xe0] sm:$0xff]
      %v2243 = vld [vmem:[#allocation3 + $0xe8] sm:$0xff]
      %v2244 = vld [vmem:[#allocation3 + $0xf0] sm:$0xff]
      %v2245 = vld [vmem:[#allocation3 + $0xf8] sm:$0xf]
      %v2246 = vld [vmem:[#allocation3 + $0xfc] sm:$0xff]
      %v2247 = vld [vmem:[#allocation3 + $0x104] sm:$0xff]
      %v2248 = vld [vmem:[#allocation3 + $0x10c] sm:$0xff]
      %v2249 = vld [vmem:[#allocation3 + $0x114] sm:$0xff]
      %v2250 = vld [vmem:[#allocation3 + $0x11c] sm:$0xf]
      %v2251 = vld [vmem:[#allocation3 + $0x120] sm:$0xff]
      %v2252 = vld [vmem:[#allocation3 + $0x128] sm:$0xff]
      %v2253 = vld [vmem:[#allocation3 + $0x130] sm:$0xff]
      %v2254 = vld [vmem:[#allocation3 + $0x138] sm:$0xff]
      %v2255 = vld [vmem:[#allocation3 + $0x140] sm:$0xf]
      %v2256 = vld [vmem:[#allocation3 + $0x144] sm:$0xff]
      %v2257 = vld [vmem:[#allocation3 + $0x14c] sm:$0xff]
      %v2258 = vld [vmem:[#allocation3 + $0x154] sm:$0xff]
      %v2259 = vld [vmem:[#allocation3 + $0x15c] sm:$0xff]
      %v2260 = vld [vmem:[#allocation3 + $0x164] sm:$0xf]
      %v2261 = vld [vmem:[#allocation3 + $0x168] sm:$0xff]
      %v2262 = vld [vmem:[#allocation3 + $0x170] sm:$0xff]
      %v2263 = vld [vmem:[#allocation3 + $0x178] sm:$0xff]
      %v2264 = vld [vmem:[#allocation3 + $0x180] sm:$0xff]
      %v2265 = vld [vmem:[#allocation3 + $0x188] sm:$0xf]
      %v2266 = vld [vmem:[#allocation3 + $0x18c] sm:$0xff]
      %v2267 = vld [vmem:[#allocation3 + $0x194] sm:$0xff]
      %v2268 = vld [vmem:[#allocation3 + $0x19c] sm:$0xff]
      %v2269 = vld [vmem:[#allocation3 + $0x1a4] sm:$0xff]
      %v2270 = vld [vmem:[#allocation3 + $0x1ac] sm:$0xf]
      %v2271 = vld [vmem:[#allocation3 + $0x1b0] sm:$0xff]
      %v2272 = vld [vmem:[#allocation3 + $0x1b8] sm:$0xff]
      %v2273 = vld [vmem:[#allocation3 + $0x1c0] sm:$0xff]
      %v2274 = vld [vmem:[#allocation3 + $0x1c8] sm:$0xff]
      %v2275 = vld [vmem:[#allocation3 + $0x1d0] sm:$0xf]
      %v2276 = vld [vmem:[#allocation3 + $0x1d4] sm:$0xff]
      %v2277 = vld [vmem:[#allocation3 + $0x1dc] sm:$0xff]
      %v2278 = vld [vmem:[#allocation3 + $0x1e4] sm:$0xff]
      %v2279 = vld [vmem:[#allocation3 + $0x1ec] sm:$0xff]
      %v2280 = vld [vmem:[#allocation3 + $0x1f4] sm:$0xf]
      %v2281 = vld [vmem:[#allocation3 + $0x1f8] sm:$0xff]
      %v2282 = vld [vmem:[#allocation3 + $0x200] sm:$0xff]
      %v2283 = vld [vmem:[#allocation3 + $0x208] sm:$0xff]
      %v2284 = vld [vmem:[#allocation3 + $0x210] sm:$0xff]
      %v2285 = vld [vmem:[#allocation3 + $0x218] sm:$0xf]
      %v2286 = vld [vmem:[#allocation3 + $0x21c] sm:$0xff]
      %v2287 = vld [vmem:[#allocation3 + $0x224] sm:$0xff]
      %v2288 = vld [vmem:[#allocation3 + $0x22c] sm:$0xff]
      %v2289 = vld [vmem:[#allocation3 + $0x234] sm:$0xff]
      %v2290 = vld [vmem:[#allocation3 + $0x23c] sm:$0xf]
      %v2291 = vld [vmem:[%s1] sm:$0xf]
      %v2292 = vld [vmem:[%s1 + $0x4] sm:$0xf]
      %v2293 = vld [vmem:[%s1 + $0x8] sm:$0xf]
      %v2294 = vld [vmem:[%s1 + $0xc] sm:$0xf]
      %v2295 = vld [vmem:[%s1 + $0x10] sm:$0xf]
      %v2296 = vld [vmem:[%s1 + $0x14] sm:$0xf]
      %v2297 = vld [vmem:[%s1 + $0x18] sm:$0xf]
      %v2298 = vld [vmem:[%s1 + $0x1c] sm:$0xf]
      %v2299 = vld [vmem:[%s1 + $0x20] sm:$0xf]
      %v2300 = vld [vmem:[%s1 + $0x24] sm:$0xf]
      %v2301 = vld [vmem:[%s1 + $0x28] sm:$0xf]
      %v2302 = vld [vmem:[%s1 + $0x2c] sm:$0xf]
      %v2303 = vld [vmem:[%s1 + $0x30] sm:$0xf]
      %v2304 = vld [vmem:[%s1 + $0x34] sm:$0xf]
      %v2305 = vld [vmem:[%s1 + $0x38] sm:$0xf]
      %v2306 = vld [vmem:[%s1 + $0x3c] sm:$0xf]
      %v2307 = vld [vmem:[%s1 + $0x40] sm:$0xf]
      %v2308 = vld [vmem:[%s1 + $0x44] sm:$0xf]
      %v2309 = vld [vmem:[%s1 + $0x48] sm:$0xf]
      %v2310 = vld [vmem:[%s1 + $0x4c] sm:$0xf]
      %v2311 = vld [vmem:[%s1 + $0x50] sm:$0xf]
      %v2312 = vld [vmem:[%s1 + $0x54] sm:$0xf]
      %v2313 = vld [vmem:[%s1 + $0x58] sm:$0xf]
      %v2314 = vld [vmem:[%s1 + $0x5c] sm:$0xf]
      %v2315 = vld [vmem:[%s1 + $0x60] sm:$0xf]
      %v2316 = vld [vmem:[%s1 + $0x64] sm:$0xf]
      %v2317 = vld [vmem:[%s1 + $0x68] sm:$0xf]
      %v2318 = vld [vmem:[%s1 + $0x6c] sm:$0xf]
      %v2319 = vld [vmem:[%s1 + $0x70] sm:$0xf]
      %v2320 = vld [vmem:[%s1 + $0x74] sm:$0xf]
      %v2321 = vld [vmem:[%s1 + $0x78] sm:$0xf]
      %v2322 = vld [vmem:[%s1 + $0x7c] sm:$0xf]
      %v2323 = vld [vmem:[%s1 + $0x80] sm:$0xf]
      %v2324 = vld [vmem:[%s1 + $0x84] sm:$0xf]
      %v2325 = vld [vmem:[%s1 + $0x88] sm:$0xf]
      %v2326 = vld [vmem:[%s1 + $0x8c] sm:$0xf]
      %v2327 = vld [vmem:[%s1 + $0x90] sm:$0xf]
      %v2328 = vld [vmem:[%s1 + $0x94] sm:$0xf]
      %v2329 = vld [vmem:[%s1 + $0x98] sm:$0xf]
      %v2330 = vld [vmem:[%s1 + $0x9c] sm:$0xf]
      %v2331 = vld [vmem:[%s1 + $0xa0] sm:$0xf]
      %v2332 = vld [vmem:[%s1 + $0xa4] sm:$0xf]
      %v2333 = vld [vmem:[%s1 + $0xa8] sm:$0xf]
      %v2334 = vld [vmem:[%s1 + $0xac] sm:$0xf]
      %v2335 = vld [vmem:[%s1 + $0xb0] sm:$0xf]
      %v2336 = vld [vmem:[%s1 + $0xb4] sm:$0xf]
      %v2337 = vld [vmem:[%s1 + $0xb8] sm:$0xf]
      %v2338 = vld [vmem:[%s1 + $0xbc] sm:$0xf]
      %v2339 = vld [vmem:[%s1 + $0xc0] sm:$0xf]
      %v2340 = vld [vmem:[%s1 + $0xc4] sm:$0xf]
      %v2341 = vld [vmem:[%s1 + $0xc8] sm:$0xf]
      %v2342 = vld [vmem:[%s1 + $0xcc] sm:$0xf]
      %v2343 = vld [vmem:[%s1 + $0xd0] sm:$0xf]
      %v2344 = vld [vmem:[%s1 + $0xd4] sm:$0xf]
      %v2345 = vld [vmem:[%s1 + $0xd8] sm:$0xf]
      %v2346 = vld [vmem:[%s1 + $0xdc] sm:$0xf]
      %v2347 = vld [vmem:[%s1 + $0xe0] sm:$0xf]
      %v2348 = vld [vmem:[%s1 + $0xe4] sm:$0xf]
      %v2349 = vld [vmem:[%s1 + $0xe8] sm:$0xf]
      %v2350 = vld [vmem:[%s1 + $0xec] sm:$0xf]
      %v2351 = vld [vmem:[%s1 + $0xf0] sm:$0xf]
      %v2352 = vld [vmem:[%s1 + $0xf4] sm:$0xf]
      %v2353 = vld [vmem:[%s1 + $0xf8] sm:$0xf]
      %v2354 = vld [vmem:[%s1 + $0xfc] sm:$0xf]
      %v2355 = vld [vmem:[%s1 + $0x100] sm:$0xf]
      %v2356 = vld [vmem:[%s1 + $0x104] sm:$0xf]
      %v2357 = vld [vmem:[%s1 + $0x108] sm:$0xf]
      %v2358 = vld [vmem:[%s1 + $0x10c] sm:$0xf]
      %v2359 = vld [vmem:[%s1 + $0x110] sm:$0xf]
      %v2360 = vld [vmem:[%s1 + $0x114] sm:$0xf]
      %v2361 = vld [vmem:[%s1 + $0x118] sm:$0xf]
      %v2362 = vld [vmem:[%s1 + $0x11c] sm:$0xf]
      %v2363 = vld [vmem:[%s1 + $0x120] sm:$0xf]
      %v2364 = vld [vmem:[%s1 + $0x124] sm:$0xf]
      %v2365 = vld [vmem:[%s1 + $0x128] sm:$0xf]
      %v2366 = vld [vmem:[%s1 + $0x12c] sm:$0xf]
      %v2367 = vld [vmem:[%s1 + $0x130] sm:$0xf]
      %v2368 = vld [vmem:[%s1 + $0x134] sm:$0xf]
      %v2369 = vld [vmem:[%s1 + $0x138] sm:$0xf]
      %v2370 = vld [vmem:[%s1 + $0x13c] sm:$0xf]
      %v2371 = vld [vmem:[%s1 + $0x140] sm:$0xf]
      %v2372 = vld [vmem:[%s1 + $0x144] sm:$0xf]
      %v2373 = vld [vmem:[%s1 + $0x148] sm:$0xf]
      %v2374 = vld [vmem:[%s1 + $0x14c] sm:$0xf]
      %v2375 = vld [vmem:[%s1 + $0x150] sm:$0xf]
      %v2376 = vld [vmem:[%s1 + $0x154] sm:$0xf]
      %v2377 = vld [vmem:[%s1 + $0x158] sm:$0xf]
      %v2378 = vld [vmem:[%s1 + $0x15c] sm:$0xf]
      %v2379 = vld [vmem:[%s1 + $0x160] sm:$0xf]
      %v2380 = vld [vmem:[%s1 + $0x164] sm:$0xf]
      %v2381 = vld [vmem:[%s1 + $0x168] sm:$0xf]
      %v2382 = vld [vmem:[%s1 + $0x16c] sm:$0xf]
      %v2383 = vld [vmem:[%s1 + $0x170] sm:$0xf]
      %v2384 = vld [vmem:[%s1 + $0x174] sm:$0xf]
      %v2385 = vld [vmem:[%s1 + $0x178] sm:$0xf]
      %v2386 = vld [vmem:[%s1 + $0x17c] sm:$0xf]
      %v2387 = vld [vmem:[%s1 + $0x180] sm:$0xf]
      %v2388 = vld [vmem:[%s1 + $0x184] sm:$0xf]
      %v2389 = vld [vmem:[%s1 + $0x188] sm:$0xf]
      %v2390 = vld [vmem:[%s1 + $0x18c] sm:$0xf]
      %v2391 = vld [vmem:[%s1 + $0x190] sm:$0xf]
      %v2392 = vld [vmem:[%s1 + $0x194] sm:$0xf]
      %v2393 = vld [vmem:[%s1 + $0x198] sm:$0xf]
      %v2394 = vld [vmem:[%s1 + $0x19c] sm:$0xf]
      %v2395 = vld [vmem:[%s1 + $0x1a0] sm:$0xf]
      %v2396 = vld [vmem:[%s1 + $0x1a4] sm:$0xf]
      %v2397 = vld [vmem:[%s1 + $0x1a8] sm:$0xf]
      %v2398 = vld [vmem:[%s1 + $0x1ac] sm:$0xf]
      %v2399 = vld [vmem:[%s1 + $0x1b0] sm:$0xf]
      %v2400 = vld [vmem:[%s1 + $0x1b4] sm:$0xf]
      %v2401 = vld [vmem:[%s1 + $0x1b8] sm:$0xf]
      %v2402 = vld [vmem:[%s1 + $0x1bc] sm:$0xf]
      %v2403 = vld [vmem:[%s1 + $0x1c0] sm:$0xf]
      %v2404 = vld [vmem:[%s1 + $0x1c4] sm:$0xf]
      %v2405 = vld [vmem:[%s1 + $0x1c8] sm:$0xf]
      %v2406 = vld [vmem:[%s1 + $0x1cc] sm:$0xf]
      %v2407 = vld [vmem:[%s1 + $0x1d0] sm:$0xf]
      %v2408 = vld [vmem:[%s1 + $0x1d4] sm:$0xf]
      %v2409 = vld [vmem:[%s1 + $0x1d8] sm:$0xf]
      %v2410 = vld [vmem:[%s1 + $0x1dc] sm:$0xf]
      %v2411 = vld [vmem:[%s1 + $0x1e0] sm:$0xf]
      %v2412 = vld [vmem:[%s1 + $0x1e4] sm:$0xf]
      %v2413 = vld [vmem:[%s1 + $0x1e8] sm:$0xf]
      %v2414 = vld [vmem:[%s1 + $0x1ec] sm:$0xf]
      %v2415 = vld [vmem:[%s1 + $0x1f0] sm:$0xf]
      %v2416 = vld [vmem:[%s1 + $0x1f4] sm:$0xf]
      %v2417 = vld [vmem:[%s1 + $0x1f8] sm:$0xf]
      %v2418 = vld [vmem:[%s1 + $0x1fc] sm:$0xf]
      %v2419 = vld [vmem:[%s1 + $0x200] sm:$0xf]
      %v2420 = vld [vmem:[%s1 + $0x204] sm:$0xf]
      %v2421 = vld [vmem:[%s1 + $0x208] sm:$0xf]
      %v2422 = vld [vmem:[%s1 + $0x20c] sm:$0xf]
      %v2423 = vld [vmem:[%s1 + $0x210] sm:$0xf]
      %v2424 = vld [vmem:[%s1 + $0x214] sm:$0xf]
      %v2425 = vld [vmem:[%s1 + $0x218] sm:$0xf]
      %v2426 = vld [vmem:[%s1 + $0x21c] sm:$0xf]
      %v2427 = vld [vmem:[%s1 + $0x220] sm:$0xf]
      %v2428 = vld [vmem:[%s1 + $0x224] sm:$0xf]
      %v2429 = vld [vmem:[%s1 + $0x228] sm:$0xf]
      %v2430 = vld [vmem:[%s1 + $0x22c] sm:$0xf]
      %v2431 = vld [vmem:[%s1 + $0x230] sm:$0xf]
      %v2432 = vld [vmem:[%s1 + $0x234] sm:$0xf]
      %v2433 = vld [vmem:[%s1 + $0x238] sm:$0xf]
      %v2434 = vld [vmem:[%s1 + $0x23c] sm:$0xf]
      %v2515 = vunpack.c.l.b16 %v2211
      %v2516 = vunpack.c.h.b16 %v2211
      %v2517 = vunpack.c.l.b16 %v2212
      %v2518 = vunpack.c.h.b16 %v2212
      %v2519 = vunpack.c.l.b16 %v2213
      %v2520 = vunpack.c.h.b16 %v2213
      %v2521 = vunpack.c.l.b16 %v2214
      %v2522 = vunpack.c.h.b16 %v2214
      %v2523 = vunpack.c.l.b16 %v2215
      %v2524 = vunpack.c.l.b16 %v2216
      %v2525 = vunpack.c.h.b16 %v2216
      %v2526 = vunpack.c.l.b16 %v2217
      %v2527 = vunpack.c.h.b16 %v2217
      %v2528 = vunpack.c.l.b16 %v2218
      %v2529 = vunpack.c.h.b16 %v2218
      %v2530 = vunpack.c.l.b16 %v2219
      %v2531 = vunpack.c.h.b16 %v2219
      %v2532 = vunpack.c.l.b16 %v2220
      %v2533 = vunpack.c.l.b16 %v2221
      %v2534 = vunpack.c.h.b16 %v2221
      %v2535 = vunpack.c.l.b16 %v2222
      %v2536 = vunpack.c.h.b16 %v2222
      %v2537 = vunpack.c.l.b16 %v2223
      %v2538 = vunpack.c.h.b16 %v2223
      %v2539 = vunpack.c.l.b16 %v2224
      %v2540 = vunpack.c.h.b16 %v2224
      %v2541 = vunpack.c.l.b16 %v2225
      %v2542 = vunpack.c.l.b16 %v2226
      %v2543 = vunpack.c.h.b16 %v2226
      %v2544 = vunpack.c.l.b16 %v2227
      %v2545 = vunpack.c.h.b16 %v2227
      %v2546 = vunpack.c.l.b16 %v2228
      %v2547 = vunpack.c.h.b16 %v2228
      %v2548 = vunpack.c.l.b16 %v2229
      %v2549 = vunpack.c.h.b16 %v2229
      %v2550 = vunpack.c.l.b16 %v2230
      %v2551 = vunpack.c.l.b16 %v2231
      %v2552 = vunpack.c.h.b16 %v2231
      %v2553 = vunpack.c.l.b16 %v2232
      %v2554 = vunpack.c.h.b16 %v2232
      %v2555 = vunpack.c.l.b16 %v2233
      %v2556 = vunpack.c.h.b16 %v2233
      %v2557 = vunpack.c.l.b16 %v2234
      %v2558 = vunpack.c.h.b16 %v2234
      %v2559 = vunpack.c.l.b16 %v2235
      %v2560 = vunpack.c.l.b16 %v2236
      %v2561 = vunpack.c.h.b16 %v2236
      %v2562 = vunpack.c.l.b16 %v2237
      %v2563 = vunpack.c.h.b16 %v2237
      %v2564 = vunpack.c.l.b16 %v2238
      %v2565 = vunpack.c.h.b16 %v2238
      %v2566 = vunpack.c.l.b16 %v2239
      %v2567 = vunpack.c.h.b16 %v2239
      %v2568 = vunpack.c.l.b16 %v2240
      %v2569 = vunpack.c.l.b16 %v2241
      %v2570 = vunpack.c.h.b16 %v2241
      %v2571 = vunpack.c.l.b16 %v2242
      %v2572 = vunpack.c.h.b16 %v2242
      %v2573 = vunpack.c.l.b16 %v2243
      %v2574 = vunpack.c.h.b16 %v2243
      %v2575 = vunpack.c.l.b16 %v2244
      %v2576 = vunpack.c.h.b16 %v2244
      %v2577 = vunpack.c.l.b16 %v2245
      %v2578 = vunpack.c.l.b16 %v2246
      %v2579 = vunpack.c.h.b16 %v2246
      %v2580 = vunpack.c.l.b16 %v2247
      %v2581 = vunpack.c.h.b16 %v2247
      %v2582 = vunpack.c.l.b16 %v2248
      %v2583 = vunpack.c.h.b16 %v2248
      %v2584 = vunpack.c.l.b16 %v2249
      %v2585 = vunpack.c.h.b16 %v2249
      %v2586 = vunpack.c.l.b16 %v2250
      %v2587 = vunpack.c.l.b16 %v2251
      %v2588 = vunpack.c.h.b16 %v2251
      %v2589 = vunpack.c.l.b16 %v2252
      %v2590 = vunpack.c.h.b16 %v2252
      %v2591 = vunpack.c.l.b16 %v2253
      %v2592 = vunpack.c.h.b16 %v2253
      %v2593 = vunpack.c.l.b16 %v2254
      %v2594 = vunpack.c.h.b16 %v2254
      %v2595 = vunpack.c.l.b16 %v2255
      %v2596 = vunpack.c.l.b16 %v2256
      %v2597 = vunpack.c.h.b16 %v2256
      %v2598 = vunpack.c.l.b16 %v2257
      %v2599 = vunpack.c.h.b16 %v2257
      %v2600 = vunpack.c.l.b16 %v2258
      %v2601 = vunpack.c.h.b16 %v2258
      %v2602 = vunpack.c.l.b16 %v2259
      %v2603 = vunpack.c.h.b16 %v2259
      %v2604 = vunpack.c.l.b16 %v2260
      %v2605 = vunpack.c.l.b16 %v2261
      %v2606 = vunpack.c.h.b16 %v2261
      %v2607 = vunpack.c.l.b16 %v2262
      %v2608 = vunpack.c.h.b16 %v2262
      %v2609 = vunpack.c.l.b16 %v2263
      %v2610 = vunpack.c.h.b16 %v2263
      %v2611 = vunpack.c.l.b16 %v2264
      %v2612 = vunpack.c.h.b16 %v2264
      %v2613 = vunpack.c.l.b16 %v2265
      %v2614 = vunpack.c.l.b16 %v2266
      %v2615 = vunpack.c.h.b16 %v2266
      %v2616 = vunpack.c.l.b16 %v2267
      %v2617 = vunpack.c.h.b16 %v2267
      %v2618 = vunpack.c.l.b16 %v2268
      %v2619 = vunpack.c.h.b16 %v2268
      %v2620 = vunpack.c.l.b16 %v2269
      %v2621 = vunpack.c.h.b16 %v2269
      %v2622 = vunpack.c.l.b16 %v2270
      %v2623 = vunpack.c.l.b16 %v2271
      %v2624 = vunpack.c.h.b16 %v2271
      %v2625 = vunpack.c.l.b16 %v2272
      %v2626 = vunpack.c.h.b16 %v2272
      %v2627 = vunpack.c.l.b16 %v2273
      %v2628 = vunpack.c.h.b16 %v2273
      %v2629 = vunpack.c.l.b16 %v2274
      %v2630 = vunpack.c.h.b16 %v2274
      %v2631 = vunpack.c.l.b16 %v2275
      %v2632 = vunpack.c.l.b16 %v2276
      %v2633 = vunpack.c.h.b16 %v2276
      %v2634 = vunpack.c.l.b16 %v2277
      %v2635 = vunpack.c.h.b16 %v2277
      %v2636 = vunpack.c.l.b16 %v2278
      %v2637 = vunpack.c.h.b16 %v2278
      %v2638 = vunpack.c.l.b16 %v2279
      %v2639 = vunpack.c.h.b16 %v2279
      %v2640 = vunpack.c.l.b16 %v2280
      %v2641 = vunpack.c.l.b16 %v2281
      %v2642 = vunpack.c.h.b16 %v2281
      %v2643 = vunpack.c.l.b16 %v2282
      %v2644 = vunpack.c.h.b16 %v2282
      %v2645 = vunpack.c.l.b16 %v2283
      %v2646 = vunpack.c.h.b16 %v2283
      %v2647 = vunpack.c.l.b16 %v2284
      %v2648 = vunpack.c.h.b16 %v2284
      %v2649 = vunpack.c.l.b16 %v2285
      %v2650 = vunpack.c.l.b16 %v2286
      %v2651 = vunpack.c.h.b16 %v2286
      %v2652 = vunpack.c.l.b16 %v2287
      %v2653 = vunpack.c.h.b16 %v2287
      %v2654 = vunpack.c.l.b16 %v2288
      %v2655 = vunpack.c.h.b16 %v2288
      %v2656 = vunpack.c.l.b16 %v2289
      %v2657 = vunpack.c.h.b16 %v2289
      %v2658 = vunpack.c.l.b16 %v2290
      %v2659 = vpack.c.b16 %v2524, %v2515
      %v2660 = vpack.c.b16 %v2525, %v2516
      %v2661 = vpack.c.b16 %v2526, %v2517
      %v2662 = vpack.c.b16 %v2527, %v2518
      %v2663 = vpack.c.b16 %v2528, %v2519
      %v2664 = vpack.c.b16 %v2529, %v2520
      %v2665 = vpack.c.b16 %v2530, %v2521
      %v2666 = vpack.c.b16 %v2531, %v2522
      %v2667 = vpack.c.b16 %v2532, %v2523
      %v2668 = vpack.c.b16 %v2542, %v2533
      %v2669 = vpack.c.b16 %v2543, %v2534
      %v2670 = vpack.c.b16 %v2544, %v2535
      %v2671 = vpack.c.b16 %v2545, %v2536
      %v2672 = vpack.c.b16 %v2546, %v2537
      %v2673 = vpack.c.b16 %v2547, %v2538
      %v2674 = vpack.c.b16 %v2548, %v2539
      %v2675 = vpack.c.b16 %v2549, %v2540
      %v2676 = vpack.c.b16 %v2550, %v2541
      %v2677 = vpack.c.b16 %v2560, %v2551
      %v2678 = vpack.c.b16 %v2561, %v2552
      %v2679 = vpack.c.b16 %v2562, %v2553
      %v2680 = vpack.c.b16 %v2563, %v2554
      %v2681 = vpack.c.b16 %v2564, %v2555
      %v2682 = vpack.c.b16 %v2565, %v2556
      %v2683 = vpack.c.b16 %v2566, %v2557
      %v2684 = vpack.c.b16 %v2567, %v2558
      %v2685 = vpack.c.b16 %v2568, %v2559
      %v2686 = vpack.c.b16 %v2578, %v2569
      %v2687 = vpack.c.b16 %v2579, %v2570
      %v2688 = vpack.c.b16 %v2580, %v2571
      %v2689 = vpack.c.b16 %v2581, %v2572
      %v2690 = vpack.c.b16 %v2582, %v2573
      %v2691 = vpack.c.b16 %v2583, %v2574
      %v2692 = vpack.c.b16 %v2584, %v2575
      %v2693 = vpack.c.b16 %v2585, %v2576
      %v2694 = vpack.c.b16 %v2586, %v2577
      %v2695 = vpack.c.b16 %v2596, %v2587
      %v2696 = vpack.c.b16 %v2597, %v2588
      %v2697 = vpack.c.b16 %v2598, %v2589
      %v2698 = vpack.c.b16 %v2599, %v2590
      %v2699 = vpack.c.b16 %v2600, %v2591
      %v2700 = vpack.c.b16 %v2601, %v2592
      %v2701 = vpack.c.b16 %v2602, %v2593
      %v2702 = vpack.c.b16 %v2603, %v2594
      %v2703 = vpack.c.b16 %v2604, %v2595
      %v2704 = vpack.c.b16 %v2614, %v2605
      %v2705 = vpack.c.b16 %v2615, %v2606
      %v2706 = vpack.c.b16 %v2616, %v2607
      %v2707 = vpack.c.b16 %v2617, %v2608
      %v2708 = vpack.c.b16 %v2618, %v2609
      %v2709 = vpack.c.b16 %v2619, %v2610
      %v2710 = vpack.c.b16 %v2620, %v2611
      %v2711 = vpack.c.b16 %v2621, %v2612
      %v2712 = vpack.c.b16 %v2622, %v2613
      %v2713 = vpack.c.b16 %v2632, %v2623
      %v2714 = vpack.c.b16 %v2633, %v2624
      %v2715 = vpack.c.b16 %v2634, %v2625
      %v2716 = vpack.c.b16 %v2635, %v2626
      %v2717 = vpack.c.b16 %v2636, %v2627
      %v2718 = vpack.c.b16 %v2637, %v2628
      %v2719 = vpack.c.b16 %v2638, %v2629
      %v2720 = vpack.c.b16 %v2639, %v2630
      %v2721 = vpack.c.b16 %v2640, %v2631
      %v2722 = vpack.c.b16 %v2650, %v2641
      %v2723 = vpack.c.b16 %v2651, %v2642
      %v2724 = vpack.c.b16 %v2652, %v2643
      %v2725 = vpack.c.b16 %v2653, %v2644
      %v2726 = vpack.c.b16 %v2654, %v2645
      %v2727 = vpack.c.b16 %v2655, %v2646
      %v2728 = vpack.c.b16 %v2656, %v2647
      %v2729 = vpack.c.b16 %v2657, %v2648
      %v2730 = vpack.c.b16 %v2658, %v2649
      %v2947 = vunpack.c.l.b16 %v2291
      %v2948 = vunpack.c.l.b16 %v2292
      %v2949 = vunpack.c.l.b16 %v2293
      %v2950 = vunpack.c.l.b16 %v2294
      %v2951 = vunpack.c.l.b16 %v2295
      %v2952 = vunpack.c.l.b16 %v2296
      %v2953 = vunpack.c.l.b16 %v2297
      %v2954 = vunpack.c.l.b16 %v2298
      %v2955 = vunpack.c.l.b16 %v2299
      %v2956 = vunpack.c.l.b16 %v2300
      %v2957 = vunpack.c.l.b16 %v2301
      %v2958 = vunpack.c.l.b16 %v2302
      %v2959 = vunpack.c.l.b16 %v2303
      %v2960 = vunpack.c.l.b16 %v2304
      %v2961 = vunpack.c.l.b16 %v2305
      %v2962 = vunpack.c.l.b16 %v2306
      %v2963 = vunpack.c.l.b16 %v2307
      %v2964 = vunpack.c.l.b16 %v2308
      %v2965 = vunpack.c.l.b16 %v2309
      %v2966 = vunpack.c.l.b16 %v2310
      %v2967 = vunpack.c.l.b16 %v2311
      %v2968 = vunpack.c.l.b16 %v2312
      %v2969 = vunpack.c.l.b16 %v2313
      %v2970 = vunpack.c.l.b16 %v2314
      %v2971 = vunpack.c.l.b16 %v2315
      %v2972 = vunpack.c.l.b16 %v2316
      %v2973 = vunpack.c.l.b16 %v2317
      %v2974 = vunpack.c.l.b16 %v2318
      %v2975 = vunpack.c.l.b16 %v2319
      %v2976 = vunpack.c.l.b16 %v2320
      %v2977 = vunpack.c.l.b16 %v2321
      %v2978 = vunpack.c.l.b16 %v2322
      %v2979 = vunpack.c.l.b16 %v2323
      %v2980 = vunpack.c.l.b16 %v2324
      %v2981 = vunpack.c.l.b16 %v2325
      %v2982 = vunpack.c.l.b16 %v2326
      %v2983 = vunpack.c.l.b16 %v2327
      %v2984 = vunpack.c.l.b16 %v2328
      %v2985 = vunpack.c.l.b16 %v2329
      %v2986 = vunpack.c.l.b16 %v2330
      %v2987 = vunpack.c.l.b16 %v2331
      %v2988 = vunpack.c.l.b16 %v2332
      %v2989 = vunpack.c.l.b16 %v2333
      %v2990 = vunpack.c.l.b16 %v2334
      %v2991 = vunpack.c.l.b16 %v2335
      %v2992 = vunpack.c.l.b16 %v2336
      %v2993 = vunpack.c.l.b16 %v2337
      %v2994 = vunpack.c.l.b16 %v2338
      %v2995 = vunpack.c.l.b16 %v2339
      %v2996 = vunpack.c.l.b16 %v2340
      %v2997 = vunpack.c.l.b16 %v2341
      %v2998 = vunpack.c.l.b16 %v2342
      %v2999 = vunpack.c.l.b16 %v2343
      %v3000 = vunpack.c.l.b16 %v2344
      %v3001 = vunpack.c.l.b16 %v2345
      %v3002 = vunpack.c.l.b16 %v2346
      %v3003 = vunpack.c.l.b16 %v2347
      %v3004 = vunpack.c.l.b16 %v2348
      %v3005 = vunpack.c.l.b16 %v2349
      %v3006 = vunpack.c.l.b16 %v2350
      %v3007 = vunpack.c.l.b16 %v2351
      %v3008 = vunpack.c.l.b16 %v2352
      %v3009 = vunpack.c.l.b16 %v2353
      %v3010 = vunpack.c.l.b16 %v2354
      %v3011 = vunpack.c.l.b16 %v2355
      %v3012 = vunpack.c.l.b16 %v2356
      %v3013 = vunpack.c.l.b16 %v2357
      %v3014 = vunpack.c.l.b16 %v2358
      %v3015 = vunpack.c.l.b16 %v2359
      %v3016 = vunpack.c.l.b16 %v2360
      %v3017 = vunpack.c.l.b16 %v2361
      %v3018 = vunpack.c.l.b16 %v2362
      %v3019 = vunpack.c.l.b16 %v2363
      %v3020 = vunpack.c.l.b16 %v2364
      %v3021 = vunpack.c.l.b16 %v2365
      %v3022 = vunpack.c.l.b16 %v2366
      %v3023 = vunpack.c.l.b16 %v2367
      %v3024 = vunpack.c.l.b16 %v2368
      %v3025 = vunpack.c.l.b16 %v2369
      %v3026 = vunpack.c.l.b16 %v2370
      %v3027 = vunpack.c.l.b16 %v2371
      %v3028 = vunpack.c.l.b16 %v2372
      %v3029 = vunpack.c.l.b16 %v2373
      %v3030 = vunpack.c.l.b16 %v2374
      %v3031 = vunpack.c.l.b16 %v2375
      %v3032 = vunpack.c.l.b16 %v2376
      %v3033 = vunpack.c.l.b16 %v2377
      %v3034 = vunpack.c.l.b16 %v2378
      %v3035 = vunpack.c.l.b16 %v2379
      %v3036 = vunpack.c.l.b16 %v2380
      %v3037 = vunpack.c.l.b16 %v2381
      %v3038 = vunpack.c.l.b16 %v2382
      %v3039 = vunpack.c.l.b16 %v2383
      %v3040 = vunpack.c.l.b16 %v2384
      %v3041 = vunpack.c.l.b16 %v2385
      %v3042 = vunpack.c.l.b16 %v2386
      %v3043 = vunpack.c.l.b16 %v2387
      %v3044 = vunpack.c.l.b16 %v2388
      %v3045 = vunpack.c.l.b16 %v2389
      %v3046 = vunpack.c.l.b16 %v2390
      %v3047 = vunpack.c.l.b16 %v2391
      %v3048 = vunpack.c.l.b16 %v2392
      %v3049 = vunpack.c.l.b16 %v2393
      %v3050 = vunpack.c.l.b16 %v2394
      %v3051 = vunpack.c.l.b16 %v2395
      %v3052 = vunpack.c.l.b16 %v2396
      %v3053 = vunpack.c.l.b16 %v2397
      %v3054 = vunpack.c.l.b16 %v2398
      %v3055 = vunpack.c.l.b16 %v2399
      %v3056 = vunpack.c.l.b16 %v2400
      %v3057 = vunpack.c.l.b16 %v2401
      %v3058 = vunpack.c.l.b16 %v2402
      %v3059 = vunpack.c.l.b16 %v2403
      %v3060 = vunpack.c.l.b16 %v2404
      %v3061 = vunpack.c.l.b16 %v2405
      %v3062 = vunpack.c.l.b16 %v2406
      %v3063 = vunpack.c.l.b16 %v2407
      %v3064 = vunpack.c.l.b16 %v2408
      %v3065 = vunpack.c.l.b16 %v2409
      %v3066 = vunpack.c.l.b16 %v2410
      %v3067 = vunpack.c.l.b16 %v2411
      %v3068 = vunpack.c.l.b16 %v2412
      %v3069 = vunpack.c.l.b16 %v2413
      %v3070 = vunpack.c.l.b16 %v2414
      %v3071 = vunpack.c.l.b16 %v2415
      %v3072 = vunpack.c.l.b16 %v2416
      %v3073 = vunpack.c.l.b16 %v2417
      %v3074 = vunpack.c.l.b16 %v2418
      %v3075 = vunpack.c.l.b16 %v2419
      %v3076 = vunpack.c.l.b16 %v2420
      %v3077 = vunpack.c.l.b16 %v2421
      %v3078 = vunpack.c.l.b16 %v2422
      %v3079 = vunpack.c.l.b16 %v2423
      %v3080 = vunpack.c.l.b16 %v2424
      %v3081 = vunpack.c.l.b16 %v2425
      %v3082 = vunpack.c.l.b16 %v2426
      %v3083 = vunpack.c.l.b16 %v2427
      %v3084 = vunpack.c.l.b16 %v2428
      %v3085 = vunpack.c.l.b16 %v2429
      %v3086 = vunpack.c.l.b16 %v2430
      %v3087 = vunpack.c.l.b16 %v2431
      %v3088 = vunpack.c.l.b16 %v2432
      %v3089 = vunpack.c.l.b16 %v2433
      %v3090 = vunpack.c.l.b16 %v2434
      %v3091 = vpack.c.b16 %v2948, %v2947
      %v3092 = vpack.c.b16 %v2950, %v2949
      %v3093 = vpack.c.b16 %v2952, %v2951
      %v3094 = vpack.c.b16 %v2954, %v2953
      %v3095 = vpack.c.b16 %v2956, %v2955
      %v3096 = vpack.c.b16 %v2958, %v2957
      %v3097 = vpack.c.b16 %v2960, %v2959
      %v3098 = vpack.c.b16 %v2962, %v2961
      %v3099 = vpack.c.b16 %v2964, %v2963
      %v3100 = vpack.c.b16 %v2966, %v2965
      %v3101 = vpack.c.b16 %v2968, %v2967
      %v3102 = vpack.c.b16 %v2970, %v2969
      %v3103 = vpack.c.b16 %v2972, %v2971
      %v3104 = vpack.c.b16 %v2974, %v2973
      %v3105 = vpack.c.b16 %v2976, %v2975
      %v3106 = vpack.c.b16 %v2978, %v2977
      %v3107 = vpack.c.b16 %v2980, %v2979
      %v3108 = vpack.c.b16 %v2982, %v2981
      %v3109 = vpack.c.b16 %v2984, %v2983
      %v3110 = vpack.c.b16 %v2986, %v2985
      %v3111 = vpack.c.b16 %v2988, %v2987
      %v3112 = vpack.c.b16 %v2990, %v2989
      %v3113 = vpack.c.b16 %v2992, %v2991
      %v3114 = vpack.c.b16 %v2994, %v2993
      %v3115 = vpack.c.b16 %v2996, %v2995
      %v3116 = vpack.c.b16 %v2998, %v2997
      %v3117 = vpack.c.b16 %v3000, %v2999
      %v3118 = vpack.c.b16 %v3002, %v3001
      %v3119 = vpack.c.b16 %v3004, %v3003
      %v3120 = vpack.c.b16 %v3006, %v3005
      %v3121 = vpack.c.b16 %v3008, %v3007
      %v3122 = vpack.c.b16 %v3010, %v3009
      %v3123 = vpack.c.b16 %v3012, %v3011
      %v3124 = vpack.c.b16 %v3014, %v3013
      %v3125 = vpack.c.b16 %v3016, %v3015
      %v3126 = vpack.c.b16 %v3018, %v3017
      %v3127 = vpack.c.b16 %v3020, %v3019
      %v3128 = vpack.c.b16 %v3022, %v3021
      %v3129 = vpack.c.b16 %v3024, %v3023
      %v3130 = vpack.c.b16 %v3026, %v3025
      %v3131 = vpack.c.b16 %v3028, %v3027
      %v3132 = vpack.c.b16 %v3030, %v3029
      %v3133 = vpack.c.b16 %v3032, %v3031
      %v3134 = vpack.c.b16 %v3034, %v3033
      %v3135 = vpack.c.b16 %v3036, %v3035
      %v3136 = vpack.c.b16 %v3038, %v3037
      %v3137 = vpack.c.b16 %v3040, %v3039
      %v3138 = vpack.c.b16 %v3042, %v3041
      %v3139 = vpack.c.b16 %v3044, %v3043
      %v3140 = vpack.c.b16 %v3046, %v3045
      %v3141 = vpack.c.b16 %v3048, %v3047
      %v3142 = vpack.c.b16 %v3050, %v3049
      %v3143 = vpack.c.b16 %v3052, %v3051
      %v3144 = vpack.c.b16 %v3054, %v3053
      %v3145 = vpack.c.b16 %v3056, %v3055
      %v3146 = vpack.c.b16 %v3058, %v3057
      %v3147 = vpack.c.b16 %v3060, %v3059
      %v3148 = vpack.c.b16 %v3062, %v3061
      %v3149 = vpack.c.b16 %v3064, %v3063
      %v3150 = vpack.c.b16 %v3066, %v3065
      %v3151 = vpack.c.b16 %v3068, %v3067
      %v3152 = vpack.c.b16 %v3070, %v3069
      %v3153 = vpack.c.b16 %v3072, %v3071
      %v3154 = vpack.c.b16 %v3074, %v3073
      %v3155 = vpack.c.b16 %v3076, %v3075
      %v3156 = vpack.c.b16 %v3078, %v3077
      %v3157 = vpack.c.b16 %v3080, %v3079
      %v3158 = vpack.c.b16 %v3082, %v3081
      %v3159 = vpack.c.b16 %v3084, %v3083
      %v3160 = vpack.c.b16 %v3086, %v3085
      %v3161 = vpack.c.b16 %v3088, %v3087
      %v3162 = vpack.c.b16 %v3090, %v3089
      %3235 = vmatprep.subr.bf16.mxu0 0
      %3236 = vmatpush1.bf16.msra.mxu0 %v3098
      %3237 = vmatprep.subr.bf16.mxu0 0
      %3238 = vmatpush1.bf16.msra.mxu0 %v3097
      %3239 = vmatprep.subr.bf16.mxu0 0
      %3240 = vmatpush1.bf16.msra.mxu0 %v3096
      %3241 = vmatprep.subr.bf16.mxu0 0
      %3242 = vmatpush1.bf16.msra.mxu0 %v3095
      %3243 = vmatprep.subr.bf16.mxu0 0
      %3244 = vmatpush1.bf16.msra.mxu0 %v3094
      %3245 = vmatprep.subr.bf16.mxu0 0
      %3246 = vmatpush1.bf16.msra.mxu0 %v3093
      %3247 = vmatprep.subr.bf16.mxu0 0
      %3248 = vmatpush1.bf16.msra.mxu0 %v3092
      %3249 = vmatprep.subr.bf16.mxu0 0
      %3250 = vmatpush1.bf16.msra.mxu0 %v3091
      %3251 = vmatprep.subr.bf16.mxu0 0
      %3252 = vmatpush2.bf16.msra.mxu0 %v3106
      %3253 = vmatprep.subr.bf16.mxu0 0
      %3254 = vmatpush2.bf16.msra.mxu0 %v3105
      %3255 = vmatprep.subr.bf16.mxu0 0
      %3256 = vmatpush2.bf16.msra.mxu0 %v3104
      %3257 = vmatprep.subr.bf16.mxu0 0
      %3258 = vmatpush2.bf16.msra.mxu0 %v3103
      %3259 = vmatprep.subr.bf16.mxu0 0
      %3260 = vmatpush2.bf16.msra.mxu0 %v3102
      %3261 = vmatprep.subr.bf16.mxu0 0
      %3262 = vmatpush2.bf16.msra.mxu0 %v3101
      %3263 = vmatprep.subr.bf16.mxu0 0
      %3264 = vmatpush2.bf16.msra.mxu0 %v3100
      %3265 = vmatprep.subr.bf16.mxu0 0
      %3266 = vmatpush2.bf16.msra.mxu0 %v3099
      %3267 = vmatprep.mubr.bf16.mxu0 %v2660
      %3268 = vmatmul.mubr.bf16.gmra.mxu0 %v2659
      %v3269 = vpop.f32.mrf.mxu0
      %v3270 = vadd.f32 0.0, %v3269
      %v3271 = vpop.f32.mrf.mxu0
      %v3272 = vpop.f32.mrf.mxu0
      %v3273 = vadd.f32 0.0, %v3272
      %v3274 = vpop.f32.mrf.mxu0
      %3275 = vmatprep.mubr.bf16.mxu0 %v2669
      %3276 = vmatmul.mubr.bf16.gmra.mxu0 %v2668
      %v3277 = vpop.f32.mrf.mxu0
      %v3278 = vadd.f32 0.0, %v3277
      %v3279 = vpop.f32.mrf.mxu0
      %v3280 = vpop.f32.mrf.mxu0
      %v3281 = vadd.f32 0.0, %v3280
      %v3282 = vpop.f32.mrf.mxu0
      %3283 = vmatprep.mubr.bf16.mxu0 %v2678
      %3284 = vmatmul.mubr.bf16.gmra.mxu0 %v2677
      %v3285 = vpop.f32.mrf.mxu0
      %v3286 = vadd.f32 0.0, %v3285
      %v3287 = vpop.f32.mrf.mxu0
      %v3288 = vpop.f32.mrf.mxu0
      %v3289 = vadd.f32 0.0, %v3288
      %v3290 = vpop.f32.mrf.mxu0
      %3291 = vmatprep.mubr.bf16.mxu0 %v2687
      %3292 = vmatmul.mubr.bf16.gmra.mxu0 %v2686
      %v3293 = vpop.f32.mrf.mxu0
      %v3294 = vadd.f32 0.0, %v3293
      %v3295 = vpop.f32.mrf.mxu0
      %v3296 = vpop.f32.mrf.mxu0
      %v3297 = vadd.f32 0.0, %v3296
      %v3298 = vpop.f32.mrf.mxu0
      %3299 = vmatprep.mubr.bf16.mxu0 %v2696
      %3300 = vmatmul.mubr.bf16.gmra.mxu0 %v2695
      %v3301 = vpop.f32.mrf.mxu0
      %v3302 = vadd.f32 0.0, %v3301
      %v3303 = vpop.f32.mrf.mxu0
      %v3304 = vpop.f32.mrf.mxu0
      %v3305 = vadd.f32 0.0, %v3304
      %v3306 = vpop.f32.mrf.mxu0
      %3307 = vmatprep.mubr.bf16.mxu0 %v2705
      %3308 = vmatmul.mubr.bf16.gmra.mxu0 %v2704
      %v3309 = vpop.f32.mrf.mxu0
      %v3310 = vadd.f32 0.0, %v3309
      %v3311 = vpop.f32.mrf.mxu0
      %v3312 = vpop.f32.mrf.mxu0
      %v3313 = vadd.f32 0.0, %v3312
      %v3314 = vpop.f32.mrf.mxu0
      %3315 = vmatprep.mubr.bf16.mxu0 %v2714
      %3316 = vmatmul.mubr.bf16.gmra.mxu0 %v2713
      %v3317 = vpop.f32.mrf.mxu0
      %v3318 = vadd.f32 0.0, %v3317
      %v3319 = vpop.f32.mrf.mxu0
      %v3320 = vpop.f32.mrf.mxu0
      %v3321 = vadd.f32 0.0, %v3320
      %v3322 = vpop.f32.mrf.mxu0
      %3323 = vmatprep.mubr.bf16.mxu0 %v2723
      %3324 = vmatmul.mubr.bf16.gmra.mxu0 %v2722
      %v3325 = vpop.f32.mrf.mxu0
      %v3326 = vadd.f32 0.0, %v3325
      %v3327 = vpop.f32.mrf.mxu0
      %v3328 = vpop.f32.mrf.mxu0
      %v3329 = vadd.f32 0.0, %v3328
      %v3330 = vpop.f32.mrf.mxu0
      %3331 = vdwg.mxu0
      %3332 = vmatprep.subr.bf16.mxu0 0
      %3333 = vmatpush1.bf16.msra.mxu0 %v3114
      %3334 = vmatprep.subr.bf16.mxu0 0
      %3335 = vmatpush1.bf16.msra.mxu0 %v3113
      %3336 = vmatprep.subr.bf16.mxu0 0
      %3337 = vmatpush1.bf16.msra.mxu0 %v3112
      %3338 = vmatprep.subr.bf16.mxu0 0
      %3339 = vmatpush1.bf16.msra.mxu0 %v3111
      %3340 = vmatprep.subr.bf16.mxu0 0
      %3341 = vmatpush1.bf16.msra.mxu0 %v3110
      %3342 = vmatprep.subr.bf16.mxu0 0
      %3343 = vmatpush1.bf16.msra.mxu0 %v3109
      %3344 = vmatprep.subr.bf16.mxu0 0
      %3345 = vmatpush1.bf16.msra.mxu0 %v3108
      %3346 = vmatprep.subr.bf16.mxu0 0
      %3347 = vmatpush1.bf16.msra.mxu0 %v3107
      %3348 = vmatprep.subr.bf16.mxu0 0
      %3349 = vmatpush2.bf16.msra.mxu0 %v3122
      %3350 = vmatprep.subr.bf16.mxu0 0
      %3351 = vmatpush2.bf16.msra.mxu0 %v3121
      %3352 = vmatprep.subr.bf16.mxu0 0
      %3353 = vmatpush2.bf16.msra.mxu0 %v3120
      %3354 = vmatprep.subr.bf16.mxu0 0
      %3355 = vmatpush2.bf16.msra.mxu0 %v3119
      %3356 = vmatprep.subr.bf16.mxu0 0
      %3357 = vmatpush2.bf16.msra.mxu0 %v3118
      %3358 = vmatprep.subr.bf16.mxu0 0
      %3359 = vmatpush2.bf16.msra.mxu0 %v3117
      %3360 = vmatprep.subr.bf16.mxu0 0
      %3361 = vmatpush2.bf16.msra.mxu0 %v3116
      %3362 = vmatprep.subr.bf16.mxu0 0
      %3363 = vmatpush2.bf16.msra.mxu0 %v3115
      %3364 = vmatprep.mubr.bf16.mxu0 %v2662
      %3365 = vmatmul.mubr.bf16.gmra.mxu0 %v2661
      %v3366 = vpop.f32.mrf.mxu0
      %v3367 = vadd.f32 %v3270, %v3366
      %v3368 = vpop.f32.mrf.mxu0
      %v3369 = vpop.f32.mrf.mxu0
      %v3370 = vadd.f32 %v3273, %v3369
      %v3371 = vpop.f32.mrf.mxu0
      %3372 = vmatprep.mubr.bf16.mxu0 %v2671
      %3373 = vmatmul.mubr.bf16.gmra.mxu0 %v2670
      %v3374 = vpop.f32.mrf.mxu0
      %v3375 = vadd.f32 %v3278, %v3374
      %v3376 = vpop.f32.mrf.mxu0
      %v3377 = vpop.f32.mrf.mxu0
      %v3378 = vadd.f32 %v3281, %v3377
      %v3379 = vpop.f32.mrf.mxu0
      %3380 = vmatprep.mubr.bf16.mxu0 %v2680
      %3381 = vmatmul.mubr.bf16.gmra.mxu0 %v2679
      %v3382 = vpop.f32.mrf.mxu0
      %v3383 = vadd.f32 %v3286, %v3382
      %v3384 = vpop.f32.mrf.mxu0
      %v3385 = vpop.f32.mrf.mxu0
      %v3386 = vadd.f32 %v3289, %v3385
      %v3387 = vpop.f32.mrf.mxu0
      %3388 = vmatprep.mubr.bf16.mxu0 %v2689
      %3389 = vmatmul.mubr.bf16.gmra.mxu0 %v2688
      %v3390 = vpop.f32.mrf.mxu0
      %v3391 = vadd.f32 %v3294, %v3390
      %v3392 = vpop.f32.mrf.mxu0
      %v3393 = vpop.f32.mrf.mxu0
      %v3394 = vadd.f32 %v3297, %v3393
      %v3395 = vpop.f32.mrf.mxu0
      %3396 = vmatprep.mubr.bf16.mxu0 %v2698
      %3397 = vmatmul.mubr.bf16.gmra.mxu0 %v2697
      %v3398 = vpop.f32.mrf.mxu0
      %v3399 = vadd.f32 %v3302, %v3398
      %v3400 = vpop.f32.mrf.mxu0
      %v3401 = vpop.f32.mrf.mxu0
      %v3402 = vadd.f32 %v3305, %v3401
      %v3403 = vpop.f32.mrf.mxu0
      %3404 = vmatprep.mubr.bf16.mxu0 %v2707
      %3405 = vmatmul.mubr.bf16.gmra.mxu0 %v2706
      %v3406 = vpop.f32.mrf.mxu0
      %v3407 = vadd.f32 %v3310, %v3406
      %v3408 = vpop.f32.mrf.mxu0
      %v3409 = vpop.f32.mrf.mxu0
      %v3410 = vadd.f32 %v3313, %v3409
      %v3411 = vpop.f32.mrf.mxu0
      %3412 = vmatprep.mubr.bf16.mxu0 %v2716
      %3413 = vmatmul.mubr.bf16.gmra.mxu0 %v2715
      %v3414 = vpop.f32.mrf.mxu0
      %v3415 = vadd.f32 %v3318, %v3414
      %v3416 = vpop.f32.mrf.mxu0
      %v3417 = vpop.f32.mrf.mxu0
      %v3418 = vadd.f32 %v3321, %v3417
      %v3419 = vpop.f32.mrf.mxu0
      %3420 = vmatprep.mubr.bf16.mxu0 %v2725
      %3421 = vmatmul.mubr.bf16.gmra.mxu0 %v2724
      %v3422 = vpop.f32.mrf.mxu0
      %v3423 = vadd.f32 %v3326, %v3422
      %v3424 = vpop.f32.mrf.mxu0
      %v3425 = vpop.f32.mrf.mxu0
      %v3426 = vadd.f32 %v3329, %v3425
      %v3427 = vpop.f32.mrf.mxu0
      %3428 = vdwg.mxu0
      %3429 = vmatprep.subr.bf16.mxu0 0
      %3430 = vmatpush1.bf16.msra.mxu0 %v3130
      %3431 = vmatprep.subr.bf16.mxu0 0
      %3432 = vmatpush1.bf16.msra.mxu0 %v3129
      %3433 = vmatprep.subr.bf16.mxu0 0
      %3434 = vmatpush1.bf16.msra.mxu0 %v3128
      %3435 = vmatprep.subr.bf16.mxu0 0
      %3436 = vmatpush1.bf16.msra.mxu0 %v3127
      %3437 = vmatprep.subr.bf16.mxu0 0
      %3438 = vmatpush1.bf16.msra.mxu0 %v3126
      %3439 = vmatprep.subr.bf16.mxu0 0
      %3440 = vmatpush1.bf16.msra.mxu0 %v3125
      %3441 = vmatprep.subr.bf16.mxu0 0
      %3442 = vmatpush1.bf16.msra.mxu0 %v3124
      %3443 = vmatprep.subr.bf16.mxu0 0
      %3444 = vmatpush1.bf16.msra.mxu0 %v3123
      %3445 = vmatprep.subr.bf16.mxu0 0
      %3446 = vmatpush2.bf16.msra.mxu0 %v3138
      %3447 = vmatprep.subr.bf16.mxu0 0
      %3448 = vmatpush2.bf16.msra.mxu0 %v3137
      %3449 = vmatprep.subr.bf16.mxu0 0
      %3450 = vmatpush2.bf16.msra.mxu0 %v3136
      %3451 = vmatprep.subr.bf16.mxu0 0
      %3452 = vmatpush2.bf16.msra.mxu0 %v3135
      %3453 = vmatprep.subr.bf16.mxu0 0
      %3454 = vmatpush2.bf16.msra.mxu0 %v3134
      %3455 = vmatprep.subr.bf16.mxu0 0
      %3456 = vmatpush2.bf16.msra.mxu0 %v3133
      %3457 = vmatprep.subr.bf16.mxu0 0
      %3458 = vmatpush2.bf16.msra.mxu0 %v3132
      %3459 = vmatprep.subr.bf16.mxu0 0
      %3460 = vmatpush2.bf16.msra.mxu0 %v3131
      %3461 = vmatprep.mubr.bf16.mxu0 %v2664
      %3462 = vmatmul.mubr.bf16.gmra.mxu0 %v2663
      %v3463 = vpop.f32.mrf.mxu0
      %v3464 = vadd.f32 %v3367, %v3463
      %v3465 = vpop.f32.mrf.mxu0
      %v3466 = vpop.f32.mrf.mxu0
      %v3467 = vadd.f32 %v3370, %v3466
      %v3468 = vpop.f32.mrf.mxu0
      %3469 = vmatprep.mubr.bf16.mxu0 %v2673
      %3470 = vmatmul.mubr.bf16.gmra.mxu0 %v2672
      %v3471 = vpop.f32.mrf.mxu0
      %v3472 = vadd.f32 %v3375, %v3471
      %v3473 = vpop.f32.mrf.mxu0
      %v3474 = vpop.f32.mrf.mxu0
      %v3475 = vadd.f32 %v3378, %v3474
      %v3476 = vpop.f32.mrf.mxu0
      %3477 = vmatprep.mubr.bf16.mxu0 %v2682
      %3478 = vmatmul.mubr.bf16.gmra.mxu0 %v2681
      %v3479 = vpop.f32.mrf.mxu0
      %v3480 = vadd.f32 %v3383, %v3479
      %v3481 = vpop.f32.mrf.mxu0
      %v3482 = vpop.f32.mrf.mxu0
      %v3483 = vadd.f32 %v3386, %v3482
      %v3484 = vpop.f32.mrf.mxu0
      %3485 = vmatprep.mubr.bf16.mxu0 %v2691
      %3486 = vmatmul.mubr.bf16.gmra.mxu0 %v2690
      %v3487 = vpop.f32.mrf.mxu0
      %v3488 = vadd.f32 %v3391, %v3487
      %v3489 = vpop.f32.mrf.mxu0
      %v3490 = vpop.f32.mrf.mxu0
      %v3491 = vadd.f32 %v3394, %v3490
      %v3492 = vpop.f32.mrf.mxu0
      %3493 = vmatprep.mubr.bf16.mxu0 %v2700
      %3494 = vmatmul.mubr.bf16.gmra.mxu0 %v2699
      %v3495 = vpop.f32.mrf.mxu0
      %v3496 = vadd.f32 %v3399, %v3495
      %v3497 = vpop.f32.mrf.mxu0
      %v3498 = vpop.f32.mrf.mxu0
      %v3499 = vadd.f32 %v3402, %v3498
      %v3500 = vpop.f32.mrf.mxu0
      %3501 = vmatprep.mubr.bf16.mxu0 %v2709
      %3502 = vmatmul.mubr.bf16.gmra.mxu0 %v2708
      %v3503 = vpop.f32.mrf.mxu0
      %v3504 = vadd.f32 %v3407, %v3503
      %v3505 = vpop.f32.mrf.mxu0
      %v3506 = vpop.f32.mrf.mxu0
      %v3507 = vadd.f32 %v3410, %v3506
      %v3508 = vpop.f32.mrf.mxu0
      %3509 = vmatprep.mubr.bf16.mxu0 %v2718
      %3510 = vmatmul.mubr.bf16.gmra.mxu0 %v2717
      %v3511 = vpop.f32.mrf.mxu0
      %v3512 = vadd.f32 %v3415, %v3511
      %v3513 = vpop.f32.mrf.mxu0
      %v3514 = vpop.f32.mrf.mxu0
      %v3515 = vadd.f32 %v3418, %v3514
      %v3516 = vpop.f32.mrf.mxu0
      %3517 = vmatprep.mubr.bf16.mxu0 %v2727
      %3518 = vmatmul.mubr.bf16.gmra.mxu0 %v2726
      %v3519 = vpop.f32.mrf.mxu0
      %v3520 = vadd.f32 %v3423, %v3519
      %v3521 = vpop.f32.mrf.mxu0
      %v3522 = vpop.f32.mrf.mxu0
      %v3523 = vadd.f32 %v3426, %v3522
      %v3524 = vpop.f32.mrf.mxu0
      %3525 = vdwg.mxu0
      %3526 = vmatprep.subr.bf16.mxu0 0
      %3527 = vmatpush1.bf16.msra.mxu0 %v3146
      %3528 = vmatprep.subr.bf16.mxu0 0
      %3529 = vmatpush1.bf16.msra.mxu0 %v3145
      %3530 = vmatprep.subr.bf16.mxu0 0
      %3531 = vmatpush1.bf16.msra.mxu0 %v3144
      %3532 = vmatprep.subr.bf16.mxu0 0
      %3533 = vmatpush1.bf16.msra.mxu0 %v3143
      %3534 = vmatprep.subr.bf16.mxu0 0
      %3535 = vmatpush1.bf16.msra.mxu0 %v3142
      %3536 = vmatprep.subr.bf16.mxu0 0
      %3537 = vmatpush1.bf16.msra.mxu0 %v3141
      %3538 = vmatprep.subr.bf16.mxu0 0
      %3539 = vmatpush1.bf16.msra.mxu0 %v3140
      %3540 = vmatprep.subr.bf16.mxu0 0
      %3541 = vmatpush1.bf16.msra.mxu0 %v3139
      %3542 = vmatprep.subr.bf16.mxu0 0
      %3543 = vmatpush2.bf16.msra.mxu0 %v3154
      %3544 = vmatprep.subr.bf16.mxu0 0
      %3545 = vmatpush2.bf16.msra.mxu0 %v3153
      %3546 = vmatprep.subr.bf16.mxu0 0
      %3547 = vmatpush2.bf16.msra.mxu0 %v3152
      %3548 = vmatprep.subr.bf16.mxu0 0
      %3549 = vmatpush2.bf16.msra.mxu0 %v3151
      %3550 = vmatprep.subr.bf16.mxu0 0
      %3551 = vmatpush2.bf16.msra.mxu0 %v3150
      %3552 = vmatprep.subr.bf16.mxu0 0
      %3553 = vmatpush2.bf16.msra.mxu0 %v3149
      %3554 = vmatprep.subr.bf16.mxu0 0
      %3555 = vmatpush2.bf16.msra.mxu0 %v3148
      %3556 = vmatprep.subr.bf16.mxu0 0
      %3557 = vmatpush2.bf16.msra.mxu0 %v3147
      %3558 = vmatprep.mubr.bf16.mxu0 %v2666
      %3559 = vmatmul.mubr.bf16.gmra.mxu0 %v2665
      %v3560 = vpop.f32.mrf.mxu0
      %v3561 = vadd.f32 %v3464, %v3560
      %v3562 = vpop.f32.mrf.mxu0
      %v3563 = vpop.f32.mrf.mxu0
      %v3564 = vadd.f32 %v3467, %v3563
      %v3565 = vpop.f32.mrf.mxu0
      %3566 = vmatprep.mubr.bf16.mxu0 %v2675
      %3567 = vmatmul.mubr.bf16.gmra.mxu0 %v2674
      %v3568 = vpop.f32.mrf.mxu0
      %v3569 = vadd.f32 %v3472, %v3568
      %v3570 = vpop.f32.mrf.mxu0
      %v3571 = vpop.f32.mrf.mxu0
      %v3572 = vadd.f32 %v3475, %v3571
      %v3573 = vpop.f32.mrf.mxu0
      %3574 = vmatprep.mubr.bf16.mxu0 %v2684
      %3575 = vmatmul.mubr.bf16.gmra.mxu0 %v2683
      %v3576 = vpop.f32.mrf.mxu0
      %v3577 = vadd.f32 %v3480, %v3576
      %v3578 = vpop.f32.mrf.mxu0
      %v3579 = vpop.f32.mrf.mxu0
      %v3580 = vadd.f32 %v3483, %v3579
      %v3581 = vpop.f32.mrf.mxu0
      %3582 = vmatprep.mubr.bf16.mxu0 %v2693
      %3583 = vmatmul.mubr.bf16.gmra.mxu0 %v2692
      %v3584 = vpop.f32.mrf.mxu0
      %v3585 = vadd.f32 %v3488, %v3584
      %v3586 = vpop.f32.mrf.mxu0
      %v3587 = vpop.f32.mrf.mxu0
      %v3588 = vadd.f32 %v3491, %v3587
      %v3589 = vpop.f32.mrf.mxu0
      %3590 = vmatprep.mubr.bf16.mxu0 %v2702
      %3591 = vmatmul.mubr.bf16.gmra.mxu0 %v2701
      %v3592 = vpop.f32.mrf.mxu0
      %v3593 = vadd.f32 %v3496, %v3592
      %v3594 = vpop.f32.mrf.mxu0
      %v3595 = vpop.f32.mrf.mxu0
      %v3596 = vadd.f32 %v3499, %v3595
      %v3597 = vpop.f32.mrf.mxu0
      %3598 = vmatprep.mubr.bf16.mxu0 %v2711
      %3599 = vmatmul.mubr.bf16.gmra.mxu0 %v2710
      %v3600 = vpop.f32.mrf.mxu0
      %v3601 = vadd.f32 %v3504, %v3600
      %v3602 = vpop.f32.mrf.mxu0
      %v3603 = vpop.f32.mrf.mxu0
      %v3604 = vadd.f32 %v3507, %v3603
      %v3605 = vpop.f32.mrf.mxu0
      %3606 = vmatprep.mubr.bf16.mxu0 %v2720
      %3607 = vmatmul.mubr.bf16.gmra.mxu0 %v2719
      %v3608 = vpop.f32.mrf.mxu0
      %v3609 = vadd.f32 %v3512, %v3608
      %v3610 = vpop.f32.mrf.mxu0
      %v3611 = vpop.f32.mrf.mxu0
      %v3612 = vadd.f32 %v3515, %v3611
      %v3613 = vpop.f32.mrf.mxu0
      %3614 = vmatprep.mubr.bf16.mxu0 %v2729
      %3615 = vmatmul.mubr.bf16.gmra.mxu0 %v2728
      %v3616 = vpop.f32.mrf.mxu0
      %v3617 = vadd.f32 %v3520, %v3616
      %v3618 = vpop.f32.mrf.mxu0
      %v3619 = vpop.f32.mrf.mxu0
      %v3620 = vadd.f32 %v3523, %v3619
      %v3621 = vpop.f32.mrf.mxu0
      %3622 = vdwg.mxu0
      %3623 = vmatprep.subr.bf16.mxu0 0
      %3624 = vmatpush1.bf16.msra.mxu0 %v3162
      %3625 = vmatprep.subr.bf16.mxu0 0
      %3626 = vmatpush1.bf16.msra.mxu0 %v3161
      %3627 = vmatprep.subr.bf16.mxu0 0
      %3628 = vmatpush1.bf16.msra.mxu0 %v3160
      %3629 = vmatprep.subr.bf16.mxu0 0
      %3630 = vmatpush1.bf16.msra.mxu0 %v3159
      %3631 = vmatprep.subr.bf16.mxu0 0
      %3632 = vmatpush1.bf16.msra.mxu0 %v3158
      %3633 = vmatprep.subr.bf16.mxu0 0
      %3634 = vmatpush1.bf16.msra.mxu0 %v3157
      %3635 = vmatprep.subr.bf16.mxu0 0
      %3636 = vmatpush1.bf16.msra.mxu0 %v3156
      %3637 = vmatprep.subr.bf16.mxu0 0
      %3638 = vmatpush1.bf16.msra.mxu0 %v3155
      %3639 = vmatprep.subr.bf16.mxu0 0
      %3640 = vmatpush2.bf16.msra.mxu0 0
      %3641 = vmatprep.subr.bf16.mxu0 0
      %3642 = vmatpush2.bf16.msra.mxu0 0
      %3643 = vmatprep.subr.bf16.mxu0 0
      %3644 = vmatpush2.bf16.msra.mxu0 0
      %3645 = vmatprep.subr.bf16.mxu0 0
      %3646 = vmatpush2.bf16.msra.mxu0 0
      %3647 = vmatprep.subr.bf16.mxu0 0
      %3648 = vmatpush2.bf16.msra.mxu0 0
      %3649 = vmatprep.subr.bf16.mxu0 0
      %3650 = vmatpush2.bf16.msra.mxu0 0
      %3651 = vmatprep.subr.bf16.mxu0 0
      %3652 = vmatpush2.bf16.msra.mxu0 0
      %3653 = vmatprep.subr.bf16.mxu0 0
      %3654 = vmatpush2.bf16.msra.mxu0 0
      %3655 = vmatprep.mubr.bf16.mxu0 0
      %3656 = vmatmul.mubr.bf16.gmra.mxu0 %v2667
      %v3657 = vpop.f32.mrf.mxu0
      %v3658 = vadd.f32 %v3561, %v3657
      %v3659 = vpop.f32.mrf.mxu0
      %v3660 = vpop.f32.mrf.mxu0
      %v3661 = vadd.f32 %v3564, %v3660
      %v3662 = vpop.f32.mrf.mxu0
      %3663 = vmatprep.mubr.bf16.mxu0 0
      %3664 = vmatmul.mubr.bf16.gmra.mxu0 %v2676
      %v3665 = vpop.f32.mrf.mxu0
      %v3666 = vadd.f32 %v3569, %v3665
      %v3667 = vpop.f32.mrf.mxu0
      %v3668 = vpop.f32.mrf.mxu0
      %v3669 = vadd.f32 %v3572, %v3668
      %v3670 = vpop.f32.mrf.mxu0
      %3671 = vmatprep.mubr.bf16.mxu0 0
      %3672 = vmatmul.mubr.bf16.gmra.mxu0 %v2685
      %v3673 = vpop.f32.mrf.mxu0
      %v3674 = vadd.f32 %v3577, %v3673
      %v3675 = vpop.f32.mrf.mxu0
      %v3676 = vpop.f32.mrf.mxu0
      %v3677 = vadd.f32 %v3580, %v3676
      %v3678 = vpop.f32.mrf.mxu0
      %3679 = vmatprep.mubr.bf16.mxu0 0
      %3680 = vmatmul.mubr.bf16.gmra.mxu0 %v2694
      %v3681 = vpop.f32.mrf.mxu0
      %v3682 = vadd.f32 %v3585, %v3681
      %v3683 = vpop.f32.mrf.mxu0
      %v3684 = vpop.f32.mrf.mxu0
      %v3685 = vadd.f32 %v3588, %v3684
      %v3686 = vpop.f32.mrf.mxu0
      %3687 = vmatprep.mubr.bf16.mxu0 0
      %3688 = vmatmul.mubr.bf16.gmra.mxu0 %v2703
      %v3689 = vpop.f32.mrf.mxu0
      %v3690 = vadd.f32 %v3593, %v3689
      %v3691 = vpop.f32.mrf.mxu0
      %v3692 = vpop.f32.mrf.mxu0
      %v3693 = vadd.f32 %v3596, %v3692
      %v3694 = vpop.f32.mrf.mxu0
      %3695 = vmatprep.mubr.bf16.mxu0 0
      %3696 = vmatmul.mubr.bf16.gmra.mxu0 %v2712
      %v3697 = vpop.f32.mrf.mxu0
      %v3698 = vadd.f32 %v3601, %v3697
      %v3699 = vpop.f32.mrf.mxu0
      %v3700 = vpop.f32.mrf.mxu0
      %v3701 = vadd.f32 %v3604, %v3700
      %v3702 = vpop.f32.mrf.mxu0
      %3703 = vmatprep.mubr.bf16.mxu0 0
      %3704 = vmatmul.mubr.bf16.gmra.mxu0 %v2721
      %v3705 = vpop.f32.mrf.mxu0
      %v3706 = vadd.f32 %v3609, %v3705
      %v3707 = vpop.f32.mrf.mxu0
      %v3708 = vpop.f32.mrf.mxu0
      %v3709 = vadd.f32 %v3612, %v3708
      %v3710 = vpop.f32.mrf.mxu0
      %3711 = vmatprep.mubr.bf16.mxu0 0
      %3712 = vmatmul.mubr.bf16.gmra.mxu0 %v2730
      %v3713 = vpop.f32.mrf.mxu0
      %v3714 = vadd.f32 %v3617, %v3713
      %v3715 = vpop.f32.mrf.mxu0
      %v3716 = vpop.f32.mrf.mxu0
      %v3717 = vadd.f32 %v3620, %v3716
      %v3718 = vpop.f32.mrf.mxu0
      %3719 = vdwg.mxu0
      %v3720 = vpack.c.bf16 %v3661, %v3658
      %v3721 = vpack.c.bf16 %v3669, %v3666
      %v3722 = vpack.c.bf16 %v3677, %v3674
      %v3723 = vpack.c.bf16 %v3685, %v3682
      %v3724 = vpack.c.bf16 %v3693, %v3690
      %v3725 = vpack.c.bf16 %v3701, %v3698
      %v3726 = vpack.c.bf16 %v3709, %v3706
      %v3727 = vpack.c.bf16 %v3717, %v3714
      %v3736 = vunpack.c.l.b16 %v3720
      %v3737 = vunpack.c.h.b16 %v3720
      %v3738 = vunpack.c.l.b16 %v3721
      %v3739 = vunpack.c.h.b16 %v3721
      %v3740 = vunpack.c.l.b16 %v3722
      %v3741 = vunpack.c.h.b16 %v3722
      %v3742 = vunpack.c.l.b16 %v3723
      %v3743 = vunpack.c.h.b16 %v3723
      %v3744 = vunpack.c.l.b16 %v3724
      %v3745 = vunpack.c.h.b16 %v3724
      %v3746 = vunpack.c.l.b16 %v3725
      %v3747 = vunpack.c.h.b16 %v3725
      %v3748 = vunpack.c.l.b16 %v3726
      %v3749 = vunpack.c.h.b16 %v3726
      %v3750 = vunpack.c.l.b16 %v3727
      %v3751 = vunpack.c.h.b16 %v3727
      %v3752 = vpack.c.b16 %v3736, %v3736
      %v3753 = vpack.c.b16 %v3737, %v3737
      %v3754 = vpack.c.b16 %v3738, %v3738
      %v3755 = vpack.c.b16 %v3739, %v3739
      %v3756 = vpack.c.b16 %v3740, %v3740
      %v3757 = vpack.c.b16 %v3741, %v3741
      %v3758 = vpack.c.b16 %v3742, %v3742
      %v3759 = vpack.c.b16 %v3743, %v3743
      %v3760 = vpack.c.b16 %v3744, %v3744
      %v3761 = vpack.c.b16 %v3745, %v3745
      %v3762 = vpack.c.b16 %v3746, %v3746
      %v3763 = vpack.c.b16 %v3747, %v3747
      %v3764 = vpack.c.b16 %v3748, %v3748
      %v3765 = vpack.c.b16 %v3749, %v3749
      %v3766 = vpack.c.b16 %v3750, %v3750
      %v3767 = vpack.c.b16 %v3751, %v3751
      %3784 = vst [vmem:[%s261] sm:$0xf] %v3752
      %3785 = vst [vmem:[%s261 + $0x4] sm:$0xf] %v3753
      %3786 = vst [vmem:[%s261 + $0x8] sm:$0xf] %v3754
      %3787 = vst [vmem:[%s261 + $0xc] sm:$0xf] %v3755
      %3788 = vst [vmem:[%s261 + $0x10] sm:$0xf] %v3756
      %3789 = vst [vmem:[%s261 + $0x14] sm:$0xf] %v3757
      %3790 = vst [vmem:[%s261 + $0x18] sm:$0xf] %v3758
      %3791 = vst [vmem:[%s261 + $0x1c] sm:$0xf] %v3759
      %3792 = vst [vmem:[%s261 + $0x20] sm:$0xf] %v3760
      %3793 = vst [vmem:[%s261 + $0x24] sm:$0xf] %v3761
      %3794 = vst [vmem:[%s261 + $0x28] sm:$0xf] %v3762
      %3795 = vst [vmem:[%s261 + $0x2c] sm:$0xf] %v3763
      %3796 = vst [vmem:[%s261 + $0x30] sm:$0xf] %v3764
      %3797 = vst [vmem:[%s261 + $0x34] sm:$0xf] %v3765
      %3798 = vst [vmem:[%s261 + $0x38] sm:$0xf] %v3766
      %3799 = vst [vmem:[%s261 + $0x3c] sm:$0xf] %v3767
      %v3800 = vadd.f32 %v3658, %v3661
      %v3801 = vadd.f32 %v3800, %v3666
      %v3802 = vadd.f32 %v3801, %v3669
      %v3803 = vadd.f32 %v3802, %v3674
      %v3804 = vadd.f32 %v3803, %v3677
      %v3805 = vadd.f32 %v3804, %v3682
      %v3806 = vadd.f32 %v3805, %v3685
      %v3807 = vadd.f32 %v3806, %v3690
      %v3808 = vadd.f32 %v3807, %v3693
      %v3809 = vadd.f32 %v3808, %v3698
      %v3810 = vadd.f32 %v3809, %v3701
      %v3811 = vadd.f32 %v3810, %v3706
      %v3812 = vadd.f32 %v3811, %v3709
      %v3813 = vadd.f32 %v3812, %v3714
      %v3814 = vadd.f32 %v3813, %v3717
      %v3815 = vrot.slane %v3814, 4
      %v3816 = vadd.f32 %v3814, %v3815
      %v3817 = vrot.slane %v3816, 2
      %v3818 = vadd.f32 %v3816, %v3817
      %v3819 = vrot.slane %v3818, 1
      %v3820 = vadd.f32 %v3818, %v3819
      %v3821 = vrcp.pop 128.0
      %v3822 = vmul.f32 %v3820, %v3821
      %3823 = vst [vmem:[%s270] sm:$0x1] %v3822
      %v3824 = vsub.f32 %v3658, %v3822
      %v3825 = vsub.f32 %v3661, %v3822
      %v3826 = vsub.f32 %v3666, %v3822
      %v3827 = vsub.f32 %v3669, %v3822
      %v3828 = vsub.f32 %v3674, %v3822
      %v3829 = vsub.f32 %v3677, %v3822
      %v3830 = vsub.f32 %v3682, %v3822
      %v3831 = vsub.f32 %v3685, %v3822
      %v3832 = vsub.f32 %v3690, %v3822
      %v3833 = vsub.f32 %v3693, %v3822
      %v3834 = vsub.f32 %v3698, %v3822
      %v3835 = vsub.f32 %v3701, %v3822
      %v3836 = vsub.f32 %v3706, %v3822
      %v3837 = vsub.f32 %v3709, %v3822
      %v3838 = vsub.f32 %v3714, %v3822
      %v3839 = vsub.f32 %v3717, %v3822
      %v3840 = vmul.f32 %v3824, %v3824
      %v3841 = vmul.f32 %v3825, %v3825
      %v3842 = vmul.f32 %v3826, %v3826
      %v3843 = vmul.f32 %v3827, %v3827
      %v3844 = vmul.f32 %v3828, %v3828
      %v3845 = vmul.f32 %v3829, %v3829
      %v3846 = vmul.f32 %v3830, %v3830
      %v3847 = vmul.f32 %v3831, %v3831
      %v3848 = vmul.f32 %v3832, %v3832
      %v3849 = vmul.f32 %v3833, %v3833
      %v3850 = vmul.f32 %v3834, %v3834
      %v3851 = vmul.f32 %v3835, %v3835
      %v3852 = vmul.f32 %v3836, %v3836
      %v3853 = vmul.f32 %v3837, %v3837
      %v3854 = vmul.f32 %v3838, %v3838
      %v3855 = vmul.f32 %v3839, %v3839
      %v3856 = vadd.f32 %v3840, %v3841
      %v3857 = vadd.f32 %v3856, %v3842
      %v3858 = vadd.f32 %v3857, %v3843
      %v3859 = vadd.f32 %v3858, %v3844
      %v3860 = vadd.f32 %v3859, %v3845
      %v3861 = vadd.f32 %v3860, %v3846
      %v3862 = vadd.f32 %v3861, %v3847
      %v3863 = vadd.f32 %v3862, %v3848
      %v3864 = vadd.f32 %v3863, %v3849
      %v3865 = vadd.f32 %v3864, %v3850
      %v3866 = vadd.f32 %v3865, %v3851
      %v3867 = vadd.f32 %v3866, %v3852
      %v3868 = vadd.f32 %v3867, %v3853
      %v3869 = vadd.f32 %v3868, %v3854
      %v3870 = vadd.f32 %v3869, %v3855
      %v3871 = vrot.slane %v3870, 4
      %v3872 = vadd.f32 %v3870, %v3871
      %v3873 = vrot.slane %v3872, 2
      %v3874 = vadd.f32 %v3872, %v3873
      %v3875 = vrot.slane %v3874, 1
      %v3876 = vadd.f32 %v3874, %v3875
      %3877 = vst [vmem:[%s270 + $0x1] sm:$0x1] %v3876
      %s3878 = smul.u32 8, %s22
      %p3879 = scmp.lt.s32.totalorder %s21, 1
      %s3880 = scalar_select %p3879, %s21, 1
      %p3881 = scmp.lt.s32.totalorder %s3878, 15
      %s3882 = scalar_select %p3881, %s3878, 15
      %s3883 = smul.addr %s3882, 2
      %s3884 = smul.addr %s3880, 32
      %s3885 = sadd.s32 %s3883, %s3884
      %s3886 = smul.addr %s3885, 4
      %s3887 = scalar_lea.vmem %s4, %s3886
      %p3888 = scmp.lt.s32.totalorder %s21, 1
      %s3889 = scalar_select %p3888, %s21, 1
      %p3890 = scmp.lt.s32.totalorder %s22, 1
      %s3891 = scalar_select %p3890, %s22, 1
      %s3892 = smul.addr %s3889, 2
      %s3893 = sadd.s32 %s3891, %s3892
      %s3894 = smul.addr %s3893, 2
      %s3895 = scalar_lea.vmem %s5, %s3894
      // Predicated region
      $region41: #{layer_forward.4} parent=35 // pred_check
        %p3896 = pneg %p138
      $region42: #{layer_forward.4} parent=35 // pred_check_branch
        %3898 = sbr.rel (%p3896) target = $region44
      $region43: #{layer_forward.4} parent=35 // pred_region
        %s3899 = smul.u32 8, %s22
      $region44: #{layer_forward.4} parent=35 // pred_fallthru
        _
      // Predicated region
      $region45: #{layer_forward.4} parent=35 // pred_check
        %p3900 = pneg %p166
      $region46: #{layer_forward.4} parent=35 // pred_check_branch
        %3902 = sbr.rel (%p3900) target = $region48
      $region47: #{layer_forward.4} parent=35 // pred_region
        _
      $region48: #{layer_forward.4} parent=35 // pred_fallthru
        _
    $region36: #{layer_forward.4} parent=5 // pred_fallthru
      _
    %p3903 = scmp.le.s32.totalorder 2, %s12
    // Predicated region
    $region49: #{layer_forward.4} parent=5 // pred_check
      %p3904 = pneg %p3903
    $region50: #{layer_forward.4} parent=5 // pred_check_branch
      %3906 = sbr.rel (%p3904) target = $region52
    $region51: #{layer_forward.4} parent=5 // pred_region
      %s3907 = ssub.s32 %s12, 2
      // Predicated region
      $region53: #{layer_forward.4} parent=51 // pred_check
        %p3908 = pneg %p144
      $region54: #{layer_forward.4} parent=51 // pred_check_branch
        %3910 = sbr.rel (%p3908) target = $region56
      $region55: #{layer_forward.4} parent=51 // pred_region
        %s3911 = smul.u32 8, %s24
        %p3912 = scmp.lt.s32.totalorder %s23, 1
        %s3913 = scalar_select %p3912, %s23, 1
        %p3914 = scmp.lt.s32.totalorder %s3911, 15
        %s3915 = scalar_select %p3914, %s3911, 15
        %s3916 = smul.addr %s3915, 2
        %s3917 = smul.addr %s3913, 32
        %s3918 = sadd.s32 %s3916, %s3917
        %s3919 = smul.addr %s3918, 4
        %s3920 = scalar_lea.vmem %s4, %s3919
      $region56: #{layer_forward.4} parent=51 // pred_fallthru
        _
      // Predicated region
      $region57: #{layer_forward.4} parent=51 // pred_check
        %p3921 = pneg %p172
      $region58: #{layer_forward.4} parent=51 // pred_check_branch
        %3923 = sbr.rel (%p3921) target = $region60
      $region59: #{layer_forward.4} parent=51 // pred_region
        %p3924 = scmp.lt.s32.totalorder %s23, 1
        %s3925 = scalar_select %p3924, %s23, 1
        %p3926 = scmp.lt.s32.totalorder %s24, 1
        %s3927 = scalar_select %p3926, %s24, 1
        %s3928 = smul.addr %s3925, 2
        %s3929 = sadd.s32 %s3927, %s3928
        %s3930 = smul.addr %s3929, 2
        %s3931 = scalar_lea.vmem %s5, %s3930
      $region60: #{layer_forward.4} parent=51 // pred_fallthru
        _
    $region52: #{layer_forward.4} parent=5 // pred_fallthru
      _
  $region6: #{layer_forward.4} parent=0 // loop_footer
    %s16 = sadd.s32 1, %s12
  $region7: #{layer_forward.4} parent=0 // loop_footer_branch
    %11 = sbr.rel target = $region3
  $region8: #{layer_forward.4} parent=0 // loop_exit
    _

</llo_original>
